<compile_context>
chip_gen: v7x
topology: tpu7x:2x2x1
jax: 0.10.0
libtpu: 0.0.40
codegen_flags: <defaults>
</compile_context>

<pallas_src>
import jax
import jax.numpy as jnp
from jax import lax
from jax.experimental import pallas as pl
from jax.experimental.pallas import tpu as pltpu

# Small VGG-style cfg (the module accepts a custom cfg); dataset='cifar10'.
CFG = [8, 'M', 16, 'M', 16]
NUM_CLASSES = 10
BN_EPS = 1e-5
LANES = 128  # lane-dense width for the classifier output block


# --------------------------- trace-time planning ---------------------------

def _plan(cfg, in_ch, H, W):
    """Per-conv geometry (Python/trace-time constants)."""
    convs = []
    c, h, w = in_ch, H, W
    for v in cfg:
        if v == 'M':
            assert convs and not convs[-1]['pool_after'], "bad cfg ('M' placement)"
            convs[-1]['pool_after'] = True
            h, w = h // 2, w // 2
        else:
            hp, wp = h + 2, w + 2
            convs.append(dict(cin=c, cout=v, h=h, w=w, hp=hp, wp=wp,
                              margin=wp + 1, pool_after=False))
            c = v
    assert cfg[-1] != 'M', "last cfg entry must be a conv layer"
    return convs, c, h, w


# ------------------------------ fused kernel -------------------------------

def _build_kernel(N, convs):
    n_conv = len(convs)

    def kernel(*refs):
        x_ref = refs[0]
        conv_refs = refs[1:1 + 2 * n_conv]          # (w9, bias) per conv layer
        wl_ref = refs[1 + 2 * n_conv]               # (C_last, LANES)
        bl_ref = refs[2 + 2 * n_conv]               # (1, LANES)
        o_ref = refs[3 + 2 * n_conv]                # (N, LANES)
        scratch = refs[4 + 2 * n_conv:]
        apad_refs = [scratch[2 * k] for k in range(n_conv)]   # padded flat inputs
        y_refs = [scratch[2 * k + 1] for k in range(n_conv)]  # conv outputs
        pooled_ref = scratch[2 * n_conv]                      # (N, C_last)

        # ---- stage 0: zero-pad the NHWC input into flat padded VMEM scratch ----
        g0 = convs[0]
        apad_refs[0][...] = jnp.zeros_like(apad_refs[0])
        for n in range(N):
            for h in range(g0['h']):
                dst = g0['margin'] + (n * g0['hp'] + (h + 1)) * g0['wp'] + 1
                apad_refs[0][pl.ds(dst, g0['w']), :] = x_ref[n, h]

        # ---- conv / pool pipeline, everything VMEM-resident ----
        for k, g in enumerate(convs):
            hp, wp, mg = g['hp'], g['wp'], g['margin']
            mp = N * hp * wp
            w_ref, b_ref = conv_refs[2 * k], conv_refs[2 * k + 1]

            # 3x3 conv as 9 accumulating matmuls over shifted flat windows.
            acc = None
            t = 0
            for dy in (-1, 0, 1):
                for dx in (-1, 0, 1):
                    xs = apad_refs[k][pl.ds(mg + dy * wp + dx, mp), :]   # (mp, Cin)
                    part = jnp.dot(xs, w_ref[t],
                                   preferred_element_type=jnp.float32)
                    acc = part if acc is None else acc + part
                    t += 1
            # BN scale already folded into the weights; add shift, ReLU.
            y_refs[k][...] = jnp.maximum(acc + b_ref[...], 0.0)

            if k + 1 < n_conv:
                gn = convs[k + 1]
                apad_refs[k + 1][...] = jnp.zeros_like(apad_refs[k + 1])
                if g['pool_after']:
                    # 2x2 / stride-2 maxpool straight into the next padded scratch.
                    ho, wo = g['h'] // 2, g['w'] // 2
                    for n in range(N):
                        for i in range(ho):
                            top = y_refs[k][pl.ds((n * hp + 2 * i + 1) * wp + 1,
                                                  g['w']), :]
                            bot = y_refs[k][pl.ds((n * hp + 2 * i + 2) * wp + 1,
                                                  g['w']), :]
                            v = jnp.maximum(top, bot)                    # (W, C)
                            dst = gn['margin'] + (n * gn['hp'] + i + 1) * gn['wp'] + 1
                            for j in range(wo):
                                apad_refs[k + 1][pl.ds(dst + j, 1), :] = jnp.maximum(
                                    v[2 * j:2 * j + 1, :], v[2 * j + 1:2 * j + 2, :])
                else:
                    # conv -> conv (same spatial size): copy interior rows.
                    for n in range(N):
                        for h in range(g['h']):
                            src = (n * hp + h + 1) * wp + 1
                            dst = gn['margin'] + (n * gn['hp'] + h + 1) * gn['wp'] + 1
                            apad_refs[k + 1][pl.ds(dst, g['w']), :] = \
                                y_refs[k][pl.ds(src, g['w']), :]

        # ---- head: AvgPool2d(2) on the 2x2 map -> flatten -> Linear ----
        gl = convs[-1]
        hp, wp = gl['hp'], gl['wp']
        for n in range(N):
            base = n * hp * wp
            r00 = y_refs[-1][pl.ds(base + 1 * wp + 1, 1), :]
            r01 = y_refs[-1][pl.ds(base + 1 * wp + 2, 1), :]
            r10 = y_refs[-1][pl.ds(base + 2 * wp + 1, 1), :]
            r11 = y_refs[-1][pl.ds(base + 2 * wp + 2, 1), :]
            pooled_ref[pl.ds(n, 1), :] = (r00 + r01 + r10 + r11) * 0.25
        o_ref[...] = (jnp.dot(pooled_ref[...], wl_ref[...],
                              preferred_element_type=jnp.float32) + bl_ref[...])

    return kernel


# -------------------------------- wrapper ----------------------------------

def vgg_forward(x_nchw, conv_params, linear_params, cfg=CFG,
                num_classes=NUM_CLASSES):
    x = jnp.transpose(x_nchw, (0, 2, 3, 1)).astype(jnp.float32)   # NCHW -> NHWC
    N, H, W, Cin = x.shape
    convs, c_last, hf, wf = _plan(cfg, Cin, H, W)
    assert (hf, wf) == (2, 2), "final feature map must be 2x2 (CIFAR VGG head)"
    out_w = -(-num_classes // LANES) * LANES

    # Fold eval-mode BatchNorm into the conv weights once (scale -> weights,
    # shift -> bias).  Weight layout: (tap=kh*3+kw, Cin, Cout).
    flat = []
    for p, g in zip(conv_params, convs):
        w9 = jnp.transpose(p['w'], (2, 3, 1, 0)).reshape(9, g['cin'], g['cout'])
        w9 = (w9 * p['scale'][None, None, :]).astype(jnp.float32)
        flat += [w9, p['shift'].reshape(1, g['cout']).astype(jnp.float32)]
    wl, bl = linear_params
    wl_pad = jnp.zeros((c_last, out_w), jnp.float32).at[:, :num_classes].set(wl.T)
    bl_pad = jnp.zeros((1, out_w), jnp.float32).at[:, :num_classes].set(bl)
    flat += [wl_pad, bl_pad]

    # VMEM scratch: padded flat input + conv output per layer, plus the pooled
    # feature row block.  Total is well under 1 MiB for this cfg.
    scratch_shapes = []
    for g in convs:
        mp = N * g['hp'] * g['wp']
        scratch_shapes.append(
            pltpu.VMEM((2 * g['margin'] + mp, g['cin']), jnp.float32))
        scratch_shapes.append(pltpu.VMEM((mp, g['cout']), jnp.float32))
    scratch_shapes.append(pltpu.VMEM((N, c_last), jnp.float32))

    kernel = _build_kernel(N, convs)
    out = pl.pallas_call(
        kernel,
        out_shape=jax.ShapeDtypeStruct((N, out_w), jnp.float32),
        scratch_shapes=scratch_shapes,
    )(x, *flat)
    return out[:, :num_classes]


# -------------------- deterministic parameter init ----------------------

def init_params(key, cfg, in_ch=3, num_classes=NUM_CLASSES):
    """Mirrors weights_init: conv=kaiming_normal(fan_out, relu), BN gamma=1/beta=0,
    Linear ~ N(0, 0.01), Linear bias = 0."""
    conv_params = []
    c = in_ch
    for v in cfg:
        if v == 'M':
            continue
        key, sub = jax.random.split(key)
        fan_out = v * 3 * 3
        w = jax.random.normal(sub, (v, c, 3, 3), jnp.float32) * jnp.sqrt(2.0 / fan_out)
        gamma = jnp.ones((v,), jnp.float32)
        beta = jnp.zeros((v,), jnp.float32)
        run_mean = jnp.zeros((v,), jnp.float32)
        run_var = jnp.ones((v,), jnp.float32)
        scale = gamma / jnp.sqrt(run_var + BN_EPS)
        shift = beta - run_mean * scale
        conv_params.append({'w': w, 'scale': scale, 'shift': shift})
        c = v
    key, sub = jax.random.split(key)
    wl = jax.random.normal(sub, (num_classes, c), jnp.float32) * 0.01
    bl = jnp.zeros((num_classes,), jnp.float32)
    return conv_params, (wl, bl)


# ---------------------- pure-JAX reference (check) -----------------------

def vgg_forward_ref(x_nchw, conv_params, linear_params, cfg=CFG):
    x = x_nchw
    i = 0
    for v in cfg:
        if v == 'M':
            x = lax.reduce_window(x, -jnp.inf, lax.max,
                                  (1, 1, 2, 2), (1, 1, 2, 2), 'VALID')
        else:
            p = conv_params[i]
            x = lax.conv_general_dilated(
                x, p['w'], (1, 1), 'SAME',
                dimension_numbers=('NCHW', 'OIHW', 'NCHW'))
            x = x * p['scale'][None, :, None, None] + p['shift'][None, :, None, None]
            x = jnp.maximum(x, 0.0)
            i += 1
    x = lax.reduce_window(x, 0.0, lax.add, (1, 1, 2, 2), (1, 1, 2, 2), 'VALID') / 4.0
    x = x.reshape(x.shape[0], -1)
    wl, bl = linear_params
    return x @ wl.T + bl


if __name__ == "__main__":
    key = jax.random.PRNGKey(0)
    key, pkey, xkey = jax.random.split(key, 3)
    conv_params, linear_params = init_params(pkey, CFG)

    # Input mirrors PyTorch NCHW convention; small CIFAR-like shape.
    x = jax.random.normal(xkey, (2, 3, 8, 8), jnp.float32)

    fwd = jax.jit(vgg_forward)
    y = jax.block_until_ready(fwd(x, conv_params, linear_params))
    y_ref = jax.block_until_ready(vgg_forward_ref(x, conv_params, linear_params))

    assert y.shape == (2, NUM_CLASSES), y.shape
    assert jnp.allclose(y, y_ref, atol=1e-4, rtol=1e-4), \
        float(jnp.max(jnp.abs(y - y_ref)))
    print("KERNEL_OK")
</pallas_src>

<mosaic_0001>
module attributes {stable_mosaic.version = 11 : i64} {
  func.func @kernel(%arg0: memref<2x8x8x3xf32, #tpu.memory_space<vmem>>, %arg1: memref<9x3x8xf32, #tpu.memory_space<vmem>>, %arg2: memref<1x8xf32, #tpu.memory_space<vmem>>, %arg3: memref<9x8x16xf32, #tpu.memory_space<vmem>>, %arg4: memref<1x16xf32, #tpu.memory_space<vmem>>, %arg5: memref<9x16x16xf32, #tpu.memory_space<vmem>>, %arg6: memref<1x16xf32, #tpu.memory_space<vmem>>, %arg7: memref<16x128xf32, #tpu.memory_space<vmem>>, %arg8: memref<1x128xf32, #tpu.memory_space<vmem>>, %arg9: memref<2x128xf32, #tpu.memory_space<vmem>>, %arg10: memref<222x3xf32, #tpu.memory_space<vmem>>, %arg11: memref<200x8xf32, #tpu.memory_space<vmem>>, %arg12: memref<86x8xf32, #tpu.memory_space<vmem>>, %arg13: memref<72x16xf32, #tpu.memory_space<vmem>>, %arg14: memref<42x16xf32, #tpu.memory_space<vmem>>, %arg15: memref<32x16xf32, #tpu.memory_space<vmem>>, %arg16: memref<2x16xf32, #tpu.memory_space<vmem>>) attributes {dimension_semantics = [], scalar_prefetch = 0 : i64, scratch_operands = 7 : i64, tpu.core_type = #tpu.core_type<tc>} {
    %cst = arith.constant 0.000000e+00 : f32
    %0 = vector.broadcast %cst : f32 to vector<222x3xf32>
    %c0 = arith.constant 0 : index
    %c0_0 = arith.constant 0 : index
    %1 = vector.load %arg10[%c0, %c0_0] : memref<222x3xf32, #tpu.memory_space<vmem>>, vector<222x3xf32>
    tpu.vector_store %arg10[%c0, %c0_0], %0 {strides = array<i32>} : memref<222x3xf32, #tpu.memory_space<vmem>>, vector<222x3xf32>,
    %c0_1 = arith.constant 0 : index
    %c0_2 = arith.constant 0 : index
    %c0_3 = arith.constant 0 : index
    %c0_4 = arith.constant 0 : index
    %2 = vector.load %arg0[%c0_1, %c0_2, %c0_3, %c0_4] : memref<2x8x8x3xf32, #tpu.memory_space<vmem>>, vector<1x1x8x3xf32>
    %3 = vector.shape_cast %2 : vector<1x1x8x3xf32> to vector<8x3xf32>
    %c22 = arith.constant 22 : index
    %c0_5 = arith.constant 0 : index
    %4 = vector.load %arg10[%c22, %c0_5] : memref<222x3xf32, #tpu.memory_space<vmem>>, vector<8x3xf32>
    tpu.vector_store %arg10[%c22, %c0_5], %3 {strides = array<i32>} : memref<222x3xf32, #tpu.memory_space<vmem>>, vector<8x3xf32>,
    %c0_6 = arith.constant 0 : index
    %c1 = arith.constant 1 : index
    %c0_7 = arith.constant 0 : index
    %c0_8 = arith.constant 0 : index
    %5 = vector.load %arg0[%c0_6, %c1, %c0_7, %c0_8] : memref<2x8x8x3xf32, #tpu.memory_space<vmem>>, vector<1x1x8x3xf32>
    %6 = vector.shape_cast %5 : vector<1x1x8x3xf32> to vector<8x3xf32>
    %c32 = arith.constant 32 : index
    %c0_9 = arith.constant 0 : index
    %7 = vector.load %arg10[%c32, %c0_9] : memref<222x3xf32, #tpu.memory_space<vmem>>, vector<8x3xf32>
    tpu.vector_store %arg10[%c32, %c0_9], %6 {strides = array<i32>} : memref<222x3xf32, #tpu.memory_space<vmem>>, vector<8x3xf32>,
    %c0_10 = arith.constant 0 : index
    %c2 = arith.constant 2 : index
    %c0_11 = arith.constant 0 : index
    %c0_12 = arith.constant 0 : index
    %8 = vector.load %arg0[%c0_10, %c2, %c0_11, %c0_12] : memref<2x8x8x3xf32, #tpu.memory_space<vmem>>, vector<1x1x8x3xf32>
    %9 = vector.shape_cast %8 : vector<1x1x8x3xf32> to vector<8x3xf32>
    %c42 = arith.constant 42 : index
    %c0_13 = arith.constant 0 : index
    %10 = vector.load %arg10[%c42, %c0_13] : memref<222x3xf32, #tpu.memory_space<vmem>>, vector<8x3xf32>
    tpu.vector_store %arg10[%c42, %c0_13], %9 {strides = array<i32>} : memref<222x3xf32, #tpu.memory_space<vmem>>, vector<8x3xf32>,
    %c0_14 = arith.constant 0 : index
    %c3 = arith.constant 3 : index
    %c0_15 = arith.constant 0 : index
    %c0_16 = arith.constant 0 : index
    %11 = vector.load %arg0[%c0_14, %c3, %c0_15, %c0_16] : memref<2x8x8x3xf32, #tpu.memory_space<vmem>>, vector<1x1x8x3xf32>
    %12 = vector.shape_cast %11 : vector<1x1x8x3xf32> to vector<8x3xf32>
    %c52 = arith.constant 52 : index
    %c0_17 = arith.constant 0 : index
    %13 = vector.load %arg10[%c52, %c0_17] : memref<222x3xf32, #tpu.memory_space<vmem>>, vector<8x3xf32>
    tpu.vector_store %arg10[%c52, %c0_17], %12 {strides = array<i32>} : memref<222x3xf32, #tpu.memory_space<vmem>>, vector<8x3xf32>,
    %c0_18 = arith.constant 0 : index
    %c4 = arith.constant 4 : index
    %c0_19 = arith.constant 0 : index
    %c0_20 = arith.constant 0 : index
    %14 = vector.load %arg0[%c0_18, %c4, %c0_19, %c0_20] : memref<2x8x8x3xf32, #tpu.memory_space<vmem>>, vector<1x1x8x3xf32>
    %15 = vector.shape_cast %14 : vector<1x1x8x3xf32> to vector<8x3xf32>
    %c62 = arith.constant 62 : index
    %c0_21 = arith.constant 0 : index
    %16 = vector.load %arg10[%c62, %c0_21] : memref<222x3xf32, #tpu.memory_space<vmem>>, vector<8x3xf32>
    tpu.vector_store %arg10[%c62, %c0_21], %15 {strides = array<i32>} : memref<222x3xf32, #tpu.memory_space<vmem>>, vector<8x3xf32>,
    %c0_22 = arith.constant 0 : index
    %c5 = arith.constant 5 : index
    %c0_23 = arith.constant 0 : index
    %c0_24 = arith.constant 0 : index
    %17 = vector.load %arg0[%c0_22, %c5, %c0_23, %c0_24] : memref<2x8x8x3xf32, #tpu.memory_space<vmem>>, vector<1x1x8x3xf32>
    %18 = vector.shape_cast %17 : vector<1x1x8x3xf32> to vector<8x3xf32>
    %c72 = arith.constant 72 : index
    %c0_25 = arith.constant 0 : index
    %19 = vector.load %arg10[%c72, %c0_25] : memref<222x3xf32, #tpu.memory_space<vmem>>, vector<8x3xf32>
    tpu.vector_store %arg10[%c72, %c0_25], %18 {strides = array<i32>} : memref<222x3xf32, #tpu.memory_space<vmem>>, vector<8x3xf32>,
    %c0_26 = arith.constant 0 : index
    %c6 = arith.constant 6 : index
    %c0_27 = arith.constant 0 : index
    %c0_28 = arith.constant 0 : index
    %20 = vector.load %arg0[%c0_26, %c6, %c0_27, %c0_28] : memref<2x8x8x3xf32, #tpu.memory_space<vmem>>, vector<1x1x8x3xf32>
    %21 = vector.shape_cast %20 : vector<1x1x8x3xf32> to vector<8x3xf32>
    %c82 = arith.constant 82 : index
    %c0_29 = arith.constant 0 : index
    %22 = vector.load %arg10[%c82, %c0_29] : memref<222x3xf32, #tpu.memory_space<vmem>>, vector<8x3xf32>
    tpu.vector_store %arg10[%c82, %c0_29], %21 {strides = array<i32>} : memref<222x3xf32, #tpu.memory_space<vmem>>, vector<8x3xf32>,
    %c0_30 = arith.constant 0 : index
    %c7 = arith.constant 7 : index
    %c0_31 = arith.constant 0 : index
    %c0_32 = arith.constant 0 : index
    %23 = vector.load %arg0[%c0_30, %c7, %c0_31, %c0_32] : memref<2x8x8x3xf32, #tpu.memory_space<vmem>>, vector<1x1x8x3xf32>
    %24 = vector.shape_cast %23 : vector<1x1x8x3xf32> to vector<8x3xf32>
    %c92 = arith.constant 92 : index
    %c0_33 = arith.constant 0 : index
    %25 = vector.load %arg10[%c92, %c0_33] : memref<222x3xf32, #tpu.memory_space<vmem>>, vector<8x3xf32>
    tpu.vector_store %arg10[%c92, %c0_33], %24 {strides = array<i32>} : memref<222x3xf32, #tpu.memory_space<vmem>>, vector<8x3xf32>,
    %c1_34 = arith.constant 1 : index
    %c0_35 = arith.constant 0 : index
    %c0_36 = arith.constant 0 : index
    %c0_37 = arith.constant 0 : index
    %26 = vector.load %arg0[%c1_34, %c0_35, %c0_36, %c0_37] : memref<2x8x8x3xf32, #tpu.memory_space<vmem>>, vector<1x1x8x3xf32>
    %27 = vector.shape_cast %26 : vector<1x1x8x3xf32> to vector<8x3xf32>
    %c122 = arith.constant 122 : index
    %c0_38 = arith.constant 0 : index
    %28 = vector.load %arg10[%c122, %c0_38] : memref<222x3xf32, #tpu.memory_space<vmem>>, vector<8x3xf32>
    tpu.vector_store %arg10[%c122, %c0_38], %27 {strides = array<i32>} : memref<222x3xf32, #tpu.memory_space<vmem>>, vector<8x3xf32>,
    %c1_39 = arith.constant 1 : index
    %c1_40 = arith.constant 1 : index
    %c0_41 = arith.constant 0 : index
    %c0_42 = arith.constant 0 : index
    %29 = vector.load %arg0[%c1_39, %c1_40, %c0_41, %c0_42] : memref<2x8x8x3xf32, #tpu.memory_space<vmem>>, vector<1x1x8x3xf32>
    %30 = vector.shape_cast %29 : vector<1x1x8x3xf32> to vector<8x3xf32>
    %c132 = arith.constant 132 : index
    %c0_43 = arith.constant 0 : index
    %31 = vector.load %arg10[%c132, %c0_43] : memref<222x3xf32, #tpu.memory_space<vmem>>, vector<8x3xf32>
    tpu.vector_store %arg10[%c132, %c0_43], %30 {strides = array<i32>} : memref<222x3xf32, #tpu.memory_space<vmem>>, vector<8x3xf32>,
    %c1_44 = arith.constant 1 : index
    %c2_45 = arith.constant 2 : index
    %c0_46 = arith.constant 0 : index
    %c0_47 = arith.constant 0 : index
    %32 = vector.load %arg0[%c1_44, %c2_45, %c0_46, %c0_47] : memref<2x8x8x3xf32, #tpu.memory_space<vmem>>, vector<1x1x8x3xf32>
    %33 = vector.shape_cast %32 : vector<1x1x8x3xf32> to vector<8x3xf32>
    %c142 = arith.constant 142 : index
    %c0_48 = arith.constant 0 : index
    %34 = vector.load %arg10[%c142, %c0_48] : memref<222x3xf32, #tpu.memory_space<vmem>>, vector<8x3xf32>
    tpu.vector_store %arg10[%c142, %c0_48], %33 {strides = array<i32>} : memref<222x3xf32, #tpu.memory_space<vmem>>, vector<8x3xf32>,
    %c1_49 = arith.constant 1 : index
    %c3_50 = arith.constant 3 : index
    %c0_51 = arith.constant 0 : index
    %c0_52 = arith.constant 0 : index
    %35 = vector.load %arg0[%c1_49, %c3_50, %c0_51, %c0_52] : memref<2x8x8x3xf32, #tpu.memory_space<vmem>>, vector<1x1x8x3xf32>
    %36 = vector.shape_cast %35 : vector<1x1x8x3xf32> to vector<8x3xf32>
    %c152 = arith.constant 152 : index
    %c0_53 = arith.constant 0 : index
    %37 = vector.load %arg10[%c152, %c0_53] : memref<222x3xf32, #tpu.memory_space<vmem>>, vector<8x3xf32>
    tpu.vector_store %arg10[%c152, %c0_53], %36 {strides = array<i32>} : memref<222x3xf32, #tpu.memory_space<vmem>>, vector<8x3xf32>,
    %c1_54 = arith.constant 1 : index
    %c4_55 = arith.constant 4 : index
    %c0_56 = arith.constant 0 : index
    %c0_57 = arith.constant 0 : index
    %38 = vector.load %arg0[%c1_54, %c4_55, %c0_56, %c0_57] : memref<2x8x8x3xf32, #tpu.memory_space<vmem>>, vector<1x1x8x3xf32>
    %39 = vector.shape_cast %38 : vector<1x1x8x3xf32> to vector<8x3xf32>
    %c162 = arith.constant 162 : index
    %c0_58 = arith.constant 0 : index
    %40 = vector.load %arg10[%c162, %c0_58] : memref<222x3xf32, #tpu.memory_space<vmem>>, vector<8x3xf32>
    tpu.vector_store %arg10[%c162, %c0_58], %39 {strides = array<i32>} : memref<222x3xf32, #tpu.memory_space<vmem>>, vector<8x3xf32>,
    %c1_59 = arith.constant 1 : index
    %c5_60 = arith.constant 5 : index
    %c0_61 = arith.constant 0 : index
    %c0_62 = arith.constant 0 : index
    %41 = vector.load %arg0[%c1_59, %c5_60, %c0_61, %c0_62] : memref<2x8x8x3xf32, #tpu.memory_space<vmem>>, vector<1x1x8x3xf32>
    %42 = vector.shape_cast %41 : vector<1x1x8x3xf32> to vector<8x3xf32>
    %c172 = arith.constant 172 : index
    %c0_63 = arith.constant 0 : index
    %43 = vector.load %arg10[%c172, %c0_63] : memref<222x3xf32, #tpu.memory_space<vmem>>, vector<8x3xf32>
    tpu.vector_store %arg10[%c172, %c0_63], %42 {strides = array<i32>} : memref<222x3xf32, #tpu.memory_space<vmem>>, vector<8x3xf32>,
    %c1_64 = arith.constant 1 : index
    %c6_65 = arith.constant 6 : index
    %c0_66 = arith.constant 0 : index
    %c0_67 = arith.constant 0 : index
    %44 = vector.load %arg0[%c1_64, %c6_65, %c0_66, %c0_67] : memref<2x8x8x3xf32, #tpu.memory_space<vmem>>, vector<1x1x8x3xf32>
    %45 = vector.shape_cast %44 : vector<1x1x8x3xf32> to vector<8x3xf32>
    %c182 = arith.constant 182 : index
    %c0_68 = arith.constant 0 : index
    %46 = vector.load %arg10[%c182, %c0_68] : memref<222x3xf32, #tpu.memory_space<vmem>>, vector<8x3xf32>
    tpu.vector_store %arg10[%c182, %c0_68], %45 {strides = array<i32>} : memref<222x3xf32, #tpu.memory_space<vmem>>, vector<8x3xf32>,
    %c1_69 = arith.constant 1 : index
    %c7_70 = arith.constant 7 : index
    %c0_71 = arith.constant 0 : index
    %c0_72 = arith.constant 0 : index
    %47 = vector.load %arg0[%c1_69, %c7_70, %c0_71, %c0_72] : memref<2x8x8x3xf32, #tpu.memory_space<vmem>>, vector<1x1x8x3xf32>
    %48 = vector.shape_cast %47 : vector<1x1x8x3xf32> to vector<8x3xf32>
    %c192 = arith.constant 192 : index
    %c0_73 = arith.constant 0 : index
    %49 = vector.load %arg10[%c192, %c0_73] : memref<222x3xf32, #tpu.memory_space<vmem>>, vector<8x3xf32>
    tpu.vector_store %arg10[%c192, %c0_73], %48 {strides = array<i32>} : memref<222x3xf32, #tpu.memory_space<vmem>>, vector<8x3xf32>,
    %c0_74 = arith.constant 0 : index
    %c0_75 = arith.constant 0 : index
    %50 = vector.load %arg10[%c0_74, %c0_75] : memref<222x3xf32, #tpu.memory_space<vmem>>, vector<200x3xf32>
    %c0_76 = arith.constant 0 : index
    %c0_77 = arith.constant 0 : index
    %c0_78 = arith.constant 0 : index
    %51 = vector.load %arg1[%c0_76, %c0_77, %c0_78] : memref<9x3x8xf32, #tpu.memory_space<vmem>>, vector<1x3x8xf32>
    %52 = vector.shape_cast %51 : vector<1x3x8xf32> to vector<3x8xf32>
    %cst_79 = arith.constant dense<0.000000e+00> : vector<200x8xf32>
    %53 = tpu.matmul %50, %52, %cst_79 {dimension_numbers = #tpu.dot_dimension_numbers<[1], [0], [0], [1], [0, 0, 1, 1], [], []>} : vector<200x3xf32>, vector<3x8xf32>, vector<200x8xf32> -> vector<200x8xf32>
    %c1_80 = arith.constant 1 : index
    %c0_81 = arith.constant 0 : index
    %54 = vector.load %arg10[%c1_80, %c0_81] : memref<222x3xf32, #tpu.memory_space<vmem>>, vector<200x3xf32>
    %c1_82 = arith.constant 1 : index
    %c0_83 = arith.constant 0 : index
    %c0_84 = arith.constant 0 : index
    %55 = vector.load %arg1[%c1_82, %c0_83, %c0_84] : memref<9x3x8xf32, #tpu.memory_space<vmem>>, vector<1x3x8xf32>
    %56 = vector.shape_cast %55 : vector<1x3x8xf32> to vector<3x8xf32>
    %cst_85 = arith.constant dense<0.000000e+00> : vector<200x8xf32>
    %57 = tpu.matmul %54, %56, %cst_85 {dimension_numbers = #tpu.dot_dimension_numbers<[1], [0], [0], [1], [0, 0, 1, 1], [], []>} : vector<200x3xf32>, vector<3x8xf32>, vector<200x8xf32> -> vector<200x8xf32>
    %58 = arith.addf %53, %57 : vector<200x8xf32>
    %c2_86 = arith.constant 2 : index
    %c0_87 = arith.constant 0 : index
    %59 = vector.load %arg10[%c2_86, %c0_87] : memref<222x3xf32, #tpu.memory_space<vmem>>, vector<200x3xf32>
    %c2_88 = arith.constant 2 : index
    %c0_89 = arith.constant 0 : index
    %c0_90 = arith.constant 0 : index
    %60 = vector.load %arg1[%c2_88, %c0_89, %c0_90] : memref<9x3x8xf32, #tpu.memory_space<vmem>>, vector<1x3x8xf32>
    %61 = vector.shape_cast %60 : vector<1x3x8xf32> to vector<3x8xf32>
    %cst_91 = arith.constant dense<0.000000e+00> : vector<200x8xf32>
    %62 = tpu.matmul %59, %61, %cst_91 {dimension_numbers = #tpu.dot_dimension_numbers<[1], [0], [0], [1], [0, 0, 1, 1], [], []>} : vector<200x3xf32>, vector<3x8xf32>, vector<200x8xf32> -> vector<200x8xf32>
    %63 = arith.addf %58, %62 : vector<200x8xf32>
    %c10 = arith.constant 10 : index
    %c0_92 = arith.constant 0 : index
    %64 = vector.load %arg10[%c10, %c0_92] : memref<222x3xf32, #tpu.memory_space<vmem>>, vector<200x3xf32>
    %c3_93 = arith.constant 3 : index
    %c0_94 = arith.constant 0 : index
    %c0_95 = arith.constant 0 : index
    %65 = vector.load %arg1[%c3_93, %c0_94, %c0_95] : memref<9x3x8xf32, #tpu.memory_space<vmem>>, vector<1x3x8xf32>
    %66 = vector.shape_cast %65 : vector<1x3x8xf32> to vector<3x8xf32>
    %cst_96 = arith.constant dense<0.000000e+00> : vector<200x8xf32>
    %67 = tpu.matmul %64, %66, %cst_96 {dimension_numbers = #tpu.dot_dimension_numbers<[1], [0], [0], [1], [0, 0, 1, 1], [], []>} : vector<200x3xf32>, vector<3x8xf32>, vector<200x8xf32> -> vector<200x8xf32>
    %68 = arith.addf %63, %67 : vector<200x8xf32>
    %c11 = arith.constant 11 : index
    %c0_97 = arith.constant 0 : index
    %69 = vector.load %arg10[%c11, %c0_97] : memref<222x3xf32, #tpu.memory_space<vmem>>, vector<200x3xf32>
    %c4_98 = arith.constant 4 : index
    %c0_99 = arith.constant 0 : index
    %c0_100 = arith.constant 0 : index
    %70 = vector.load %arg1[%c4_98, %c0_99, %c0_100] : memref<9x3x8xf32, #tpu.memory_space<vmem>>, vector<1x3x8xf32>
    %71 = vector.shape_cast %70 : vector<1x3x8xf32> to vector<3x8xf32>
    %cst_101 = arith.constant dense<0.000000e+00> : vector<200x8xf32>
    %72 = tpu.matmul %69, %71, %cst_101 {dimension_numbers = #tpu.dot_dimension_numbers<[1], [0], [0], [1], [0, 0, 1, 1], [], []>} : vector<200x3xf32>, vector<3x8xf32>, vector<200x8xf32> -> vector<200x8xf32>
    %73 = arith.addf %68, %72 : vector<200x8xf32>
    %c12 = arith.constant 12 : index
    %c0_102 = arith.constant 0 : index
    %74 = vector.load %arg10[%c12, %c0_102] : memref<222x3xf32, #tpu.memory_space<vmem>>, vector<200x3xf32>
    %c5_103 = arith.constant 5 : index
    %c0_104 = arith.constant 0 : index
    %c0_105 = arith.constant 0 : index
    %75 = vector.load %arg1[%c5_103, %c0_104, %c0_105] : memref<9x3x8xf32, #tpu.memory_space<vmem>>, vector<1x3x8xf32>
    %76 = vector.shape_cast %75 : vector<1x3x8xf32> to vector<3x8xf32>
    %cst_106 = arith.constant dense<0.000000e+00> : vector<200x8xf32>
    %77 = tpu.matmul %74, %76, %cst_106 {dimension_numbers = #tpu.dot_dimension_numbers<[1], [0], [0], [1], [0, 0, 1, 1], [], []>} : vector<200x3xf32>, vector<3x8xf32>, vector<200x8xf32> -> vector<200x8xf32>
    %78 = arith.addf %73, %77 : vector<200x8xf32>
    %c20 = arith.constant 20 : index
    %c0_107 = arith.constant 0 : index
    %79 = vector.load %arg10[%c20, %c0_107] : memref<222x3xf32, #tpu.memory_space<vmem>>, vector<200x3xf32>
    %c6_108 = arith.constant 6 : index
    %c0_109 = arith.constant 0 : index
    %c0_110 = arith.constant 0 : index
    %80 = vector.load %arg1[%c6_108, %c0_109, %c0_110] : memref<9x3x8xf32, #tpu.memory_space<vmem>>, vector<1x3x8xf32>
    %81 = vector.shape_cast %80 : vector<1x3x8xf32> to vector<3x8xf32>
    %cst_111 = arith.constant dense<0.000000e+00> : vector<200x8xf32>
    %82 = tpu.matmul %79, %81, %cst_111 {dimension_numbers = #tpu.dot_dimension_numbers<[1], [0], [0], [1], [0, 0, 1, 1], [], []>} : vector<200x3xf32>, vector<3x8xf32>, vector<200x8xf32> -> vector<200x8xf32>
    %83 = arith.addf %78, %82 : vector<200x8xf32>
    %c21 = arith.constant 21 : index
    %c0_112 = arith.constant 0 : index
    %84 = vector.load %arg10[%c21, %c0_112] : memref<222x3xf32, #tpu.memory_space<vmem>>, vector<200x3xf32>
    %c7_113 = arith.constant 7 : index
    %c0_114 = arith.constant 0 : index
    %c0_115 = arith.constant 0 : index
    %85 = vector.load %arg1[%c7_113, %c0_114, %c0_115] : memref<9x3x8xf32, #tpu.memory_space<vmem>>, vector<1x3x8xf32>
    %86 = vector.shape_cast %85 : vector<1x3x8xf32> to vector<3x8xf32>
    %cst_116 = arith.constant dense<0.000000e+00> : vector<200x8xf32>
    %87 = tpu.matmul %84, %86, %cst_116 {dimension_numbers = #tpu.dot_dimension_numbers<[1], [0], [0], [1], [0, 0, 1, 1], [], []>} : vector<200x3xf32>, vector<3x8xf32>, vector<200x8xf32> -> vector<200x8xf32>
    %88 = arith.addf %83, %87 : vector<200x8xf32>
    %c22_117 = arith.constant 22 : index
    %c0_118 = arith.constant 0 : index
    %89 = vector.load %arg10[%c22_117, %c0_118] : memref<222x3xf32, #tpu.memory_space<vmem>>, vector<200x3xf32>
    %c8 = arith.constant 8 : index
    %c0_119 = arith.constant 0 : index
    %c0_120 = arith.constant 0 : index
    %90 = vector.load %arg1[%c8, %c0_119, %c0_120] : memref<9x3x8xf32, #tpu.memory_space<vmem>>, vector<1x3x8xf32>
    %91 = vector.shape_cast %90 : vector<1x3x8xf32> to vector<3x8xf32>
    %cst_121 = arith.constant dense<0.000000e+00> : vector<200x8xf32>
    %92 = tpu.matmul %89, %91, %cst_121 {dimension_numbers = #tpu.dot_dimension_numbers<[1], [0], [0], [1], [0, 0, 1, 1], [], []>} : vector<200x3xf32>, vector<3x8xf32>, vector<200x8xf32> -> vector<200x8xf32>
    %93 = arith.addf %88, %92 : vector<200x8xf32>
    %c0_122 = arith.constant 0 : index
    %c0_123 = arith.constant 0 : index
    %94 = vector.load %arg2[%c0_122, %c0_123] : memref<1x8xf32, #tpu.memory_space<vmem>>, vector<1x8xf32>
    %95 = vector.broadcast %94 : vector<1x8xf32> to vector<200x8xf32>
    %96 = arith.addf %93, %95 : vector<200x8xf32>
    %cst_124 = arith.constant 0.000000e+00 : f32
    %97 = vector.broadcast %cst_124 : f32 to vector<200x8xf32>
    %98 = arith.maximumf %96, %97 : vector<200x8xf32>
    %c0_125 = arith.constant 0 : index
    %c0_126 = arith.constant 0 : index
    %99 = vector.load %arg11[%c0_125, %c0_126] : memref<200x8xf32, #tpu.memory_space<vmem>>, vector<200x8xf32>
    tpu.vector_store %arg11[%c0_125, %c0_126], %98 {strides = array<i32>} : memref<200x8xf32, #tpu.memory_space<vmem>>, vector<200x8xf32>,
    %cst_127 = arith.constant 0.000000e+00 : f32
    %100 = vector.broadcast %cst_127 : f32 to vector<86x8xf32>
    %c0_128 = arith.constant 0 : index
    %c0_129 = arith.constant 0 : index
    %101 = vector.load %arg12[%c0_128, %c0_129] : memref<86x8xf32, #tpu.memory_space<vmem>>, vector<86x8xf32>
    tpu.vector_store %arg12[%c0_128, %c0_129], %100 {strides = array<i32>} : memref<86x8xf32, #tpu.memory_space<vmem>>, vector<86x8xf32>,
    %c11_130 = arith.constant 11 : index
    %c0_131 = arith.constant 0 : index
    %102 = vector.load %arg11[%c11_130, %c0_131] : memref<200x8xf32, #tpu.memory_space<vmem>>, vector<8x8xf32>
    %c21_132 = arith.constant 21 : index
    %c0_133 = arith.constant 0 : index
    %103 = vector.load %arg11[%c21_132, %c0_133] : memref<200x8xf32, #tpu.memory_space<vmem>>, vector<8x8xf32>
    %104 = arith.maximumf %102, %103 : vector<8x8xf32>
    %105 = vector.extract_strided_slice %104 {offsets = [0, 0], sizes = [1, 8], strides = [1, 1]} : vector<8x8xf32> to vector<1x8xf32>
    %106 = vector.extract_strided_slice %104 {offsets = [1, 0], sizes = [1, 8], strides = [1, 1]} : vector<8x8xf32> to vector<1x8xf32>
    %107 = arith.maximumf %105, %106 : vector<1x8xf32>
    %c14 = arith.constant 14 : index
    %c0_134 = arith.constant 0 : index
    %108 = vector.load %arg12[%c14, %c0_134] : memref<86x8xf32, #tpu.memory_space<vmem>>, vector<1x8xf32>
    tpu.vector_store %arg12[%c14, %c0_134], %107 {strides = array<i32>} : memref<86x8xf32, #tpu.memory_space<vmem>>, vector<1x8xf32>,
    %109 = vector.extract_strided_slice %104 {offsets = [2, 0], sizes = [1, 8], strides = [1, 1]} : vector<8x8xf32> to vector<1x8xf32>
    %110 = vector.extract_strided_slice %104 {offsets = [3, 0], sizes = [1, 8], strides = [1, 1]} : vector<8x8xf32> to vector<1x8xf32>
    %111 = arith.maximumf %109, %110 : vector<1x8xf32>
    %c15 = arith.constant 15 : index
    %c0_135 = arith.constant 0 : index
    %112 = vector.load %arg12[%c15, %c0_135] : memref<86x8xf32, #tpu.memory_space<vmem>>, vector<1x8xf32>
    tpu.vector_store %arg12[%c15, %c0_135], %111 {strides = array<i32>} : memref<86x8xf32, #tpu.memory_space<vmem>>, vector<1x8xf32>,
    %113 = vector.extract_strided_slice %104 {offsets = [4, 0], sizes = [1, 8], strides = [1, 1]} : vector<8x8xf32> to vector<1x8xf32>
    %114 = vector.extract_strided_slice %104 {offsets = [5, 0], sizes = [1, 8], strides = [1, 1]} : vector<8x8xf32> to vector<1x8xf32>
    %115 = arith.maximumf %113, %114 : vector<1x8xf32>
    %c16 = arith.constant 16 : index
    %c0_136 = arith.constant 0 : index
    %116 = vector.load %arg12[%c16, %c0_136] : memref<86x8xf32, #tpu.memory_space<vmem>>, vector<1x8xf32>
    tpu.vector_store %arg12[%c16, %c0_136], %115 {strides = array<i32>} : memref<86x8xf32, #tpu.memory_space<vmem>>, vector<1x8xf32>,
    %117 = vector.extract_strided_slice %104 {offsets = [6, 0], sizes = [1, 8], strides = [1, 1]} : vector<8x8xf32> to vector<1x8xf32>
    %118 = vector.extract_strided_slice %104 {offsets = [7, 0], sizes = [1, 8], strides = [1, 1]} : vector<8x8xf32> to vector<1x8xf32>
    %119 = arith.maximumf %117, %118 : vector<1x8xf32>
    %c17 = arith.constant 17 : index
    %c0_137 = arith.constant 0 : index
    %120 = vector.load %arg12[%c17, %c0_137] : memref<86x8xf32, #tpu.memory_space<vmem>>, vector<1x8xf32>
    tpu.vector_store %arg12[%c17, %c0_137], %119 {strides = array<i32>} : memref<86x8xf32, #tpu.memory_space<vmem>>, vector<1x8xf32>,
    %c31 = arith.constant 31 : index
    %c0_138 = arith.constant 0 : index
    %121 = vector.load %arg11[%c31, %c0_138] : memref<200x8xf32, #tpu.memory_space<vmem>>, vector<8x8xf32>
    %c41 = arith.constant 41 : index
    %c0_139 = arith.constant 0 : index
    %122 = vector.load %arg11[%c41, %c0_139] : memref<200x8xf32, #tpu.memory_space<vmem>>, vector<8x8xf32>
    %123 = arith.maximumf %121, %122 : vector<8x8xf32>
    %124 = vector.extract_strided_slice %123 {offsets = [0, 0], sizes = [1, 8], strides = [1, 1]} : vector<8x8xf32> to vector<1x8xf32>
    %125 = vector.extract_strided_slice %123 {offsets = [1, 0], sizes = [1, 8], strides = [1, 1]} : vector<8x8xf32> to vector<1x8xf32>
    %126 = arith.maximumf %124, %125 : vector<1x8xf32>
    %c20_140 = arith.constant 20 : index
    %c0_141 = arith.constant 0 : index
    %127 = vector.load %arg12[%c20_140, %c0_141] : memref<86x8xf32, #tpu.memory_space<vmem>>, vector<1x8xf32>
    tpu.vector_store %arg12[%c20_140, %c0_141], %126 {strides = array<i32>} : memref<86x8xf32, #tpu.memory_space<vmem>>, vector<1x8xf32>,
    %128 = vector.extract_strided_slice %123 {offsets = [2, 0], sizes = [1, 8], strides = [1, 1]} : vector<8x8xf32> to vector<1x8xf32>
    %129 = vector.extract_strided_slice %123 {offsets = [3, 0], sizes = [1, 8], strides = [1, 1]} : vector<8x8xf32> to vector<1x8xf32>
    %130 = arith.maximumf %128, %129 : vector<1x8xf32>
    %c21_142 = arith.constant 21 : index
    %c0_143 = arith.constant 0 : index
    %131 = vector.load %arg12[%c21_142, %c0_143] : memref<86x8xf32, #tpu.memory_space<vmem>>, vector<1x8xf32>
    tpu.vector_store %arg12[%c21_142, %c0_143], %130 {strides = array<i32>} : memref<86x8xf32, #tpu.memory_space<vmem>>, vector<1x8xf32>,
    %132 = vector.extract_strided_slice %123 {offsets = [4, 0], sizes = [1, 8], strides = [1, 1]} : vector<8x8xf32> to vector<1x8xf32>
    %133 = vector.extract_strided_slice %123 {offsets = [5, 0], sizes = [1, 8], strides = [1, 1]} : vector<8x8xf32> to vector<1x8xf32>
    %134 = arith.maximumf %132, %133 : vector<1x8xf32>
    %c22_144 = arith.constant 22 : index
    %c0_145 = arith.constant 0 : index
    %135 = vector.load %arg12[%c22_144, %c0_145] : memref<86x8xf32, #tpu.memory_space<vmem>>, vector<1x8xf32>
    tpu.vector_store %arg12[%c22_144, %c0_145], %134 {strides = array<i32>} : memref<86x8xf32, #tpu.memory_space<vmem>>, vector<1x8xf32>,
    %136 = vector.extract_strided_slice %123 {offsets = [6, 0], sizes = [1, 8], strides = [1, 1]} : vector<8x8xf32> to vector<1x8xf32>
    %137 = vector.extract_strided_slice %123 {offsets = [7, 0], sizes = [1, 8], strides = [1, 1]} : vector<8x8xf32> to vector<1x8xf32>
    %138 = arith.maximumf %136, %137 : vector<1x8xf32>
    %c23 = arith.constant 23 : index
    %c0_146 = arith.constant 0 : index
    %139 = vector.load %arg12[%c23, %c0_146] : memref<86x8xf32, #tpu.memory_space<vmem>>, vector<1x8xf32>
    tpu.vector_store %arg12[%c23, %c0_146], %138 {strides = array<i32>} : memref<86x8xf32, #tpu.memory_space<vmem>>, vector<1x8xf32>,
    %c51 = arith.constant 51 : index
    %c0_147 = arith.constant 0 : index
    %140 = vector.load %arg11[%c51, %c0_147] : memref<200x8xf32, #tpu.memory_space<vmem>>, vector<8x8xf32>
    %c61 = arith.constant 61 : index
    %c0_148 = arith.constant 0 : index
    %141 = vector.load %arg11[%c61, %c0_148] : memref<200x8xf32, #tpu.memory_space<vmem>>, vector<8x8xf32>
    %142 = arith.maximumf %140, %141 : vector<8x8xf32>
    %143 = vector.extract_strided_slice %142 {offsets = [0, 0], sizes = [1, 8], strides = [1, 1]} : vector<8x8xf32> to vector<1x8xf32>
    %144 = vector.extract_strided_slice %142 {offsets = [1, 0], sizes = [1, 8], strides = [1, 1]} : vector<8x8xf32> to vector<1x8xf32>
    %145 = arith.maximumf %143, %144 : vector<1x8xf32>
    %c26 = arith.constant 26 : index
    %c0_149 = arith.constant 0 : index
    %146 = vector.load %arg12[%c26, %c0_149] : memref<86x8xf32, #tpu.memory_space<vmem>>, vector<1x8xf32>
    tpu.vector_store %arg12[%c26, %c0_149], %145 {strides = array<i32>} : memref<86x8xf32, #tpu.memory_space<vmem>>, vector<1x8xf32>,
    %147 = vector.extract_strided_slice %142 {offsets = [2, 0], sizes = [1, 8], strides = [1, 1]} : vector<8x8xf32> to vector<1x8xf32>
    %148 = vector.extract_strided_slice %142 {offsets = [3, 0], sizes = [1, 8], strides = [1, 1]} : vector<8x8xf32> to vector<1x8xf32>
    %149 = arith.maximumf %147, %148 : vector<1x8xf32>
    %c27 = arith.constant 27 : index
    %c0_150 = arith.constant 0 : index
    %150 = vector.load %arg12[%c27, %c0_150] : memref<86x8xf32, #tpu.memory_space<vmem>>, vector<1x8xf32>
    tpu.vector_store %arg12[%c27, %c0_150], %149 {strides = array<i32>} : memref<86x8xf32, #tpu.memory_space<vmem>>, vector<1x8xf32>,
    %151 = vector.extract_strided_slice %142 {offsets = [4, 0], sizes = [1, 8], strides = [1, 1]} : vector<8x8xf32> to vector<1x8xf32>
    %152 = vector.extract_strided_slice %142 {offsets = [5, 0], sizes = [1, 8], strides = [1, 1]} : vector<8x8xf32> to vector<1x8xf32>
    %153 = arith.maximumf %151, %152 : vector<1x8xf32>
    %c28 = arith.constant 28 : index
    %c0_151 = arith.constant 0 : index
    %154 = vector.load %arg12[%c28, %c0_151] : memref<86x8xf32, #tpu.memory_space<vmem>>, vector<1x8xf32>
    tpu.vector_store %arg12[%c28, %c0_151], %153 {strides = array<i32>} : memref<86x8xf32, #tpu.memory_space<vmem>>, vector<1x8xf32>,
    %155 = vector.extract_strided_slice %142 {offsets = [6, 0], sizes = [1, 8], strides = [1, 1]} : vector<8x8xf32> to vector<1x8xf32>
    %156 = vector.extract_strided_slice %142 {offsets = [7, 0], sizes = [1, 8], strides = [1, 1]} : vector<8x8xf32> to vector<1x8xf32>
    %157 = arith.maximumf %155, %156 : vector<1x8xf32>
    %c29 = arith.constant 29 : index
    %c0_152 = arith.constant 0 : index
    %158 = vector.load %arg12[%c29, %c0_152] : memref<86x8xf32, #tpu.memory_space<vmem>>, vector<1x8xf32>
    tpu.vector_store %arg12[%c29, %c0_152], %157 {strides = array<i32>} : memref<86x8xf32, #tpu.memory_space<vmem>>, vector<1x8xf32>,
    %c71 = arith.constant 71 : index
    %c0_153 = arith.constant 0 : index
    %159 = vector.load %arg11[%c71, %c0_153] : memref<200x8xf32, #tpu.memory_space<vmem>>, vector<8x8xf32>
    %c81 = arith.constant 81 : index
    %c0_154 = arith.constant 0 : index
    %160 = vector.load %arg11[%c81, %c0_154] : memref<200x8xf32, #tpu.memory_space<vmem>>, vector<8x8xf32>
    %161 = arith.maximumf %159, %160 : vector<8x8xf32>
    %162 = vector.extract_strided_slice %161 {offsets = [0, 0], sizes = [1, 8], strides = [1, 1]} : vector<8x8xf32> to vector<1x8xf32>
    %163 = vector.extract_strided_slice %161 {offsets = [1, 0], sizes = [1, 8], strides = [1, 1]} : vector<8x8xf32> to vector<1x8xf32>
    %164 = arith.maximumf %162, %163 : vector<1x8xf32>
    %c32_155 = arith.constant 32 : index
    %c0_156 = arith.constant 0 : index
    %165 = vector.load %arg12[%c32_155, %c0_156] : memref<86x8xf32, #tpu.memory_space<vmem>>, vector<1x8xf32>
    tpu.vector_store %arg12[%c32_155, %c0_156], %164 {strides = array<i32>} : memref<86x8xf32, #tpu.memory_space<vmem>>, vector<1x8xf32>,
    %166 = vector.extract_strided_slice %161 {offsets = [2, 0], sizes = [1, 8], strides = [1, 1]} : vector<8x8xf32> to vector<1x8xf32>
    %167 = vector.extract_strided_slice %161 {offsets = [3, 0], sizes = [1, 8], strides = [1, 1]} : vector<8x8xf32> to vector<1x8xf32>
    %168 = arith.maximumf %166, %167 : vector<1x8xf32>
    %c33 = arith.constant 33 : index
    %c0_157 = arith.constant 0 : index
    %169 = vector.load %arg12[%c33, %c0_157] : memref<86x8xf32, #tpu.memory_space<vmem>>, vector<1x8xf32>
    tpu.vector_store %arg12[%c33, %c0_157], %168 {strides = array<i32>} : memref<86x8xf32, #tpu.memory_space<vmem>>, vector<1x8xf32>,
    %170 = vector.extract_strided_slice %161 {offsets = [4, 0], sizes = [1, 8], strides = [1, 1]} : vector<8x8xf32> to vector<1x8xf32>
    %171 = vector.extract_strided_slice %161 {offsets = [5, 0], sizes = [1, 8], strides = [1, 1]} : vector<8x8xf32> to vector<1x8xf32>
    %172 = arith.maximumf %170, %171 : vector<1x8xf32>
    %c34 = arith.constant 34 : index
    %c0_158 = arith.constant 0 : index
    %173 = vector.load %arg12[%c34, %c0_158] : memref<86x8xf32, #tpu.memory_space<vmem>>, vector<1x8xf32>
    tpu.vector_store %arg12[%c34, %c0_158], %172 {strides = array<i32>} : memref<86x8xf32, #tpu.memory_space<vmem>>, vector<1x8xf32>,
    %174 = vector.extract_strided_slice %161 {offsets = [6, 0], sizes = [1, 8], strides = [1, 1]} : vector<8x8xf32> to vector<1x8xf32>
    %175 = vector.extract_strided_slice %161 {offsets = [7, 0], sizes = [1, 8], strides = [1, 1]} : vector<8x8xf32> to vector<1x8xf32>
    %176 = arith.maximumf %174, %175 : vector<1x8xf32>
    %c35 = arith.constant 35 : index
    %c0_159 = arith.constant 0 : index
    %177 = vector.load %arg12[%c35, %c0_159] : memref<86x8xf32, #tpu.memory_space<vmem>>, vector<1x8xf32>
    tpu.vector_store %arg12[%c35, %c0_159], %176 {strides = array<i32>} : memref<86x8xf32, #tpu.memory_space<vmem>>, vector<1x8xf32>,
    %c111 = arith.constant 111 : index
    %c0_160 = arith.constant 0 : index
    %178 = vector.load %arg11[%c111, %c0_160] : memref<200x8xf32, #tpu.memory_space<vmem>>, vector<8x8xf32>
    %c121 = arith.constant 121 : index
    %c0_161 = arith.constant 0 : index
    %179 = vector.load %arg11[%c121, %c0_161] : memref<200x8xf32, #tpu.memory_space<vmem>>, vector<8x8xf32>
    %180 = arith.maximumf %178, %179 : vector<8x8xf32>
    %181 = vector.extract_strided_slice %180 {offsets = [0, 0], sizes = [1, 8], strides = [1, 1]} : vector<8x8xf32> to vector<1x8xf32>
    %182 = vector.extract_strided_slice %180 {offsets = [1, 0], sizes = [1, 8], strides = [1, 1]} : vector<8x8xf32> to vector<1x8xf32>
    %183 = arith.maximumf %181, %182 : vector<1x8xf32>
    %c50 = arith.constant 50 : index
    %c0_162 = arith.constant 0 : index
    %184 = vector.load %arg12[%c50, %c0_162] : memref<86x8xf32, #tpu.memory_space<vmem>>, vector<1x8xf32>
    tpu.vector_store %arg12[%c50, %c0_162], %183 {strides = array<i32>} : memref<86x8xf32, #tpu.memory_space<vmem>>, vector<1x8xf32>,
    %185 = vector.extract_strided_slice %180 {offsets = [2, 0], sizes = [1, 8], strides = [1, 1]} : vector<8x8xf32> to vector<1x8xf32>
    %186 = vector.extract_strided_slice %180 {offsets = [3, 0], sizes = [1, 8], strides = [1, 1]} : vector<8x8xf32> to vector<1x8xf32>
    %187 = arith.maximumf %185, %186 : vector<1x8xf32>
    %c51_163 = arith.constant 51 : index
    %c0_164 = arith.constant 0 : index
    %188 = vector.load %arg12[%c51_163, %c0_164] : memref<86x8xf32, #tpu.memory_space<vmem>>, vector<1x8xf32>
    tpu.vector_store %arg12[%c51_163, %c0_164], %187 {strides = array<i32>} : memref<86x8xf32, #tpu.memory_space<vmem>>, vector<1x8xf32>,
    %189 = vector.extract_strided_slice %180 {offsets = [4, 0], sizes = [1, 8], strides = [1, 1]} : vector<8x8xf32> to vector<1x8xf32>
    %190 = vector.extract_strided_slice %180 {offsets = [5, 0], sizes = [1, 8], strides = [1, 1]} : vector<8x8xf32> to vector<1x8xf32>
    %191 = arith.maximumf %189, %190 : vector<1x8xf32>
    %c52_165 = arith.constant 52 : index
    %c0_166 = arith.constant 0 : index
    %192 = vector.load %arg12[%c52_165, %c0_166] : memref<86x8xf32, #tpu.memory_space<vmem>>, vector<1x8xf32>
    tpu.vector_store %arg12[%c52_165, %c0_166], %191 {strides = array<i32>} : memref<86x8xf32, #tpu.memory_space<vmem>>, vector<1x8xf32>,
    %193 = vector.extract_strided_slice %180 {offsets = [6, 0], sizes = [1, 8], strides = [1, 1]} : vector<8x8xf32> to vector<1x8xf32>
    %194 = vector.extract_strided_slice %180 {offsets = [7, 0], sizes = [1, 8], strides = [1, 1]} : vector<8x8xf32> to vector<1x8xf32>
    %195 = arith.maximumf %193, %194 : vector<1x8xf32>
    %c53 = arith.constant 53 : index
    %c0_167 = arith.constant 0 : index
    %196 = vector.load %arg12[%c53, %c0_167] : memref<86x8xf32, #tpu.memory_space<vmem>>, vector<1x8xf32>
    tpu.vector_store %arg12[%c53, %c0_167], %195 {strides = array<i32>} : memref<86x8xf32, #tpu.memory_space<vmem>>, vector<1x8xf32>,
    %c131 = arith.constant 131 : index
    %c0_168 = arith.constant 0 : index
    %197 = vector.load %arg11[%c131, %c0_168] : memref<200x8xf32, #tpu.memory_space<vmem>>, vector<8x8xf32>
    %c141 = arith.constant 141 : index
    %c0_169 = arith.constant 0 : index
    %198 = vector.load %arg11[%c141, %c0_169] : memref<200x8xf32, #tpu.memory_space<vmem>>, vector<8x8xf32>
    %199 = arith.maximumf %197, %198 : vector<8x8xf32>
    %200 = vector.extract_strided_slice %199 {offsets = [0, 0], sizes = [1, 8], strides = [1, 1]} : vector<8x8xf32> to vector<1x8xf32>
    %201 = vector.extract_strided_slice %199 {offsets = [1, 0], sizes = [1, 8], strides = [1, 1]} : vector<8x8xf32> to vector<1x8xf32>
    %202 = arith.maximumf %200, %201 : vector<1x8xf32>
    %c56 = arith.constant 56 : index
    %c0_170 = arith.constant 0 : index
    %203 = vector.load %arg12[%c56, %c0_170] : memref<86x8xf32, #tpu.memory_space<vmem>>, vector<1x8xf32>
    tpu.vector_store %arg12[%c56, %c0_170], %202 {strides = array<i32>} : memref<86x8xf32, #tpu.memory_space<vmem>>, vector<1x8xf32>,
    %204 = vector.extract_strided_slice %199 {offsets = [2, 0], sizes = [1, 8], strides = [1, 1]} : vector<8x8xf32> to vector<1x8xf32>
    %205 = vector.extract_strided_slice %199 {offsets = [3, 0], sizes = [1, 8], strides = [1, 1]} : vector<8x8xf32> to vector<1x8xf32>
    %206 = arith.maximumf %204, %205 : vector<1x8xf32>
    %c57 = arith.constant 57 : index
    %c0_171 = arith.constant 0 : index
    %207 = vector.load %arg12[%c57, %c0_171] : memref<86x8xf32, #tpu.memory_space<vmem>>, vector<1x8xf32>
    tpu.vector_store %arg12[%c57, %c0_171], %206 {strides = array<i32>} : memref<86x8xf32, #tpu.memory_space<vmem>>, vector<1x8xf32>,
    %208 = vector.extract_strided_slice %199 {offsets = [4, 0], sizes = [1, 8], strides = [1, 1]} : vector<8x8xf32> to vector<1x8xf32>
    %209 = vector.extract_strided_slice %199 {offsets = [5, 0], sizes = [1, 8], strides = [1, 1]} : vector<8x8xf32> to vector<1x8xf32>
    %210 = arith.maximumf %208, %209 : vector<1x8xf32>
    %c58 = arith.constant 58 : index
    %c0_172 = arith.constant 0 : index
    %211 = vector.load %arg12[%c58, %c0_172] : memref<86x8xf32, #tpu.memory_space<vmem>>, vector<1x8xf32>
    tpu.vector_store %arg12[%c58, %c0_172], %210 {strides = array<i32>} : memref<86x8xf32, #tpu.memory_space<vmem>>, vector<1x8xf32>,
    %212 = vector.extract_strided_slice %199 {offsets = [6, 0], sizes = [1, 8], strides = [1, 1]} : vector<8x8xf32> to vector<1x8xf32>
    %213 = vector.extract_strided_slice %199 {offsets = [7, 0], sizes = [1, 8], strides = [1, 1]} : vector<8x8xf32> to vector<1x8xf32>
    %214 = arith.maximumf %212, %213 : vector<1x8xf32>
    %c59 = arith.constant 59 : index
    %c0_173 = arith.constant 0 : index
    %215 = vector.load %arg12[%c59, %c0_173] : memref<86x8xf32, #tpu.memory_space<vmem>>, vector<1x8xf32>
    tpu.vector_store %arg12[%c59, %c0_173], %214 {strides = array<i32>} : memref<86x8xf32, #tpu.memory_space<vmem>>, vector<1x8xf32>,
    %c151 = arith.constant 151 : index
    %c0_174 = arith.constant 0 : index
    %216 = vector.load %arg11[%c151, %c0_174] : memref<200x8xf32, #tpu.memory_space<vmem>>, vector<8x8xf32>
    %c161 = arith.constant 161 : index
    %c0_175 = arith.constant 0 : index
    %217 = vector.load %arg11[%c161, %c0_175] : memref<200x8xf32, #tpu.memory_space<vmem>>, vector<8x8xf32>
    %218 = arith.maximumf %216, %217 : vector<8x8xf32>
    %219 = vector.extract_strided_slice %218 {offsets = [0, 0], sizes = [1, 8], strides = [1, 1]} : vector<8x8xf32> to vector<1x8xf32>
    %220 = vector.extract_strided_slice %218 {offsets = [1, 0], sizes = [1, 8], strides = [1, 1]} : vector<8x8xf32> to vector<1x8xf32>
    %221 = arith.maximumf %219, %220 : vector<1x8xf32>
    %c62_176 = arith.constant 62 : index
    %c0_177 = arith.constant 0 : index
    %222 = vector.load %arg12[%c62_176, %c0_177] : memref<86x8xf32, #tpu.memory_space<vmem>>, vector<1x8xf32>
    tpu.vector_store %arg12[%c62_176, %c0_177], %221 {strides = array<i32>} : memref<86x8xf32, #tpu.memory_space<vmem>>, vector<1x8xf32>,
    %223 = vector.extract_strided_slice %218 {offsets = [2, 0], sizes = [1, 8], strides = [1, 1]} : vector<8x8xf32> to vector<1x8xf32>
    %224 = vector.extract_strided_slice %218 {offsets = [3, 0], sizes = [1, 8], strides = [1, 1]} : vector<8x8xf32> to vector<1x8xf32>
    %225 = arith.maximumf %223, %224 : vector<1x8xf32>
    %c63 = arith.constant 63 : index
    %c0_178 = arith.constant 0 : index
    %226 = vector.load %arg12[%c63, %c0_178] : memref<86x8xf32, #tpu.memory_space<vmem>>, vector<1x8xf32>
    tpu.vector_store %arg12[%c63, %c0_178], %225 {strides = array<i32>} : memref<86x8xf32, #tpu.memory_space<vmem>>, vector<1x8xf32>,
    %227 = vector.extract_strided_slice %218 {offsets = [4, 0], sizes = [1, 8], strides = [1, 1]} : vector<8x8xf32> to vector<1x8xf32>
    %228 = vector.extract_strided_slice %218 {offsets = [5, 0], sizes = [1, 8], strides = [1, 1]} : vector<8x8xf32> to vector<1x8xf32>
    %229 = arith.maximumf %227, %228 : vector<1x8xf32>
    %c64 = arith.constant 64 : index
    %c0_179 = arith.constant 0 : index
    %230 = vector.load %arg12[%c64, %c0_179] : memref<86x8xf32, #tpu.memory_space<vmem>>, vector<1x8xf32>
    tpu.vector_store %arg12[%c64, %c0_179], %229 {strides = array<i32>} : memref<86x8xf32, #tpu.memory_space<vmem>>, vector<1x8xf32>,
    %231 = vector.extract_strided_slice %218 {offsets = [6, 0], sizes = [1, 8], strides = [1, 1]} : vector<8x8xf32> to vector<1x8xf32>
    %232 = vector.extract_strided_slice %218 {offsets = [7, 0], sizes = [1, 8], strides = [1, 1]} : vector<8x8xf32> to vector<1x8xf32>
    %233 = arith.maximumf %231, %232 : vector<1x8xf32>
    %c65 = arith.constant 65 : index
    %c0_180 = arith.constant 0 : index
    %234 = vector.load %arg12[%c65, %c0_180] : memref<86x8xf32, #tpu.memory_space<vmem>>, vector<1x8xf32>
    tpu.vector_store %arg12[%c65, %c0_180], %233 {strides = array<i32>} : memref<86x8xf32, #tpu.memory_space<vmem>>, vector<1x8xf32>,
    %c171 = arith.constant 171 : index
    %c0_181 = arith.constant 0 : index
    %235 = vector.load %arg11[%c171, %c0_181] : memref<200x8xf32, #tpu.memory_space<vmem>>, vector<8x8xf32>
    %c181 = arith.constant 181 : index
    %c0_182 = arith.constant 0 : index
    %236 = vector.load %arg11[%c181, %c0_182] : memref<200x8xf32, #tpu.memory_space<vmem>>, vector<8x8xf32>
    %237 = arith.maximumf %235, %236 : vector<8x8xf32>
    %238 = vector.extract_strided_slice %237 {offsets = [0, 0], sizes = [1, 8], strides = [1, 1]} : vector<8x8xf32> to vector<1x8xf32>
    %239 = vector.extract_strided_slice %237 {offsets = [1, 0], sizes = [1, 8], strides = [1, 1]} : vector<8x8xf32> to vector<1x8xf32>
    %240 = arith.maximumf %238, %239 : vector<1x8xf32>
    %c68 = arith.constant 68 : index
    %c0_183 = arith.constant 0 : index
    %241 = vector.load %arg12[%c68, %c0_183] : memref<86x8xf32, #tpu.memory_space<vmem>>, vector<1x8xf32>
    tpu.vector_store %arg12[%c68, %c0_183], %240 {strides = array<i32>} : memref<86x8xf32, #tpu.memory_space<vmem>>, vector<1x8xf32>,
    %242 = vector.extract_strided_slice %237 {offsets = [2, 0], sizes = [1, 8], strides = [1, 1]} : vector<8x8xf32> to vector<1x8xf32>
    %243 = vector.extract_strided_slice %237 {offsets = [3, 0], sizes = [1, 8], strides = [1, 1]} : vector<8x8xf32> to vector<1x8xf32>
    %244 = arith.maximumf %242, %243 : vector<1x8xf32>
    %c69 = arith.constant 69 : index
    %c0_184 = arith.constant 0 : index
    %245 = vector.load %arg12[%c69, %c0_184] : memref<86x8xf32, #tpu.memory_space<vmem>>, vector<1x8xf32>
    tpu.vector_store %arg12[%c69, %c0_184], %244 {strides = array<i32>} : memref<86x8xf32, #tpu.memory_space<vmem>>, vector<1x8xf32>,
    %246 = vector.extract_strided_slice %237 {offsets = [4, 0], sizes = [1, 8], strides = [1, 1]} : vector<8x8xf32> to vector<1x8xf32>
    %247 = vector.extract_strided_slice %237 {offsets = [5, 0], sizes = [1, 8], strides = [1, 1]} : vector<8x8xf32> to vector<1x8xf32>
    %248 = arith.maximumf %246, %247 : vector<1x8xf32>
    %c70 = arith.constant 70 : index
    %c0_185 = arith.constant 0 : index
    %249 = vector.load %arg12[%c70, %c0_185] : memref<86x8xf32, #tpu.memory_space<vmem>>, vector<1x8xf32>
    tpu.vector_store %arg12[%c70, %c0_185], %248 {strides = array<i32>} : memref<86x8xf32, #tpu.memory_space<vmem>>, vector<1x8xf32>,
    %250 = vector.extract_strided_slice %237 {offsets = [6, 0], sizes = [1, 8], strides = [1, 1]} : vector<8x8xf32> to vector<1x8xf32>
    %251 = vector.extract_strided_slice %237 {offsets = [7, 0], sizes = [1, 8], strides = [1, 1]} : vector<8x8xf32> to vector<1x8xf32>
    %252 = arith.maximumf %250, %251 : vector<1x8xf32>
    %c71_186 = arith.constant 71 : index
    %c0_187 = arith.constant 0 : index
    %253 = vector.load %arg12[%c71_186, %c0_187] : memref<86x8xf32, #tpu.memory_space<vmem>>, vector<1x8xf32>
    tpu.vector_store %arg12[%c71_186, %c0_187], %252 {strides = array<i32>} : memref<86x8xf32, #tpu.memory_space<vmem>>, vector<1x8xf32>,
    %c0_188 = arith.constant 0 : index
    %c0_189 = arith.constant 0 : index
    %254 = vector.load %arg12[%c0_188, %c0_189] : memref<86x8xf32, #tpu.memory_space<vmem>>, vector<72x8xf32>
    %c0_190 = arith.constant 0 : index
    %c0_191 = arith.constant 0 : index
    %c0_192 = arith.constant 0 : index
    %255 = vector.load %arg3[%c0_190, %c0_191, %c0_192] : memref<9x8x16xf32, #tpu.memory_space<vmem>>, vector<1x8x16xf32>
    %256 = vector.shape_cast %255 : vector<1x8x16xf32> to vector<8x16xf32>
    %cst_193 = arith.constant dense<0.000000e+00> : vector<72x16xf32>
    %257 = tpu.matmul %254, %256, %cst_193 {dimension_numbers = #tpu.dot_dimension_numbers<[1], [0], [0], [1], [0, 0, 1, 1], [], []>} : vector<72x8xf32>, vector<8x16xf32>, vector<72x16xf32> -> vector<72x16xf32>
    %c1_194 = arith.constant 1 : index
    %c0_195 = arith.constant 0 : index
    %258 = vector.load %arg12[%c1_194, %c0_195] : memref<86x8xf32, #tpu.memory_space<vmem>>, vector<72x8xf32>
    %c1_196 = arith.constant 1 : index
    %c0_197 = arith.constant 0 : index
    %c0_198 = arith.constant 0 : index
    %259 = vector.load %arg3[%c1_196, %c0_197, %c0_198] : memref<9x8x16xf32, #tpu.memory_space<vmem>>, vector<1x8x16xf32>
    %260 = vector.shape_cast %259 : vector<1x8x16xf32> to vector<8x16xf32>
    %cst_199 = arith.constant dense<0.000000e+00> : vector<72x16xf32>
    %261 = tpu.matmul %258, %260, %cst_199 {dimension_numbers = #tpu.dot_dimension_numbers<[1], [0], [0], [1], [0, 0, 1, 1], [], []>} : vector<72x8xf32>, vector<8x16xf32>, vector<72x16xf32> -> vector<72x16xf32>
    %262 = arith.addf %257, %261 : vector<72x16xf32>
    %c2_200 = arith.constant 2 : index
    %c0_201 = arith.constant 0 : index
    %263 = vector.load %arg12[%c2_200, %c0_201] : memref<86x8xf32, #tpu.memory_space<vmem>>, vector<72x8xf32>
    %c2_202 = arith.constant 2 : index
    %c0_203 = arith.constant 0 : index
    %c0_204 = arith.constant 0 : index
    %264 = vector.load %arg3[%c2_202, %c0_203, %c0_204] : memref<9x8x16xf32, #tpu.memory_space<vmem>>, vector<1x8x16xf32>
    %265 = vector.shape_cast %264 : vector<1x8x16xf32> to vector<8x16xf32>
    %cst_205 = arith.constant dense<0.000000e+00> : vector<72x16xf32>
    %266 = tpu.matmul %263, %265, %cst_205 {dimension_numbers = #tpu.dot_dimension_numbers<[1], [0], [0], [1], [0, 0, 1, 1], [], []>} : vector<72x8xf32>, vector<8x16xf32>, vector<72x16xf32> -> vector<72x16xf32>
    %267 = arith.addf %262, %266 : vector<72x16xf32>
    %c6_206 = arith.constant 6 : index
    %c0_207 = arith.constant 0 : index
    %268 = vector.load %arg12[%c6_206, %c0_207] : memref<86x8xf32, #tpu.memory_space<vmem>>, vector<72x8xf32>
    %c3_208 = arith.constant 3 : index
    %c0_209 = arith.constant 0 : index
    %c0_210 = arith.constant 0 : index
    %269 = vector.load %arg3[%c3_208, %c0_209, %c0_210] : memref<9x8x16xf32, #tpu.memory_space<vmem>>, vector<1x8x16xf32>
    %270 = vector.shape_cast %269 : vector<1x8x16xf32> to vector<8x16xf32>
    %cst_211 = arith.constant dense<0.000000e+00> : vector<72x16xf32>
    %271 = tpu.matmul %268, %270, %cst_211 {dimension_numbers = #tpu.dot_dimension_numbers<[1], [0], [0], [1], [0, 0, 1, 1], [], []>} : vector<72x8xf32>, vector<8x16xf32>, vector<72x16xf32> -> vector<72x16xf32>
    %272 = arith.addf %267, %271 : vector<72x16xf32>
    %c7_212 = arith.constant 7 : index
    %c0_213 = arith.constant 0 : index
    %273 = vector.load %arg12[%c7_212, %c0_213] : memref<86x8xf32, #tpu.memory_space<vmem>>, vector<72x8xf32>
    %c4_214 = arith.constant 4 : index
    %c0_215 = arith.constant 0 : index
    %c0_216 = arith.constant 0 : index
    %274 = vector.load %arg3[%c4_214, %c0_215, %c0_216] : memref<9x8x16xf32, #tpu.memory_space<vmem>>, vector<1x8x16xf32>
    %275 = vector.shape_cast %274 : vector<1x8x16xf32> to vector<8x16xf32>
    %cst_217 = arith.constant dense<0.000000e+00> : vector<72x16xf32>
    %276 = tpu.matmul %273, %275, %cst_217 {dimension_numbers = #tpu.dot_dimension_numbers<[1], [0], [0], [1], [0, 0, 1, 1], [], []>} : vector<72x8xf32>, vector<8x16xf32>, vector<72x16xf32> -> vector<72x16xf32>
    %277 = arith.addf %272, %276 : vector<72x16xf32>
    %c8_218 = arith.constant 8 : index
    %c0_219 = arith.constant 0 : index
    %278 = vector.load %arg12[%c8_218, %c0_219] : memref<86x8xf32, #tpu.memory_space<vmem>>, vector<72x8xf32>
    %c5_220 = arith.constant 5 : index
    %c0_221 = arith.constant 0 : index
    %c0_222 = arith.constant 0 : index
    %279 = vector.load %arg3[%c5_220, %c0_221, %c0_222] : memref<9x8x16xf32, #tpu.memory_space<vmem>>, vector<1x8x16xf32>
    %280 = vector.shape_cast %279 : vector<1x8x16xf32> to vector<8x16xf32>
    %cst_223 = arith.constant dense<0.000000e+00> : vector<72x16xf32>
    %281 = tpu.matmul %278, %280, %cst_223 {dimension_numbers = #tpu.dot_dimension_numbers<[1], [0], [0], [1], [0, 0, 1, 1], [], []>} : vector<72x8xf32>, vector<8x16xf32>, vector<72x16xf32> -> vector<72x16xf32>
    %282 = arith.addf %277, %281 : vector<72x16xf32>
    %c12_224 = arith.constant 12 : index
    %c0_225 = arith.constant 0 : index
    %283 = vector.load %arg12[%c12_224, %c0_225] : memref<86x8xf32, #tpu.memory_space<vmem>>, vector<72x8xf32>
    %c6_226 = arith.constant 6 : index
    %c0_227 = arith.constant 0 : index
    %c0_228 = arith.constant 0 : index
    %284 = vector.load %arg3[%c6_226, %c0_227, %c0_228] : memref<9x8x16xf32, #tpu.memory_space<vmem>>, vector<1x8x16xf32>
    %285 = vector.shape_cast %284 : vector<1x8x16xf32> to vector<8x16xf32>
    %cst_229 = arith.constant dense<0.000000e+00> : vector<72x16xf32>
    %286 = tpu.matmul %283, %285, %cst_229 {dimension_numbers = #tpu.dot_dimension_numbers<[1], [0], [0], [1], [0, 0, 1, 1], [], []>} : vector<72x8xf32>, vector<8x16xf32>, vector<72x16xf32> -> vector<72x16xf32>
    %287 = arith.addf %282, %286 : vector<72x16xf32>
    %c13 = arith.constant 13 : index
    %c0_230 = arith.constant 0 : index
    %288 = vector.load %arg12[%c13, %c0_230] : memref<86x8xf32, #tpu.memory_space<vmem>>, vector<72x8xf32>
    %c7_231 = arith.constant 7 : index
    %c0_232 = arith.constant 0 : index
    %c0_233 = arith.constant 0 : index
    %289 = vector.load %arg3[%c7_231, %c0_232, %c0_233] : memref<9x8x16xf32, #tpu.memory_space<vmem>>, vector<1x8x16xf32>
    %290 = vector.shape_cast %289 : vector<1x8x16xf32> to vector<8x16xf32>
    %cst_234 = arith.constant dense<0.000000e+00> : vector<72x16xf32>
    %291 = tpu.matmul %288, %290, %cst_234 {dimension_numbers = #tpu.dot_dimension_numbers<[1], [0], [0], [1], [0, 0, 1, 1], [], []>} : vector<72x8xf32>, vector<8x16xf32>, vector<72x16xf32> -> vector<72x16xf32>
    %292 = arith.addf %287, %291 : vector<72x16xf32>
    %c14_235 = arith.constant 14 : index
    %c0_236 = arith.constant 0 : index
    %293 = vector.load %arg12[%c14_235, %c0_236] : memref<86x8xf32, #tpu.memory_space<vmem>>, vector<72x8xf32>
    %c8_237 = arith.constant 8 : index
    %c0_238 = arith.constant 0 : index
    %c0_239 = arith.constant 0 : index
    %294 = vector.load %arg3[%c8_237, %c0_238, %c0_239] : memref<9x8x16xf32, #tpu.memory_space<vmem>>, vector<1x8x16xf32>
    %295 = vector.shape_cast %294 : vector<1x8x16xf32> to vector<8x16xf32>
    %cst_240 = arith.constant dense<0.000000e+00> : vector<72x16xf32>
    %296 = tpu.matmul %293, %295, %cst_240 {dimension_numbers = #tpu.dot_dimension_numbers<[1], [0], [0], [1], [0, 0, 1, 1], [], []>} : vector<72x8xf32>, vector<8x16xf32>, vector<72x16xf32> -> vector<72x16xf32>
    %297 = arith.addf %292, %296 : vector<72x16xf32>
    %c0_241 = arith.constant 0 : index
    %c0_242 = arith.constant 0 : index
    %298 = vector.load %arg4[%c0_241, %c0_242] : memref<1x16xf32, #tpu.memory_space<vmem>>, vector<1x16xf32>
    %299 = vector.broadcast %298 : vector<1x16xf32> to vector<72x16xf32>
    %300 = arith.addf %297, %299 : vector<72x16xf32>
    %cst_243 = arith.constant 0.000000e+00 : f32
    %301 = vector.broadcast %cst_243 : f32 to vector<72x16xf32>
    %302 = arith.maximumf %300, %301 : vector<72x16xf32>
    %c0_244 = arith.constant 0 : index
    %c0_245 = arith.constant 0 : index
    %303 = vector.load %arg13[%c0_244, %c0_245] : memref<72x16xf32, #tpu.memory_space<vmem>>, vector<72x16xf32>
    tpu.vector_store %arg13[%c0_244, %c0_245], %302 {strides = array<i32>} : memref<72x16xf32, #tpu.memory_space<vmem>>, vector<72x16xf32>,
    %cst_246 = arith.constant 0.000000e+00 : f32
    %304 = vector.broadcast %cst_246 : f32 to vector<42x16xf32>
    %c0_247 = arith.constant 0 : index
    %c0_248 = arith.constant 0 : index
    %305 = vector.load %arg14[%c0_247, %c0_248] : memref<42x16xf32, #tpu.memory_space<vmem>>, vector<42x16xf32>
    tpu.vector_store %arg14[%c0_247, %c0_248], %304 {strides = array<i32>} : memref<42x16xf32, #tpu.memory_space<vmem>>, vector<42x16xf32>,
    %c7_249 = arith.constant 7 : index
    %c0_250 = arith.constant 0 : index
    %306 = vector.load %arg13[%c7_249, %c0_250] : memref<72x16xf32, #tpu.memory_space<vmem>>, vector<4x16xf32>
    %c13_251 = arith.constant 13 : index
    %c0_252 = arith.constant 0 : index
    %307 = vector.load %arg13[%c13_251, %c0_252] : memref<72x16xf32, #tpu.memory_space<vmem>>, vector<4x16xf32>
    %308 = arith.maximumf %306, %307 : vector<4x16xf32>
    %309 = vector.extract_strided_slice %308 {offsets = [0, 0], sizes = [1, 16], strides = [1, 1]} : vector<4x16xf32> to vector<1x16xf32>
    %310 = vector.extract_strided_slice %308 {offsets = [1, 0], sizes = [1, 16], strides = [1, 1]} : vector<4x16xf32> to vector<1x16xf32>
    %311 = arith.maximumf %309, %310 : vector<1x16xf32>
    %c10_253 = arith.constant 10 : index
    %c0_254 = arith.constant 0 : index
    %312 = vector.load %arg14[%c10_253, %c0_254] : memref<42x16xf32, #tpu.memory_space<vmem>>, vector<1x16xf32>
    tpu.vector_store %arg14[%c10_253, %c0_254], %311 {strides = array<i32>} : memref<42x16xf32, #tpu.memory_space<vmem>>, vector<1x16xf32>,
    %313 = vector.extract_strided_slice %308 {offsets = [2, 0], sizes = [1, 16], strides = [1, 1]} : vector<4x16xf32> to vector<1x16xf32>
    %314 = vector.extract_strided_slice %308 {offsets = [3, 0], sizes = [1, 16], strides = [1, 1]} : vector<4x16xf32> to vector<1x16xf32>
    %315 = arith.maximumf %313, %314 : vector<1x16xf32>
    %c11_255 = arith.constant 11 : index
    %c0_256 = arith.constant 0 : index
    %316 = vector.load %arg14[%c11_255, %c0_256] : memref<42x16xf32, #tpu.memory_space<vmem>>, vector<1x16xf32>
    tpu.vector_store %arg14[%c11_255, %c0_256], %315 {strides = array<i32>} : memref<42x16xf32, #tpu.memory_space<vmem>>, vector<1x16xf32>,
    %c19 = arith.constant 19 : index
    %c0_257 = arith.constant 0 : index
    %317 = vector.load %arg13[%c19, %c0_257] : memref<72x16xf32, #tpu.memory_space<vmem>>, vector<4x16xf32>
    %c25 = arith.constant 25 : index
    %c0_258 = arith.constant 0 : index
    %318 = vector.load %arg13[%c25, %c0_258] : memref<72x16xf32, #tpu.memory_space<vmem>>, vector<4x16xf32>
    %319 = arith.maximumf %317, %318 : vector<4x16xf32>
    %320 = vector.extract_strided_slice %319 {offsets = [0, 0], sizes = [1, 16], strides = [1, 1]} : vector<4x16xf32> to vector<1x16xf32>
    %321 = vector.extract_strided_slice %319 {offsets = [1, 0], sizes = [1, 16], strides = [1, 1]} : vector<4x16xf32> to vector<1x16xf32>
    %322 = arith.maximumf %320, %321 : vector<1x16xf32>
    %c14_259 = arith.constant 14 : index
    %c0_260 = arith.constant 0 : index
    %323 = vector.load %arg14[%c14_259, %c0_260] : memref<42x16xf32, #tpu.memory_space<vmem>>, vector<1x16xf32>
    tpu.vector_store %arg14[%c14_259, %c0_260], %322 {strides = array<i32>} : memref<42x16xf32, #tpu.memory_space<vmem>>, vector<1x16xf32>,
    %324 = vector.extract_strided_slice %319 {offsets = [2, 0], sizes = [1, 16], strides = [1, 1]} : vector<4x16xf32> to vector<1x16xf32>
    %325 = vector.extract_strided_slice %319 {offsets = [3, 0], sizes = [1, 16], strides = [1, 1]} : vector<4x16xf32> to vector<1x16xf32>
    %326 = arith.maximumf %324, %325 : vector<1x16xf32>
    %c15_261 = arith.constant 15 : index
    %c0_262 = arith.constant 0 : index
    %327 = vector.load %arg14[%c15_261, %c0_262] : memref<42x16xf32, #tpu.memory_space<vmem>>, vector<1x16xf32>
    tpu.vector_store %arg14[%c15_261, %c0_262], %326 {strides = array<i32>} : memref<42x16xf32, #tpu.memory_space<vmem>>, vector<1x16xf32>,
    %c43 = arith.constant 43 : index
    %c0_263 = arith.constant 0 : index
    %328 = vector.load %arg13[%c43, %c0_263] : memref<72x16xf32, #tpu.memory_space<vmem>>, vector<4x16xf32>
    %c49 = arith.constant 49 : index
    %c0_264 = arith.constant 0 : index
    %329 = vector.load %arg13[%c49, %c0_264] : memref<72x16xf32, #tpu.memory_space<vmem>>, vector<4x16xf32>
    %330 = arith.maximumf %328, %329 : vector<4x16xf32>
    %331 = vector.extract_strided_slice %330 {offsets = [0, 0], sizes = [1, 16], strides = [1, 1]} : vector<4x16xf32> to vector<1x16xf32>
    %332 = vector.extract_strided_slice %330 {offsets = [1, 0], sizes = [1, 16], strides = [1, 1]} : vector<4x16xf32> to vector<1x16xf32>
    %333 = arith.maximumf %331, %332 : vector<1x16xf32>
    %c26_265 = arith.constant 26 : index
    %c0_266 = arith.constant 0 : index
    %334 = vector.load %arg14[%c26_265, %c0_266] : memref<42x16xf32, #tpu.memory_space<vmem>>, vector<1x16xf32>
    tpu.vector_store %arg14[%c26_265, %c0_266], %333 {strides = array<i32>} : memref<42x16xf32, #tpu.memory_space<vmem>>, vector<1x16xf32>,
    %335 = vector.extract_strided_slice %330 {offsets = [2, 0], sizes = [1, 16], strides = [1, 1]} : vector<4x16xf32> to vector<1x16xf32>
    %336 = vector.extract_strided_slice %330 {offsets = [3, 0], sizes = [1, 16], strides = [1, 1]} : vector<4x16xf32> to vector<1x16xf32>
    %337 = arith.maximumf %335, %336 : vector<1x16xf32>
    %c27_267 = arith.constant 27 : index
    %c0_268 = arith.constant 0 : index
    %338 = vector.load %arg14[%c27_267, %c0_268] : memref<42x16xf32, #tpu.memory_space<vmem>>, vector<1x16xf32>
    tpu.vector_store %arg14[%c27_267, %c0_268], %337 {strides = array<i32>} : memref<42x16xf32, #tpu.memory_space<vmem>>, vector<1x16xf32>,
    %c55 = arith.constant 55 : index
    %c0_269 = arith.constant 0 : index
    %339 = vector.load %arg13[%c55, %c0_269] : memref<72x16xf32, #tpu.memory_space<vmem>>, vector<4x16xf32>
    %c61_270 = arith.constant 61 : index
    %c0_271 = arith.constant 0 : index
    %340 = vector.load %arg13[%c61_270, %c0_271] : memref<72x16xf32, #tpu.memory_space<vmem>>, vector<4x16xf32>
    %341 = arith.maximumf %339, %340 : vector<4x16xf32>
    %342 = vector.extract_strided_slice %341 {offsets = [0, 0], sizes = [1, 16], strides = [1, 1]} : vector<4x16xf32> to vector<1x16xf32>
    %343 = vector.extract_strided_slice %341 {offsets = [1, 0], sizes = [1, 16], strides = [1, 1]} : vector<4x16xf32> to vector<1x16xf32>
    %344 = arith.maximumf %342, %343 : vector<1x16xf32>
    %c30 = arith.constant 30 : index
    %c0_272 = arith.constant 0 : index
    %345 = vector.load %arg14[%c30, %c0_272] : memref<42x16xf32, #tpu.memory_space<vmem>>, vector<1x16xf32>
    tpu.vector_store %arg14[%c30, %c0_272], %344 {strides = array<i32>} : memref<42x16xf32, #tpu.memory_space<vmem>>, vector<1x16xf32>,
    %346 = vector.extract_strided_slice %341 {offsets = [2, 0], sizes = [1, 16], strides = [1, 1]} : vector<4x16xf32> to vector<1x16xf32>
    %347 = vector.extract_strided_slice %341 {offsets = [3, 0], sizes = [1, 16], strides = [1, 1]} : vector<4x16xf32> to vector<1x16xf32>
    %348 = arith.maximumf %346, %347 : vector<1x16xf32>
    %c31_273 = arith.constant 31 : index
    %c0_274 = arith.constant 0 : index
    %349 = vector.load %arg14[%c31_273, %c0_274] : memref<42x16xf32, #tpu.memory_space<vmem>>, vector<1x16xf32>
    tpu.vector_store %arg14[%c31_273, %c0_274], %348 {strides = array<i32>} : memref<42x16xf32, #tpu.memory_space<vmem>>, vector<1x16xf32>,
    %c0_275 = arith.constant 0 : index
    %c0_276 = arith.constant 0 : index
    %350 = vector.load %arg14[%c0_275, %c0_276] : memref<42x16xf32, #tpu.memory_space<vmem>>, vector<32x16xf32>
    %c0_277 = arith.constant 0 : index
    %c0_278 = arith.constant 0 : index
    %c0_279 = arith.constant 0 : index
    %351 = vector.load %arg5[%c0_277, %c0_278, %c0_279] : memref<9x16x16xf32, #tpu.memory_space<vmem>>, vector<1x16x16xf32>
    %352 = vector.shape_cast %351 : vector<1x16x16xf32> to vector<16x16xf32>
    %cst_280 = arith.constant dense<0.000000e+00> : vector<32x16xf32>
    %353 = tpu.matmul %350, %352, %cst_280 {dimension_numbers = #tpu.dot_dimension_numbers<[1], [0], [0], [1], [0, 0, 1, 1], [], []>} : vector<32x16xf32>, vector<16x16xf32>, vector<32x16xf32> -> vector<32x16xf32>
    %c1_281 = arith.constant 1 : index
    %c0_282 = arith.constant 0 : index
    %354 = vector.load %arg14[%c1_281, %c0_282] : memref<42x16xf32, #tpu.memory_space<vmem>>, vector<32x16xf32>
    %c1_283 = arith.constant 1 : index
    %c0_284 = arith.constant 0 : index
    %c0_285 = arith.constant 0 : index
    %355 = vector.load %arg5[%c1_283, %c0_284, %c0_285] : memref<9x16x16xf32, #tpu.memory_space<vmem>>, vector<1x16x16xf32>
    %356 = vector.shape_cast %355 : vector<1x16x16xf32> to vector<16x16xf32>
    %cst_286 = arith.constant dense<0.000000e+00> : vector<32x16xf32>
    %357 = tpu.matmul %354, %356, %cst_286 {dimension_numbers = #tpu.dot_dimension_numbers<[1], [0], [0], [1], [0, 0, 1, 1], [], []>} : vector<32x16xf32>, vector<16x16xf32>, vector<32x16xf32> -> vector<32x16xf32>
    %358 = arith.addf %353, %357 : vector<32x16xf32>
    %c2_287 = arith.constant 2 : index
    %c0_288 = arith.constant 0 : index
    %359 = vector.load %arg14[%c2_287, %c0_288] : memref<42x16xf32, #tpu.memory_space<vmem>>, vector<32x16xf32>
    %c2_289 = arith.constant 2 : index
    %c0_290 = arith.constant 0 : index
    %c0_291 = arith.constant 0 : index
    %360 = vector.load %arg5[%c2_289, %c0_290, %c0_291] : memref<9x16x16xf32, #tpu.memory_space<vmem>>, vector<1x16x16xf32>
    %361 = vector.shape_cast %360 : vector<1x16x16xf32> to vector<16x16xf32>
    %cst_292 = arith.constant dense<0.000000e+00> : vector<32x16xf32>
    %362 = tpu.matmul %359, %361, %cst_292 {dimension_numbers = #tpu.dot_dimension_numbers<[1], [0], [0], [1], [0, 0, 1, 1], [], []>} : vector<32x16xf32>, vector<16x16xf32>, vector<32x16xf32> -> vector<32x16xf32>
    %363 = arith.addf %358, %362 : vector<32x16xf32>
    %c4_293 = arith.constant 4 : index
    %c0_294 = arith.constant 0 : index
    %364 = vector.load %arg14[%c4_293, %c0_294] : memref<42x16xf32, #tpu.memory_space<vmem>>, vector<32x16xf32>
    %c3_295 = arith.constant 3 : index
    %c0_296 = arith.constant 0 : index
    %c0_297 = arith.constant 0 : index
    %365 = vector.load %arg5[%c3_295, %c0_296, %c0_297] : memref<9x16x16xf32, #tpu.memory_space<vmem>>, vector<1x16x16xf32>
    %366 = vector.shape_cast %365 : vector<1x16x16xf32> to vector<16x16xf32>
    %cst_298 = arith.constant dense<0.000000e+00> : vector<32x16xf32>
    %367 = tpu.matmul %364, %366, %cst_298 {dimension_numbers = #tpu.dot_dimension_numbers<[1], [0], [0], [1], [0, 0, 1, 1], [], []>} : vector<32x16xf32>, vector<16x16xf32>, vector<32x16xf32> -> vector<32x16xf32>
    %368 = arith.addf %363, %367 : vector<32x16xf32>
    %c5_299 = arith.constant 5 : index
    %c0_300 = arith.constant 0 : index
    %369 = vector.load %arg14[%c5_299, %c0_300] : memref<42x16xf32, #tpu.memory_space<vmem>>, vector<32x16xf32>
    %c4_301 = arith.constant 4 : index
    %c0_302 = arith.constant 0 : index
    %c0_303 = arith.constant 0 : index
    %370 = vector.load %arg5[%c4_301, %c0_302, %c0_303] : memref<9x16x16xf32, #tpu.memory_space<vmem>>, vector<1x16x16xf32>
    %371 = vector.shape_cast %370 : vector<1x16x16xf32> to vector<16x16xf32>
    %cst_304 = arith.constant dense<0.000000e+00> : vector<32x16xf32>
    %372 = tpu.matmul %369, %371, %cst_304 {dimension_numbers = #tpu.dot_dimension_numbers<[1], [0], [0], [1], [0, 0, 1, 1], [], []>} : vector<32x16xf32>, vector<16x16xf32>, vector<32x16xf32> -> vector<32x16xf32>
    %373 = arith.addf %368, %372 : vector<32x16xf32>
    %c6_305 = arith.constant 6 : index
    %c0_306 = arith.constant 0 : index
    %374 = vector.load %arg14[%c6_305, %c0_306] : memref<42x16xf32, #tpu.memory_space<vmem>>, vector<32x16xf32>
    %c5_307 = arith.constant 5 : index
    %c0_308 = arith.constant 0 : index
    %c0_309 = arith.constant 0 : index
    %375 = vector.load %arg5[%c5_307, %c0_308, %c0_309] : memref<9x16x16xf32, #tpu.memory_space<vmem>>, vector<1x16x16xf32>
    %376 = vector.shape_cast %375 : vector<1x16x16xf32> to vector<16x16xf32>
    %cst_310 = arith.constant dense<0.000000e+00> : vector<32x16xf32>
    %377 = tpu.matmul %374, %376, %cst_310 {dimension_numbers = #tpu.dot_dimension_numbers<[1], [0], [0], [1], [0, 0, 1, 1], [], []>} : vector<32x16xf32>, vector<16x16xf32>, vector<32x16xf32> -> vector<32x16xf32>
    %378 = arith.addf %373, %377 : vector<32x16xf32>
    %c8_311 = arith.constant 8 : index
    %c0_312 = arith.constant 0 : index
    %379 = vector.load %arg14[%c8_311, %c0_312] : memref<42x16xf32, #tpu.memory_space<vmem>>, vector<32x16xf32>
    %c6_313 = arith.constant 6 : index
    %c0_314 = arith.constant 0 : index
    %c0_315 = arith.constant 0 : index
    %380 = vector.load %arg5[%c6_313, %c0_314, %c0_315] : memref<9x16x16xf32, #tpu.memory_space<vmem>>, vector<1x16x16xf32>
    %381 = vector.shape_cast %380 : vector<1x16x16xf32> to vector<16x16xf32>
    %cst_316 = arith.constant dense<0.000000e+00> : vector<32x16xf32>
    %382 = tpu.matmul %379, %381, %cst_316 {dimension_numbers = #tpu.dot_dimension_numbers<[1], [0], [0], [1], [0, 0, 1, 1], [], []>} : vector<32x16xf32>, vector<16x16xf32>, vector<32x16xf32> -> vector<32x16xf32>
    %383 = arith.addf %378, %382 : vector<32x16xf32>
    %c9 = arith.constant 9 : index
    %c0_317 = arith.constant 0 : index
    %384 = vector.load %arg14[%c9, %c0_317] : memref<42x16xf32, #tpu.memory_space<vmem>>, vector<32x16xf32>
    %c7_318 = arith.constant 7 : index
    %c0_319 = arith.constant 0 : index
    %c0_320 = arith.constant 0 : index
    %385 = vector.load %arg5[%c7_318, %c0_319, %c0_320] : memref<9x16x16xf32, #tpu.memory_space<vmem>>, vector<1x16x16xf32>
    %386 = vector.shape_cast %385 : vector<1x16x16xf32> to vector<16x16xf32>
    %cst_321 = arith.constant dense<0.000000e+00> : vector<32x16xf32>
    %387 = tpu.matmul %384, %386, %cst_321 {dimension_numbers = #tpu.dot_dimension_numbers<[1], [0], [0], [1], [0, 0, 1, 1], [], []>} : vector<32x16xf32>, vector<16x16xf32>, vector<32x16xf32> -> vector<32x16xf32>
    %388 = arith.addf %383, %387 : vector<32x16xf32>
    %c10_322 = arith.constant 10 : index
    %c0_323 = arith.constant 0 : index
    %389 = vector.load %arg14[%c10_322, %c0_323] : memref<42x16xf32, #tpu.memory_space<vmem>>, vector<32x16xf32>
    %c8_324 = arith.constant 8 : index
    %c0_325 = arith.constant 0 : index
    %c0_326 = arith.constant 0 : index
    %390 = vector.load %arg5[%c8_324, %c0_325, %c0_326] : memref<9x16x16xf32, #tpu.memory_space<vmem>>, vector<1x16x16xf32>
    %391 = vector.shape_cast %390 : vector<1x16x16xf32> to vector<16x16xf32>
    %cst_327 = arith.constant dense<0.000000e+00> : vector<32x16xf32>
    %392 = tpu.matmul %389, %391, %cst_327 {dimension_numbers = #tpu.dot_dimension_numbers<[1], [0], [0], [1], [0, 0, 1, 1], [], []>} : vector<32x16xf32>, vector<16x16xf32>, vector<32x16xf32> -> vector<32x16xf32>
    %393 = arith.addf %388, %392 : vector<32x16xf32>
    %c0_328 = arith.constant 0 : index
    %c0_329 = arith.constant 0 : index
    %394 = vector.load %arg6[%c0_328, %c0_329] : memref<1x16xf32, #tpu.memory_space<vmem>>, vector<1x16xf32>
    %395 = vector.broadcast %394 : vector<1x16xf32> to vector<32x16xf32>
    %396 = arith.addf %393, %395 : vector<32x16xf32>
    %cst_330 = arith.constant 0.000000e+00 : f32
    %397 = vector.broadcast %cst_330 : f32 to vector<32x16xf32>
    %398 = arith.maximumf %396, %397 : vector<32x16xf32>
    %c0_331 = arith.constant 0 : index
    %c0_332 = arith.constant 0 : index
    %399 = vector.load %arg15[%c0_331, %c0_332] : memref<32x16xf32, #tpu.memory_space<vmem>>, vector<32x16xf32>
    tpu.vector_store %arg15[%c0_331, %c0_332], %398 {strides = array<i32>} : memref<32x16xf32, #tpu.memory_space<vmem>>, vector<32x16xf32>,
    %c5_333 = arith.constant 5 : index
    %c0_334 = arith.constant 0 : index
    %400 = vector.load %arg15[%c5_333, %c0_334] : memref<32x16xf32, #tpu.memory_space<vmem>>, vector<1x16xf32>
    %c6_335 = arith.constant 6 : index
    %c0_336 = arith.constant 0 : index
    %401 = vector.load %arg15[%c6_335, %c0_336] : memref<32x16xf32, #tpu.memory_space<vmem>>, vector<1x16xf32>
    %c9_337 = arith.constant 9 : index
    %c0_338 = arith.constant 0 : index
    %402 = vector.load %arg15[%c9_337, %c0_338] : memref<32x16xf32, #tpu.memory_space<vmem>>, vector<1x16xf32>
    %c10_339 = arith.constant 10 : index
    %c0_340 = arith.constant 0 : index
    %403 = vector.load %arg15[%c10_339, %c0_340] : memref<32x16xf32, #tpu.memory_space<vmem>>, vector<1x16xf32>
    %404 = arith.addf %400, %401 : vector<1x16xf32>
    %405 = arith.addf %404, %402 : vector<1x16xf32>
    %406 = arith.addf %405, %403 : vector<1x16xf32>
    %cst_341 = arith.constant 2.500000e-01 : f32
    %407 = vector.broadcast %cst_341 : f32 to vector<1x16xf32>
    %408 = arith.mulf %406, %407 : vector<1x16xf32>
    %c0_342 = arith.constant 0 : index
    %c0_343 = arith.constant 0 : index
    %409 = vector.load %arg16[%c0_342, %c0_343] : memref<2x16xf32, #tpu.memory_space<vmem>>, vector<1x16xf32>
    tpu.vector_store %arg16[%c0_342, %c0_343], %408 {strides = array<i32>} : memref<2x16xf32, #tpu.memory_space<vmem>>, vector<1x16xf32>,
    %c21_344 = arith.constant 21 : index
    %c0_345 = arith.constant 0 : index
    %410 = vector.load %arg15[%c21_344, %c0_345] : memref<32x16xf32, #tpu.memory_space<vmem>>, vector<1x16xf32>
    %c22_346 = arith.constant 22 : index
    %c0_347 = arith.constant 0 : index
    %411 = vector.load %arg15[%c22_346, %c0_347] : memref<32x16xf32, #tpu.memory_space<vmem>>, vector<1x16xf32>
    %c25_348 = arith.constant 25 : index
    %c0_349 = arith.constant 0 : index
    %412 = vector.load %arg15[%c25_348, %c0_349] : memref<32x16xf32, #tpu.memory_space<vmem>>, vector<1x16xf32>
    %c26_350 = arith.constant 26 : index
    %c0_351 = arith.constant 0 : index
    %413 = vector.load %arg15[%c26_350, %c0_351] : memref<32x16xf32, #tpu.memory_space<vmem>>, vector<1x16xf32>
    %414 = arith.addf %410, %411 : vector<1x16xf32>
    %415 = arith.addf %414, %412 : vector<1x16xf32>
    %416 = arith.addf %415, %413 : vector<1x16xf32>
    %cst_352 = arith.constant 2.500000e-01 : f32
    %417 = vector.broadcast %cst_352 : f32 to vector<1x16xf32>
    %418 = arith.mulf %416, %417 : vector<1x16xf32>
    %c1_353 = arith.constant 1 : index
    %c0_354 = arith.constant 0 : index
    %419 = vector.load %arg16[%c1_353, %c0_354] : memref<2x16xf32, #tpu.memory_space<vmem>>, vector<1x16xf32>
    tpu.vector_store %arg16[%c1_353, %c0_354], %418 {strides = array<i32>} : memref<2x16xf32, #tpu.memory_space<vmem>>, vector<1x16xf32>,
    %c0_355 = arith.constant 0 : index
    %c0_356 = arith.constant 0 : index
    %420 = vector.load %arg16[%c0_355, %c0_356] : memref<2x16xf32, #tpu.memory_space<vmem>>, vector<2x16xf32>
    %c0_357 = arith.constant 0 : index
    %c0_358 = arith.constant 0 : index
    %421 = vector.load %arg7[%c0_357, %c0_358] : memref<16x128xf32, #tpu.memory_space<vmem>>, vector<16x128xf32>
    %cst_359 = arith.constant dense<0.000000e+00> : vector<2x128xf32>
    %422 = tpu.matmul %420, %421, %cst_359 {dimension_numbers = #tpu.dot_dimension_numbers<[1], [0], [0], [1], [0, 0, 1, 1], [], []>} : vector<2x16xf32>, vector<16x128xf32>, vector<2x128xf32> -> vector<2x128xf32>
    %c0_360 = arith.constant 0 : index
    %c0_361 = arith.constant 0 : index
    %423 = vector.load %arg8[%c0_360, %c0_361] : memref<1x128xf32, #tpu.memory_space<vmem>>, vector<1x128xf32>
    %424 = vector.broadcast %423 : vector<1x128xf32> to vector<2x128xf32>
    %425 = arith.addf %422, %424 : vector<2x128xf32>
    %c0_362 = arith.constant 0 : index
    %c0_363 = arith.constant 0 : index
    %426 = vector.load %arg9[%c0_362, %c0_363] : memref<2x128xf32, #tpu.memory_space<vmem>>, vector<2x128xf32>
    tpu.vector_store %arg9[%c0_362, %c0_363], %425 {strides = array<i32>} : memref<2x128xf32, #tpu.memory_space<vmem>>, vector<2x128xf32>,
    return
  }
}

</mosaic_0001>

<llo_original>
// kernel: vgg_forward.1
$region0: #{vgg_forward.1}
  #allocation0 [shape = 'u32[]', space=smem, size = 0x4, offset = 0x4, fixed_abs, tag = 'smem constant byte address 0x4 - core index']
  #allocation1 [shape = 'u32[144,128]{1,0:T(1,128)}', space=vmem, size = 0x12000, scoped, tag = 'internal scratch']
  #allocation2 [shape = 'f32[222,3]{1,0:T(8,128)}', space=vmem, size = 0x1c000, scoped, tag = 'scratch operand']
  #allocation3 [shape = 'f32[200,8]{1,0:T(8,128)}', space=vmem, size = 0x19000, scoped, tag = 'scratch operand']
  #allocation4 [shape = 'f32[86,8]{1,0:T(8,128)}', space=vmem, size = 0xb000, scoped, tag = 'scratch operand']
  #allocation5 [shape = 'f32[72,16]{1,0:T(8,128)}', space=vmem, size = 0x9000, scoped, tag = 'scratch operand']
  #allocation6 [shape = 'f32[42,16]{1,0:T(8,128)}', space=vmem, size = 0x6000, scoped, tag = 'scratch operand']
  #allocation7 [shape = 'f32[32,16]{1,0:T(8,128)}', space=vmem, size = 0x4000, scoped, tag = 'scratch operand']
  #allocation8 [shape = 'f32[2,16]{1,0:T(2,128)}', space=vmem, size = 0x400, scoped, tag = 'scratch operand']
  %s0 = inlined_call_operand.vmem [shape: f32[2,8,8,3], index: 0, kind: input, shape index: {}]
  %s1 = inlined_call_operand.vmem [shape: f32[9,3,8], index: 1, kind: input, shape index: {}]
  %s2 = inlined_call_operand.vmem [shape: f32[1,8], index: 2, kind: input, shape index: {}]
  %s3 = inlined_call_operand.vmem [shape: f32[9,8,16], index: 3, kind: input, shape index: {}]
  %s4 = inlined_call_operand.vmem [shape: f32[1,16], index: 4, kind: input, shape index: {}]
  %s5 = inlined_call_operand.vmem [shape: f32[9,16,16], index: 5, kind: input, shape index: {}]
  %s6 = inlined_call_operand.vmem [shape: f32[1,16], index: 6, kind: input, shape index: {}]
  %s7 = inlined_call_operand.vmem [shape: f32[16,128], index: 7, kind: input, shape index: {}]
  %s8 = inlined_call_operand.vmem [shape: f32[1,128], index: 8, kind: input, shape index: {}]
  %s9 = inlined_call_operand.hbm [shape: f32[2,128], index: 9, kind: output, shape index: {}]
  %s10 = sld [smem:[#allocation0]]
  $region46: #{vgg_forward.1} parent=0
    _
  %s12 = ssub.s32 1, %s10
  %s13 = scalar_select 0, %s12, %s10
  $region1: #{vgg_forward.1} parent=0
    #allocation9 [shape = 'u8[1024]{0}', space=vmem, size = 0x400, scoped, tag = 'output window, operand 0, single buffered']
    #allocation10 [shape = 's32[1]{0}', space=sflag, size = 0x4, scoped, tag = 'scoped memory for vgg_forward.1']
    %14 = vsyncpa [#allocation10], 0
    // Predicated region
    $region2: #{vgg_forward.1} parent=1 // pred_check
      _
    $region3: #{vgg_forward.1} parent=1 // pred_check_branch
      %16 = sbr.rel (0) target = $region5
    $region4: #{vgg_forward.1} parent=1 // pred_region
      _
    $region5: #{vgg_forward.1} parent=1 // pred_fallthru
      _
    // Predicated region
    $region6: #{vgg_forward.1} parent=1 // pred_check
      _
    $region7: #{vgg_forward.1} parent=1 // pred_check_branch
      %18 = sbr.rel (0) target = $region9
    $region8: #{vgg_forward.1} parent=1 // pred_region
      _
    $region9: #{vgg_forward.1} parent=1 // pred_fallthru
      _
    // Predicated region
    $region10: #{vgg_forward.1} parent=1 // pred_check
      _
    $region11: #{vgg_forward.1} parent=1 // pred_check_branch
      %20 = sbr.rel (0) target = $region13
    $region12: #{vgg_forward.1} parent=1 // pred_region
      _
    $region13: #{vgg_forward.1} parent=1 // pred_fallthru
      _
    // Predicated region
    $region14: #{vgg_forward.1} parent=1 // pred_check
      _
    $region15: #{vgg_forward.1} parent=1 // pred_check_branch
      %22 = sbr.rel (0) target = $region17
    $region16: #{vgg_forward.1} parent=1 // pred_region
      _
    $region17: #{vgg_forward.1} parent=1 // pred_fallthru
      _
    // Predicated region
    $region18: #{vgg_forward.1} parent=1 // pred_check
      _
    $region19: #{vgg_forward.1} parent=1 // pred_check_branch
      %24 = sbr.rel (0) target = $region21
    $region20: #{vgg_forward.1} parent=1 // pred_region
      _
    $region21: #{vgg_forward.1} parent=1 // pred_fallthru
      _
    // Predicated region
    $region22: #{vgg_forward.1} parent=1 // pred_check
      _
    $region23: #{vgg_forward.1} parent=1 // pred_check_branch
      %26 = sbr.rel (0) target = $region25
    $region24: #{vgg_forward.1} parent=1 // pred_region
      _
    $region25: #{vgg_forward.1} parent=1 // pred_fallthru
      _
    // Predicated region
    $region26: #{vgg_forward.1} parent=1 // pred_check
      _
    $region27: #{vgg_forward.1} parent=1 // pred_check_branch
      %28 = sbr.rel (0) target = $region29
    $region28: #{vgg_forward.1} parent=1 // pred_region
      _
    $region29: #{vgg_forward.1} parent=1 // pred_fallthru
      _
    // Predicated region
    $region30: #{vgg_forward.1} parent=1 // pred_check
      _
    $region31: #{vgg_forward.1} parent=1 // pred_check_branch
      %30 = sbr.rel (0) target = $region33
    $region32: #{vgg_forward.1} parent=1 // pred_region
      _
    $region33: #{vgg_forward.1} parent=1 // pred_fallthru
      _
    // Predicated region
    $region34: #{vgg_forward.1} parent=1 // pred_check
      _
    $region35: #{vgg_forward.1} parent=1 // pred_check_branch
      %32 = sbr.rel (0) target = $region37
    $region36: #{vgg_forward.1} parent=1 // pred_region
      _
    $region37: #{vgg_forward.1} parent=1 // pred_fallthru
      _
    %vm33 = vcmask 23552
    %34 = vst.msk [vmem:[#allocation2] sm:$0xff] %vm33, 0.0
    %35 = vst.msk [vmem:[#allocation2 + $0x8] sm:$0xff] %vm33, 0.0
    %36 = vst.msk [vmem:[#allocation2 + $0x10] sm:$0xff] %vm33, 0.0
    %37 = vst.msk [vmem:[#allocation2 + $0x18] sm:$0xff] %vm33, 0.0
    %38 = vst.msk [vmem:[#allocation2 + $0x20] sm:$0xff] %vm33, 0.0
    %39 = vst.msk [vmem:[#allocation2 + $0x28] sm:$0xff] %vm33, 0.0
    %40 = vst.msk [vmem:[#allocation2 + $0x30] sm:$0xff] %vm33, 0.0
    %41 = vst.msk [vmem:[#allocation2 + $0x38] sm:$0xff] %vm33, 0.0
    %42 = vst.msk [vmem:[#allocation2 + $0x40] sm:$0xff] %vm33, 0.0
    %43 = vst.msk [vmem:[#allocation2 + $0x48] sm:$0xff] %vm33, 0.0
    %44 = vst.msk [vmem:[#allocation2 + $0x50] sm:$0xff] %vm33, 0.0
    %45 = vst.msk [vmem:[#allocation2 + $0x58] sm:$0xff] %vm33, 0.0
    %46 = vst.msk [vmem:[#allocation2 + $0x60] sm:$0xff] %vm33, 0.0
    %47 = vst.msk [vmem:[#allocation2 + $0x68] sm:$0xff] %vm33, 0.0
    %48 = vst.msk [vmem:[#allocation2 + $0x70] sm:$0xff] %vm33, 0.0
    %49 = vst.msk [vmem:[#allocation2 + $0x78] sm:$0xff] %vm33, 0.0
    %50 = vst.msk [vmem:[#allocation2 + $0x80] sm:$0xff] %vm33, 0.0
    %51 = vst.msk [vmem:[#allocation2 + $0x88] sm:$0xff] %vm33, 0.0
    %52 = vst.msk [vmem:[#allocation2 + $0x90] sm:$0xff] %vm33, 0.0
    %53 = vst.msk [vmem:[#allocation2 + $0x98] sm:$0xff] %vm33, 0.0
    %54 = vst.msk [vmem:[#allocation2 + $0xa0] sm:$0xff] %vm33, 0.0
    %55 = vst.msk [vmem:[#allocation2 + $0xa8] sm:$0xff] %vm33, 0.0
    %56 = vst.msk [vmem:[#allocation2 + $0xb0] sm:$0xff] %vm33, 0.0
    %57 = vst.msk [vmem:[#allocation2 + $0xb8] sm:$0xff] %vm33, 0.0
    %58 = vst.msk [vmem:[#allocation2 + $0xc0] sm:$0xff] %vm33, 0.0
    %59 = vst.msk [vmem:[#allocation2 + $0xc8] sm:$0xff] %vm33, 0.0
    %60 = vst.msk [vmem:[#allocation2 + $0xd0] sm:$0xff] %vm33, 0.0
    %vm61 = vcmask 21504
    %62 = vst.msk [vmem:[#allocation2 + $0xd8] sm:$0x3f] %vm61, 0.0
    %v63 = vld [vmem:[%s0] sm:$0xff]
    %64 = vst.msk [vmem:[#allocation2 + $0x16] sm:$0xff] %vm33, %v63
    %s65 = scalar_lea.vmem %s0, 8
    %v66 = vld [vmem:[%s65] sm:$0xff]
    %67 = vst.msk [vmem:[#allocation2 + $0x20] sm:$0xff] %vm33, %v66
    %s68 = scalar_lea.vmem %s0, 16
    %v69 = vld [vmem:[%s68] sm:$0xff]
    %70 = vst.msk [vmem:[#allocation2 + $0x2a] sm:$0xff] %vm33, %v69
    %s71 = scalar_lea.vmem %s0, 24
    %v72 = vld [vmem:[%s71] sm:$0xff]
    %73 = vst.msk [vmem:[#allocation2 + $0x34] sm:$0xff] %vm33, %v72
    %s74 = scalar_lea.vmem %s0, 32
    %v75 = vld [vmem:[%s74] sm:$0xff]
    %76 = vst.msk [vmem:[#allocation2 + $0x3e] sm:$0xff] %vm33, %v75
    %s77 = scalar_lea.vmem %s0, 40
    %v78 = vld [vmem:[%s77] sm:$0xff]
    %79 = vst.msk [vmem:[#allocation2 + $0x48] sm:$0xff] %vm33, %v78
    %s80 = scalar_lea.vmem %s0, 48
    %v81 = vld [vmem:[%s80] sm:$0xff]
    %82 = vst.msk [vmem:[#allocation2 + $0x52] sm:$0xff] %vm33, %v81
    %s83 = scalar_lea.vmem %s0, 56
    %v84 = vld [vmem:[%s83] sm:$0xff]
    %85 = vst.msk [vmem:[#allocation2 + $0x5c] sm:$0xff] %vm33, %v84
    %s86 = scalar_lea.vmem %s0, 64
    %v87 = vld [vmem:[%s86] sm:$0xff]
    %88 = vst.msk [vmem:[#allocation2 + $0x7a] sm:$0xff] %vm33, %v87
    %s89 = scalar_lea.vmem %s0, 72
    %v90 = vld [vmem:[%s89] sm:$0xff]
    %91 = vst.msk [vmem:[#allocation2 + $0x84] sm:$0xff] %vm33, %v90
    %s92 = scalar_lea.vmem %s0, 80
    %v93 = vld [vmem:[%s92] sm:$0xff]
    %94 = vst.msk [vmem:[#allocation2 + $0x8e] sm:$0xff] %vm33, %v93
    %s95 = scalar_lea.vmem %s0, 88
    %v96 = vld [vmem:[%s95] sm:$0xff]
    %97 = vst.msk [vmem:[#allocation2 + $0x98] sm:$0xff] %vm33, %v96
    %s98 = scalar_lea.vmem %s0, 96
    %v99 = vld [vmem:[%s98] sm:$0xff]
    %100 = vst.msk [vmem:[#allocation2 + $0xa2] sm:$0xff] %vm33, %v99
    %s101 = scalar_lea.vmem %s0, 104
    %v102 = vld [vmem:[%s101] sm:$0xff]
    %103 = vst.msk [vmem:[#allocation2 + $0xac] sm:$0xff] %vm33, %v102
    %s104 = scalar_lea.vmem %s0, 112
    %v105 = vld [vmem:[%s104] sm:$0xff]
    %106 = vst.msk [vmem:[#allocation2 + $0xb6] sm:$0xff] %vm33, %v105
    %s107 = scalar_lea.vmem %s0, 120
    %v108 = vld [vmem:[%s107] sm:$0xff]
    %109 = vst.msk [vmem:[#allocation2 + $0xc0] sm:$0xff] %vm33, %v108
    %v110 = vld [vmem:[#allocation2] sm:$0xff]
    %v111 = vld [vmem:[#allocation2 + $0x8] sm:$0xff]
    %v112 = vld [vmem:[#allocation2 + $0x10] sm:$0xff]
    %v113 = vld [vmem:[#allocation2 + $0x18] sm:$0xff]
    %v114 = vld [vmem:[#allocation2 + $0x20] sm:$0xff]
    %v115 = vld [vmem:[#allocation2 + $0x28] sm:$0xff]
    %v116 = vld [vmem:[#allocation2 + $0x30] sm:$0xff]
    %v117 = vld [vmem:[#allocation2 + $0x38] sm:$0xff]
    %v118 = vld [vmem:[#allocation2 + $0x40] sm:$0xff]
    %v119 = vld [vmem:[#allocation2 + $0x48] sm:$0xff]
    %v120 = vld [vmem:[#allocation2 + $0x50] sm:$0xff]
    %v121 = vld [vmem:[#allocation2 + $0x58] sm:$0xff]
    %v122 = vld [vmem:[#allocation2 + $0x60] sm:$0xff]
    %v123 = vld [vmem:[#allocation2 + $0x68] sm:$0xff]
    %v124 = vld [vmem:[#allocation2 + $0x70] sm:$0xff]
    %v125 = vld [vmem:[#allocation2 + $0x78] sm:$0xff]
    %v126 = vld [vmem:[#allocation2 + $0x80] sm:$0xff]
    %v127 = vld [vmem:[#allocation2 + $0x88] sm:$0xff]
    %v128 = vld [vmem:[#allocation2 + $0x90] sm:$0xff]
    %v129 = vld [vmem:[#allocation2 + $0x98] sm:$0xff]
    %v130 = vld [vmem:[#allocation2 + $0xa0] sm:$0xff]
    %v131 = vld [vmem:[#allocation2 + $0xa8] sm:$0xff]
    %v132 = vld [vmem:[#allocation2 + $0xb0] sm:$0xff]
    %v133 = vld [vmem:[#allocation2 + $0xb8] sm:$0xff]
    %v134 = vld [vmem:[#allocation2 + $0xc0] sm:$0xff]
    %v135 = vld [vmem:[%s1] sm:$0x7]
    %v136 = vld [vmem:[#allocation2 + $0x1] sm:$0xff]
    %v137 = vld [vmem:[#allocation2 + $0x9] sm:$0xff]
    %v138 = vld [vmem:[#allocation2 + $0x11] sm:$0xff]
    %v139 = vld [vmem:[#allocation2 + $0x19] sm:$0xff]
    %v140 = vld [vmem:[#allocation2 + $0x21] sm:$0xff]
    %v141 = vld [vmem:[#allocation2 + $0x29] sm:$0xff]
    %v142 = vld [vmem:[#allocation2 + $0x31] sm:$0xff]
    %v143 = vld [vmem:[#allocation2 + $0x39] sm:$0xff]
    %v144 = vld [vmem:[#allocation2 + $0x41] sm:$0xff]
    %v145 = vld [vmem:[#allocation2 + $0x49] sm:$0xff]
    %v146 = vld [vmem:[#allocation2 + $0x51] sm:$0xff]
    %v147 = vld [vmem:[#allocation2 + $0x59] sm:$0xff]
    %v148 = vld [vmem:[#allocation2 + $0x61] sm:$0xff]
    %v149 = vld [vmem:[#allocation2 + $0x69] sm:$0xff]
    %v150 = vld [vmem:[#allocation2 + $0x71] sm:$0xff]
    %v151 = vld [vmem:[#allocation2 + $0x79] sm:$0xff]
    %v152 = vld [vmem:[#allocation2 + $0x81] sm:$0xff]
    %v153 = vld [vmem:[#allocation2 + $0x89] sm:$0xff]
    %v154 = vld [vmem:[#allocation2 + $0x91] sm:$0xff]
    %v155 = vld [vmem:[#allocation2 + $0x99] sm:$0xff]
    %v156 = vld [vmem:[#allocation2 + $0xa1] sm:$0xff]
    %v157 = vld [vmem:[#allocation2 + $0xa9] sm:$0xff]
    %v158 = vld [vmem:[#allocation2 + $0xb1] sm:$0xff]
    %v159 = vld [vmem:[#allocation2 + $0xb9] sm:$0xff]
    %v160 = vld [vmem:[#allocation2 + $0xc1] sm:$0xff]
    %s161 = scalar_lea.vmem %s1, 4
    %v162 = vld [vmem:[%s161] sm:$0x7]
    %v164 = vsel %vm33, %v136, 0
    %v167 = vsel %vm33, %v137, 0
    %v170 = vsel %vm33, %v138, 0
    %v173 = vsel %vm33, %v139, 0
    %v176 = vsel %vm33, %v140, 0
    %v179 = vsel %vm33, %v141, 0
    %v182 = vsel %vm33, %v142, 0
    %v185 = vsel %vm33, %v143, 0
    %v188 = vsel %vm33, %v144, 0
    %v191 = vsel %vm33, %v145, 0
    %v194 = vsel %vm33, %v146, 0
    %v197 = vsel %vm33, %v147, 0
    %v200 = vsel %vm33, %v148, 0
    %v203 = vsel %vm33, %v149, 0
    %v206 = vsel %vm33, %v150, 0
    %v209 = vsel %vm33, %v151, 0
    %v212 = vsel %vm33, %v152, 0
    %v215 = vsel %vm33, %v153, 0
    %v218 = vsel %vm33, %v154, 0
    %v221 = vsel %vm33, %v155, 0
    %v224 = vsel %vm33, %v156, 0
    %v227 = vsel %vm33, %v157, 0
    %v230 = vsel %vm33, %v158, 0
    %v233 = vsel %vm33, %v159, 0
    %v236 = vsel %vm33, %v160, 0
    %vm238 = vcmask 1042432
    %v240 = vsel %vm238, %v162, 0
    %242 = vmatprep.subr.mxu0 0.0
    %243 = vmatpush1.msra.mxu0 %v240
    %244 = vmatprep.subr.mxu0 0.0
    %245 = vmatpush1.msra.mxu0 0.0
    %246 = vmatprep.subr.mxu0 0.0
    %247 = vmatpush1.msra.mxu0 0.0
    %248 = vmatprep.subr.mxu0 0.0
    %249 = vmatpush1.msra.mxu0 0.0
    %250 = vmatprep.subr.mxu0 0.0
    %251 = vmatpush1.msra.mxu0 0.0
    %252 = vmatprep.subr.mxu0 0.0
    %253 = vmatpush1.msra.mxu0 0.0
    %254 = vmatprep.subr.mxu0 0.0
    %255 = vmatpush1.msra.mxu0 0.0
    %256 = vmatprep.subr.mxu0 0.0
    %257 = vmatpush1.msra.mxu0 0.0
    %258 = vmatprep.subr.mxu0 0.0
    %259 = vmatpush1.msra.mxu0 0.0
    %260 = vmatprep.subr.mxu0 0.0
    %261 = vmatpush1.msra.mxu0 0.0
    %262 = vmatprep.subr.mxu0 0.0
    %263 = vmatpush1.msra.mxu0 0.0
    %264 = vmatprep.subr.mxu0 0.0
    %265 = vmatpush1.msra.mxu0 0.0
    %266 = vmatprep.subr.mxu0 0.0
    %267 = vmatpush1.msra.mxu0 0.0
    %268 = vmatprep.subr.mxu0 0.0
    %269 = vmatpush1.msra.mxu0 0.0
    %270 = vmatprep.subr.mxu0 0.0
    %271 = vmatpush1.msra.mxu0 0.0
    %272 = vmatprep.subr.mxu0 0.0
    %273 = vmatpush1.msra.mxu0 0.0
    %274 = vmatprep.subr.mxu0 0.0
    %275 = vmatpush1.msra.mxu0 0.0
    %276 = vmatprep.subr.mxu0 0.0
    %277 = vmatpush1.msra.mxu0 0.0
    %278 = vmatprep.subr.mxu0 0.0
    %279 = vmatpush1.msra.mxu0 0.0
    %280 = vmatprep.subr.mxu0 0.0
    %281 = vmatpush1.msra.mxu0 0.0
    %282 = vmatprep.subr.mxu0 0.0
    %283 = vmatpush1.msra.mxu0 0.0
    %284 = vmatprep.subr.mxu0 0.0
    %285 = vmatpush1.msra.mxu0 0.0
    %286 = vmatprep.subr.mxu0 0.0
    %287 = vmatpush1.msra.mxu0 0.0
    %288 = vmatprep.subr.mxu0 0.0
    %289 = vmatpush1.msra.mxu0 0.0
    %290 = vmatprep.subr.mxu0 0.0
    %291 = vmatpush1.msra.mxu0 0.0
    %292 = vmatprep.subr.mxu0 0.0
    %293 = vmatpush1.msra.mxu0 0.0
    %294 = vmatprep.subr.mxu0 0.0
    %295 = vmatpush1.msra.mxu0 0.0
    %296 = vmatprep.subr.mxu0 0.0
    %297 = vmatpush1.msra.mxu0 0.0
    %298 = vmatprep.subr.mxu0 0.0
    %299 = vmatpush1.msra.mxu0 0.0
    %300 = vmatprep.subr.mxu0 0.0
    %301 = vmatpush1.msra.mxu0 0.0
    %302 = vmatprep.subr.mxu0 0.0
    %303 = vmatpush1.msra.mxu0 0.0
    %304 = vmatprep.subr.mxu0 0.0
    %305 = vmatpush1.msra.mxu0 0.0
    %306 = vmatprep.mubr.f32.mxu0 0.0
    %307 = vmatmul.mubr.f32.gmra.mrb[0].mxu0 %v164
    %v308 = vpop.f32.mrb[0].mxu0
    %v309 = vadd.f32 0.0, %v308
    %v310 = vpop.f32.mrb[0].mxu0
    %311 = vmatprep.mubr.f32.mxu0 0.0
    %312 = vmatmul.mubr.f32.gmra.mrb[0].mxu0 %v167
    %v313 = vpop.f32.mrb[0].mxu0
    %v314 = vadd.f32 0.0, %v313
    %v315 = vpop.f32.mrb[0].mxu0
    %316 = vmatprep.mubr.f32.mxu0 0.0
    %317 = vmatmul.mubr.f32.gmra.mrb[0].mxu0 %v170
    %v318 = vpop.f32.mrb[0].mxu0
    %v319 = vadd.f32 0.0, %v318
    %v320 = vpop.f32.mrb[0].mxu0
    %321 = vmatprep.mubr.f32.mxu0 0.0
    %322 = vmatmul.mubr.f32.gmra.mrb[0].mxu0 %v173
    %v323 = vpop.f32.mrb[0].mxu0
    %v324 = vadd.f32 0.0, %v323
    %v325 = vpop.f32.mrb[0].mxu0
    %326 = vmatprep.mubr.f32.mxu0 0.0
    %327 = vmatmul.mubr.f32.gmra.mrb[0].mxu0 %v176
    %v328 = vpop.f32.mrb[0].mxu0
    %v329 = vadd.f32 0.0, %v328
    %v330 = vpop.f32.mrb[0].mxu0
    %331 = vmatprep.mubr.f32.mxu0 0.0
    %332 = vmatmul.mubr.f32.gmra.mrb[0].mxu0 %v179
    %v333 = vpop.f32.mrb[0].mxu0
    %v334 = vadd.f32 0.0, %v333
    %v335 = vpop.f32.mrb[0].mxu0
    %336 = vmatprep.mubr.f32.mxu0 0.0
    %337 = vmatmul.mubr.f32.gmra.mrb[0].mxu0 %v182
    %v338 = vpop.f32.mrb[0].mxu0
    %v339 = vadd.f32 0.0, %v338
    %v340 = vpop.f32.mrb[0].mxu0
    %341 = vmatprep.mubr.f32.mxu0 0.0
    %342 = vmatmul.mubr.f32.gmra.mrb[0].mxu0 %v185
    %v343 = vpop.f32.mrb[0].mxu0
    %v344 = vadd.f32 0.0, %v343
    %v345 = vpop.f32.mrb[0].mxu0
    %346 = vmatprep.mubr.f32.mxu0 0.0
    %347 = vmatmul.mubr.f32.gmra.mrb[0].mxu0 %v188
    %v348 = vpop.f32.mrb[0].mxu0
    %v349 = vadd.f32 0.0, %v348
    %v350 = vpop.f32.mrb[0].mxu0
    %351 = vmatprep.mubr.f32.mxu0 0.0
    %352 = vmatmul.mubr.f32.gmra.mrb[0].mxu0 %v191
    %v353 = vpop.f32.mrb[0].mxu0
    %v354 = vadd.f32 0.0, %v353
    %v355 = vpop.f32.mrb[0].mxu0
    %356 = vmatprep.mubr.f32.mxu0 0.0
    %357 = vmatmul.mubr.f32.gmra.mrb[0].mxu0 %v194
    %v358 = vpop.f32.mrb[0].mxu0
    %v359 = vadd.f32 0.0, %v358
    %v360 = vpop.f32.mrb[0].mxu0
    %361 = vmatprep.mubr.f32.mxu0 0.0
    %362 = vmatmul.mubr.f32.gmra.mrb[0].mxu0 %v197
    %v363 = vpop.f32.mrb[0].mxu0
    %v364 = vadd.f32 0.0, %v363
    %v365 = vpop.f32.mrb[0].mxu0
    %366 = vmatprep.mubr.f32.mxu0 0.0
    %367 = vmatmul.mubr.f32.gmra.mrb[0].mxu0 %v200
    %v368 = vpop.f32.mrb[0].mxu0
    %v369 = vadd.f32 0.0, %v368
    %v370 = vpop.f32.mrb[0].mxu0
    %371 = vmatprep.mubr.f32.mxu0 0.0
    %372 = vmatmul.mubr.f32.gmra.mrb[0].mxu0 %v203
    %v373 = vpop.f32.mrb[0].mxu0
    %v374 = vadd.f32 0.0, %v373
    %v375 = vpop.f32.mrb[0].mxu0
    %376 = vmatprep.mubr.f32.mxu0 0.0
    %377 = vmatmul.mubr.f32.gmra.mrb[0].mxu0 %v206
    %v378 = vpop.f32.mrb[0].mxu0
    %v379 = vadd.f32 0.0, %v378
    %v380 = vpop.f32.mrb[0].mxu0
    %381 = vmatprep.mubr.f32.mxu0 0.0
    %382 = vmatmul.mubr.f32.gmra.mrb[0].mxu0 %v209
    %v383 = vpop.f32.mrb[0].mxu0
    %v384 = vadd.f32 0.0, %v383
    %v385 = vpop.f32.mrb[0].mxu0
    %386 = vmatprep.mubr.f32.mxu0 0.0
    %387 = vmatmul.mubr.f32.gmra.mrb[0].mxu0 %v212
    %v388 = vpop.f32.mrb[0].mxu0
    %v389 = vadd.f32 0.0, %v388
    %v390 = vpop.f32.mrb[0].mxu0
    %391 = vmatprep.mubr.f32.mxu0 0.0
    %392 = vmatmul.mubr.f32.gmra.mrb[0].mxu0 %v215
    %v393 = vpop.f32.mrb[0].mxu0
    %v394 = vadd.f32 0.0, %v393
    %v395 = vpop.f32.mrb[0].mxu0
    %396 = vmatprep.mubr.f32.mxu0 0.0
    %397 = vmatmul.mubr.f32.gmra.mrb[0].mxu0 %v218
    %v398 = vpop.f32.mrb[0].mxu0
    %v399 = vadd.f32 0.0, %v398
    %v400 = vpop.f32.mrb[0].mxu0
    %401 = vmatprep.mubr.f32.mxu0 0.0
    %402 = vmatmul.mubr.f32.gmra.mrb[0].mxu0 %v221
    %v403 = vpop.f32.mrb[0].mxu0
    %v404 = vadd.f32 0.0, %v403
    %v405 = vpop.f32.mrb[0].mxu0
    %406 = vmatprep.mubr.f32.mxu0 0.0
    %407 = vmatmul.mubr.f32.gmra.mrb[0].mxu0 %v224
    %v408 = vpop.f32.mrb[0].mxu0
    %v409 = vadd.f32 0.0, %v408
    %v410 = vpop.f32.mrb[0].mxu0
    %411 = vmatprep.mubr.f32.mxu0 0.0
    %412 = vmatmul.mubr.f32.gmra.mrb[0].mxu0 %v227
    %v413 = vpop.f32.mrb[0].mxu0
    %v414 = vadd.f32 0.0, %v413
    %v415 = vpop.f32.mrb[0].mxu0
    %416 = vmatprep.mubr.f32.mxu0 0.0
    %417 = vmatmul.mubr.f32.gmra.mrb[0].mxu0 %v230
    %v418 = vpop.f32.mrb[0].mxu0
    %v419 = vadd.f32 0.0, %v418
    %v420 = vpop.f32.mrb[0].mxu0
    %421 = vmatprep.mubr.f32.mxu0 0.0
    %422 = vmatmul.mubr.f32.gmra.mrb[0].mxu0 %v233
    %v423 = vpop.f32.mrb[0].mxu0
    %v424 = vadd.f32 0.0, %v423
    %v425 = vpop.f32.mrb[0].mxu0
    %426 = vmatprep.mubr.f32.mxu0 0.0
    %427 = vmatmul.mubr.f32.gmra.mrb[0].mxu0 %v236
    %v428 = vpop.f32.mrb[0].mxu0
    %v429 = vadd.f32 0.0, %v428
    %v430 = vpop.f32.mrb[0].mxu0
    %431 = vdwg.mxu0
    %v433 = vsel %vm33, %v110, 0
    %v436 = vsel %vm33, %v111, 0
    %v439 = vsel %vm33, %v112, 0
    %v442 = vsel %vm33, %v113, 0
    %v445 = vsel %vm33, %v114, 0
    %v448 = vsel %vm33, %v115, 0
    %v451 = vsel %vm33, %v116, 0
    %v454 = vsel %vm33, %v117, 0
    %v457 = vsel %vm33, %v118, 0
    %v460 = vsel %vm33, %v119, 0
    %v463 = vsel %vm33, %v120, 0
    %v466 = vsel %vm33, %v121, 0
    %v469 = vsel %vm33, %v122, 0
    %v472 = vsel %vm33, %v123, 0
    %v475 = vsel %vm33, %v124, 0
    %v478 = vsel %vm33, %v125, 0
    %v481 = vsel %vm33, %v126, 0
    %v484 = vsel %vm33, %v127, 0
    %v487 = vsel %vm33, %v128, 0
    %v490 = vsel %vm33, %v129, 0
    %v493 = vsel %vm33, %v130, 0
    %v496 = vsel %vm33, %v131, 0
    %v499 = vsel %vm33, %v132, 0
    %v502 = vsel %vm33, %v133, 0
    %v505 = vsel %vm33, %v134, 0
    %v508 = vsel %vm238, %v135, 0
    %510 = vmatprep.subr.mxu0 0.0
    %511 = vmatpush1.msra.mxu0 %v508
    %512 = vmatprep.subr.mxu0 0.0
    %513 = vmatpush1.msra.mxu0 0.0
    %514 = vmatprep.subr.mxu0 0.0
    %515 = vmatpush1.msra.mxu0 0.0
    %516 = vmatprep.subr.mxu0 0.0
    %517 = vmatpush1.msra.mxu0 0.0
    %518 = vmatprep.subr.mxu0 0.0
    %519 = vmatpush1.msra.mxu0 0.0
    %520 = vmatprep.subr.mxu0 0.0
    %521 = vmatpush1.msra.mxu0 0.0
    %522 = vmatprep.subr.mxu0 0.0
    %523 = vmatpush1.msra.mxu0 0.0
    %524 = vmatprep.subr.mxu0 0.0
    %525 = vmatpush1.msra.mxu0 0.0
    %526 = vmatprep.subr.mxu0 0.0
    %527 = vmatpush1.msra.mxu0 0.0
    %528 = vmatprep.subr.mxu0 0.0
    %529 = vmatpush1.msra.mxu0 0.0
    %530 = vmatprep.subr.mxu0 0.0
    %531 = vmatpush1.msra.mxu0 0.0
    %532 = vmatprep.subr.mxu0 0.0
    %533 = vmatpush1.msra.mxu0 0.0
    %534 = vmatprep.subr.mxu0 0.0
    %535 = vmatpush1.msra.mxu0 0.0
    %536 = vmatprep.subr.mxu0 0.0
    %537 = vmatpush1.msra.mxu0 0.0
    %538 = vmatprep.subr.mxu0 0.0
    %539 = vmatpush1.msra.mxu0 0.0
    %540 = vmatprep.subr.mxu0 0.0
    %541 = vmatpush1.msra.mxu0 0.0
    %542 = vmatprep.subr.mxu0 0.0
    %543 = vmatpush1.msra.mxu0 0.0
    %544 = vmatprep.subr.mxu0 0.0
    %545 = vmatpush1.msra.mxu0 0.0
    %546 = vmatprep.subr.mxu0 0.0
    %547 = vmatpush1.msra.mxu0 0.0
    %548 = vmatprep.subr.mxu0 0.0
    %549 = vmatpush1.msra.mxu0 0.0
    %550 = vmatprep.subr.mxu0 0.0
    %551 = vmatpush1.msra.mxu0 0.0
    %552 = vmatprep.subr.mxu0 0.0
    %553 = vmatpush1.msra.mxu0 0.0
    %554 = vmatprep.subr.mxu0 0.0
    %555 = vmatpush1.msra.mxu0 0.0
    %556 = vmatprep.subr.mxu0 0.0
    %557 = vmatpush1.msra.mxu0 0.0
    %558 = vmatprep.subr.mxu0 0.0
    %559 = vmatpush1.msra.mxu0 0.0
    %560 = vmatprep.subr.mxu0 0.0
    %561 = vmatpush1.msra.mxu0 0.0
    %562 = vmatprep.subr.mxu0 0.0
    %563 = vmatpush1.msra.mxu0 0.0
    %564 = vmatprep.subr.mxu0 0.0
    %565 = vmatpush1.msra.mxu0 0.0
    %566 = vmatprep.subr.mxu0 0.0
    %567 = vmatpush1.msra.mxu0 0.0
    %568 = vmatprep.subr.mxu0 0.0
    %569 = vmatpush1.msra.mxu0 0.0
    %570 = vmatprep.subr.mxu0 0.0
    %571 = vmatpush1.msra.mxu0 0.0
    %572 = vmatprep.subr.mxu0 0.0
    %573 = vmatpush1.msra.mxu0 0.0
    %574 = vmatprep.mubr.f32.mxu0 0.0
    %575 = vmatmul.mubr.f32.gmra.mrb[0].mxu0 %v433
    %v576 = vpop.f32.mrb[0].mxu0
    %v577 = vadd.f32 %v309, %v576
    %v578 = vpop.f32.mrb[0].mxu0
    %579 = vmatprep.mubr.f32.mxu0 0.0
    %580 = vmatmul.mubr.f32.gmra.mrb[0].mxu0 %v436
    %v581 = vpop.f32.mrb[0].mxu0
    %v582 = vadd.f32 %v314, %v581
    %v583 = vpop.f32.mrb[0].mxu0
    %584 = vmatprep.mubr.f32.mxu0 0.0
    %585 = vmatmul.mubr.f32.gmra.mrb[0].mxu0 %v439
    %v586 = vpop.f32.mrb[0].mxu0
    %v587 = vadd.f32 %v319, %v586
    %v588 = vpop.f32.mrb[0].mxu0
    %589 = vmatprep.mubr.f32.mxu0 0.0
    %590 = vmatmul.mubr.f32.gmra.mrb[0].mxu0 %v442
    %v591 = vpop.f32.mrb[0].mxu0
    %v592 = vadd.f32 %v324, %v591
    %v593 = vpop.f32.mrb[0].mxu0
    %594 = vmatprep.mubr.f32.mxu0 0.0
    %595 = vmatmul.mubr.f32.gmra.mrb[0].mxu0 %v445
    %v596 = vpop.f32.mrb[0].mxu0
    %v597 = vadd.f32 %v329, %v596
    %v598 = vpop.f32.mrb[0].mxu0
    %599 = vmatprep.mubr.f32.mxu0 0.0
    %600 = vmatmul.mubr.f32.gmra.mrb[0].mxu0 %v448
    %v601 = vpop.f32.mrb[0].mxu0
    %v602 = vadd.f32 %v334, %v601
    %v603 = vpop.f32.mrb[0].mxu0
    %604 = vmatprep.mubr.f32.mxu0 0.0
    %605 = vmatmul.mubr.f32.gmra.mrb[0].mxu0 %v451
    %v606 = vpop.f32.mrb[0].mxu0
    %v607 = vadd.f32 %v339, %v606
    %v608 = vpop.f32.mrb[0].mxu0
    %609 = vmatprep.mubr.f32.mxu0 0.0
    %610 = vmatmul.mubr.f32.gmra.mrb[0].mxu0 %v454
    %v611 = vpop.f32.mrb[0].mxu0
    %v612 = vadd.f32 %v344, %v611
    %v613 = vpop.f32.mrb[0].mxu0
    %614 = vmatprep.mubr.f32.mxu0 0.0
    %615 = vmatmul.mubr.f32.gmra.mrb[0].mxu0 %v457
    %v616 = vpop.f32.mrb[0].mxu0
    %v617 = vadd.f32 %v349, %v616
    %v618 = vpop.f32.mrb[0].mxu0
    %619 = vmatprep.mubr.f32.mxu0 0.0
    %620 = vmatmul.mubr.f32.gmra.mrb[0].mxu0 %v460
    %v621 = vpop.f32.mrb[0].mxu0
    %v622 = vadd.f32 %v354, %v621
    %v623 = vpop.f32.mrb[0].mxu0
    %624 = vmatprep.mubr.f32.mxu0 0.0
    %625 = vmatmul.mubr.f32.gmra.mrb[0].mxu0 %v463
    %v626 = vpop.f32.mrb[0].mxu0
    %v627 = vadd.f32 %v359, %v626
    %v628 = vpop.f32.mrb[0].mxu0
    %629 = vmatprep.mubr.f32.mxu0 0.0
    %630 = vmatmul.mubr.f32.gmra.mrb[0].mxu0 %v466
    %v631 = vpop.f32.mrb[0].mxu0
    %v632 = vadd.f32 %v364, %v631
    %v633 = vpop.f32.mrb[0].mxu0
    %634 = vmatprep.mubr.f32.mxu0 0.0
    %635 = vmatmul.mubr.f32.gmra.mrb[0].mxu0 %v469
    %v636 = vpop.f32.mrb[0].mxu0
    %v637 = vadd.f32 %v369, %v636
    %v638 = vpop.f32.mrb[0].mxu0
    %639 = vmatprep.mubr.f32.mxu0 0.0
    %640 = vmatmul.mubr.f32.gmra.mrb[0].mxu0 %v472
    %v641 = vpop.f32.mrb[0].mxu0
    %v642 = vadd.f32 %v374, %v641
    %v643 = vpop.f32.mrb[0].mxu0
    %644 = vmatprep.mubr.f32.mxu0 0.0
    %645 = vmatmul.mubr.f32.gmra.mrb[0].mxu0 %v475
    %v646 = vpop.f32.mrb[0].mxu0
    %v647 = vadd.f32 %v379, %v646
    %v648 = vpop.f32.mrb[0].mxu0
    %649 = vmatprep.mubr.f32.mxu0 0.0
    %650 = vmatmul.mubr.f32.gmra.mrb[0].mxu0 %v478
    %v651 = vpop.f32.mrb[0].mxu0
    %v652 = vadd.f32 %v384, %v651
    %v653 = vpop.f32.mrb[0].mxu0
    %654 = vmatprep.mubr.f32.mxu0 0.0
    %655 = vmatmul.mubr.f32.gmra.mrb[0].mxu0 %v481
    %v656 = vpop.f32.mrb[0].mxu0
    %v657 = vadd.f32 %v389, %v656
    %v658 = vpop.f32.mrb[0].mxu0
    %659 = vmatprep.mubr.f32.mxu0 0.0
    %660 = vmatmul.mubr.f32.gmra.mrb[0].mxu0 %v484
    %v661 = vpop.f32.mrb[0].mxu0
    %v662 = vadd.f32 %v394, %v661
    %v663 = vpop.f32.mrb[0].mxu0
    %664 = vmatprep.mubr.f32.mxu0 0.0
    %665 = vmatmul.mubr.f32.gmra.mrb[0].mxu0 %v487
    %v666 = vpop.f32.mrb[0].mxu0
    %v667 = vadd.f32 %v399, %v666
    %v668 = vpop.f32.mrb[0].mxu0
    %669 = vmatprep.mubr.f32.mxu0 0.0
    %670 = vmatmul.mubr.f32.gmra.mrb[0].mxu0 %v490
    %v671 = vpop.f32.mrb[0].mxu0
    %v672 = vadd.f32 %v404, %v671
    %v673 = vpop.f32.mrb[0].mxu0
    %674 = vmatprep.mubr.f32.mxu0 0.0
    %675 = vmatmul.mubr.f32.gmra.mrb[0].mxu0 %v493
    %v676 = vpop.f32.mrb[0].mxu0
    %v677 = vadd.f32 %v409, %v676
    %v678 = vpop.f32.mrb[0].mxu0
    %679 = vmatprep.mubr.f32.mxu0 0.0
    %680 = vmatmul.mubr.f32.gmra.mrb[0].mxu0 %v496
    %v681 = vpop.f32.mrb[0].mxu0
    %v682 = vadd.f32 %v414, %v681
    %v683 = vpop.f32.mrb[0].mxu0
    %684 = vmatprep.mubr.f32.mxu0 0.0
    %685 = vmatmul.mubr.f32.gmra.mrb[0].mxu0 %v499
    %v686 = vpop.f32.mrb[0].mxu0
    %v687 = vadd.f32 %v419, %v686
    %v688 = vpop.f32.mrb[0].mxu0
    %689 = vmatprep.mubr.f32.mxu0 0.0
    %690 = vmatmul.mubr.f32.gmra.mrb[0].mxu0 %v502
    %v691 = vpop.f32.mrb[0].mxu0
    %v692 = vadd.f32 %v424, %v691
    %v693 = vpop.f32.mrb[0].mxu0
    %694 = vmatprep.mubr.f32.mxu0 0.0
    %695 = vmatmul.mubr.f32.gmra.mrb[0].mxu0 %v505
    %v696 = vpop.f32.mrb[0].mxu0
    %v697 = vadd.f32 %v429, %v696
    %v698 = vpop.f32.mrb[0].mxu0
    %699 = vdwg.mxu0
    %v700 = vld [vmem:[#allocation2 + $0x2] sm:$0xff]
    %v701 = vld [vmem:[#allocation2 + $0xa] sm:$0xff]
    %v702 = vld [vmem:[#allocation2 + $0x12] sm:$0xff]
    %v703 = vld [vmem:[#allocation2 + $0x1a] sm:$0xff]
    %v704 = vld [vmem:[#allocation2 + $0x22] sm:$0xff]
    %v705 = vld [vmem:[#allocation2 + $0x2a] sm:$0xff]
    %v706 = vld [vmem:[#allocation2 + $0x32] sm:$0xff]
    %v707 = vld [vmem:[#allocation2 + $0x3a] sm:$0xff]
    %v708 = vld [vmem:[#allocation2 + $0x42] sm:$0xff]
    %v709 = vld [vmem:[#allocation2 + $0x4a] sm:$0xff]
    %v710 = vld [vmem:[#allocation2 + $0x52] sm:$0xff]
    %v711 = vld [vmem:[#allocation2 + $0x5a] sm:$0xff]
    %v712 = vld [vmem:[#allocation2 + $0x62] sm:$0xff]
    %v713 = vld [vmem:[#allocation2 + $0x6a] sm:$0xff]
    %v714 = vld [vmem:[#allocation2 + $0x72] sm:$0xff]
    %v715 = vld [vmem:[#allocation2 + $0x7a] sm:$0xff]
    %v716 = vld [vmem:[#allocation2 + $0x82] sm:$0xff]
    %v717 = vld [vmem:[#allocation2 + $0x8a] sm:$0xff]
    %v718 = vld [vmem:[#allocation2 + $0x92] sm:$0xff]
    %v719 = vld [vmem:[#allocation2 + $0x9a] sm:$0xff]
    %v720 = vld [vmem:[#allocation2 + $0xa2] sm:$0xff]
    %v721 = vld [vmem:[#allocation2 + $0xaa] sm:$0xff]
    %v722 = vld [vmem:[#allocation2 + $0xb2] sm:$0xff]
    %v723 = vld [vmem:[#allocation2 + $0xba] sm:$0xff]
    %v724 = vld [vmem:[#allocation2 + $0xc2] sm:$0xff]
    %s725 = scalar_lea.vmem %s1, 8
    %v726 = vld [vmem:[%s725] sm:$0x7]
    %v728 = vsel %vm33, %v700, 0
    %v731 = vsel %vm33, %v701, 0
    %v734 = vsel %vm33, %v702, 0
    %v737 = vsel %vm33, %v703, 0
    %v740 = vsel %vm33, %v704, 0
    %v743 = vsel %vm33, %v705, 0
    %v746 = vsel %vm33, %v706, 0
    %v749 = vsel %vm33, %v707, 0
    %v752 = vsel %vm33, %v708, 0
    %v755 = vsel %vm33, %v709, 0
    %v758 = vsel %vm33, %v710, 0
    %v761 = vsel %vm33, %v711, 0
    %v764 = vsel %vm33, %v712, 0
    %v767 = vsel %vm33, %v713, 0
    %v770 = vsel %vm33, %v714, 0
    %v773 = vsel %vm33, %v715, 0
    %v776 = vsel %vm33, %v716, 0
    %v779 = vsel %vm33, %v717, 0
    %v782 = vsel %vm33, %v718, 0
    %v785 = vsel %vm33, %v719, 0
    %v788 = vsel %vm33, %v720, 0
    %v791 = vsel %vm33, %v721, 0
    %v794 = vsel %vm33, %v722, 0
    %v797 = vsel %vm33, %v723, 0
    %v800 = vsel %vm33, %v724, 0
    %v803 = vsel %vm238, %v726, 0
    %805 = vmatprep.subr.mxu0 0.0
    %806 = vmatpush1.msra.mxu0 %v803
    %807 = vmatprep.subr.mxu0 0.0
    %808 = vmatpush1.msra.mxu0 0.0
    %809 = vmatprep.subr.mxu0 0.0
    %810 = vmatpush1.msra.mxu0 0.0
    %811 = vmatprep.subr.mxu0 0.0
    %812 = vmatpush1.msra.mxu0 0.0
    %813 = vmatprep.subr.mxu0 0.0
    %814 = vmatpush1.msra.mxu0 0.0
    %815 = vmatprep.subr.mxu0 0.0
    %816 = vmatpush1.msra.mxu0 0.0
    %817 = vmatprep.subr.mxu0 0.0
    %818 = vmatpush1.msra.mxu0 0.0
    %819 = vmatprep.subr.mxu0 0.0
    %820 = vmatpush1.msra.mxu0 0.0
    %821 = vmatprep.subr.mxu0 0.0
    %822 = vmatpush1.msra.mxu0 0.0
    %823 = vmatprep.subr.mxu0 0.0
    %824 = vmatpush1.msra.mxu0 0.0
    %825 = vmatprep.subr.mxu0 0.0
    %826 = vmatpush1.msra.mxu0 0.0
    %827 = vmatprep.subr.mxu0 0.0
    %828 = vmatpush1.msra.mxu0 0.0
    %829 = vmatprep.subr.mxu0 0.0
    %830 = vmatpush1.msra.mxu0 0.0
    %831 = vmatprep.subr.mxu0 0.0
    %832 = vmatpush1.msra.mxu0 0.0
    %833 = vmatprep.subr.mxu0 0.0
    %834 = vmatpush1.msra.mxu0 0.0
    %835 = vmatprep.subr.mxu0 0.0
    %836 = vmatpush1.msra.mxu0 0.0
    %837 = vmatprep.subr.mxu0 0.0
    %838 = vmatpush1.msra.mxu0 0.0
    %839 = vmatprep.subr.mxu0 0.0
    %840 = vmatpush1.msra.mxu0 0.0
    %841 = vmatprep.subr.mxu0 0.0
    %842 = vmatpush1.msra.mxu0 0.0
    %843 = vmatprep.subr.mxu0 0.0
    %844 = vmatpush1.msra.mxu0 0.0
    %845 = vmatprep.subr.mxu0 0.0
    %846 = vmatpush1.msra.mxu0 0.0
    %847 = vmatprep.subr.mxu0 0.0
    %848 = vmatpush1.msra.mxu0 0.0
    %849 = vmatprep.subr.mxu0 0.0
    %850 = vmatpush1.msra.mxu0 0.0
    %851 = vmatprep.subr.mxu0 0.0
    %852 = vmatpush1.msra.mxu0 0.0
    %853 = vmatprep.subr.mxu0 0.0
    %854 = vmatpush1.msra.mxu0 0.0
    %855 = vmatprep.subr.mxu0 0.0
    %856 = vmatpush1.msra.mxu0 0.0
    %857 = vmatprep.subr.mxu0 0.0
    %858 = vmatpush1.msra.mxu0 0.0
    %859 = vmatprep.subr.mxu0 0.0
    %860 = vmatpush1.msra.mxu0 0.0
    %861 = vmatprep.subr.mxu0 0.0
    %862 = vmatpush1.msra.mxu0 0.0
    %863 = vmatprep.subr.mxu0 0.0
    %864 = vmatpush1.msra.mxu0 0.0
    %865 = vmatprep.subr.mxu0 0.0
    %866 = vmatpush1.msra.mxu0 0.0
    %867 = vmatprep.subr.mxu0 0.0
    %868 = vmatpush1.msra.mxu0 0.0
    %869 = vmatprep.mubr.f32.mxu0 0.0
    %870 = vmatmul.mubr.f32.gmra.mrb[0].mxu0 %v728
    %v871 = vpop.f32.mrb[0].mxu0
    %v872 = vadd.f32 0.0, %v871
    %v873 = vpop.f32.mrb[0].mxu0
    %874 = vmatprep.mubr.f32.mxu0 0.0
    %875 = vmatmul.mubr.f32.gmra.mrb[0].mxu0 %v731
    %v876 = vpop.f32.mrb[0].mxu0
    %v877 = vadd.f32 0.0, %v876
    %v878 = vpop.f32.mrb[0].mxu0
    %879 = vmatprep.mubr.f32.mxu0 0.0
    %880 = vmatmul.mubr.f32.gmra.mrb[0].mxu0 %v734
    %v881 = vpop.f32.mrb[0].mxu0
    %v882 = vadd.f32 0.0, %v881
    %v883 = vpop.f32.mrb[0].mxu0
    %884 = vmatprep.mubr.f32.mxu0 0.0
    %885 = vmatmul.mubr.f32.gmra.mrb[0].mxu0 %v737
    %v886 = vpop.f32.mrb[0].mxu0
    %v887 = vadd.f32 0.0, %v886
    %v888 = vpop.f32.mrb[0].mxu0
    %889 = vmatprep.mubr.f32.mxu0 0.0
    %890 = vmatmul.mubr.f32.gmra.mrb[0].mxu0 %v740
    %v891 = vpop.f32.mrb[0].mxu0
    %v892 = vadd.f32 0.0, %v891
    %v893 = vpop.f32.mrb[0].mxu0
    %894 = vmatprep.mubr.f32.mxu0 0.0
    %895 = vmatmul.mubr.f32.gmra.mrb[0].mxu0 %v743
    %v896 = vpop.f32.mrb[0].mxu0
    %v897 = vadd.f32 0.0, %v896
    %v898 = vpop.f32.mrb[0].mxu0
    %899 = vmatprep.mubr.f32.mxu0 0.0
    %900 = vmatmul.mubr.f32.gmra.mrb[0].mxu0 %v746
    %v901 = vpop.f32.mrb[0].mxu0
    %v902 = vadd.f32 0.0, %v901
    %v903 = vpop.f32.mrb[0].mxu0
    %904 = vmatprep.mubr.f32.mxu0 0.0
    %905 = vmatmul.mubr.f32.gmra.mrb[0].mxu0 %v749
    %v906 = vpop.f32.mrb[0].mxu0
    %v907 = vadd.f32 0.0, %v906
    %v908 = vpop.f32.mrb[0].mxu0
    %909 = vmatprep.mubr.f32.mxu0 0.0
    %910 = vmatmul.mubr.f32.gmra.mrb[0].mxu0 %v752
    %v911 = vpop.f32.mrb[0].mxu0
    %v912 = vadd.f32 0.0, %v911
    %v913 = vpop.f32.mrb[0].mxu0
    %914 = vmatprep.mubr.f32.mxu0 0.0
    %915 = vmatmul.mubr.f32.gmra.mrb[0].mxu0 %v755
    %v916 = vpop.f32.mrb[0].mxu0
    %v917 = vadd.f32 0.0, %v916
    %v918 = vpop.f32.mrb[0].mxu0
    %919 = vmatprep.mubr.f32.mxu0 0.0
    %920 = vmatmul.mubr.f32.gmra.mrb[0].mxu0 %v758
    %v921 = vpop.f32.mrb[0].mxu0
    %v922 = vadd.f32 0.0, %v921
    %v923 = vpop.f32.mrb[0].mxu0
    %924 = vmatprep.mubr.f32.mxu0 0.0
    %925 = vmatmul.mubr.f32.gmra.mrb[0].mxu0 %v761
    %v926 = vpop.f32.mrb[0].mxu0
    %v927 = vadd.f32 0.0, %v926
    %v928 = vpop.f32.mrb[0].mxu0
    %929 = vmatprep.mubr.f32.mxu0 0.0
    %930 = vmatmul.mubr.f32.gmra.mrb[0].mxu0 %v764
    %v931 = vpop.f32.mrb[0].mxu0
    %v932 = vadd.f32 0.0, %v931
    %v933 = vpop.f32.mrb[0].mxu0
    %934 = vmatprep.mubr.f32.mxu0 0.0
    %935 = vmatmul.mubr.f32.gmra.mrb[0].mxu0 %v767
    %v936 = vpop.f32.mrb[0].mxu0
    %v937 = vadd.f32 0.0, %v936
    %v938 = vpop.f32.mrb[0].mxu0
    %939 = vmatprep.mubr.f32.mxu0 0.0
    %940 = vmatmul.mubr.f32.gmra.mrb[0].mxu0 %v770
    %v941 = vpop.f32.mrb[0].mxu0
    %v942 = vadd.f32 0.0, %v941
    %v943 = vpop.f32.mrb[0].mxu0
    %944 = vmatprep.mubr.f32.mxu0 0.0
    %945 = vmatmul.mubr.f32.gmra.mrb[0].mxu0 %v773
    %v946 = vpop.f32.mrb[0].mxu0
    %v947 = vadd.f32 0.0, %v946
    %v948 = vpop.f32.mrb[0].mxu0
    %949 = vmatprep.mubr.f32.mxu0 0.0
    %950 = vmatmul.mubr.f32.gmra.mrb[0].mxu0 %v776
    %v951 = vpop.f32.mrb[0].mxu0
    %v952 = vadd.f32 0.0, %v951
    %v953 = vpop.f32.mrb[0].mxu0
    %954 = vmatprep.mubr.f32.mxu0 0.0
    %955 = vmatmul.mubr.f32.gmra.mrb[0].mxu0 %v779
    %v956 = vpop.f32.mrb[0].mxu0
    %v957 = vadd.f32 0.0, %v956
    %v958 = vpop.f32.mrb[0].mxu0
    %959 = vmatprep.mubr.f32.mxu0 0.0
    %960 = vmatmul.mubr.f32.gmra.mrb[0].mxu0 %v782
    %v961 = vpop.f32.mrb[0].mxu0
    %v962 = vadd.f32 0.0, %v961
    %v963 = vpop.f32.mrb[0].mxu0
    %964 = vmatprep.mubr.f32.mxu0 0.0
    %965 = vmatmul.mubr.f32.gmra.mrb[0].mxu0 %v785
    %v966 = vpop.f32.mrb[0].mxu0
    %v967 = vadd.f32 0.0, %v966
    %v968 = vpop.f32.mrb[0].mxu0
    %969 = vmatprep.mubr.f32.mxu0 0.0
    %970 = vmatmul.mubr.f32.gmra.mrb[0].mxu0 %v788
    %v971 = vpop.f32.mrb[0].mxu0
    %v972 = vadd.f32 0.0, %v971
    %v973 = vpop.f32.mrb[0].mxu0
    %974 = vmatprep.mubr.f32.mxu0 0.0
    %975 = vmatmul.mubr.f32.gmra.mrb[0].mxu0 %v791
    %v976 = vpop.f32.mrb[0].mxu0
    %v977 = vadd.f32 0.0, %v976
    %v978 = vpop.f32.mrb[0].mxu0
    %979 = vmatprep.mubr.f32.mxu0 0.0
    %980 = vmatmul.mubr.f32.gmra.mrb[0].mxu0 %v794
    %v981 = vpop.f32.mrb[0].mxu0
    %v982 = vadd.f32 0.0, %v981
    %v983 = vpop.f32.mrb[0].mxu0
    %984 = vmatprep.mubr.f32.mxu0 0.0
    %985 = vmatmul.mubr.f32.gmra.mrb[0].mxu0 %v797
    %v986 = vpop.f32.mrb[0].mxu0
    %v987 = vadd.f32 0.0, %v986
    %v988 = vpop.f32.mrb[0].mxu0
    %989 = vmatprep.mubr.f32.mxu0 0.0
    %990 = vmatmul.mubr.f32.gmra.mrb[0].mxu0 %v800
    %v991 = vpop.f32.mrb[0].mxu0
    %v992 = vadd.f32 0.0, %v991
    %v993 = vpop.f32.mrb[0].mxu0
    %994 = vdwg.mxu0
    %v995 = vadd.f32 %v577, %v872
    %v996 = vadd.f32 %v582, %v877
    %v997 = vadd.f32 %v587, %v882
    %v998 = vadd.f32 %v592, %v887
    %v999 = vadd.f32 %v597, %v892
    %v1000 = vadd.f32 %v602, %v897
    %v1001 = vadd.f32 %v607, %v902
    %v1002 = vadd.f32 %v612, %v907
    %v1003 = vadd.f32 %v617, %v912
    %v1004 = vadd.f32 %v622, %v917
    %v1005 = vadd.f32 %v627, %v922
    %v1006 = vadd.f32 %v632, %v927
    %v1007 = vadd.f32 %v637, %v932
    %v1008 = vadd.f32 %v642, %v937
    %v1009 = vadd.f32 %v647, %v942
    %v1010 = vadd.f32 %v652, %v947
    %v1011 = vadd.f32 %v657, %v952
    %v1012 = vadd.f32 %v662, %v957
    %v1013 = vadd.f32 %v667, %v962
    %v1014 = vadd.f32 %v672, %v967
    %v1015 = vadd.f32 %v677, %v972
    %v1016 = vadd.f32 %v682, %v977
    %v1017 = vadd.f32 %v687, %v982
    %v1018 = vadd.f32 %v692, %v987
    %v1019 = vadd.f32 %v697, %v992
    %v1020 = vld [vmem:[#allocation2 + $0xa] sm:$0xff]
    %v1021 = vld [vmem:[#allocation2 + $0x12] sm:$0xff]
    %v1022 = vld [vmem:[#allocation2 + $0x1a] sm:$0xff]
    %v1023 = vld [vmem:[#allocation2 + $0x22] sm:$0xff]
    %v1024 = vld [vmem:[#allocation2 + $0x2a] sm:$0xff]
    %v1025 = vld [vmem:[#allocation2 + $0x32] sm:$0xff]
    %v1026 = vld [vmem:[#allocation2 + $0x3a] sm:$0xff]
    %v1027 = vld [vmem:[#allocation2 + $0x42] sm:$0xff]
    %v1028 = vld [vmem:[#allocation2 + $0x4a] sm:$0xff]
    %v1029 = vld [vmem:[#allocation2 + $0x52] sm:$0xff]
    %v1030 = vld [vmem:[#allocation2 + $0x5a] sm:$0xff]
    %v1031 = vld [vmem:[#allocation2 + $0x62] sm:$0xff]
    %v1032 = vld [vmem:[#allocation2 + $0x6a] sm:$0xff]
    %v1033 = vld [vmem:[#allocation2 + $0x72] sm:$0xff]
    %v1034 = vld [vmem:[#allocation2 + $0x7a] sm:$0xff]
    %v1035 = vld [vmem:[#allocation2 + $0x82] sm:$0xff]
    %v1036 = vld [vmem:[#allocation2 + $0x8a] sm:$0xff]
    %v1037 = vld [vmem:[#allocation2 + $0x92] sm:$0xff]
    %v1038 = vld [vmem:[#allocation2 + $0x9a] sm:$0xff]
    %v1039 = vld [vmem:[#allocation2 + $0xa2] sm:$0xff]
    %v1040 = vld [vmem:[#allocation2 + $0xaa] sm:$0xff]
    %v1041 = vld [vmem:[#allocation2 + $0xb2] sm:$0xff]
    %v1042 = vld [vmem:[#allocation2 + $0xba] sm:$0xff]
    %v1043 = vld [vmem:[#allocation2 + $0xc2] sm:$0xff]
    %v1044 = vld [vmem:[#allocation2 + $0xca] sm:$0xff]
    %s1045 = scalar_lea.vmem %s1, 12
    %v1046 = vld [vmem:[%s1045] sm:$0x7]
    %v1048 = vsel %vm33, %v1020, 0
    %v1051 = vsel %vm33, %v1021, 0
    %v1054 = vsel %vm33, %v1022, 0
    %v1057 = vsel %vm33, %v1023, 0
    %v1060 = vsel %vm33, %v1024, 0
    %v1063 = vsel %vm33, %v1025, 0
    %v1066 = vsel %vm33, %v1026, 0
    %v1069 = vsel %vm33, %v1027, 0
    %v1072 = vsel %vm33, %v1028, 0
    %v1075 = vsel %vm33, %v1029, 0
    %v1078 = vsel %vm33, %v1030, 0
    %v1081 = vsel %vm33, %v1031, 0
    %v1084 = vsel %vm33, %v1032, 0
    %v1087 = vsel %vm33, %v1033, 0
    %v1090 = vsel %vm33, %v1034, 0
    %v1093 = vsel %vm33, %v1035, 0
    %v1096 = vsel %vm33, %v1036, 0
    %v1099 = vsel %vm33, %v1037, 0
    %v1102 = vsel %vm33, %v1038, 0
    %v1105 = vsel %vm33, %v1039, 0
    %v1108 = vsel %vm33, %v1040, 0
    %v1111 = vsel %vm33, %v1041, 0
    %v1114 = vsel %vm33, %v1042, 0
    %v1117 = vsel %vm33, %v1043, 0
    %v1120 = vsel %vm33, %v1044, 0
    %v1123 = vsel %vm238, %v1046, 0
    %1125 = vmatprep.subr.mxu0 0.0
    %1126 = vmatpush1.msra.mxu0 %v1123
    %1127 = vmatprep.subr.mxu0 0.0
    %1128 = vmatpush1.msra.mxu0 0.0
    %1129 = vmatprep.subr.mxu0 0.0
    %1130 = vmatpush1.msra.mxu0 0.0
    %1131 = vmatprep.subr.mxu0 0.0
    %1132 = vmatpush1.msra.mxu0 0.0
    %1133 = vmatprep.subr.mxu0 0.0
    %1134 = vmatpush1.msra.mxu0 0.0
    %1135 = vmatprep.subr.mxu0 0.0
    %1136 = vmatpush1.msra.mxu0 0.0
    %1137 = vmatprep.subr.mxu0 0.0
    %1138 = vmatpush1.msra.mxu0 0.0
    %1139 = vmatprep.subr.mxu0 0.0
    %1140 = vmatpush1.msra.mxu0 0.0
    %1141 = vmatprep.subr.mxu0 0.0
    %1142 = vmatpush1.msra.mxu0 0.0
    %1143 = vmatprep.subr.mxu0 0.0
    %1144 = vmatpush1.msra.mxu0 0.0
    %1145 = vmatprep.subr.mxu0 0.0
    %1146 = vmatpush1.msra.mxu0 0.0
    %1147 = vmatprep.subr.mxu0 0.0
    %1148 = vmatpush1.msra.mxu0 0.0
    %1149 = vmatprep.subr.mxu0 0.0
    %1150 = vmatpush1.msra.mxu0 0.0
    %1151 = vmatprep.subr.mxu0 0.0
    %1152 = vmatpush1.msra.mxu0 0.0
    %1153 = vmatprep.subr.mxu0 0.0
    %1154 = vmatpush1.msra.mxu0 0.0
    %1155 = vmatprep.subr.mxu0 0.0
    %1156 = vmatpush1.msra.mxu0 0.0
    %1157 = vmatprep.subr.mxu0 0.0
    %1158 = vmatpush1.msra.mxu0 0.0
    %1159 = vmatprep.subr.mxu0 0.0
    %1160 = vmatpush1.msra.mxu0 0.0
    %1161 = vmatprep.subr.mxu0 0.0
    %1162 = vmatpush1.msra.mxu0 0.0
    %1163 = vmatprep.subr.mxu0 0.0
    %1164 = vmatpush1.msra.mxu0 0.0
    %1165 = vmatprep.subr.mxu0 0.0
    %1166 = vmatpush1.msra.mxu0 0.0
    %1167 = vmatprep.subr.mxu0 0.0
    %1168 = vmatpush1.msra.mxu0 0.0
    %1169 = vmatprep.subr.mxu0 0.0
    %1170 = vmatpush1.msra.mxu0 0.0
    %1171 = vmatprep.subr.mxu0 0.0
    %1172 = vmatpush1.msra.mxu0 0.0
    %1173 = vmatprep.subr.mxu0 0.0
    %1174 = vmatpush1.msra.mxu0 0.0
    %1175 = vmatprep.subr.mxu0 0.0
    %1176 = vmatpush1.msra.mxu0 0.0
    %1177 = vmatprep.subr.mxu0 0.0
    %1178 = vmatpush1.msra.mxu0 0.0
    %1179 = vmatprep.subr.mxu0 0.0
    %1180 = vmatpush1.msra.mxu0 0.0
    %1181 = vmatprep.subr.mxu0 0.0
    %1182 = vmatpush1.msra.mxu0 0.0
    %1183 = vmatprep.subr.mxu0 0.0
    %1184 = vmatpush1.msra.mxu0 0.0
    %1185 = vmatprep.subr.mxu0 0.0
    %1186 = vmatpush1.msra.mxu0 0.0
    %1187 = vmatprep.subr.mxu0 0.0
    %1188 = vmatpush1.msra.mxu0 0.0
    %1189 = vmatprep.mubr.f32.mxu0 0.0
    %1190 = vmatmul.mubr.f32.gmra.mrb[0].mxu0 %v1048
    %v1191 = vpop.f32.mrb[0].mxu0
    %v1192 = vadd.f32 0.0, %v1191
    %v1193 = vpop.f32.mrb[0].mxu0
    %1194 = vmatprep.mubr.f32.mxu0 0.0
    %1195 = vmatmul.mubr.f32.gmra.mrb[0].mxu0 %v1051
    %v1196 = vpop.f32.mrb[0].mxu0
    %v1197 = vadd.f32 0.0, %v1196
    %v1198 = vpop.f32.mrb[0].mxu0
    %1199 = vmatprep.mubr.f32.mxu0 0.0
    %1200 = vmatmul.mubr.f32.gmra.mrb[0].mxu0 %v1054
    %v1201 = vpop.f32.mrb[0].mxu0
    %v1202 = vadd.f32 0.0, %v1201
    %v1203 = vpop.f32.mrb[0].mxu0
    %1204 = vmatprep.mubr.f32.mxu0 0.0
    %1205 = vmatmul.mubr.f32.gmra.mrb[0].mxu0 %v1057
    %v1206 = vpop.f32.mrb[0].mxu0
    %v1207 = vadd.f32 0.0, %v1206
    %v1208 = vpop.f32.mrb[0].mxu0
    %1209 = vmatprep.mubr.f32.mxu0 0.0
    %1210 = vmatmul.mubr.f32.gmra.mrb[0].mxu0 %v1060
    %v1211 = vpop.f32.mrb[0].mxu0
    %v1212 = vadd.f32 0.0, %v1211
    %v1213 = vpop.f32.mrb[0].mxu0
    %1214 = vmatprep.mubr.f32.mxu0 0.0
    %1215 = vmatmul.mubr.f32.gmra.mrb[0].mxu0 %v1063
    %v1216 = vpop.f32.mrb[0].mxu0
    %v1217 = vadd.f32 0.0, %v1216
    %v1218 = vpop.f32.mrb[0].mxu0
    %1219 = vmatprep.mubr.f32.mxu0 0.0
    %1220 = vmatmul.mubr.f32.gmra.mrb[0].mxu0 %v1066
    %v1221 = vpop.f32.mrb[0].mxu0
    %v1222 = vadd.f32 0.0, %v1221
    %v1223 = vpop.f32.mrb[0].mxu0
    %1224 = vmatprep.mubr.f32.mxu0 0.0
    %1225 = vmatmul.mubr.f32.gmra.mrb[0].mxu0 %v1069
    %v1226 = vpop.f32.mrb[0].mxu0
    %v1227 = vadd.f32 0.0, %v1226
    %v1228 = vpop.f32.mrb[0].mxu0
    %1229 = vmatprep.mubr.f32.mxu0 0.0
    %1230 = vmatmul.mubr.f32.gmra.mrb[0].mxu0 %v1072
    %v1231 = vpop.f32.mrb[0].mxu0
    %v1232 = vadd.f32 0.0, %v1231
    %v1233 = vpop.f32.mrb[0].mxu0
    %1234 = vmatprep.mubr.f32.mxu0 0.0
    %1235 = vmatmul.mubr.f32.gmra.mrb[0].mxu0 %v1075
    %v1236 = vpop.f32.mrb[0].mxu0
    %v1237 = vadd.f32 0.0, %v1236
    %v1238 = vpop.f32.mrb[0].mxu0
    %1239 = vmatprep.mubr.f32.mxu0 0.0
    %1240 = vmatmul.mubr.f32.gmra.mrb[0].mxu0 %v1078
    %v1241 = vpop.f32.mrb[0].mxu0
    %v1242 = vadd.f32 0.0, %v1241
    %v1243 = vpop.f32.mrb[0].mxu0
    %1244 = vmatprep.mubr.f32.mxu0 0.0
    %1245 = vmatmul.mubr.f32.gmra.mrb[0].mxu0 %v1081
    %v1246 = vpop.f32.mrb[0].mxu0
    %v1247 = vadd.f32 0.0, %v1246
    %v1248 = vpop.f32.mrb[0].mxu0
    %1249 = vmatprep.mubr.f32.mxu0 0.0
    %1250 = vmatmul.mubr.f32.gmra.mrb[0].mxu0 %v1084
    %v1251 = vpop.f32.mrb[0].mxu0
    %v1252 = vadd.f32 0.0, %v1251
    %v1253 = vpop.f32.mrb[0].mxu0
    %1254 = vmatprep.mubr.f32.mxu0 0.0
    %1255 = vmatmul.mubr.f32.gmra.mrb[0].mxu0 %v1087
    %v1256 = vpop.f32.mrb[0].mxu0
    %v1257 = vadd.f32 0.0, %v1256
    %v1258 = vpop.f32.mrb[0].mxu0
    %1259 = vmatprep.mubr.f32.mxu0 0.0
    %1260 = vmatmul.mubr.f32.gmra.mrb[0].mxu0 %v1090
    %v1261 = vpop.f32.mrb[0].mxu0
    %v1262 = vadd.f32 0.0, %v1261
    %v1263 = vpop.f32.mrb[0].mxu0
    %1264 = vmatprep.mubr.f32.mxu0 0.0
    %1265 = vmatmul.mubr.f32.gmra.mrb[0].mxu0 %v1093
    %v1266 = vpop.f32.mrb[0].mxu0
    %v1267 = vadd.f32 0.0, %v1266
    %v1268 = vpop.f32.mrb[0].mxu0
    %1269 = vmatprep.mubr.f32.mxu0 0.0
    %1270 = vmatmul.mubr.f32.gmra.mrb[0].mxu0 %v1096
    %v1271 = vpop.f32.mrb[0].mxu0
    %v1272 = vadd.f32 0.0, %v1271
    %v1273 = vpop.f32.mrb[0].mxu0
    %1274 = vmatprep.mubr.f32.mxu0 0.0
    %1275 = vmatmul.mubr.f32.gmra.mrb[0].mxu0 %v1099
    %v1276 = vpop.f32.mrb[0].mxu0
    %v1277 = vadd.f32 0.0, %v1276
    %v1278 = vpop.f32.mrb[0].mxu0
    %1279 = vmatprep.mubr.f32.mxu0 0.0
    %1280 = vmatmul.mubr.f32.gmra.mrb[0].mxu0 %v1102
    %v1281 = vpop.f32.mrb[0].mxu0
    %v1282 = vadd.f32 0.0, %v1281
    %v1283 = vpop.f32.mrb[0].mxu0
    %1284 = vmatprep.mubr.f32.mxu0 0.0
    %1285 = vmatmul.mubr.f32.gmra.mrb[0].mxu0 %v1105
    %v1286 = vpop.f32.mrb[0].mxu0
    %v1287 = vadd.f32 0.0, %v1286
    %v1288 = vpop.f32.mrb[0].mxu0
    %1289 = vmatprep.mubr.f32.mxu0 0.0
    %1290 = vmatmul.mubr.f32.gmra.mrb[0].mxu0 %v1108
    %v1291 = vpop.f32.mrb[0].mxu0
    %v1292 = vadd.f32 0.0, %v1291
    %v1293 = vpop.f32.mrb[0].mxu0
    %1294 = vmatprep.mubr.f32.mxu0 0.0
    %1295 = vmatmul.mubr.f32.gmra.mrb[0].mxu0 %v1111
    %v1296 = vpop.f32.mrb[0].mxu0
    %v1297 = vadd.f32 0.0, %v1296
    %v1298 = vpop.f32.mrb[0].mxu0
    %1299 = vmatprep.mubr.f32.mxu0 0.0
    %1300 = vmatmul.mubr.f32.gmra.mrb[0].mxu0 %v1114
    %v1301 = vpop.f32.mrb[0].mxu0
    %v1302 = vadd.f32 0.0, %v1301
    %v1303 = vpop.f32.mrb[0].mxu0
    %1304 = vmatprep.mubr.f32.mxu0 0.0
    %1305 = vmatmul.mubr.f32.gmra.mrb[0].mxu0 %v1117
    %v1306 = vpop.f32.mrb[0].mxu0
    %v1307 = vadd.f32 0.0, %v1306
    %v1308 = vpop.f32.mrb[0].mxu0
    %1309 = vmatprep.mubr.f32.mxu0 0.0
    %1310 = vmatmul.mubr.f32.gmra.mrb[0].mxu0 %v1120
    %v1311 = vpop.f32.mrb[0].mxu0
    %v1312 = vadd.f32 0.0, %v1311
    %v1313 = vpop.f32.mrb[0].mxu0
    %1314 = vdwg.mxu0
    %v1315 = vadd.f32 %v995, %v1192
    %v1316 = vadd.f32 %v996, %v1197
    %v1317 = vadd.f32 %v997, %v1202
    %v1318 = vadd.f32 %v998, %v1207
    %v1319 = vadd.f32 %v999, %v1212
    %v1320 = vadd.f32 %v1000, %v1217
    %v1321 = vadd.f32 %v1001, %v1222
    %v1322 = vadd.f32 %v1002, %v1227
    %v1323 = vadd.f32 %v1003, %v1232
    %v1324 = vadd.f32 %v1004, %v1237
    %v1325 = vadd.f32 %v1005, %v1242
    %v1326 = vadd.f32 %v1006, %v1247
    %v1327 = vadd.f32 %v1007, %v1252
    %v1328 = vadd.f32 %v1008, %v1257
    %v1329 = vadd.f32 %v1009, %v1262
    %v1330 = vadd.f32 %v1010, %v1267
    %v1331 = vadd.f32 %v1011, %v1272
    %v1332 = vadd.f32 %v1012, %v1277
    %v1333 = vadd.f32 %v1013, %v1282
    %v1334 = vadd.f32 %v1014, %v1287
    %v1335 = vadd.f32 %v1015, %v1292
    %v1336 = vadd.f32 %v1016, %v1297
    %v1337 = vadd.f32 %v1017, %v1302
    %v1338 = vadd.f32 %v1018, %v1307
    %v1339 = vadd.f32 %v1019, %v1312
    %v1340 = vld [vmem:[#allocation2 + $0xb] sm:$0xff]
    %v1341 = vld [vmem:[#allocation2 + $0x13] sm:$0xff]
    %v1342 = vld [vmem:[#allocation2 + $0x1b] sm:$0xff]
    %v1343 = vld [vmem:[#allocation2 + $0x23] sm:$0xff]
    %v1344 = vld [vmem:[#allocation2 + $0x2b] sm:$0xff]
    %v1345 = vld [vmem:[#allocation2 + $0x33] sm:$0xff]
    %v1346 = vld [vmem:[#allocation2 + $0x3b] sm:$0xff]
    %v1347 = vld [vmem:[#allocation2 + $0x43] sm:$0xff]
    %v1348 = vld [vmem:[#allocation2 + $0x4b] sm:$0xff]
    %v1349 = vld [vmem:[#allocation2 + $0x53] sm:$0xff]
    %v1350 = vld [vmem:[#allocation2 + $0x5b] sm:$0xff]
    %v1351 = vld [vmem:[#allocation2 + $0x63] sm:$0xff]
    %v1352 = vld [vmem:[#allocation2 + $0x6b] sm:$0xff]
    %v1353 = vld [vmem:[#allocation2 + $0x73] sm:$0xff]
    %v1354 = vld [vmem:[#allocation2 + $0x7b] sm:$0xff]
    %v1355 = vld [vmem:[#allocation2 + $0x83] sm:$0xff]
    %v1356 = vld [vmem:[#allocation2 + $0x8b] sm:$0xff]
    %v1357 = vld [vmem:[#allocation2 + $0x93] sm:$0xff]
    %v1358 = vld [vmem:[#allocation2 + $0x9b] sm:$0xff]
    %v1359 = vld [vmem:[#allocation2 + $0xa3] sm:$0xff]
    %v1360 = vld [vmem:[#allocation2 + $0xab] sm:$0xff]
    %v1361 = vld [vmem:[#allocation2 + $0xb3] sm:$0xff]
    %v1362 = vld [vmem:[#allocation2 + $0xbb] sm:$0xff]
    %v1363 = vld [vmem:[#allocation2 + $0xc3] sm:$0xff]
    %v1364 = vld [vmem:[#allocation2 + $0xcb] sm:$0xff]
    %s1365 = scalar_lea.vmem %s1, 16
    %v1366 = vld [vmem:[%s1365] sm:$0x7]
    %v1368 = vsel %vm33, %v1340, 0
    %v1371 = vsel %vm33, %v1341, 0
    %v1374 = vsel %vm33, %v1342, 0
    %v1377 = vsel %vm33, %v1343, 0
    %v1380 = vsel %vm33, %v1344, 0
    %v1383 = vsel %vm33, %v1345, 0
    %v1386 = vsel %vm33, %v1346, 0
    %v1389 = vsel %vm33, %v1347, 0
    %v1392 = vsel %vm33, %v1348, 0
    %v1395 = vsel %vm33, %v1349, 0
    %v1398 = vsel %vm33, %v1350, 0
    %v1401 = vsel %vm33, %v1351, 0
    %v1404 = vsel %vm33, %v1352, 0
    %v1407 = vsel %vm33, %v1353, 0
    %v1410 = vsel %vm33, %v1354, 0
    %v1413 = vsel %vm33, %v1355, 0
    %v1416 = vsel %vm33, %v1356, 0
    %v1419 = vsel %vm33, %v1357, 0
    %v1422 = vsel %vm33, %v1358, 0
    %v1425 = vsel %vm33, %v1359, 0
    %v1428 = vsel %vm33, %v1360, 0
    %v1431 = vsel %vm33, %v1361, 0
    %v1434 = vsel %vm33, %v1362, 0
    %v1437 = vsel %vm33, %v1363, 0
    %v1440 = vsel %vm33, %v1364, 0
    %v1443 = vsel %vm238, %v1366, 0
    %1445 = vmatprep.subr.mxu0 0.0
    %1446 = vmatpush1.msra.mxu0 %v1443
    %1447 = vmatprep.subr.mxu0 0.0
    %1448 = vmatpush1.msra.mxu0 0.0
    %1449 = vmatprep.subr.mxu0 0.0
    %1450 = vmatpush1.msra.mxu0 0.0
    %1451 = vmatprep.subr.mxu0 0.0
    %1452 = vmatpush1.msra.mxu0 0.0
    %1453 = vmatprep.subr.mxu0 0.0
    %1454 = vmatpush1.msra.mxu0 0.0
    %1455 = vmatprep.subr.mxu0 0.0
    %1456 = vmatpush1.msra.mxu0 0.0
    %1457 = vmatprep.subr.mxu0 0.0
    %1458 = vmatpush1.msra.mxu0 0.0
    %1459 = vmatprep.subr.mxu0 0.0
    %1460 = vmatpush1.msra.mxu0 0.0
    %1461 = vmatprep.subr.mxu0 0.0
    %1462 = vmatpush1.msra.mxu0 0.0
    %1463 = vmatprep.subr.mxu0 0.0
    %1464 = vmatpush1.msra.mxu0 0.0
    %1465 = vmatprep.subr.mxu0 0.0
    %1466 = vmatpush1.msra.mxu0 0.0
    %1467 = vmatprep.subr.mxu0 0.0
    %1468 = vmatpush1.msra.mxu0 0.0
    %1469 = vmatprep.subr.mxu0 0.0
    %1470 = vmatpush1.msra.mxu0 0.0
    %1471 = vmatprep.subr.mxu0 0.0
    %1472 = vmatpush1.msra.mxu0 0.0
    %1473 = vmatprep.subr.mxu0 0.0
    %1474 = vmatpush1.msra.mxu0 0.0
    %1475 = vmatprep.subr.mxu0 0.0
    %1476 = vmatpush1.msra.mxu0 0.0
    %1477 = vmatprep.subr.mxu0 0.0
    %1478 = vmatpush1.msra.mxu0 0.0
    %1479 = vmatprep.subr.mxu0 0.0
    %1480 = vmatpush1.msra.mxu0 0.0
    %1481 = vmatprep.subr.mxu0 0.0
    %1482 = vmatpush1.msra.mxu0 0.0
    %1483 = vmatprep.subr.mxu0 0.0
    %1484 = vmatpush1.msra.mxu0 0.0
    %1485 = vmatprep.subr.mxu0 0.0
    %1486 = vmatpush1.msra.mxu0 0.0
    %1487 = vmatprep.subr.mxu0 0.0
    %1488 = vmatpush1.msra.mxu0 0.0
    %1489 = vmatprep.subr.mxu0 0.0
    %1490 = vmatpush1.msra.mxu0 0.0
    %1491 = vmatprep.subr.mxu0 0.0
    %1492 = vmatpush1.msra.mxu0 0.0
    %1493 = vmatprep.subr.mxu0 0.0
    %1494 = vmatpush1.msra.mxu0 0.0
    %1495 = vmatprep.subr.mxu0 0.0
    %1496 = vmatpush1.msra.mxu0 0.0
    %1497 = vmatprep.subr.mxu0 0.0
    %1498 = vmatpush1.msra.mxu0 0.0
    %1499 = vmatprep.subr.mxu0 0.0
    %1500 = vmatpush1.msra.mxu0 0.0
    %1501 = vmatprep.subr.mxu0 0.0
    %1502 = vmatpush1.msra.mxu0 0.0
    %1503 = vmatprep.subr.mxu0 0.0
    %1504 = vmatpush1.msra.mxu0 0.0
    %1505 = vmatprep.subr.mxu0 0.0
    %1506 = vmatpush1.msra.mxu0 0.0
    %1507 = vmatprep.subr.mxu0 0.0
    %1508 = vmatpush1.msra.mxu0 0.0
    %1509 = vmatprep.mubr.f32.mxu0 0.0
    %1510 = vmatmul.mubr.f32.gmra.mrb[0].mxu0 %v1368
    %v1511 = vpop.f32.mrb[0].mxu0
    %v1512 = vadd.f32 0.0, %v1511
    %v1513 = vpop.f32.mrb[0].mxu0
    %1514 = vmatprep.mubr.f32.mxu0 0.0
    %1515 = vmatmul.mubr.f32.gmra.mrb[0].mxu0 %v1371
    %v1516 = vpop.f32.mrb[0].mxu0
    %v1517 = vadd.f32 0.0, %v1516
    %v1518 = vpop.f32.mrb[0].mxu0
    %1519 = vmatprep.mubr.f32.mxu0 0.0
    %1520 = vmatmul.mubr.f32.gmra.mrb[0].mxu0 %v1374
    %v1521 = vpop.f32.mrb[0].mxu0
    %v1522 = vadd.f32 0.0, %v1521
    %v1523 = vpop.f32.mrb[0].mxu0
    %1524 = vmatprep.mubr.f32.mxu0 0.0
    %1525 = vmatmul.mubr.f32.gmra.mrb[0].mxu0 %v1377
    %v1526 = vpop.f32.mrb[0].mxu0
    %v1527 = vadd.f32 0.0, %v1526
    %v1528 = vpop.f32.mrb[0].mxu0
    %1529 = vmatprep.mubr.f32.mxu0 0.0
    %1530 = vmatmul.mubr.f32.gmra.mrb[0].mxu0 %v1380
    %v1531 = vpop.f32.mrb[0].mxu0
    %v1532 = vadd.f32 0.0, %v1531
    %v1533 = vpop.f32.mrb[0].mxu0
    %1534 = vmatprep.mubr.f32.mxu0 0.0
    %1535 = vmatmul.mubr.f32.gmra.mrb[0].mxu0 %v1383
    %v1536 = vpop.f32.mrb[0].mxu0
    %v1537 = vadd.f32 0.0, %v1536
    %v1538 = vpop.f32.mrb[0].mxu0
    %1539 = vmatprep.mubr.f32.mxu0 0.0
    %1540 = vmatmul.mubr.f32.gmra.mrb[0].mxu0 %v1386
    %v1541 = vpop.f32.mrb[0].mxu0
    %v1542 = vadd.f32 0.0, %v1541
    %v1543 = vpop.f32.mrb[0].mxu0
    %1544 = vmatprep.mubr.f32.mxu0 0.0
    %1545 = vmatmul.mubr.f32.gmra.mrb[0].mxu0 %v1389
    %v1546 = vpop.f32.mrb[0].mxu0
    %v1547 = vadd.f32 0.0, %v1546
    %v1548 = vpop.f32.mrb[0].mxu0
    %1549 = vmatprep.mubr.f32.mxu0 0.0
    %1550 = vmatmul.mubr.f32.gmra.mrb[0].mxu0 %v1392
    %v1551 = vpop.f32.mrb[0].mxu0
    %v1552 = vadd.f32 0.0, %v1551
    %v1553 = vpop.f32.mrb[0].mxu0
    %1554 = vmatprep.mubr.f32.mxu0 0.0
    %1555 = vmatmul.mubr.f32.gmra.mrb[0].mxu0 %v1395
    %v1556 = vpop.f32.mrb[0].mxu0
    %v1557 = vadd.f32 0.0, %v1556
    %v1558 = vpop.f32.mrb[0].mxu0
    %1559 = vmatprep.mubr.f32.mxu0 0.0
    %1560 = vmatmul.mubr.f32.gmra.mrb[0].mxu0 %v1398
    %v1561 = vpop.f32.mrb[0].mxu0
    %v1562 = vadd.f32 0.0, %v1561
    %v1563 = vpop.f32.mrb[0].mxu0
    %1564 = vmatprep.mubr.f32.mxu0 0.0
    %1565 = vmatmul.mubr.f32.gmra.mrb[0].mxu0 %v1401
    %v1566 = vpop.f32.mrb[0].mxu0
    %v1567 = vadd.f32 0.0, %v1566
    %v1568 = vpop.f32.mrb[0].mxu0
    %1569 = vmatprep.mubr.f32.mxu0 0.0
    %1570 = vmatmul.mubr.f32.gmra.mrb[0].mxu0 %v1404
    %v1571 = vpop.f32.mrb[0].mxu0
    %v1572 = vadd.f32 0.0, %v1571
    %v1573 = vpop.f32.mrb[0].mxu0
    %1574 = vmatprep.mubr.f32.mxu0 0.0
    %1575 = vmatmul.mubr.f32.gmra.mrb[0].mxu0 %v1407
    %v1576 = vpop.f32.mrb[0].mxu0
    %v1577 = vadd.f32 0.0, %v1576
    %v1578 = vpop.f32.mrb[0].mxu0
    %1579 = vmatprep.mubr.f32.mxu0 0.0
    %1580 = vmatmul.mubr.f32.gmra.mrb[0].mxu0 %v1410
    %v1581 = vpop.f32.mrb[0].mxu0
    %v1582 = vadd.f32 0.0, %v1581
    %v1583 = vpop.f32.mrb[0].mxu0
    %1584 = vmatprep.mubr.f32.mxu0 0.0
    %1585 = vmatmul.mubr.f32.gmra.mrb[0].mxu0 %v1413
    %v1586 = vpop.f32.mrb[0].mxu0
    %v1587 = vadd.f32 0.0, %v1586
    %v1588 = vpop.f32.mrb[0].mxu0
    %1589 = vmatprep.mubr.f32.mxu0 0.0
    %1590 = vmatmul.mubr.f32.gmra.mrb[0].mxu0 %v1416
    %v1591 = vpop.f32.mrb[0].mxu0
    %v1592 = vadd.f32 0.0, %v1591
    %v1593 = vpop.f32.mrb[0].mxu0
    %1594 = vmatprep.mubr.f32.mxu0 0.0
    %1595 = vmatmul.mubr.f32.gmra.mrb[0].mxu0 %v1419
    %v1596 = vpop.f32.mrb[0].mxu0
    %v1597 = vadd.f32 0.0, %v1596
    %v1598 = vpop.f32.mrb[0].mxu0
    %1599 = vmatprep.mubr.f32.mxu0 0.0
    %1600 = vmatmul.mubr.f32.gmra.mrb[0].mxu0 %v1422
    %v1601 = vpop.f32.mrb[0].mxu0
    %v1602 = vadd.f32 0.0, %v1601
    %v1603 = vpop.f32.mrb[0].mxu0
    %1604 = vmatprep.mubr.f32.mxu0 0.0
    %1605 = vmatmul.mubr.f32.gmra.mrb[0].mxu0 %v1425
    %v1606 = vpop.f32.mrb[0].mxu0
    %v1607 = vadd.f32 0.0, %v1606
    %v1608 = vpop.f32.mrb[0].mxu0
    %1609 = vmatprep.mubr.f32.mxu0 0.0
    %1610 = vmatmul.mubr.f32.gmra.mrb[0].mxu0 %v1428
    %v1611 = vpop.f32.mrb[0].mxu0
    %v1612 = vadd.f32 0.0, %v1611
    %v1613 = vpop.f32.mrb[0].mxu0
    %1614 = vmatprep.mubr.f32.mxu0 0.0
    %1615 = vmatmul.mubr.f32.gmra.mrb[0].mxu0 %v1431
    %v1616 = vpop.f32.mrb[0].mxu0
    %v1617 = vadd.f32 0.0, %v1616
    %v1618 = vpop.f32.mrb[0].mxu0
    %1619 = vmatprep.mubr.f32.mxu0 0.0
    %1620 = vmatmul.mubr.f32.gmra.mrb[0].mxu0 %v1434
    %v1621 = vpop.f32.mrb[0].mxu0
    %v1622 = vadd.f32 0.0, %v1621
    %v1623 = vpop.f32.mrb[0].mxu0
    %1624 = vmatprep.mubr.f32.mxu0 0.0
    %1625 = vmatmul.mubr.f32.gmra.mrb[0].mxu0 %v1437
    %v1626 = vpop.f32.mrb[0].mxu0
    %v1627 = vadd.f32 0.0, %v1626
    %v1628 = vpop.f32.mrb[0].mxu0
    %1629 = vmatprep.mubr.f32.mxu0 0.0
    %1630 = vmatmul.mubr.f32.gmra.mrb[0].mxu0 %v1440
    %v1631 = vpop.f32.mrb[0].mxu0
    %v1632 = vadd.f32 0.0, %v1631
    %v1633 = vpop.f32.mrb[0].mxu0
    %1634 = vdwg.mxu0
    %v1635 = vadd.f32 %v1315, %v1512
    %v1636 = vadd.f32 %v1316, %v1517
    %v1637 = vadd.f32 %v1317, %v1522
    %v1638 = vadd.f32 %v1318, %v1527
    %v1639 = vadd.f32 %v1319, %v1532
    %v1640 = vadd.f32 %v1320, %v1537
    %v1641 = vadd.f32 %v1321, %v1542
    %v1642 = vadd.f32 %v1322, %v1547
    %v1643 = vadd.f32 %v1323, %v1552
    %v1644 = vadd.f32 %v1324, %v1557
    %v1645 = vadd.f32 %v1325, %v1562
    %v1646 = vadd.f32 %v1326, %v1567
    %v1647 = vadd.f32 %v1327, %v1572
    %v1648 = vadd.f32 %v1328, %v1577
    %v1649 = vadd.f32 %v1329, %v1582
    %v1650 = vadd.f32 %v1330, %v1587
    %v1651 = vadd.f32 %v1331, %v1592
    %v1652 = vadd.f32 %v1332, %v1597
    %v1653 = vadd.f32 %v1333, %v1602
    %v1654 = vadd.f32 %v1334, %v1607
    %v1655 = vadd.f32 %v1335, %v1612
    %v1656 = vadd.f32 %v1336, %v1617
    %v1657 = vadd.f32 %v1337, %v1622
    %v1658 = vadd.f32 %v1338, %v1627
    %v1659 = vadd.f32 %v1339, %v1632
    %v1660 = vld [vmem:[#allocation2 + $0xc] sm:$0xff]
    %v1661 = vld [vmem:[#allocation2 + $0x14] sm:$0xff]
    %v1662 = vld [vmem:[#allocation2 + $0x1c] sm:$0xff]
    %v1663 = vld [vmem:[#allocation2 + $0x24] sm:$0xff]
    %v1664 = vld [vmem:[#allocation2 + $0x2c] sm:$0xff]
    %v1665 = vld [vmem:[#allocation2 + $0x34] sm:$0xff]
    %v1666 = vld [vmem:[#allocation2 + $0x3c] sm:$0xff]
    %v1667 = vld [vmem:[#allocation2 + $0x44] sm:$0xff]
    %v1668 = vld [vmem:[#allocation2 + $0x4c] sm:$0xff]
    %v1669 = vld [vmem:[#allocation2 + $0x54] sm:$0xff]
    %v1670 = vld [vmem:[#allocation2 + $0x5c] sm:$0xff]
    %v1671 = vld [vmem:[#allocation2 + $0x64] sm:$0xff]
    %v1672 = vld [vmem:[#allocation2 + $0x6c] sm:$0xff]
    %v1673 = vld [vmem:[#allocation2 + $0x74] sm:$0xff]
    %v1674 = vld [vmem:[#allocation2 + $0x7c] sm:$0xff]
    %v1675 = vld [vmem:[#allocation2 + $0x84] sm:$0xff]
    %v1676 = vld [vmem:[#allocation2 + $0x8c] sm:$0xff]
    %v1677 = vld [vmem:[#allocation2 + $0x94] sm:$0xff]
    %v1678 = vld [vmem:[#allocation2 + $0x9c] sm:$0xff]
    %v1679 = vld [vmem:[#allocation2 + $0xa4] sm:$0xff]
    %v1680 = vld [vmem:[#allocation2 + $0xac] sm:$0xff]
    %v1681 = vld [vmem:[#allocation2 + $0xb4] sm:$0xff]
    %v1682 = vld [vmem:[#allocation2 + $0xbc] sm:$0xff]
    %v1683 = vld [vmem:[#allocation2 + $0xc4] sm:$0xff]
    %v1684 = vld [vmem:[#allocation2 + $0xcc] sm:$0xff]
    %s1685 = scalar_lea.vmem %s1, 20
    %v1686 = vld [vmem:[%s1685] sm:$0x7]
    %v1688 = vsel %vm33, %v1660, 0
    %v1691 = vsel %vm33, %v1661, 0
    %v1694 = vsel %vm33, %v1662, 0
    %v1697 = vsel %vm33, %v1663, 0
    %v1700 = vsel %vm33, %v1664, 0
    %v1703 = vsel %vm33, %v1665, 0
    %v1706 = vsel %vm33, %v1666, 0
    %v1709 = vsel %vm33, %v1667, 0
    %v1712 = vsel %vm33, %v1668, 0
    %v1715 = vsel %vm33, %v1669, 0
    %v1718 = vsel %vm33, %v1670, 0
    %v1721 = vsel %vm33, %v1671, 0
    %v1724 = vsel %vm33, %v1672, 0
    %v1727 = vsel %vm33, %v1673, 0
    %v1730 = vsel %vm33, %v1674, 0
    %v1733 = vsel %vm33, %v1675, 0
    %v1736 = vsel %vm33, %v1676, 0
    %v1739 = vsel %vm33, %v1677, 0
    %v1742 = vsel %vm33, %v1678, 0
    %v1745 = vsel %vm33, %v1679, 0
    %v1748 = vsel %vm33, %v1680, 0
    %v1751 = vsel %vm33, %v1681, 0
    %v1754 = vsel %vm33, %v1682, 0
    %v1757 = vsel %vm33, %v1683, 0
    %v1760 = vsel %vm33, %v1684, 0
    %v1763 = vsel %vm238, %v1686, 0
    %1765 = vmatprep.subr.mxu0 0.0
    %1766 = vmatpush1.msra.mxu0 %v1763
    %1767 = vmatprep.subr.mxu0 0.0
    %1768 = vmatpush1.msra.mxu0 0.0
    %1769 = vmatprep.subr.mxu0 0.0
    %1770 = vmatpush1.msra.mxu0 0.0
    %1771 = vmatprep.subr.mxu0 0.0
    %1772 = vmatpush1.msra.mxu0 0.0
    %1773 = vmatprep.subr.mxu0 0.0
    %1774 = vmatpush1.msra.mxu0 0.0
    %1775 = vmatprep.subr.mxu0 0.0
    %1776 = vmatpush1.msra.mxu0 0.0
    %1777 = vmatprep.subr.mxu0 0.0
    %1778 = vmatpush1.msra.mxu0 0.0
    %1779 = vmatprep.subr.mxu0 0.0
    %1780 = vmatpush1.msra.mxu0 0.0
    %1781 = vmatprep.subr.mxu0 0.0
    %1782 = vmatpush1.msra.mxu0 0.0
    %1783 = vmatprep.subr.mxu0 0.0
    %1784 = vmatpush1.msra.mxu0 0.0
    %1785 = vmatprep.subr.mxu0 0.0
    %1786 = vmatpush1.msra.mxu0 0.0
    %1787 = vmatprep.subr.mxu0 0.0
    %1788 = vmatpush1.msra.mxu0 0.0
    %1789 = vmatprep.subr.mxu0 0.0
    %1790 = vmatpush1.msra.mxu0 0.0
    %1791 = vmatprep.subr.mxu0 0.0
    %1792 = vmatpush1.msra.mxu0 0.0
    %1793 = vmatprep.subr.mxu0 0.0
    %1794 = vmatpush1.msra.mxu0 0.0
    %1795 = vmatprep.subr.mxu0 0.0
    %1796 = vmatpush1.msra.mxu0 0.0
    %1797 = vmatprep.subr.mxu0 0.0
    %1798 = vmatpush1.msra.mxu0 0.0
    %1799 = vmatprep.subr.mxu0 0.0
    %1800 = vmatpush1.msra.mxu0 0.0
    %1801 = vmatprep.subr.mxu0 0.0
    %1802 = vmatpush1.msra.mxu0 0.0
    %1803 = vmatprep.subr.mxu0 0.0
    %1804 = vmatpush1.msra.mxu0 0.0
    %1805 = vmatprep.subr.mxu0 0.0
    %1806 = vmatpush1.msra.mxu0 0.0
    %1807 = vmatprep.subr.mxu0 0.0
    %1808 = vmatpush1.msra.mxu0 0.0
    %1809 = vmatprep.subr.mxu0 0.0
    %1810 = vmatpush1.msra.mxu0 0.0
    %1811 = vmatprep.subr.mxu0 0.0
    %1812 = vmatpush1.msra.mxu0 0.0
    %1813 = vmatprep.subr.mxu0 0.0
    %1814 = vmatpush1.msra.mxu0 0.0
    %1815 = vmatprep.subr.mxu0 0.0
    %1816 = vmatpush1.msra.mxu0 0.0
    %1817 = vmatprep.subr.mxu0 0.0
    %1818 = vmatpush1.msra.mxu0 0.0
    %1819 = vmatprep.subr.mxu0 0.0
    %1820 = vmatpush1.msra.mxu0 0.0
    %1821 = vmatprep.subr.mxu0 0.0
    %1822 = vmatpush1.msra.mxu0 0.0
    %1823 = vmatprep.subr.mxu0 0.0
    %1824 = vmatpush1.msra.mxu0 0.0
    %1825 = vmatprep.subr.mxu0 0.0
    %1826 = vmatpush1.msra.mxu0 0.0
    %1827 = vmatprep.subr.mxu0 0.0
    %1828 = vmatpush1.msra.mxu0 0.0
    %1829 = vmatprep.mubr.f32.mxu0 0.0
    %1830 = vmatmul.mubr.f32.gmra.mrb[0].mxu0 %v1688
    %v1831 = vpop.f32.mrb[0].mxu0
    %v1832 = vadd.f32 0.0, %v1831
    %v1833 = vpop.f32.mrb[0].mxu0
    %1834 = vmatprep.mubr.f32.mxu0 0.0
    %1835 = vmatmul.mubr.f32.gmra.mrb[0].mxu0 %v1691
    %v1836 = vpop.f32.mrb[0].mxu0
    %v1837 = vadd.f32 0.0, %v1836
    %v1838 = vpop.f32.mrb[0].mxu0
    %1839 = vmatprep.mubr.f32.mxu0 0.0
    %1840 = vmatmul.mubr.f32.gmra.mrb[0].mxu0 %v1694
    %v1841 = vpop.f32.mrb[0].mxu0
    %v1842 = vadd.f32 0.0, %v1841
    %v1843 = vpop.f32.mrb[0].mxu0
    %1844 = vmatprep.mubr.f32.mxu0 0.0
    %1845 = vmatmul.mubr.f32.gmra.mrb[0].mxu0 %v1697
    %v1846 = vpop.f32.mrb[0].mxu0
    %v1847 = vadd.f32 0.0, %v1846
    %v1848 = vpop.f32.mrb[0].mxu0
    %1849 = vmatprep.mubr.f32.mxu0 0.0
    %1850 = vmatmul.mubr.f32.gmra.mrb[0].mxu0 %v1700
    %v1851 = vpop.f32.mrb[0].mxu0
    %v1852 = vadd.f32 0.0, %v1851
    %v1853 = vpop.f32.mrb[0].mxu0
    %1854 = vmatprep.mubr.f32.mxu0 0.0
    %1855 = vmatmul.mubr.f32.gmra.mrb[0].mxu0 %v1703
    %v1856 = vpop.f32.mrb[0].mxu0
    %v1857 = vadd.f32 0.0, %v1856
    %v1858 = vpop.f32.mrb[0].mxu0
    %1859 = vmatprep.mubr.f32.mxu0 0.0
    %1860 = vmatmul.mubr.f32.gmra.mrb[0].mxu0 %v1706
    %v1861 = vpop.f32.mrb[0].mxu0
    %v1862 = vadd.f32 0.0, %v1861
    %v1863 = vpop.f32.mrb[0].mxu0
    %1864 = vmatprep.mubr.f32.mxu0 0.0
    %1865 = vmatmul.mubr.f32.gmra.mrb[0].mxu0 %v1709
    %v1866 = vpop.f32.mrb[0].mxu0
    %v1867 = vadd.f32 0.0, %v1866
    %v1868 = vpop.f32.mrb[0].mxu0
    %1869 = vmatprep.mubr.f32.mxu0 0.0
    %1870 = vmatmul.mubr.f32.gmra.mrb[0].mxu0 %v1712
    %v1871 = vpop.f32.mrb[0].mxu0
    %v1872 = vadd.f32 0.0, %v1871
    %v1873 = vpop.f32.mrb[0].mxu0
    %1874 = vmatprep.mubr.f32.mxu0 0.0
    %1875 = vmatmul.mubr.f32.gmra.mrb[0].mxu0 %v1715
    %v1876 = vpop.f32.mrb[0].mxu0
    %v1877 = vadd.f32 0.0, %v1876
    %v1878 = vpop.f32.mrb[0].mxu0
    %1879 = vmatprep.mubr.f32.mxu0 0.0
    %1880 = vmatmul.mubr.f32.gmra.mrb[0].mxu0 %v1718
    %v1881 = vpop.f32.mrb[0].mxu0
    %v1882 = vadd.f32 0.0, %v1881
    %v1883 = vpop.f32.mrb[0].mxu0
    %1884 = vmatprep.mubr.f32.mxu0 0.0
    %1885 = vmatmul.mubr.f32.gmra.mrb[0].mxu0 %v1721
    %v1886 = vpop.f32.mrb[0].mxu0
    %v1887 = vadd.f32 0.0, %v1886
    %v1888 = vpop.f32.mrb[0].mxu0
    %1889 = vmatprep.mubr.f32.mxu0 0.0
    %1890 = vmatmul.mubr.f32.gmra.mrb[0].mxu0 %v1724
    %v1891 = vpop.f32.mrb[0].mxu0
    %v1892 = vadd.f32 0.0, %v1891
    %v1893 = vpop.f32.mrb[0].mxu0
    %1894 = vmatprep.mubr.f32.mxu0 0.0
    %1895 = vmatmul.mubr.f32.gmra.mrb[0].mxu0 %v1727
    %v1896 = vpop.f32.mrb[0].mxu0
    %v1897 = vadd.f32 0.0, %v1896
    %v1898 = vpop.f32.mrb[0].mxu0
    %1899 = vmatprep.mubr.f32.mxu0 0.0
    %1900 = vmatmul.mubr.f32.gmra.mrb[0].mxu0 %v1730
    %v1901 = vpop.f32.mrb[0].mxu0
    %v1902 = vadd.f32 0.0, %v1901
    %v1903 = vpop.f32.mrb[0].mxu0
    %1904 = vmatprep.mubr.f32.mxu0 0.0
    %1905 = vmatmul.mubr.f32.gmra.mrb[0].mxu0 %v1733
    %v1906 = vpop.f32.mrb[0].mxu0
    %v1907 = vadd.f32 0.0, %v1906
    %v1908 = vpop.f32.mrb[0].mxu0
    %1909 = vmatprep.mubr.f32.mxu0 0.0
    %1910 = vmatmul.mubr.f32.gmra.mrb[0].mxu0 %v1736
    %v1911 = vpop.f32.mrb[0].mxu0
    %v1912 = vadd.f32 0.0, %v1911
    %v1913 = vpop.f32.mrb[0].mxu0
    %1914 = vmatprep.mubr.f32.mxu0 0.0
    %1915 = vmatmul.mubr.f32.gmra.mrb[0].mxu0 %v1739
    %v1916 = vpop.f32.mrb[0].mxu0
    %v1917 = vadd.f32 0.0, %v1916
    %v1918 = vpop.f32.mrb[0].mxu0
    %1919 = vmatprep.mubr.f32.mxu0 0.0
    %1920 = vmatmul.mubr.f32.gmra.mrb[0].mxu0 %v1742
    %v1921 = vpop.f32.mrb[0].mxu0
    %v1922 = vadd.f32 0.0, %v1921
    %v1923 = vpop.f32.mrb[0].mxu0
    %1924 = vmatprep.mubr.f32.mxu0 0.0
    %1925 = vmatmul.mubr.f32.gmra.mrb[0].mxu0 %v1745
    %v1926 = vpop.f32.mrb[0].mxu0
    %v1927 = vadd.f32 0.0, %v1926
    %v1928 = vpop.f32.mrb[0].mxu0
    %1929 = vmatprep.mubr.f32.mxu0 0.0
    %1930 = vmatmul.mubr.f32.gmra.mrb[0].mxu0 %v1748
    %v1931 = vpop.f32.mrb[0].mxu0
    %v1932 = vadd.f32 0.0, %v1931
    %v1933 = vpop.f32.mrb[0].mxu0
    %1934 = vmatprep.mubr.f32.mxu0 0.0
    %1935 = vmatmul.mubr.f32.gmra.mrb[0].mxu0 %v1751
    %v1936 = vpop.f32.mrb[0].mxu0
    %v1937 = vadd.f32 0.0, %v1936
    %v1938 = vpop.f32.mrb[0].mxu0
    %1939 = vmatprep.mubr.f32.mxu0 0.0
    %1940 = vmatmul.mubr.f32.gmra.mrb[0].mxu0 %v1754
    %v1941 = vpop.f32.mrb[0].mxu0
    %v1942 = vadd.f32 0.0, %v1941
    %v1943 = vpop.f32.mrb[0].mxu0
    %1944 = vmatprep.mubr.f32.mxu0 0.0
    %1945 = vmatmul.mubr.f32.gmra.mrb[0].mxu0 %v1757
    %v1946 = vpop.f32.mrb[0].mxu0
    %v1947 = vadd.f32 0.0, %v1946
    %v1948 = vpop.f32.mrb[0].mxu0
    %1949 = vmatprep.mubr.f32.mxu0 0.0
    %1950 = vmatmul.mubr.f32.gmra.mrb[0].mxu0 %v1760
    %v1951 = vpop.f32.mrb[0].mxu0
    %v1952 = vadd.f32 0.0, %v1951
    %v1953 = vpop.f32.mrb[0].mxu0
    %1954 = vdwg.mxu0
    %v1955 = vadd.f32 %v1635, %v1832
    %v1956 = vadd.f32 %v1636, %v1837
    %v1957 = vadd.f32 %v1637, %v1842
    %v1958 = vadd.f32 %v1638, %v1847
    %v1959 = vadd.f32 %v1639, %v1852
    %v1960 = vadd.f32 %v1640, %v1857
    %v1961 = vadd.f32 %v1641, %v1862
    %v1962 = vadd.f32 %v1642, %v1867
    %v1963 = vadd.f32 %v1643, %v1872
    %v1964 = vadd.f32 %v1644, %v1877
    %v1965 = vadd.f32 %v1645, %v1882
    %v1966 = vadd.f32 %v1646, %v1887
    %v1967 = vadd.f32 %v1647, %v1892
    %v1968 = vadd.f32 %v1648, %v1897
    %v1969 = vadd.f32 %v1649, %v1902
    %v1970 = vadd.f32 %v1650, %v1907
    %v1971 = vadd.f32 %v1651, %v1912
    %v1972 = vadd.f32 %v1652, %v1917
    %v1973 = vadd.f32 %v1653, %v1922
    %v1974 = vadd.f32 %v1654, %v1927
    %v1975 = vadd.f32 %v1655, %v1932
    %v1976 = vadd.f32 %v1656, %v1937
    %v1977 = vadd.f32 %v1657, %v1942
    %v1978 = vadd.f32 %v1658, %v1947
    %v1979 = vadd.f32 %v1659, %v1952
    %v1980 = vld [vmem:[#allocation2 + $0x14] sm:$0xff]
    %v1981 = vld [vmem:[#allocation2 + $0x1c] sm:$0xff]
    %v1982 = vld [vmem:[#allocation2 + $0x24] sm:$0xff]
    %v1983 = vld [vmem:[#allocation2 + $0x2c] sm:$0xff]
    %v1984 = vld [vmem:[#allocation2 + $0x34] sm:$0xff]
    %v1985 = vld [vmem:[#allocation2 + $0x3c] sm:$0xff]
    %v1986 = vld [vmem:[#allocation2 + $0x44] sm:$0xff]
    %v1987 = vld [vmem:[#allocation2 + $0x4c] sm:$0xff]
    %v1988 = vld [vmem:[#allocation2 + $0x54] sm:$0xff]
    %v1989 = vld [vmem:[#allocation2 + $0x5c] sm:$0xff]
    %v1990 = vld [vmem:[#allocation2 + $0x64] sm:$0xff]
    %v1991 = vld [vmem:[#allocation2 + $0x6c] sm:$0xff]
    %v1992 = vld [vmem:[#allocation2 + $0x74] sm:$0xff]
    %v1993 = vld [vmem:[#allocation2 + $0x7c] sm:$0xff]
    %v1994 = vld [vmem:[#allocation2 + $0x84] sm:$0xff]
    %v1995 = vld [vmem:[#allocation2 + $0x8c] sm:$0xff]
    %v1996 = vld [vmem:[#allocation2 + $0x94] sm:$0xff]
    %v1997 = vld [vmem:[#allocation2 + $0x9c] sm:$0xff]
    %v1998 = vld [vmem:[#allocation2 + $0xa4] sm:$0xff]
    %v1999 = vld [vmem:[#allocation2 + $0xac] sm:$0xff]
    %v2000 = vld [vmem:[#allocation2 + $0xb4] sm:$0xff]
    %v2001 = vld [vmem:[#allocation2 + $0xbc] sm:$0xff]
    %v2002 = vld [vmem:[#allocation2 + $0xc4] sm:$0xff]
    %v2003 = vld [vmem:[#allocation2 + $0xcc] sm:$0xff]
    %v2004 = vld [vmem:[#allocation2 + $0xd4] sm:$0xff]
    %s2005 = scalar_lea.vmem %s1, 24
    %v2006 = vld [vmem:[%s2005] sm:$0x7]
    %v2008 = vsel %vm33, %v1980, 0
    %v2011 = vsel %vm33, %v1981, 0
    %v2014 = vsel %vm33, %v1982, 0
    %v2017 = vsel %vm33, %v1983, 0
    %v2020 = vsel %vm33, %v1984, 0
    %v2023 = vsel %vm33, %v1985, 0
    %v2026 = vsel %vm33, %v1986, 0
    %v2029 = vsel %vm33, %v1987, 0
    %v2032 = vsel %vm33, %v1988, 0
    %v2035 = vsel %vm33, %v1989, 0
    %v2038 = vsel %vm33, %v1990, 0
    %v2041 = vsel %vm33, %v1991, 0
    %v2044 = vsel %vm33, %v1992, 0
    %v2047 = vsel %vm33, %v1993, 0
    %v2050 = vsel %vm33, %v1994, 0
    %v2053 = vsel %vm33, %v1995, 0
    %v2056 = vsel %vm33, %v1996, 0
    %v2059 = vsel %vm33, %v1997, 0
    %v2062 = vsel %vm33, %v1998, 0
    %v2065 = vsel %vm33, %v1999, 0
    %v2068 = vsel %vm33, %v2000, 0
    %v2071 = vsel %vm33, %v2001, 0
    %v2074 = vsel %vm33, %v2002, 0
    %v2077 = vsel %vm33, %v2003, 0
    %v2080 = vsel %vm33, %v2004, 0
    %v2083 = vsel %vm238, %v2006, 0
    %2085 = vmatprep.subr.mxu0 0.0
    %2086 = vmatpush1.msra.mxu0 %v2083
    %2087 = vmatprep.subr.mxu0 0.0
    %2088 = vmatpush1.msra.mxu0 0.0
    %2089 = vmatprep.subr.mxu0 0.0
    %2090 = vmatpush1.msra.mxu0 0.0
    %2091 = vmatprep.subr.mxu0 0.0
    %2092 = vmatpush1.msra.mxu0 0.0
    %2093 = vmatprep.subr.mxu0 0.0
    %2094 = vmatpush1.msra.mxu0 0.0
    %2095 = vmatprep.subr.mxu0 0.0
    %2096 = vmatpush1.msra.mxu0 0.0
    %2097 = vmatprep.subr.mxu0 0.0
    %2098 = vmatpush1.msra.mxu0 0.0
    %2099 = vmatprep.subr.mxu0 0.0
    %2100 = vmatpush1.msra.mxu0 0.0
    %2101 = vmatprep.subr.mxu0 0.0
    %2102 = vmatpush1.msra.mxu0 0.0
    %2103 = vmatprep.subr.mxu0 0.0
    %2104 = vmatpush1.msra.mxu0 0.0
    %2105 = vmatprep.subr.mxu0 0.0
    %2106 = vmatpush1.msra.mxu0 0.0
    %2107 = vmatprep.subr.mxu0 0.0
    %2108 = vmatpush1.msra.mxu0 0.0
    %2109 = vmatprep.subr.mxu0 0.0
    %2110 = vmatpush1.msra.mxu0 0.0
    %2111 = vmatprep.subr.mxu0 0.0
    %2112 = vmatpush1.msra.mxu0 0.0
    %2113 = vmatprep.subr.mxu0 0.0
    %2114 = vmatpush1.msra.mxu0 0.0
    %2115 = vmatprep.subr.mxu0 0.0
    %2116 = vmatpush1.msra.mxu0 0.0
    %2117 = vmatprep.subr.mxu0 0.0
    %2118 = vmatpush1.msra.mxu0 0.0
    %2119 = vmatprep.subr.mxu0 0.0
    %2120 = vmatpush1.msra.mxu0 0.0
    %2121 = vmatprep.subr.mxu0 0.0
    %2122 = vmatpush1.msra.mxu0 0.0
    %2123 = vmatprep.subr.mxu0 0.0
    %2124 = vmatpush1.msra.mxu0 0.0
    %2125 = vmatprep.subr.mxu0 0.0
    %2126 = vmatpush1.msra.mxu0 0.0
    %2127 = vmatprep.subr.mxu0 0.0
    %2128 = vmatpush1.msra.mxu0 0.0
    %2129 = vmatprep.subr.mxu0 0.0
    %2130 = vmatpush1.msra.mxu0 0.0
    %2131 = vmatprep.subr.mxu0 0.0
    %2132 = vmatpush1.msra.mxu0 0.0
    %2133 = vmatprep.subr.mxu0 0.0
    %2134 = vmatpush1.msra.mxu0 0.0
    %2135 = vmatprep.subr.mxu0 0.0
    %2136 = vmatpush1.msra.mxu0 0.0
    %2137 = vmatprep.subr.mxu0 0.0
    %2138 = vmatpush1.msra.mxu0 0.0
    %2139 = vmatprep.subr.mxu0 0.0
    %2140 = vmatpush1.msra.mxu0 0.0
    %2141 = vmatprep.subr.mxu0 0.0
    %2142 = vmatpush1.msra.mxu0 0.0
    %2143 = vmatprep.subr.mxu0 0.0
    %2144 = vmatpush1.msra.mxu0 0.0
    %2145 = vmatprep.subr.mxu0 0.0
    %2146 = vmatpush1.msra.mxu0 0.0
    %2147 = vmatprep.subr.mxu0 0.0
    %2148 = vmatpush1.msra.mxu0 0.0
    %2149 = vmatprep.mubr.f32.mxu0 0.0
    %2150 = vmatmul.mubr.f32.gmra.mrb[0].mxu0 %v2008
    %v2151 = vpop.f32.mrb[0].mxu0
    %v2152 = vadd.f32 0.0, %v2151
    %v2153 = vpop.f32.mrb[0].mxu0
    %2154 = vmatprep.mubr.f32.mxu0 0.0
    %2155 = vmatmul.mubr.f32.gmra.mrb[0].mxu0 %v2011
    %v2156 = vpop.f32.mrb[0].mxu0
    %v2157 = vadd.f32 0.0, %v2156
    %v2158 = vpop.f32.mrb[0].mxu0
    %2159 = vmatprep.mubr.f32.mxu0 0.0
    %2160 = vmatmul.mubr.f32.gmra.mrb[0].mxu0 %v2014
    %v2161 = vpop.f32.mrb[0].mxu0
    %v2162 = vadd.f32 0.0, %v2161
    %v2163 = vpop.f32.mrb[0].mxu0
    %2164 = vmatprep.mubr.f32.mxu0 0.0
    %2165 = vmatmul.mubr.f32.gmra.mrb[0].mxu0 %v2017
    %v2166 = vpop.f32.mrb[0].mxu0
    %v2167 = vadd.f32 0.0, %v2166
    %v2168 = vpop.f32.mrb[0].mxu0
    %2169 = vmatprep.mubr.f32.mxu0 0.0
    %2170 = vmatmul.mubr.f32.gmra.mrb[0].mxu0 %v2020
    %v2171 = vpop.f32.mrb[0].mxu0
    %v2172 = vadd.f32 0.0, %v2171
    %v2173 = vpop.f32.mrb[0].mxu0
    %2174 = vmatprep.mubr.f32.mxu0 0.0
    %2175 = vmatmul.mubr.f32.gmra.mrb[0].mxu0 %v2023
    %v2176 = vpop.f32.mrb[0].mxu0
    %v2177 = vadd.f32 0.0, %v2176
    %v2178 = vpop.f32.mrb[0].mxu0
    %2179 = vmatprep.mubr.f32.mxu0 0.0
    %2180 = vmatmul.mubr.f32.gmra.mrb[0].mxu0 %v2026
    %v2181 = vpop.f32.mrb[0].mxu0
    %v2182 = vadd.f32 0.0, %v2181
    %v2183 = vpop.f32.mrb[0].mxu0
    %2184 = vmatprep.mubr.f32.mxu0 0.0
    %2185 = vmatmul.mubr.f32.gmra.mrb[0].mxu0 %v2029
    %v2186 = vpop.f32.mrb[0].mxu0
    %v2187 = vadd.f32 0.0, %v2186
    %v2188 = vpop.f32.mrb[0].mxu0
    %2189 = vmatprep.mubr.f32.mxu0 0.0
    %2190 = vmatmul.mubr.f32.gmra.mrb[0].mxu0 %v2032
    %v2191 = vpop.f32.mrb[0].mxu0
    %v2192 = vadd.f32 0.0, %v2191
    %v2193 = vpop.f32.mrb[0].mxu0
    %2194 = vmatprep.mubr.f32.mxu0 0.0
    %2195 = vmatmul.mubr.f32.gmra.mrb[0].mxu0 %v2035
    %v2196 = vpop.f32.mrb[0].mxu0
    %v2197 = vadd.f32 0.0, %v2196
    %v2198 = vpop.f32.mrb[0].mxu0
    %2199 = vmatprep.mubr.f32.mxu0 0.0
    %2200 = vmatmul.mubr.f32.gmra.mrb[0].mxu0 %v2038
    %v2201 = vpop.f32.mrb[0].mxu0
    %v2202 = vadd.f32 0.0, %v2201
    %v2203 = vpop.f32.mrb[0].mxu0
    %2204 = vmatprep.mubr.f32.mxu0 0.0
    %2205 = vmatmul.mubr.f32.gmra.mrb[0].mxu0 %v2041
    %v2206 = vpop.f32.mrb[0].mxu0
    %v2207 = vadd.f32 0.0, %v2206
    %v2208 = vpop.f32.mrb[0].mxu0
    %2209 = vmatprep.mubr.f32.mxu0 0.0
    %2210 = vmatmul.mubr.f32.gmra.mrb[0].mxu0 %v2044
    %v2211 = vpop.f32.mrb[0].mxu0
    %v2212 = vadd.f32 0.0, %v2211
    %v2213 = vpop.f32.mrb[0].mxu0
    %2214 = vmatprep.mubr.f32.mxu0 0.0
    %2215 = vmatmul.mubr.f32.gmra.mrb[0].mxu0 %v2047
    %v2216 = vpop.f32.mrb[0].mxu0
    %v2217 = vadd.f32 0.0, %v2216
    %v2218 = vpop.f32.mrb[0].mxu0
    %2219 = vmatprep.mubr.f32.mxu0 0.0
    %2220 = vmatmul.mubr.f32.gmra.mrb[0].mxu0 %v2050
    %v2221 = vpop.f32.mrb[0].mxu0
    %v2222 = vadd.f32 0.0, %v2221
    %v2223 = vpop.f32.mrb[0].mxu0
    %2224 = vmatprep.mubr.f32.mxu0 0.0
    %2225 = vmatmul.mubr.f32.gmra.mrb[0].mxu0 %v2053
    %v2226 = vpop.f32.mrb[0].mxu0
    %v2227 = vadd.f32 0.0, %v2226
    %v2228 = vpop.f32.mrb[0].mxu0
    %2229 = vmatprep.mubr.f32.mxu0 0.0
    %2230 = vmatmul.mubr.f32.gmra.mrb[0].mxu0 %v2056
    %v2231 = vpop.f32.mrb[0].mxu0
    %v2232 = vadd.f32 0.0, %v2231
    %v2233 = vpop.f32.mrb[0].mxu0
    %2234 = vmatprep.mubr.f32.mxu0 0.0
    %2235 = vmatmul.mubr.f32.gmra.mrb[0].mxu0 %v2059
    %v2236 = vpop.f32.mrb[0].mxu0
    %v2237 = vadd.f32 0.0, %v2236
    %v2238 = vpop.f32.mrb[0].mxu0
    %2239 = vmatprep.mubr.f32.mxu0 0.0
    %2240 = vmatmul.mubr.f32.gmra.mrb[0].mxu0 %v2062
    %v2241 = vpop.f32.mrb[0].mxu0
    %v2242 = vadd.f32 0.0, %v2241
    %v2243 = vpop.f32.mrb[0].mxu0
    %2244 = vmatprep.mubr.f32.mxu0 0.0
    %2245 = vmatmul.mubr.f32.gmra.mrb[0].mxu0 %v2065
    %v2246 = vpop.f32.mrb[0].mxu0
    %v2247 = vadd.f32 0.0, %v2246
    %v2248 = vpop.f32.mrb[0].mxu0
    %2249 = vmatprep.mubr.f32.mxu0 0.0
    %2250 = vmatmul.mubr.f32.gmra.mrb[0].mxu0 %v2068
    %v2251 = vpop.f32.mrb[0].mxu0
    %v2252 = vadd.f32 0.0, %v2251
    %v2253 = vpop.f32.mrb[0].mxu0
    %2254 = vmatprep.mubr.f32.mxu0 0.0
    %2255 = vmatmul.mubr.f32.gmra.mrb[0].mxu0 %v2071
    %v2256 = vpop.f32.mrb[0].mxu0
    %v2257 = vadd.f32 0.0, %v2256
    %v2258 = vpop.f32.mrb[0].mxu0
    %2259 = vmatprep.mubr.f32.mxu0 0.0
    %2260 = vmatmul.mubr.f32.gmra.mrb[0].mxu0 %v2074
    %v2261 = vpop.f32.mrb[0].mxu0
    %v2262 = vadd.f32 0.0, %v2261
    %v2263 = vpop.f32.mrb[0].mxu0
    %2264 = vmatprep.mubr.f32.mxu0 0.0
    %2265 = vmatmul.mubr.f32.gmra.mrb[0].mxu0 %v2077
    %v2266 = vpop.f32.mrb[0].mxu0
    %v2267 = vadd.f32 0.0, %v2266
    %v2268 = vpop.f32.mrb[0].mxu0
    %2269 = vmatprep.mubr.f32.mxu0 0.0
    %2270 = vmatmul.mubr.f32.gmra.mrb[0].mxu0 %v2080
    %v2271 = vpop.f32.mrb[0].mxu0
    %v2272 = vadd.f32 0.0, %v2271
    %v2273 = vpop.f32.mrb[0].mxu0
    %2274 = vdwg.mxu0
    %v2275 = vadd.f32 %v1955, %v2152
    %v2276 = vadd.f32 %v1956, %v2157
    %v2277 = vadd.f32 %v1957, %v2162
    %v2278 = vadd.f32 %v1958, %v2167
    %v2279 = vadd.f32 %v1959, %v2172
    %v2280 = vadd.f32 %v1960, %v2177
    %v2281 = vadd.f32 %v1961, %v2182
    %v2282 = vadd.f32 %v1962, %v2187
    %v2283 = vadd.f32 %v1963, %v2192
    %v2284 = vadd.f32 %v1964, %v2197
    %v2285 = vadd.f32 %v1965, %v2202
    %v2286 = vadd.f32 %v1966, %v2207
    %v2287 = vadd.f32 %v1967, %v2212
    %v2288 = vadd.f32 %v1968, %v2217
    %v2289 = vadd.f32 %v1969, %v2222
    %v2290 = vadd.f32 %v1970, %v2227
    %v2291 = vadd.f32 %v1971, %v2232
    %v2292 = vadd.f32 %v1972, %v2237
    %v2293 = vadd.f32 %v1973, %v2242
    %v2294 = vadd.f32 %v1974, %v2247
    %v2295 = vadd.f32 %v1975, %v2252
    %v2296 = vadd.f32 %v1976, %v2257
    %v2297 = vadd.f32 %v1977, %v2262
    %v2298 = vadd.f32 %v1978, %v2267
    %v2299 = vadd.f32 %v1979, %v2272
    %v2300 = vld [vmem:[#allocation2 + $0x15] sm:$0xff]
    %v2301 = vld [vmem:[#allocation2 + $0x1d] sm:$0xff]
    %v2302 = vld [vmem:[#allocation2 + $0x25] sm:$0xff]
    %v2303 = vld [vmem:[#allocation2 + $0x2d] sm:$0xff]
    %v2304 = vld [vmem:[#allocation2 + $0x35] sm:$0xff]
    %v2305 = vld [vmem:[#allocation2 + $0x3d] sm:$0xff]
    %v2306 = vld [vmem:[#allocation2 + $0x45] sm:$0xff]
    %v2307 = vld [vmem:[#allocation2 + $0x4d] sm:$0xff]
    %v2308 = vld [vmem:[#allocation2 + $0x55] sm:$0xff]
    %v2309 = vld [vmem:[#allocation2 + $0x5d] sm:$0xff]
    %v2310 = vld [vmem:[#allocation2 + $0x65] sm:$0xff]
    %v2311 = vld [vmem:[#allocation2 + $0x6d] sm:$0xff]
    %v2312 = vld [vmem:[#allocation2 + $0x75] sm:$0xff]
    %v2313 = vld [vmem:[#allocation2 + $0x7d] sm:$0xff]
    %v2314 = vld [vmem:[#allocation2 + $0x85] sm:$0xff]
    %v2315 = vld [vmem:[#allocation2 + $0x8d] sm:$0xff]
    %v2316 = vld [vmem:[#allocation2 + $0x95] sm:$0xff]
    %v2317 = vld [vmem:[#allocation2 + $0x9d] sm:$0xff]
    %v2318 = vld [vmem:[#allocation2 + $0xa5] sm:$0xff]
    %v2319 = vld [vmem:[#allocation2 + $0xad] sm:$0xff]
    %v2320 = vld [vmem:[#allocation2 + $0xb5] sm:$0xff]
    %v2321 = vld [vmem:[#allocation2 + $0xbd] sm:$0xff]
    %v2322 = vld [vmem:[#allocation2 + $0xc5] sm:$0xff]
    %v2323 = vld [vmem:[#allocation2 + $0xcd] sm:$0xff]
    %v2324 = vld [vmem:[#allocation2 + $0xd5] sm:$0xff]
    %s2325 = scalar_lea.vmem %s1, 28
    %v2326 = vld [vmem:[%s2325] sm:$0x7]
    %v2328 = vsel %vm33, %v2300, 0
    %v2331 = vsel %vm33, %v2301, 0
    %v2334 = vsel %vm33, %v2302, 0
    %v2337 = vsel %vm33, %v2303, 0
    %v2340 = vsel %vm33, %v2304, 0
    %v2343 = vsel %vm33, %v2305, 0
    %v2346 = vsel %vm33, %v2306, 0
    %v2349 = vsel %vm33, %v2307, 0
    %v2352 = vsel %vm33, %v2308, 0
    %v2355 = vsel %vm33, %v2309, 0
    %v2358 = vsel %vm33, %v2310, 0
    %v2361 = vsel %vm33, %v2311, 0
    %v2364 = vsel %vm33, %v2312, 0
    %v2367 = vsel %vm33, %v2313, 0
    %v2370 = vsel %vm33, %v2314, 0
    %v2373 = vsel %vm33, %v2315, 0
    %v2376 = vsel %vm33, %v2316, 0
    %v2379 = vsel %vm33, %v2317, 0
    %v2382 = vsel %vm33, %v2318, 0
    %v2385 = vsel %vm33, %v2319, 0
    %v2388 = vsel %vm33, %v2320, 0
    %v2391 = vsel %vm33, %v2321, 0
    %v2394 = vsel %vm33, %v2322, 0
    %v2397 = vsel %vm33, %v2323, 0
    %v2400 = vsel %vm33, %v2324, 0
    %v2403 = vsel %vm238, %v2326, 0
    %2405 = vmatprep.subr.mxu0 0.0
    %2406 = vmatpush1.msra.mxu0 %v2403
    %2407 = vmatprep.subr.mxu0 0.0
    %2408 = vmatpush1.msra.mxu0 0.0
    %2409 = vmatprep.subr.mxu0 0.0
    %2410 = vmatpush1.msra.mxu0 0.0
    %2411 = vmatprep.subr.mxu0 0.0
    %2412 = vmatpush1.msra.mxu0 0.0
    %2413 = vmatprep.subr.mxu0 0.0
    %2414 = vmatpush1.msra.mxu0 0.0
    %2415 = vmatprep.subr.mxu0 0.0
    %2416 = vmatpush1.msra.mxu0 0.0
    %2417 = vmatprep.subr.mxu0 0.0
    %2418 = vmatpush1.msra.mxu0 0.0
    %2419 = vmatprep.subr.mxu0 0.0
    %2420 = vmatpush1.msra.mxu0 0.0
    %2421 = vmatprep.subr.mxu0 0.0
    %2422 = vmatpush1.msra.mxu0 0.0
    %2423 = vmatprep.subr.mxu0 0.0
    %2424 = vmatpush1.msra.mxu0 0.0
    %2425 = vmatprep.subr.mxu0 0.0
    %2426 = vmatpush1.msra.mxu0 0.0
    %2427 = vmatprep.subr.mxu0 0.0
    %2428 = vmatpush1.msra.mxu0 0.0
    %2429 = vmatprep.subr.mxu0 0.0
    %2430 = vmatpush1.msra.mxu0 0.0
    %2431 = vmatprep.subr.mxu0 0.0
    %2432 = vmatpush1.msra.mxu0 0.0
    %2433 = vmatprep.subr.mxu0 0.0
    %2434 = vmatpush1.msra.mxu0 0.0
    %2435 = vmatprep.subr.mxu0 0.0
    %2436 = vmatpush1.msra.mxu0 0.0
    %2437 = vmatprep.subr.mxu0 0.0
    %2438 = vmatpush1.msra.mxu0 0.0
    %2439 = vmatprep.subr.mxu0 0.0
    %2440 = vmatpush1.msra.mxu0 0.0
    %2441 = vmatprep.subr.mxu0 0.0
    %2442 = vmatpush1.msra.mxu0 0.0
    %2443 = vmatprep.subr.mxu0 0.0
    %2444 = vmatpush1.msra.mxu0 0.0
    %2445 = vmatprep.subr.mxu0 0.0
    %2446 = vmatpush1.msra.mxu0 0.0
    %2447 = vmatprep.subr.mxu0 0.0
    %2448 = vmatpush1.msra.mxu0 0.0
    %2449 = vmatprep.subr.mxu0 0.0
    %2450 = vmatpush1.msra.mxu0 0.0
    %2451 = vmatprep.subr.mxu0 0.0
    %2452 = vmatpush1.msra.mxu0 0.0
    %2453 = vmatprep.subr.mxu0 0.0
    %2454 = vmatpush1.msra.mxu0 0.0
    %2455 = vmatprep.subr.mxu0 0.0
    %2456 = vmatpush1.msra.mxu0 0.0
    %2457 = vmatprep.subr.mxu0 0.0
    %2458 = vmatpush1.msra.mxu0 0.0
    %2459 = vmatprep.subr.mxu0 0.0
    %2460 = vmatpush1.msra.mxu0 0.0
    %2461 = vmatprep.subr.mxu0 0.0
    %2462 = vmatpush1.msra.mxu0 0.0
    %2463 = vmatprep.subr.mxu0 0.0
    %2464 = vmatpush1.msra.mxu0 0.0
    %2465 = vmatprep.subr.mxu0 0.0
    %2466 = vmatpush1.msra.mxu0 0.0
    %2467 = vmatprep.subr.mxu0 0.0
    %2468 = vmatpush1.msra.mxu0 0.0
    %2469 = vmatprep.mubr.f32.mxu0 0.0
    %2470 = vmatmul.mubr.f32.gmra.mrb[0].mxu0 %v2328
    %v2471 = vpop.f32.mrb[0].mxu0
    %v2472 = vadd.f32 0.0, %v2471
    %v2473 = vpop.f32.mrb[0].mxu0
    %2474 = vmatprep.mubr.f32.mxu0 0.0
    %2475 = vmatmul.mubr.f32.gmra.mrb[0].mxu0 %v2331
    %v2476 = vpop.f32.mrb[0].mxu0
    %v2477 = vadd.f32 0.0, %v2476
    %v2478 = vpop.f32.mrb[0].mxu0
    %2479 = vmatprep.mubr.f32.mxu0 0.0
    %2480 = vmatmul.mubr.f32.gmra.mrb[0].mxu0 %v2334
    %v2481 = vpop.f32.mrb[0].mxu0
    %v2482 = vadd.f32 0.0, %v2481
    %v2483 = vpop.f32.mrb[0].mxu0
    %2484 = vmatprep.mubr.f32.mxu0 0.0
    %2485 = vmatmul.mubr.f32.gmra.mrb[0].mxu0 %v2337
    %v2486 = vpop.f32.mrb[0].mxu0
    %v2487 = vadd.f32 0.0, %v2486
    %v2488 = vpop.f32.mrb[0].mxu0
    %2489 = vmatprep.mubr.f32.mxu0 0.0
    %2490 = vmatmul.mubr.f32.gmra.mrb[0].mxu0 %v2340
    %v2491 = vpop.f32.mrb[0].mxu0
    %v2492 = vadd.f32 0.0, %v2491
    %v2493 = vpop.f32.mrb[0].mxu0
    %2494 = vmatprep.mubr.f32.mxu0 0.0
    %2495 = vmatmul.mubr.f32.gmra.mrb[0].mxu0 %v2343
    %v2496 = vpop.f32.mrb[0].mxu0
    %v2497 = vadd.f32 0.0, %v2496
    %v2498 = vpop.f32.mrb[0].mxu0
    %2499 = vmatprep.mubr.f32.mxu0 0.0
    %2500 = vmatmul.mubr.f32.gmra.mrb[0].mxu0 %v2346
    %v2501 = vpop.f32.mrb[0].mxu0
    %v2502 = vadd.f32 0.0, %v2501
    %v2503 = vpop.f32.mrb[0].mxu0
    %2504 = vmatprep.mubr.f32.mxu0 0.0
    %2505 = vmatmul.mubr.f32.gmra.mrb[0].mxu0 %v2349
    %v2506 = vpop.f32.mrb[0].mxu0
    %v2507 = vadd.f32 0.0, %v2506
    %v2508 = vpop.f32.mrb[0].mxu0
    %2509 = vmatprep.mubr.f32.mxu0 0.0
    %2510 = vmatmul.mubr.f32.gmra.mrb[0].mxu0 %v2352
    %v2511 = vpop.f32.mrb[0].mxu0
    %v2512 = vadd.f32 0.0, %v2511
    %v2513 = vpop.f32.mrb[0].mxu0
    %2514 = vmatprep.mubr.f32.mxu0 0.0
    %2515 = vmatmul.mubr.f32.gmra.mrb[0].mxu0 %v2355
    %v2516 = vpop.f32.mrb[0].mxu0
    %v2517 = vadd.f32 0.0, %v2516
    %v2518 = vpop.f32.mrb[0].mxu0
    %2519 = vmatprep.mubr.f32.mxu0 0.0
    %2520 = vmatmul.mubr.f32.gmra.mrb[0].mxu0 %v2358
    %v2521 = vpop.f32.mrb[0].mxu0
    %v2522 = vadd.f32 0.0, %v2521
    %v2523 = vpop.f32.mrb[0].mxu0
    %2524 = vmatprep.mubr.f32.mxu0 0.0
    %2525 = vmatmul.mubr.f32.gmra.mrb[0].mxu0 %v2361
    %v2526 = vpop.f32.mrb[0].mxu0
    %v2527 = vadd.f32 0.0, %v2526
    %v2528 = vpop.f32.mrb[0].mxu0
    %2529 = vmatprep.mubr.f32.mxu0 0.0
    %2530 = vmatmul.mubr.f32.gmra.mrb[0].mxu0 %v2364
    %v2531 = vpop.f32.mrb[0].mxu0
    %v2532 = vadd.f32 0.0, %v2531
    %v2533 = vpop.f32.mrb[0].mxu0
    %2534 = vmatprep.mubr.f32.mxu0 0.0
    %2535 = vmatmul.mubr.f32.gmra.mrb[0].mxu0 %v2367
    %v2536 = vpop.f32.mrb[0].mxu0
    %v2537 = vadd.f32 0.0, %v2536
    %v2538 = vpop.f32.mrb[0].mxu0
    %2539 = vmatprep.mubr.f32.mxu0 0.0
    %2540 = vmatmul.mubr.f32.gmra.mrb[0].mxu0 %v2370
    %v2541 = vpop.f32.mrb[0].mxu0
    %v2542 = vadd.f32 0.0, %v2541
    %v2543 = vpop.f32.mrb[0].mxu0
    %2544 = vmatprep.mubr.f32.mxu0 0.0
    %2545 = vmatmul.mubr.f32.gmra.mrb[0].mxu0 %v2373
    %v2546 = vpop.f32.mrb[0].mxu0
    %v2547 = vadd.f32 0.0, %v2546
    %v2548 = vpop.f32.mrb[0].mxu0
    %2549 = vmatprep.mubr.f32.mxu0 0.0
    %2550 = vmatmul.mubr.f32.gmra.mrb[0].mxu0 %v2376
    %v2551 = vpop.f32.mrb[0].mxu0
    %v2552 = vadd.f32 0.0, %v2551
    %v2553 = vpop.f32.mrb[0].mxu0
    %2554 = vmatprep.mubr.f32.mxu0 0.0
    %2555 = vmatmul.mubr.f32.gmra.mrb[0].mxu0 %v2379
    %v2556 = vpop.f32.mrb[0].mxu0
    %v2557 = vadd.f32 0.0, %v2556
    %v2558 = vpop.f32.mrb[0].mxu0
    %2559 = vmatprep.mubr.f32.mxu0 0.0
    %2560 = vmatmul.mubr.f32.gmra.mrb[0].mxu0 %v2382
    %v2561 = vpop.f32.mrb[0].mxu0
    %v2562 = vadd.f32 0.0, %v2561
    %v2563 = vpop.f32.mrb[0].mxu0
    %2564 = vmatprep.mubr.f32.mxu0 0.0
    %2565 = vmatmul.mubr.f32.gmra.mrb[0].mxu0 %v2385
    %v2566 = vpop.f32.mrb[0].mxu0
    %v2567 = vadd.f32 0.0, %v2566
    %v2568 = vpop.f32.mrb[0].mxu0
    %2569 = vmatprep.mubr.f32.mxu0 0.0
    %2570 = vmatmul.mubr.f32.gmra.mrb[0].mxu0 %v2388
    %v2571 = vpop.f32.mrb[0].mxu0
    %v2572 = vadd.f32 0.0, %v2571
    %v2573 = vpop.f32.mrb[0].mxu0
    %2574 = vmatprep.mubr.f32.mxu0 0.0
    %2575 = vmatmul.mubr.f32.gmra.mrb[0].mxu0 %v2391
    %v2576 = vpop.f32.mrb[0].mxu0
    %v2577 = vadd.f32 0.0, %v2576
    %v2578 = vpop.f32.mrb[0].mxu0
    %2579 = vmatprep.mubr.f32.mxu0 0.0
    %2580 = vmatmul.mubr.f32.gmra.mrb[0].mxu0 %v2394
    %v2581 = vpop.f32.mrb[0].mxu0
    %v2582 = vadd.f32 0.0, %v2581
    %v2583 = vpop.f32.mrb[0].mxu0
    %2584 = vmatprep.mubr.f32.mxu0 0.0
    %2585 = vmatmul.mubr.f32.gmra.mrb[0].mxu0 %v2397
    %v2586 = vpop.f32.mrb[0].mxu0
    %v2587 = vadd.f32 0.0, %v2586
    %v2588 = vpop.f32.mrb[0].mxu0
    %2589 = vmatprep.mubr.f32.mxu0 0.0
    %2590 = vmatmul.mubr.f32.gmra.mrb[0].mxu0 %v2400
    %v2591 = vpop.f32.mrb[0].mxu0
    %v2592 = vadd.f32 0.0, %v2591
    %v2593 = vpop.f32.mrb[0].mxu0
    %2594 = vdwg.mxu0
    %v2595 = vadd.f32 %v2275, %v2472
    %v2596 = vadd.f32 %v2276, %v2477
    %v2597 = vadd.f32 %v2277, %v2482
    %v2598 = vadd.f32 %v2278, %v2487
    %v2599 = vadd.f32 %v2279, %v2492
    %v2600 = vadd.f32 %v2280, %v2497
    %v2601 = vadd.f32 %v2281, %v2502
    %v2602 = vadd.f32 %v2282, %v2507
    %v2603 = vadd.f32 %v2283, %v2512
    %v2604 = vadd.f32 %v2284, %v2517
    %v2605 = vadd.f32 %v2285, %v2522
    %v2606 = vadd.f32 %v2286, %v2527
    %v2607 = vadd.f32 %v2287, %v2532
    %v2608 = vadd.f32 %v2288, %v2537
    %v2609 = vadd.f32 %v2289, %v2542
    %v2610 = vadd.f32 %v2290, %v2547
    %v2611 = vadd.f32 %v2291, %v2552
    %v2612 = vadd.f32 %v2292, %v2557
    %v2613 = vadd.f32 %v2293, %v2562
    %v2614 = vadd.f32 %v2294, %v2567
    %v2615 = vadd.f32 %v2295, %v2572
    %v2616 = vadd.f32 %v2296, %v2577
    %v2617 = vadd.f32 %v2297, %v2582
    %v2618 = vadd.f32 %v2298, %v2587
    %v2619 = vadd.f32 %v2299, %v2592
    %v2620 = vld [vmem:[#allocation2 + $0x16] sm:$0xff]
    %v2621 = vld [vmem:[#allocation2 + $0x1e] sm:$0xff]
    %v2622 = vld [vmem:[#allocation2 + $0x26] sm:$0xff]
    %v2623 = vld [vmem:[#allocation2 + $0x2e] sm:$0xff]
    %v2624 = vld [vmem:[#allocation2 + $0x36] sm:$0xff]
    %v2625 = vld [vmem:[#allocation2 + $0x3e] sm:$0xff]
    %v2626 = vld [vmem:[#allocation2 + $0x46] sm:$0xff]
    %v2627 = vld [vmem:[#allocation2 + $0x4e] sm:$0xff]
    %v2628 = vld [vmem:[#allocation2 + $0x56] sm:$0xff]
    %v2629 = vld [vmem:[#allocation2 + $0x5e] sm:$0xff]
    %v2630 = vld [vmem:[#allocation2 + $0x66] sm:$0xff]
    %v2631 = vld [vmem:[#allocation2 + $0x6e] sm:$0xff]
    %v2632 = vld [vmem:[#allocation2 + $0x76] sm:$0xff]
    %v2633 = vld [vmem:[#allocation2 + $0x7e] sm:$0xff]
    %v2634 = vld [vmem:[#allocation2 + $0x86] sm:$0xff]
    %v2635 = vld [vmem:[#allocation2 + $0x8e] sm:$0xff]
    %v2636 = vld [vmem:[#allocation2 + $0x96] sm:$0xff]
    %v2637 = vld [vmem:[#allocation2 + $0x9e] sm:$0xff]
    %v2638 = vld [vmem:[#allocation2 + $0xa6] sm:$0xff]
    %v2639 = vld [vmem:[#allocation2 + $0xae] sm:$0xff]
    %v2640 = vld [vmem:[#allocation2 + $0xb6] sm:$0xff]
    %v2641 = vld [vmem:[#allocation2 + $0xbe] sm:$0xff]
    %v2642 = vld [vmem:[#allocation2 + $0xc6] sm:$0xff]
    %v2643 = vld [vmem:[#allocation2 + $0xce] sm:$0xff]
    %v2644 = vld [vmem:[#allocation2 + $0xd6] sm:$0xff]
    %s2645 = scalar_lea.vmem %s1, 32
    %v2646 = vld [vmem:[%s2645] sm:$0x7]
    %v2648 = vsel %vm33, %v2620, 0
    %v2651 = vsel %vm33, %v2621, 0
    %v2654 = vsel %vm33, %v2622, 0
    %v2657 = vsel %vm33, %v2623, 0
    %v2660 = vsel %vm33, %v2624, 0
    %v2663 = vsel %vm33, %v2625, 0
    %v2666 = vsel %vm33, %v2626, 0
    %v2669 = vsel %vm33, %v2627, 0
    %v2672 = vsel %vm33, %v2628, 0
    %v2675 = vsel %vm33, %v2629, 0
    %v2678 = vsel %vm33, %v2630, 0
    %v2681 = vsel %vm33, %v2631, 0
    %v2684 = vsel %vm33, %v2632, 0
    %v2687 = vsel %vm33, %v2633, 0
    %v2690 = vsel %vm33, %v2634, 0
    %v2693 = vsel %vm33, %v2635, 0
    %v2696 = vsel %vm33, %v2636, 0
    %v2699 = vsel %vm33, %v2637, 0
    %v2702 = vsel %vm33, %v2638, 0
    %v2705 = vsel %vm33, %v2639, 0
    %v2708 = vsel %vm33, %v2640, 0
    %v2711 = vsel %vm33, %v2641, 0
    %v2714 = vsel %vm33, %v2642, 0
    %v2717 = vsel %vm33, %v2643, 0
    %v2720 = vsel %vm33, %v2644, 0
    %v2723 = vsel %vm238, %v2646, 0
    %2725 = vmatprep.subr.mxu0 0.0
    %2726 = vmatpush1.msra.mxu0 %v2723
    %2727 = vmatprep.subr.mxu0 0.0
    %2728 = vmatpush1.msra.mxu0 0.0
    %2729 = vmatprep.subr.mxu0 0.0
    %2730 = vmatpush1.msra.mxu0 0.0
    %2731 = vmatprep.subr.mxu0 0.0
    %2732 = vmatpush1.msra.mxu0 0.0
    %2733 = vmatprep.subr.mxu0 0.0
    %2734 = vmatpush1.msra.mxu0 0.0
    %2735 = vmatprep.subr.mxu0 0.0
    %2736 = vmatpush1.msra.mxu0 0.0
    %2737 = vmatprep.subr.mxu0 0.0
    %2738 = vmatpush1.msra.mxu0 0.0
    %2739 = vmatprep.subr.mxu0 0.0
    %2740 = vmatpush1.msra.mxu0 0.0
    %2741 = vmatprep.subr.mxu0 0.0
    %2742 = vmatpush1.msra.mxu0 0.0
    %2743 = vmatprep.subr.mxu0 0.0
    %2744 = vmatpush1.msra.mxu0 0.0
    %2745 = vmatprep.subr.mxu0 0.0
    %2746 = vmatpush1.msra.mxu0 0.0
    %2747 = vmatprep.subr.mxu0 0.0
    %2748 = vmatpush1.msra.mxu0 0.0
    %2749 = vmatprep.subr.mxu0 0.0
    %2750 = vmatpush1.msra.mxu0 0.0
    %2751 = vmatprep.subr.mxu0 0.0
    %2752 = vmatpush1.msra.mxu0 0.0
    %2753 = vmatprep.subr.mxu0 0.0
    %2754 = vmatpush1.msra.mxu0 0.0
    %2755 = vmatprep.subr.mxu0 0.0
    %2756 = vmatpush1.msra.mxu0 0.0
    %2757 = vmatprep.subr.mxu0 0.0
    %2758 = vmatpush1.msra.mxu0 0.0
    %2759 = vmatprep.subr.mxu0 0.0
    %2760 = vmatpush1.msra.mxu0 0.0
    %2761 = vmatprep.subr.mxu0 0.0
    %2762 = vmatpush1.msra.mxu0 0.0
    %2763 = vmatprep.subr.mxu0 0.0
    %2764 = vmatpush1.msra.mxu0 0.0
    %2765 = vmatprep.subr.mxu0 0.0
    %2766 = vmatpush1.msra.mxu0 0.0
    %2767 = vmatprep.subr.mxu0 0.0
    %2768 = vmatpush1.msra.mxu0 0.0
    %2769 = vmatprep.subr.mxu0 0.0
    %2770 = vmatpush1.msra.mxu0 0.0
    %2771 = vmatprep.subr.mxu0 0.0
    %2772 = vmatpush1.msra.mxu0 0.0
    %2773 = vmatprep.subr.mxu0 0.0
    %2774 = vmatpush1.msra.mxu0 0.0
    %2775 = vmatprep.subr.mxu0 0.0
    %2776 = vmatpush1.msra.mxu0 0.0
    %2777 = vmatprep.subr.mxu0 0.0
    %2778 = vmatpush1.msra.mxu0 0.0
    %2779 = vmatprep.subr.mxu0 0.0
    %2780 = vmatpush1.msra.mxu0 0.0
    %2781 = vmatprep.subr.mxu0 0.0
    %2782 = vmatpush1.msra.mxu0 0.0
    %2783 = vmatprep.subr.mxu0 0.0
    %2784 = vmatpush1.msra.mxu0 0.0
    %2785 = vmatprep.subr.mxu0 0.0
    %2786 = vmatpush1.msra.mxu0 0.0
    %2787 = vmatprep.subr.mxu0 0.0
    %2788 = vmatpush1.msra.mxu0 0.0
    %2789 = vmatprep.mubr.f32.mxu0 0.0
    %2790 = vmatmul.mubr.f32.gmra.mrb[0].mxu0 %v2648
    %v2791 = vpop.f32.mrb[0].mxu0
    %v2792 = vadd.f32 0.0, %v2791
    %v2793 = vpop.f32.mrb[0].mxu0
    %2794 = vmatprep.mubr.f32.mxu0 0.0
    %2795 = vmatmul.mubr.f32.gmra.mrb[0].mxu0 %v2651
    %v2796 = vpop.f32.mrb[0].mxu0
    %v2797 = vadd.f32 0.0, %v2796
    %v2798 = vpop.f32.mrb[0].mxu0
    %2799 = vmatprep.mubr.f32.mxu0 0.0
    %2800 = vmatmul.mubr.f32.gmra.mrb[0].mxu0 %v2654
    %v2801 = vpop.f32.mrb[0].mxu0
    %v2802 = vadd.f32 0.0, %v2801
    %v2803 = vpop.f32.mrb[0].mxu0
    %2804 = vmatprep.mubr.f32.mxu0 0.0
    %2805 = vmatmul.mubr.f32.gmra.mrb[0].mxu0 %v2657
    %v2806 = vpop.f32.mrb[0].mxu0
    %v2807 = vadd.f32 0.0, %v2806
    %v2808 = vpop.f32.mrb[0].mxu0
    %2809 = vmatprep.mubr.f32.mxu0 0.0
    %2810 = vmatmul.mubr.f32.gmra.mrb[0].mxu0 %v2660
    %v2811 = vpop.f32.mrb[0].mxu0
    %v2812 = vadd.f32 0.0, %v2811
    %v2813 = vpop.f32.mrb[0].mxu0
    %2814 = vmatprep.mubr.f32.mxu0 0.0
    %2815 = vmatmul.mubr.f32.gmra.mrb[0].mxu0 %v2663
    %v2816 = vpop.f32.mrb[0].mxu0
    %v2817 = vadd.f32 0.0, %v2816
    %v2818 = vpop.f32.mrb[0].mxu0
    %2819 = vmatprep.mubr.f32.mxu0 0.0
    %2820 = vmatmul.mubr.f32.gmra.mrb[0].mxu0 %v2666
    %v2821 = vpop.f32.mrb[0].mxu0
    %v2822 = vadd.f32 0.0, %v2821
    %v2823 = vpop.f32.mrb[0].mxu0
    %2824 = vmatprep.mubr.f32.mxu0 0.0
    %2825 = vmatmul.mubr.f32.gmra.mrb[0].mxu0 %v2669
    %v2826 = vpop.f32.mrb[0].mxu0
    %v2827 = vadd.f32 0.0, %v2826
    %v2828 = vpop.f32.mrb[0].mxu0
    %2829 = vmatprep.mubr.f32.mxu0 0.0
    %2830 = vmatmul.mubr.f32.gmra.mrb[0].mxu0 %v2672
    %v2831 = vpop.f32.mrb[0].mxu0
    %v2832 = vadd.f32 0.0, %v2831
    %v2833 = vpop.f32.mrb[0].mxu0
    %2834 = vmatprep.mubr.f32.mxu0 0.0
    %2835 = vmatmul.mubr.f32.gmra.mrb[0].mxu0 %v2675
    %v2836 = vpop.f32.mrb[0].mxu0
    %v2837 = vadd.f32 0.0, %v2836
    %v2838 = vpop.f32.mrb[0].mxu0
    %2839 = vmatprep.mubr.f32.mxu0 0.0
    %2840 = vmatmul.mubr.f32.gmra.mrb[0].mxu0 %v2678
    %v2841 = vpop.f32.mrb[0].mxu0
    %v2842 = vadd.f32 0.0, %v2841
    %v2843 = vpop.f32.mrb[0].mxu0
    %2844 = vmatprep.mubr.f32.mxu0 0.0
    %2845 = vmatmul.mubr.f32.gmra.mrb[0].mxu0 %v2681
    %v2846 = vpop.f32.mrb[0].mxu0
    %v2847 = vadd.f32 0.0, %v2846
    %v2848 = vpop.f32.mrb[0].mxu0
    %2849 = vmatprep.mubr.f32.mxu0 0.0
    %2850 = vmatmul.mubr.f32.gmra.mrb[0].mxu0 %v2684
    %v2851 = vpop.f32.mrb[0].mxu0
    %v2852 = vadd.f32 0.0, %v2851
    %v2853 = vpop.f32.mrb[0].mxu0
    %2854 = vmatprep.mubr.f32.mxu0 0.0
    %2855 = vmatmul.mubr.f32.gmra.mrb[0].mxu0 %v2687
    %v2856 = vpop.f32.mrb[0].mxu0
    %v2857 = vadd.f32 0.0, %v2856
    %v2858 = vpop.f32.mrb[0].mxu0
    %2859 = vmatprep.mubr.f32.mxu0 0.0
    %2860 = vmatmul.mubr.f32.gmra.mrb[0].mxu0 %v2690
    %v2861 = vpop.f32.mrb[0].mxu0
    %v2862 = vadd.f32 0.0, %v2861
    %v2863 = vpop.f32.mrb[0].mxu0
    %2864 = vmatprep.mubr.f32.mxu0 0.0
    %2865 = vmatmul.mubr.f32.gmra.mrb[0].mxu0 %v2693
    %v2866 = vpop.f32.mrb[0].mxu0
    %v2867 = vadd.f32 0.0, %v2866
    %v2868 = vpop.f32.mrb[0].mxu0
    %2869 = vmatprep.mubr.f32.mxu0 0.0
    %2870 = vmatmul.mubr.f32.gmra.mrb[0].mxu0 %v2696
    %v2871 = vpop.f32.mrb[0].mxu0
    %v2872 = vadd.f32 0.0, %v2871
    %v2873 = vpop.f32.mrb[0].mxu0
    %2874 = vmatprep.mubr.f32.mxu0 0.0
    %2875 = vmatmul.mubr.f32.gmra.mrb[0].mxu0 %v2699
    %v2876 = vpop.f32.mrb[0].mxu0
    %v2877 = vadd.f32 0.0, %v2876
    %v2878 = vpop.f32.mrb[0].mxu0
    %2879 = vmatprep.mubr.f32.mxu0 0.0
    %2880 = vmatmul.mubr.f32.gmra.mrb[0].mxu0 %v2702
    %v2881 = vpop.f32.mrb[0].mxu0
    %v2882 = vadd.f32 0.0, %v2881
    %v2883 = vpop.f32.mrb[0].mxu0
    %2884 = vmatprep.mubr.f32.mxu0 0.0
    %2885 = vmatmul.mubr.f32.gmra.mrb[0].mxu0 %v2705
    %v2886 = vpop.f32.mrb[0].mxu0
    %v2887 = vadd.f32 0.0, %v2886
    %v2888 = vpop.f32.mrb[0].mxu0
    %2889 = vmatprep.mubr.f32.mxu0 0.0
    %2890 = vmatmul.mubr.f32.gmra.mrb[0].mxu0 %v2708
    %v2891 = vpop.f32.mrb[0].mxu0
    %v2892 = vadd.f32 0.0, %v2891
    %v2893 = vpop.f32.mrb[0].mxu0
    %2894 = vmatprep.mubr.f32.mxu0 0.0
    %2895 = vmatmul.mubr.f32.gmra.mrb[0].mxu0 %v2711
    %v2896 = vpop.f32.mrb[0].mxu0
    %v2897 = vadd.f32 0.0, %v2896
    %v2898 = vpop.f32.mrb[0].mxu0
    %2899 = vmatprep.mubr.f32.mxu0 0.0
    %2900 = vmatmul.mubr.f32.gmra.mrb[0].mxu0 %v2714
    %v2901 = vpop.f32.mrb[0].mxu0
    %v2902 = vadd.f32 0.0, %v2901
    %v2903 = vpop.f32.mrb[0].mxu0
    %2904 = vmatprep.mubr.f32.mxu0 0.0
    %2905 = vmatmul.mubr.f32.gmra.mrb[0].mxu0 %v2717
    %v2906 = vpop.f32.mrb[0].mxu0
    %v2907 = vadd.f32 0.0, %v2906
    %v2908 = vpop.f32.mrb[0].mxu0
    %2909 = vmatprep.mubr.f32.mxu0 0.0
    %2910 = vmatmul.mubr.f32.gmra.mrb[0].mxu0 %v2720
    %v2911 = vpop.f32.mrb[0].mxu0
    %v2912 = vadd.f32 0.0, %v2911
    %v2913 = vpop.f32.mrb[0].mxu0
    %2914 = vdwg.mxu0
    %v2915 = vadd.f32 %v2595, %v2792
    %v2916 = vadd.f32 %v2596, %v2797
    %v2917 = vadd.f32 %v2597, %v2802
    %v2918 = vadd.f32 %v2598, %v2807
    %v2919 = vadd.f32 %v2599, %v2812
    %v2920 = vadd.f32 %v2600, %v2817
    %v2921 = vadd.f32 %v2601, %v2822
    %v2922 = vadd.f32 %v2602, %v2827
    %v2923 = vadd.f32 %v2603, %v2832
    %v2924 = vadd.f32 %v2604, %v2837
    %v2925 = vadd.f32 %v2605, %v2842
    %v2926 = vadd.f32 %v2606, %v2847
    %v2927 = vadd.f32 %v2607, %v2852
    %v2928 = vadd.f32 %v2608, %v2857
    %v2929 = vadd.f32 %v2609, %v2862
    %v2930 = vadd.f32 %v2610, %v2867
    %v2931 = vadd.f32 %v2611, %v2872
    %v2932 = vadd.f32 %v2612, %v2877
    %v2933 = vadd.f32 %v2613, %v2882
    %v2934 = vadd.f32 %v2614, %v2887
    %v2935 = vadd.f32 %v2615, %v2892
    %v2936 = vadd.f32 %v2616, %v2897
    %v2937 = vadd.f32 %v2617, %v2902
    %v2938 = vadd.f32 %v2618, %v2907
    %v2939 = vadd.f32 %v2619, %v2912
    %v2940 = vld [vmem:[%s2] sm:$0x1]
    %v2942 = vlaneseq
    %v2943 = vshrl.u32 %v2942, 7
    %v2944 = vsub.s32 0, %v2943
    %v2945 = vrot.slane %v2940, %v2944
    %v2947 = vadd.f32 %v2915, %v2945
    %v2948 = vadd.f32 %v2916, %v2945
    %v2949 = vadd.f32 %v2917, %v2945
    %v2950 = vadd.f32 %v2918, %v2945
    %v2951 = vadd.f32 %v2919, %v2945
    %v2952 = vadd.f32 %v2920, %v2945
    %v2953 = vadd.f32 %v2921, %v2945
    %v2954 = vadd.f32 %v2922, %v2945
    %v2955 = vadd.f32 %v2923, %v2945
    %v2956 = vadd.f32 %v2924, %v2945
    %v2957 = vadd.f32 %v2925, %v2945
    %v2958 = vadd.f32 %v2926, %v2945
    %v2959 = vadd.f32 %v2927, %v2945
    %v2960 = vadd.f32 %v2928, %v2945
    %v2961 = vadd.f32 %v2929, %v2945
    %v2962 = vadd.f32 %v2930, %v2945
    %v2963 = vadd.f32 %v2931, %v2945
    %v2964 = vadd.f32 %v2932, %v2945
    %v2965 = vadd.f32 %v2933, %v2945
    %v2966 = vadd.f32 %v2934, %v2945
    %v2967 = vadd.f32 %v2935, %v2945
    %v2968 = vadd.f32 %v2936, %v2945
    %v2969 = vadd.f32 %v2937, %v2945
    %v2970 = vadd.f32 %v2938, %v2945
    %v2971 = vadd.f32 %v2939, %v2945
    %v2972 = vmax.f32 %v2947, 0.0
    %v2973 = vmax.f32 %v2948, 0.0
    %v2974 = vmax.f32 %v2949, 0.0
    %v2975 = vmax.f32 %v2950, 0.0
    %v2976 = vmax.f32 %v2951, 0.0
    %v2977 = vmax.f32 %v2952, 0.0
    %v2978 = vmax.f32 %v2953, 0.0
    %v2979 = vmax.f32 %v2954, 0.0
    %v2980 = vmax.f32 %v2955, 0.0
    %v2981 = vmax.f32 %v2956, 0.0
    %v2982 = vmax.f32 %v2957, 0.0
    %v2983 = vmax.f32 %v2958, 0.0
    %v2984 = vmax.f32 %v2959, 0.0
    %v2985 = vmax.f32 %v2960, 0.0
    %v2986 = vmax.f32 %v2961, 0.0
    %v2987 = vmax.f32 %v2962, 0.0
    %v2988 = vmax.f32 %v2963, 0.0
    %v2989 = vmax.f32 %v2964, 0.0
    %v2990 = vmax.f32 %v2965, 0.0
    %v2991 = vmax.f32 %v2966, 0.0
    %v2992 = vmax.f32 %v2967, 0.0
    %v2993 = vmax.f32 %v2968, 0.0
    %v2994 = vmax.f32 %v2969, 0.0
    %v2995 = vmax.f32 %v2970, 0.0
    %v2996 = vmax.f32 %v2971, 0.0
    %vm2997 = vcmask 64512
    %2998 = vst.msk [vmem:[#allocation3] sm:$0xff] %vm2997, %v2972
    %2999 = vst.msk [vmem:[#allocation3 + $0x8] sm:$0xff] %vm2997, %v2973
    %3000 = vst.msk [vmem:[#allocation3 + $0x10] sm:$0xff] %vm2997, %v2974
    %3001 = vst.msk [vmem:[#allocation3 + $0x18] sm:$0xff] %vm2997, %v2975
    %3002 = vst.msk [vmem:[#allocation3 + $0x20] sm:$0xff] %vm2997, %v2976
    %3003 = vst.msk [vmem:[#allocation3 + $0x28] sm:$0xff] %vm2997, %v2977
    %3004 = vst.msk [vmem:[#allocation3 + $0x30] sm:$0xff] %vm2997, %v2978
    %3005 = vst.msk [vmem:[#allocation3 + $0x38] sm:$0xff] %vm2997, %v2979
    %3006 = vst.msk [vmem:[#allocation3 + $0x40] sm:$0xff] %vm2997, %v2980
    %3007 = vst.msk [vmem:[#allocation3 + $0x48] sm:$0xff] %vm2997, %v2981
    %3008 = vst.msk [vmem:[#allocation3 + $0x50] sm:$0xff] %vm2997, %v2982
    %3009 = vst.msk [vmem:[#allocation3 + $0x58] sm:$0xff] %vm2997, %v2983
    %3010 = vst.msk [vmem:[#allocation3 + $0x60] sm:$0xff] %vm2997, %v2984
    %3011 = vst.msk [vmem:[#allocation3 + $0x68] sm:$0xff] %vm2997, %v2985
    %3012 = vst.msk [vmem:[#allocation3 + $0x70] sm:$0xff] %vm2997, %v2986
    %3013 = vst.msk [vmem:[#allocation3 + $0x78] sm:$0xff] %vm2997, %v2987
    %3014 = vst.msk [vmem:[#allocation3 + $0x80] sm:$0xff] %vm2997, %v2988
    %3015 = vst.msk [vmem:[#allocation3 + $0x88] sm:$0xff] %vm2997, %v2989
    %3016 = vst.msk [vmem:[#allocation3 + $0x90] sm:$0xff] %vm2997, %v2990
    %3017 = vst.msk [vmem:[#allocation3 + $0x98] sm:$0xff] %vm2997, %v2991
    %3018 = vst.msk [vmem:[#allocation3 + $0xa0] sm:$0xff] %vm2997, %v2992
    %3019 = vst.msk [vmem:[#allocation3 + $0xa8] sm:$0xff] %vm2997, %v2993
    %3020 = vst.msk [vmem:[#allocation3 + $0xb0] sm:$0xff] %vm2997, %v2994
    %3021 = vst.msk [vmem:[#allocation3 + $0xb8] sm:$0xff] %vm2997, %v2995
    %3022 = vst.msk [vmem:[#allocation3 + $0xc0] sm:$0xff] %vm2997, %v2996
    %3023 = vst.msk [vmem:[#allocation4] sm:$0xff] %vm2997, 0.0
    %3024 = vst.msk [vmem:[#allocation4 + $0x8] sm:$0xff] %vm2997, 0.0
    %3025 = vst.msk [vmem:[#allocation4 + $0x10] sm:$0xff] %vm2997, 0.0
    %3026 = vst.msk [vmem:[#allocation4 + $0x18] sm:$0xff] %vm2997, 0.0
    %3027 = vst.msk [vmem:[#allocation4 + $0x20] sm:$0xff] %vm2997, 0.0
    %3028 = vst.msk [vmem:[#allocation4 + $0x28] sm:$0xff] %vm2997, 0.0
    %3029 = vst.msk [vmem:[#allocation4 + $0x30] sm:$0xff] %vm2997, 0.0
    %3030 = vst.msk [vmem:[#allocation4 + $0x38] sm:$0xff] %vm2997, 0.0
    %3031 = vst.msk [vmem:[#allocation4 + $0x40] sm:$0xff] %vm2997, 0.0
    %3032 = vst.msk [vmem:[#allocation4 + $0x48] sm:$0xff] %vm2997, 0.0
    %vm3033 = vcmask 62464
    %3034 = vst.msk [vmem:[#allocation4 + $0x50] sm:$0x3f] %vm3033, 0.0
    %v3035 = vld [vmem:[#allocation3 + $0xb] sm:$0xff]
    %v3036 = vld [vmem:[#allocation3 + $0x15] sm:$0xff]
    %v3037 = vmax.f32 %v3035, %v3036
    %v3039 = vrot.slane %v3037, 1
    %v3041 = vmax.f32 %v3037, %v3039
    %vm3042 = vcmask 57344
    %3043 = vst.msk [vmem:[#allocation4 + $0xe] sm:$0x1] %vm3042, %v3041
    %vm3044 = vcmask 59394
    %3045 = vst.msk [vmem:[#allocation4 + $0xd] sm:$0x4] %vm3044, %v3041
    %vm3046 = vcmask 61444
    %3047 = vst.msk [vmem:[#allocation4 + $0xc] sm:$0x10] %vm3046, %v3041
    %vm3048 = vcmask 63494
    %3049 = vst.msk [vmem:[#allocation4 + $0xb] sm:$0x40] %vm3048, %v3041
    %v3050 = vld [vmem:[#allocation3 + $0x1f] sm:$0xff]
    %v3051 = vld [vmem:[#allocation3 + $0x29] sm:$0xff]
    %v3052 = vmax.f32 %v3050, %v3051
    %v3054 = vrot.slane %v3052, 1
    %v3056 = vmax.f32 %v3052, %v3054
    %3057 = vst.msk [vmem:[#allocation4 + $0x14] sm:$0x1] %vm3042, %v3056
    %3058 = vst.msk [vmem:[#allocation4 + $0x13] sm:$0x4] %vm3044, %v3056
    %3059 = vst.msk [vmem:[#allocation4 + $0x12] sm:$0x10] %vm3046, %v3056
    %3060 = vst.msk [vmem:[#allocation4 + $0x11] sm:$0x40] %vm3048, %v3056
    %v3061 = vld [vmem:[#allocation3 + $0x33] sm:$0xff]
    %v3062 = vld [vmem:[#allocation3 + $0x3d] sm:$0xff]
    %v3063 = vmax.f32 %v3061, %v3062
    %v3065 = vrot.slane %v3063, 1
    %v3067 = vmax.f32 %v3063, %v3065
    %3068 = vst.msk [vmem:[#allocation4 + $0x1a] sm:$0x1] %vm3042, %v3067
    %3069 = vst.msk [vmem:[#allocation4 + $0x19] sm:$0x4] %vm3044, %v3067
    %3070 = vst.msk [vmem:[#allocation4 + $0x18] sm:$0x10] %vm3046, %v3067
    %3071 = vst.msk [vmem:[#allocation4 + $0x17] sm:$0x40] %vm3048, %v3067
    %v3072 = vld [vmem:[#allocation3 + $0x47] sm:$0xff]
    %v3073 = vld [vmem:[#allocation3 + $0x51] sm:$0xff]
    %v3074 = vmax.f32 %v3072, %v3073
    %v3076 = vrot.slane %v3074, 1
    %v3078 = vmax.f32 %v3074, %v3076
    %3079 = vst.msk [vmem:[#allocation4 + $0x20] sm:$0x1] %vm3042, %v3078
    %3080 = vst.msk [vmem:[#allocation4 + $0x1f] sm:$0x4] %vm3044, %v3078
    %3081 = vst.msk [vmem:[#allocation4 + $0x1e] sm:$0x10] %vm3046, %v3078
    %3082 = vst.msk [vmem:[#allocation4 + $0x1d] sm:$0x40] %vm3048, %v3078
    %v3083 = vld [vmem:[#allocation3 + $0x6f] sm:$0xff]
    %v3084 = vld [vmem:[#allocation3 + $0x79] sm:$0xff]
    %v3085 = vmax.f32 %v3083, %v3084
    %v3087 = vrot.slane %v3085, 1
    %v3089 = vmax.f32 %v3085, %v3087
    %3090 = vst.msk [vmem:[#allocation4 + $0x32] sm:$0x1] %vm3042, %v3089
    %3091 = vst.msk [vmem:[#allocation4 + $0x31] sm:$0x4] %vm3044, %v3089
    %3092 = vst.msk [vmem:[#allocation4 + $0x30] sm:$0x10] %vm3046, %v3089
    %3093 = vst.msk [vmem:[#allocation4 + $0x2f] sm:$0x40] %vm3048, %v3089
    %v3094 = vld [vmem:[#allocation3 + $0x83] sm:$0xff]
    %v3095 = vld [vmem:[#allocation3 + $0x8d] sm:$0xff]
    %v3096 = vmax.f32 %v3094, %v3095
    %v3098 = vrot.slane %v3096, 1
    %v3100 = vmax.f32 %v3096, %v3098
    %3101 = vst.msk [vmem:[#allocation4 + $0x38] sm:$0x1] %vm3042, %v3100
    %3102 = vst.msk [vmem:[#allocation4 + $0x37] sm:$0x4] %vm3044, %v3100
    %3103 = vst.msk [vmem:[#allocation4 + $0x36] sm:$0x10] %vm3046, %v3100
    %3104 = vst.msk [vmem:[#allocation4 + $0x35] sm:$0x40] %vm3048, %v3100
    %v3105 = vld [vmem:[#allocation3 + $0x97] sm:$0xff]
    %v3106 = vld [vmem:[#allocation3 + $0xa1] sm:$0xff]
    %v3107 = vmax.f32 %v3105, %v3106
    %v3109 = vrot.slane %v3107, 1
    %v3111 = vmax.f32 %v3107, %v3109
    %3112 = vst.msk [vmem:[#allocation4 + $0x3e] sm:$0x1] %vm3042, %v3111
    %3113 = vst.msk [vmem:[#allocation4 + $0x3d] sm:$0x4] %vm3044, %v3111
    %3114 = vst.msk [vmem:[#allocation4 + $0x3c] sm:$0x10] %vm3046, %v3111
    %3115 = vst.msk [vmem:[#allocation4 + $0x3b] sm:$0x40] %vm3048, %v3111
    %v3116 = vld [vmem:[#allocation3 + $0xab] sm:$0xff]
    %v3117 = vld [vmem:[#allocation3 + $0xb5] sm:$0xff]
    %v3118 = vmax.f32 %v3116, %v3117
    %v3120 = vrot.slane %v3118, 1
    %v3122 = vmax.f32 %v3118, %v3120
    %3123 = vst.msk [vmem:[#allocation4 + $0x44] sm:$0x1] %vm3042, %v3122
    %3124 = vst.msk [vmem:[#allocation4 + $0x43] sm:$0x4] %vm3044, %v3122
    %3125 = vst.msk [vmem:[#allocation4 + $0x42] sm:$0x10] %vm3046, %v3122
    %3126 = vst.msk [vmem:[#allocation4 + $0x41] sm:$0x40] %vm3048, %v3122
    %v3127 = vld [vmem:[#allocation4] sm:$0xff]
    %v3128 = vld [vmem:[#allocation4 + $0x8] sm:$0xff]
    %v3129 = vld [vmem:[#allocation4 + $0x10] sm:$0xff]
    %v3130 = vld [vmem:[#allocation4 + $0x18] sm:$0xff]
    %v3131 = vld [vmem:[#allocation4 + $0x20] sm:$0xff]
    %v3132 = vld [vmem:[#allocation4 + $0x28] sm:$0xff]
    %v3133 = vld [vmem:[#allocation4 + $0x30] sm:$0xff]
    %v3134 = vld [vmem:[#allocation4 + $0x38] sm:$0xff]
    %v3135 = vld [vmem:[#allocation4 + $0x40] sm:$0xff]
    %v3136 = vld [vmem:[%s3] sm:$0xff]
    %v3137 = vld [vmem:[#allocation4 + $0x1] sm:$0xff]
    %v3138 = vld [vmem:[#allocation4 + $0x9] sm:$0xff]
    %v3139 = vld [vmem:[#allocation4 + $0x11] sm:$0xff]
    %v3140 = vld [vmem:[#allocation4 + $0x19] sm:$0xff]
    %v3141 = vld [vmem:[#allocation4 + $0x21] sm:$0xff]
    %v3142 = vld [vmem:[#allocation4 + $0x29] sm:$0xff]
    %v3143 = vld [vmem:[#allocation4 + $0x31] sm:$0xff]
    %v3144 = vld [vmem:[#allocation4 + $0x39] sm:$0xff]
    %v3145 = vld [vmem:[#allocation4 + $0x41] sm:$0xff]
    %s3146 = scalar_lea.vmem %s3, 8
    %v3147 = vld [vmem:[%s3146] sm:$0xff]
    %v3149 = vsel %vm2997, %v3137, 0
    %v3152 = vsel %vm2997, %v3138, 0
    %v3155 = vsel %vm2997, %v3139, 0
    %v3158 = vsel %vm2997, %v3140, 0
    %v3161 = vsel %vm2997, %v3141, 0
    %v3164 = vsel %vm2997, %v3142, 0
    %v3167 = vsel %vm2997, %v3143, 0
    %v3170 = vsel %vm2997, %v3144, 0
    %v3173 = vsel %vm2997, %v3145, 0
    %3175 = vmatprep.subr.mxu0 0.0
    %3176 = vmatpush1.msra.mxu0 %v3147
    %3177 = vmatprep.subr.mxu0 0.0
    %3178 = vmatpush1.msra.mxu0 0.0
    %3179 = vmatprep.subr.mxu0 0.0
    %3180 = vmatpush1.msra.mxu0 0.0
    %3181 = vmatprep.subr.mxu0 0.0
    %3182 = vmatpush1.msra.mxu0 0.0
    %3183 = vmatprep.subr.mxu0 0.0
    %3184 = vmatpush1.msra.mxu0 0.0
    %3185 = vmatprep.subr.mxu0 0.0
    %3186 = vmatpush1.msra.mxu0 0.0
    %3187 = vmatprep.subr.mxu0 0.0
    %3188 = vmatpush1.msra.mxu0 0.0
    %3189 = vmatprep.subr.mxu0 0.0
    %3190 = vmatpush1.msra.mxu0 0.0
    %3191 = vmatprep.subr.mxu0 0.0
    %3192 = vmatpush1.msra.mxu0 0.0
    %3193 = vmatprep.subr.mxu0 0.0
    %3194 = vmatpush1.msra.mxu0 0.0
    %3195 = vmatprep.subr.mxu0 0.0
    %3196 = vmatpush1.msra.mxu0 0.0
    %3197 = vmatprep.subr.mxu0 0.0
    %3198 = vmatpush1.msra.mxu0 0.0
    %3199 = vmatprep.subr.mxu0 0.0
    %3200 = vmatpush1.msra.mxu0 0.0
    %3201 = vmatprep.subr.mxu0 0.0
    %3202 = vmatpush1.msra.mxu0 0.0
    %3203 = vmatprep.subr.mxu0 0.0
    %3204 = vmatpush1.msra.mxu0 0.0
    %3205 = vmatprep.subr.mxu0 0.0
    %3206 = vmatpush1.msra.mxu0 0.0
    %3207 = vmatprep.subr.mxu0 0.0
    %3208 = vmatpush1.msra.mxu0 0.0
    %3209 = vmatprep.subr.mxu0 0.0
    %3210 = vmatpush1.msra.mxu0 0.0
    %3211 = vmatprep.subr.mxu0 0.0
    %3212 = vmatpush1.msra.mxu0 0.0
    %3213 = vmatprep.subr.mxu0 0.0
    %3214 = vmatpush1.msra.mxu0 0.0
    %3215 = vmatprep.subr.mxu0 0.0
    %3216 = vmatpush1.msra.mxu0 0.0
    %3217 = vmatprep.subr.mxu0 0.0
    %3218 = vmatpush1.msra.mxu0 0.0
    %3219 = vmatprep.subr.mxu0 0.0
    %3220 = vmatpush1.msra.mxu0 0.0
    %3221 = vmatprep.subr.mxu0 0.0
    %3222 = vmatpush1.msra.mxu0 0.0
    %3223 = vmatprep.subr.mxu0 0.0
    %3224 = vmatpush1.msra.mxu0 0.0
    %3225 = vmatprep.subr.mxu0 0.0
    %3226 = vmatpush1.msra.mxu0 0.0
    %3227 = vmatprep.subr.mxu0 0.0
    %3228 = vmatpush1.msra.mxu0 0.0
    %3229 = vmatprep.subr.mxu0 0.0
    %3230 = vmatpush1.msra.mxu0 0.0
    %3231 = vmatprep.subr.mxu0 0.0
    %3232 = vmatpush1.msra.mxu0 0.0
    %3233 = vmatprep.subr.mxu0 0.0
    %3234 = vmatpush1.msra.mxu0 0.0
    %3235 = vmatprep.subr.mxu0 0.0
    %3236 = vmatpush1.msra.mxu0 0.0
    %3237 = vmatprep.subr.mxu0 0.0
    %3238 = vmatpush1.msra.mxu0 0.0
    %3239 = vmatprep.mubr.f32.mxu0 0.0
    %3240 = vmatmul.mubr.f32.gmra.mrb[0].mxu0 %v3149
    %v3241 = vpop.f32.mrb[0].mxu0
    %v3242 = vadd.f32 0.0, %v3241
    %v3243 = vpop.f32.mrb[0].mxu0
    %3244 = vmatprep.mubr.f32.mxu0 0.0
    %3245 = vmatmul.mubr.f32.gmra.mrb[0].mxu0 %v3152
    %v3246 = vpop.f32.mrb[0].mxu0
    %v3247 = vadd.f32 0.0, %v3246
    %v3248 = vpop.f32.mrb[0].mxu0
    %3249 = vmatprep.mubr.f32.mxu0 0.0
    %3250 = vmatmul.mubr.f32.gmra.mrb[0].mxu0 %v3155
    %v3251 = vpop.f32.mrb[0].mxu0
    %v3252 = vadd.f32 0.0, %v3251
    %v3253 = vpop.f32.mrb[0].mxu0
    %3254 = vmatprep.mubr.f32.mxu0 0.0
    %3255 = vmatmul.mubr.f32.gmra.mrb[0].mxu0 %v3158
    %v3256 = vpop.f32.mrb[0].mxu0
    %v3257 = vadd.f32 0.0, %v3256
    %v3258 = vpop.f32.mrb[0].mxu0
    %3259 = vmatprep.mubr.f32.mxu0 0.0
    %3260 = vmatmul.mubr.f32.gmra.mrb[0].mxu0 %v3161
    %v3261 = vpop.f32.mrb[0].mxu0
    %v3262 = vadd.f32 0.0, %v3261
    %v3263 = vpop.f32.mrb[0].mxu0
    %3264 = vmatprep.mubr.f32.mxu0 0.0
    %3265 = vmatmul.mubr.f32.gmra.mrb[0].mxu0 %v3164
    %v3266 = vpop.f32.mrb[0].mxu0
    %v3267 = vadd.f32 0.0, %v3266
    %v3268 = vpop.f32.mrb[0].mxu0
    %3269 = vmatprep.mubr.f32.mxu0 0.0
    %3270 = vmatmul.mubr.f32.gmra.mrb[0].mxu0 %v3167
    %v3271 = vpop.f32.mrb[0].mxu0
    %v3272 = vadd.f32 0.0, %v3271
    %v3273 = vpop.f32.mrb[0].mxu0
    %3274 = vmatprep.mubr.f32.mxu0 0.0
    %3275 = vmatmul.mubr.f32.gmra.mrb[0].mxu0 %v3170
    %v3276 = vpop.f32.mrb[0].mxu0
    %v3277 = vadd.f32 0.0, %v3276
    %v3278 = vpop.f32.mrb[0].mxu0
    %3279 = vmatprep.mubr.f32.mxu0 0.0
    %3280 = vmatmul.mubr.f32.gmra.mrb[0].mxu0 %v3173
    %v3281 = vpop.f32.mrb[0].mxu0
    %v3282 = vadd.f32 0.0, %v3281
    %v3283 = vpop.f32.mrb[0].mxu0
    %3284 = vdwg.mxu0
    %v3286 = vsel %vm2997, %v3127, 0
    %v3289 = vsel %vm2997, %v3128, 0
    %v3292 = vsel %vm2997, %v3129, 0
    %v3295 = vsel %vm2997, %v3130, 0
    %v3298 = vsel %vm2997, %v3131, 0
    %v3301 = vsel %vm2997, %v3132, 0
    %v3304 = vsel %vm2997, %v3133, 0
    %v3307 = vsel %vm2997, %v3134, 0
    %v3310 = vsel %vm2997, %v3135, 0
    %3312 = vmatprep.subr.mxu0 0.0
    %3313 = vmatpush1.msra.mxu0 %v3136
    %3314 = vmatprep.subr.mxu0 0.0
    %3315 = vmatpush1.msra.mxu0 0.0
    %3316 = vmatprep.subr.mxu0 0.0
    %3317 = vmatpush1.msra.mxu0 0.0
    %3318 = vmatprep.subr.mxu0 0.0
    %3319 = vmatpush1.msra.mxu0 0.0
    %3320 = vmatprep.subr.mxu0 0.0
    %3321 = vmatpush1.msra.mxu0 0.0
    %3322 = vmatprep.subr.mxu0 0.0
    %3323 = vmatpush1.msra.mxu0 0.0
    %3324 = vmatprep.subr.mxu0 0.0
    %3325 = vmatpush1.msra.mxu0 0.0
    %3326 = vmatprep.subr.mxu0 0.0
    %3327 = vmatpush1.msra.mxu0 0.0
    %3328 = vmatprep.subr.mxu0 0.0
    %3329 = vmatpush1.msra.mxu0 0.0
    %3330 = vmatprep.subr.mxu0 0.0
    %3331 = vmatpush1.msra.mxu0 0.0
    %3332 = vmatprep.subr.mxu0 0.0
    %3333 = vmatpush1.msra.mxu0 0.0
    %3334 = vmatprep.subr.mxu0 0.0
    %3335 = vmatpush1.msra.mxu0 0.0
    %3336 = vmatprep.subr.mxu0 0.0
    %3337 = vmatpush1.msra.mxu0 0.0
    %3338 = vmatprep.subr.mxu0 0.0
    %3339 = vmatpush1.msra.mxu0 0.0
    %3340 = vmatprep.subr.mxu0 0.0
    %3341 = vmatpush1.msra.mxu0 0.0
    %3342 = vmatprep.subr.mxu0 0.0
    %3343 = vmatpush1.msra.mxu0 0.0
    %3344 = vmatprep.subr.mxu0 0.0
    %3345 = vmatpush1.msra.mxu0 0.0
    %3346 = vmatprep.subr.mxu0 0.0
    %3347 = vmatpush1.msra.mxu0 0.0
    %3348 = vmatprep.subr.mxu0 0.0
    %3349 = vmatpush1.msra.mxu0 0.0
    %3350 = vmatprep.subr.mxu0 0.0
    %3351 = vmatpush1.msra.mxu0 0.0
    %3352 = vmatprep.subr.mxu0 0.0
    %3353 = vmatpush1.msra.mxu0 0.0
    %3354 = vmatprep.subr.mxu0 0.0
    %3355 = vmatpush1.msra.mxu0 0.0
    %3356 = vmatprep.subr.mxu0 0.0
    %3357 = vmatpush1.msra.mxu0 0.0
    %3358 = vmatprep.subr.mxu0 0.0
    %3359 = vmatpush1.msra.mxu0 0.0
    %3360 = vmatprep.subr.mxu0 0.0
    %3361 = vmatpush1.msra.mxu0 0.0
    %3362 = vmatprep.subr.mxu0 0.0
    %3363 = vmatpush1.msra.mxu0 0.0
    %3364 = vmatprep.subr.mxu0 0.0
    %3365 = vmatpush1.msra.mxu0 0.0
    %3366 = vmatprep.subr.mxu0 0.0
    %3367 = vmatpush1.msra.mxu0 0.0
    %3368 = vmatprep.subr.mxu0 0.0
    %3369 = vmatpush1.msra.mxu0 0.0
    %3370 = vmatprep.subr.mxu0 0.0
    %3371 = vmatpush1.msra.mxu0 0.0
    %3372 = vmatprep.subr.mxu0 0.0
    %3373 = vmatpush1.msra.mxu0 0.0
    %3374 = vmatprep.subr.mxu0 0.0
    %3375 = vmatpush1.msra.mxu0 0.0
    %3376 = vmatprep.mubr.f32.mxu0 0.0
    %3377 = vmatmul.mubr.f32.gmra.mrb[0].mxu0 %v3286
    %v3378 = vpop.f32.mrb[0].mxu0
    %v3379 = vadd.f32 %v3242, %v3378
    %v3380 = vpop.f32.mrb[0].mxu0
    %3381 = vmatprep.mubr.f32.mxu0 0.0
    %3382 = vmatmul.mubr.f32.gmra.mrb[0].mxu0 %v3289
    %v3383 = vpop.f32.mrb[0].mxu0
    %v3384 = vadd.f32 %v3247, %v3383
    %v3385 = vpop.f32.mrb[0].mxu0
    %3386 = vmatprep.mubr.f32.mxu0 0.0
    %3387 = vmatmul.mubr.f32.gmra.mrb[0].mxu0 %v3292
    %v3388 = vpop.f32.mrb[0].mxu0
    %v3389 = vadd.f32 %v3252, %v3388
    %v3390 = vpop.f32.mrb[0].mxu0
    %3391 = vmatprep.mubr.f32.mxu0 0.0
    %3392 = vmatmul.mubr.f32.gmra.mrb[0].mxu0 %v3295
    %v3393 = vpop.f32.mrb[0].mxu0
    %v3394 = vadd.f32 %v3257, %v3393
    %v3395 = vpop.f32.mrb[0].mxu0
    %3396 = vmatprep.mubr.f32.mxu0 0.0
    %3397 = vmatmul.mubr.f32.gmra.mrb[0].mxu0 %v3298
    %v3398 = vpop.f32.mrb[0].mxu0
    %v3399 = vadd.f32 %v3262, %v3398
    %v3400 = vpop.f32.mrb[0].mxu0
    %3401 = vmatprep.mubr.f32.mxu0 0.0
    %3402 = vmatmul.mubr.f32.gmra.mrb[0].mxu0 %v3301
    %v3403 = vpop.f32.mrb[0].mxu0
    %v3404 = vadd.f32 %v3267, %v3403
    %v3405 = vpop.f32.mrb[0].mxu0
    %3406 = vmatprep.mubr.f32.mxu0 0.0
    %3407 = vmatmul.mubr.f32.gmra.mrb[0].mxu0 %v3304
    %v3408 = vpop.f32.mrb[0].mxu0
    %v3409 = vadd.f32 %v3272, %v3408
    %v3410 = vpop.f32.mrb[0].mxu0
    %3411 = vmatprep.mubr.f32.mxu0 0.0
    %3412 = vmatmul.mubr.f32.gmra.mrb[0].mxu0 %v3307
    %v3413 = vpop.f32.mrb[0].mxu0
    %v3414 = vadd.f32 %v3277, %v3413
    %v3415 = vpop.f32.mrb[0].mxu0
    %3416 = vmatprep.mubr.f32.mxu0 0.0
    %3417 = vmatmul.mubr.f32.gmra.mrb[0].mxu0 %v3310
    %v3418 = vpop.f32.mrb[0].mxu0
    %v3419 = vadd.f32 %v3282, %v3418
    %v3420 = vpop.f32.mrb[0].mxu0
    %3421 = vdwg.mxu0
    %v3422 = vld [vmem:[#allocation4 + $0x2] sm:$0xff]
    %v3423 = vld [vmem:[#allocation4 + $0xa] sm:$0xff]
    %v3424 = vld [vmem:[#allocation4 + $0x12] sm:$0xff]
    %v3425 = vld [vmem:[#allocation4 + $0x1a] sm:$0xff]
    %v3426 = vld [vmem:[#allocation4 + $0x22] sm:$0xff]
    %v3427 = vld [vmem:[#allocation4 + $0x2a] sm:$0xff]
    %v3428 = vld [vmem:[#allocation4 + $0x32] sm:$0xff]
    %v3429 = vld [vmem:[#allocation4 + $0x3a] sm:$0xff]
    %v3430 = vld [vmem:[#allocation4 + $0x42] sm:$0xff]
    %s3431 = scalar_lea.vmem %s3, 16
    %v3432 = vld [vmem:[%s3431] sm:$0xff]
    %v3434 = vsel %vm2997, %v3422, 0
    %v3437 = vsel %vm2997, %v3423, 0
    %v3440 = vsel %vm2997, %v3424, 0
    %v3443 = vsel %vm2997, %v3425, 0
    %v3446 = vsel %vm2997, %v3426, 0
    %v3449 = vsel %vm2997, %v3427, 0
    %v3452 = vsel %vm2997, %v3428, 0
    %v3455 = vsel %vm2997, %v3429, 0
    %v3458 = vsel %vm2997, %v3430, 0
    %3460 = vmatprep.subr.mxu0 0.0
    %3461 = vmatpush1.msra.mxu0 %v3432
    %3462 = vmatprep.subr.mxu0 0.0
    %3463 = vmatpush1.msra.mxu0 0.0
    %3464 = vmatprep.subr.mxu0 0.0
    %3465 = vmatpush1.msra.mxu0 0.0
    %3466 = vmatprep.subr.mxu0 0.0
    %3467 = vmatpush1.msra.mxu0 0.0
    %3468 = vmatprep.subr.mxu0 0.0
    %3469 = vmatpush1.msra.mxu0 0.0
    %3470 = vmatprep.subr.mxu0 0.0
    %3471 = vmatpush1.msra.mxu0 0.0
    %3472 = vmatprep.subr.mxu0 0.0
    %3473 = vmatpush1.msra.mxu0 0.0
    %3474 = vmatprep.subr.mxu0 0.0
    %3475 = vmatpush1.msra.mxu0 0.0
    %3476 = vmatprep.subr.mxu0 0.0
    %3477 = vmatpush1.msra.mxu0 0.0
    %3478 = vmatprep.subr.mxu0 0.0
    %3479 = vmatpush1.msra.mxu0 0.0
    %3480 = vmatprep.subr.mxu0 0.0
    %3481 = vmatpush1.msra.mxu0 0.0
    %3482 = vmatprep.subr.mxu0 0.0
    %3483 = vmatpush1.msra.mxu0 0.0
    %3484 = vmatprep.subr.mxu0 0.0
    %3485 = vmatpush1.msra.mxu0 0.0
    %3486 = vmatprep.subr.mxu0 0.0
    %3487 = vmatpush1.msra.mxu0 0.0
    %3488 = vmatprep.subr.mxu0 0.0
    %3489 = vmatpush1.msra.mxu0 0.0
    %3490 = vmatprep.subr.mxu0 0.0
    %3491 = vmatpush1.msra.mxu0 0.0
    %3492 = vmatprep.subr.mxu0 0.0
    %3493 = vmatpush1.msra.mxu0 0.0
    %3494 = vmatprep.subr.mxu0 0.0
    %3495 = vmatpush1.msra.mxu0 0.0
    %3496 = vmatprep.subr.mxu0 0.0
    %3497 = vmatpush1.msra.mxu0 0.0
    %3498 = vmatprep.subr.mxu0 0.0
    %3499 = vmatpush1.msra.mxu0 0.0
    %3500 = vmatprep.subr.mxu0 0.0
    %3501 = vmatpush1.msra.mxu0 0.0
    %3502 = vmatprep.subr.mxu0 0.0
    %3503 = vmatpush1.msra.mxu0 0.0
    %3504 = vmatprep.subr.mxu0 0.0
    %3505 = vmatpush1.msra.mxu0 0.0
    %3506 = vmatprep.subr.mxu0 0.0
    %3507 = vmatpush1.msra.mxu0 0.0
    %3508 = vmatprep.subr.mxu0 0.0
    %3509 = vmatpush1.msra.mxu0 0.0
    %3510 = vmatprep.subr.mxu0 0.0
    %3511 = vmatpush1.msra.mxu0 0.0
    %3512 = vmatprep.subr.mxu0 0.0
    %3513 = vmatpush1.msra.mxu0 0.0
    %3514 = vmatprep.subr.mxu0 0.0
    %3515 = vmatpush1.msra.mxu0 0.0
    %3516 = vmatprep.subr.mxu0 0.0
    %3517 = vmatpush1.msra.mxu0 0.0
    %3518 = vmatprep.subr.mxu0 0.0
    %3519 = vmatpush1.msra.mxu0 0.0
    %3520 = vmatprep.subr.mxu0 0.0
    %3521 = vmatpush1.msra.mxu0 0.0
    %3522 = vmatprep.subr.mxu0 0.0
    %3523 = vmatpush1.msra.mxu0 0.0
    %3524 = vmatprep.mubr.f32.mxu0 0.0
    %3525 = vmatmul.mubr.f32.gmra.mrb[0].mxu0 %v3434
    %v3526 = vpop.f32.mrb[0].mxu0
    %v3527 = vadd.f32 0.0, %v3526
    %v3528 = vpop.f32.mrb[0].mxu0
    %3529 = vmatprep.mubr.f32.mxu0 0.0
    %3530 = vmatmul.mubr.f32.gmra.mrb[0].mxu0 %v3437
    %v3531 = vpop.f32.mrb[0].mxu0
    %v3532 = vadd.f32 0.0, %v3531
    %v3533 = vpop.f32.mrb[0].mxu0
    %3534 = vmatprep.mubr.f32.mxu0 0.0
    %3535 = vmatmul.mubr.f32.gmra.mrb[0].mxu0 %v3440
    %v3536 = vpop.f32.mrb[0].mxu0
    %v3537 = vadd.f32 0.0, %v3536
    %v3538 = vpop.f32.mrb[0].mxu0
    %3539 = vmatprep.mubr.f32.mxu0 0.0
    %3540 = vmatmul.mubr.f32.gmra.mrb[0].mxu0 %v3443
    %v3541 = vpop.f32.mrb[0].mxu0
    %v3542 = vadd.f32 0.0, %v3541
    %v3543 = vpop.f32.mrb[0].mxu0
    %3544 = vmatprep.mubr.f32.mxu0 0.0
    %3545 = vmatmul.mubr.f32.gmra.mrb[0].mxu0 %v3446
    %v3546 = vpop.f32.mrb[0].mxu0
    %v3547 = vadd.f32 0.0, %v3546
    %v3548 = vpop.f32.mrb[0].mxu0
    %3549 = vmatprep.mubr.f32.mxu0 0.0
    %3550 = vmatmul.mubr.f32.gmra.mrb[0].mxu0 %v3449
    %v3551 = vpop.f32.mrb[0].mxu0
    %v3552 = vadd.f32 0.0, %v3551
    %v3553 = vpop.f32.mrb[0].mxu0
    %3554 = vmatprep.mubr.f32.mxu0 0.0
    %3555 = vmatmul.mubr.f32.gmra.mrb[0].mxu0 %v3452
    %v3556 = vpop.f32.mrb[0].mxu0
    %v3557 = vadd.f32 0.0, %v3556
    %v3558 = vpop.f32.mrb[0].mxu0
    %3559 = vmatprep.mubr.f32.mxu0 0.0
    %3560 = vmatmul.mubr.f32.gmra.mrb[0].mxu0 %v3455
    %v3561 = vpop.f32.mrb[0].mxu0
    %v3562 = vadd.f32 0.0, %v3561
    %v3563 = vpop.f32.mrb[0].mxu0
    %3564 = vmatprep.mubr.f32.mxu0 0.0
    %3565 = vmatmul.mubr.f32.gmra.mrb[0].mxu0 %v3458
    %v3566 = vpop.f32.mrb[0].mxu0
    %v3567 = vadd.f32 0.0, %v3566
    %v3568 = vpop.f32.mrb[0].mxu0
    %3569 = vdwg.mxu0
    %v3570 = vadd.f32 %v3379, %v3527
    %v3571 = vadd.f32 %v3384, %v3532
    %v3572 = vadd.f32 %v3389, %v3537
    %v3573 = vadd.f32 %v3394, %v3542
    %v3574 = vadd.f32 %v3399, %v3547
    %v3575 = vadd.f32 %v3404, %v3552
    %v3576 = vadd.f32 %v3409, %v3557
    %v3577 = vadd.f32 %v3414, %v3562
    %v3578 = vadd.f32 %v3419, %v3567
    %v3579 = vld [vmem:[#allocation4 + $0x6] sm:$0xff]
    %v3580 = vld [vmem:[#allocation4 + $0xe] sm:$0xff]
    %v3581 = vld [vmem:[#allocation4 + $0x16] sm:$0xff]
    %v3582 = vld [vmem:[#allocation4 + $0x1e] sm:$0xff]
    %v3583 = vld [vmem:[#allocation4 + $0x26] sm:$0xff]
    %v3584 = vld [vmem:[#allocation4 + $0x2e] sm:$0xff]
    %v3585 = vld [vmem:[#allocation4 + $0x36] sm:$0xff]
    %v3586 = vld [vmem:[#allocation4 + $0x3e] sm:$0xff]
    %v3587 = vld [vmem:[#allocation4 + $0x46] sm:$0xff]
    %s3588 = scalar_lea.vmem %s3, 24
    %v3589 = vld [vmem:[%s3588] sm:$0xff]
    %v3591 = vsel %vm2997, %v3579, 0
    %v3594 = vsel %vm2997, %v3580, 0
    %v3597 = vsel %vm2997, %v3581, 0
    %v3600 = vsel %vm2997, %v3582, 0
    %v3603 = vsel %vm2997, %v3583, 0
    %v3606 = vsel %vm2997, %v3584, 0
    %v3609 = vsel %vm2997, %v3585, 0
    %v3612 = vsel %vm2997, %v3586, 0
    %v3615 = vsel %vm2997, %v3587, 0
    %3617 = vmatprep.subr.mxu0 0.0
    %3618 = vmatpush1.msra.mxu0 %v3589
    %3619 = vmatprep.subr.mxu0 0.0
    %3620 = vmatpush1.msra.mxu0 0.0
    %3621 = vmatprep.subr.mxu0 0.0
    %3622 = vmatpush1.msra.mxu0 0.0
    %3623 = vmatprep.subr.mxu0 0.0
    %3624 = vmatpush1.msra.mxu0 0.0
    %3625 = vmatprep.subr.mxu0 0.0
    %3626 = vmatpush1.msra.mxu0 0.0
    %3627 = vmatprep.subr.mxu0 0.0
    %3628 = vmatpush1.msra.mxu0 0.0
    %3629 = vmatprep.subr.mxu0 0.0
    %3630 = vmatpush1.msra.mxu0 0.0
    %3631 = vmatprep.subr.mxu0 0.0
    %3632 = vmatpush1.msra.mxu0 0.0
    %3633 = vmatprep.subr.mxu0 0.0
    %3634 = vmatpush1.msra.mxu0 0.0
    %3635 = vmatprep.subr.mxu0 0.0
    %3636 = vmatpush1.msra.mxu0 0.0
    %3637 = vmatprep.subr.mxu0 0.0
    %3638 = vmatpush1.msra.mxu0 0.0
    %3639 = vmatprep.subr.mxu0 0.0
    %3640 = vmatpush1.msra.mxu0 0.0
    %3641 = vmatprep.subr.mxu0 0.0
    %3642 = vmatpush1.msra.mxu0 0.0
    %3643 = vmatprep.subr.mxu0 0.0
    %3644 = vmatpush1.msra.mxu0 0.0
    %3645 = vmatprep.subr.mxu0 0.0
    %3646 = vmatpush1.msra.mxu0 0.0
    %3647 = vmatprep.subr.mxu0 0.0
    %3648 = vmatpush1.msra.mxu0 0.0
    %3649 = vmatprep.subr.mxu0 0.0
    %3650 = vmatpush1.msra.mxu0 0.0
    %3651 = vmatprep.subr.mxu0 0.0
    %3652 = vmatpush1.msra.mxu0 0.0
    %3653 = vmatprep.subr.mxu0 0.0
    %3654 = vmatpush1.msra.mxu0 0.0
    %3655 = vmatprep.subr.mxu0 0.0
    %3656 = vmatpush1.msra.mxu0 0.0
    %3657 = vmatprep.subr.mxu0 0.0
    %3658 = vmatpush1.msra.mxu0 0.0
    %3659 = vmatprep.subr.mxu0 0.0
    %3660 = vmatpush1.msra.mxu0 0.0
    %3661 = vmatprep.subr.mxu0 0.0
    %3662 = vmatpush1.msra.mxu0 0.0
    %3663 = vmatprep.subr.mxu0 0.0
    %3664 = vmatpush1.msra.mxu0 0.0
    %3665 = vmatprep.subr.mxu0 0.0
    %3666 = vmatpush1.msra.mxu0 0.0
    %3667 = vmatprep.subr.mxu0 0.0
    %3668 = vmatpush1.msra.mxu0 0.0
    %3669 = vmatprep.subr.mxu0 0.0
    %3670 = vmatpush1.msra.mxu0 0.0
    %3671 = vmatprep.subr.mxu0 0.0
    %3672 = vmatpush1.msra.mxu0 0.0
    %3673 = vmatprep.subr.mxu0 0.0
    %3674 = vmatpush1.msra.mxu0 0.0
    %3675 = vmatprep.subr.mxu0 0.0
    %3676 = vmatpush1.msra.mxu0 0.0
    %3677 = vmatprep.subr.mxu0 0.0
    %3678 = vmatpush1.msra.mxu0 0.0
    %3679 = vmatprep.subr.mxu0 0.0
    %3680 = vmatpush1.msra.mxu0 0.0
    %3681 = vmatprep.mubr.f32.mxu0 0.0
    %3682 = vmatmul.mubr.f32.gmra.mrb[0].mxu0 %v3591
    %v3683 = vpop.f32.mrb[0].mxu0
    %v3684 = vadd.f32 0.0, %v3683
    %v3685 = vpop.f32.mrb[0].mxu0
    %3686 = vmatprep.mubr.f32.mxu0 0.0
    %3687 = vmatmul.mubr.f32.gmra.mrb[0].mxu0 %v3594
    %v3688 = vpop.f32.mrb[0].mxu0
    %v3689 = vadd.f32 0.0, %v3688
    %v3690 = vpop.f32.mrb[0].mxu0
    %3691 = vmatprep.mubr.f32.mxu0 0.0
    %3692 = vmatmul.mubr.f32.gmra.mrb[0].mxu0 %v3597
    %v3693 = vpop.f32.mrb[0].mxu0
    %v3694 = vadd.f32 0.0, %v3693
    %v3695 = vpop.f32.mrb[0].mxu0
    %3696 = vmatprep.mubr.f32.mxu0 0.0
    %3697 = vmatmul.mubr.f32.gmra.mrb[0].mxu0 %v3600
    %v3698 = vpop.f32.mrb[0].mxu0
    %v3699 = vadd.f32 0.0, %v3698
    %v3700 = vpop.f32.mrb[0].mxu0
    %3701 = vmatprep.mubr.f32.mxu0 0.0
    %3702 = vmatmul.mubr.f32.gmra.mrb[0].mxu0 %v3603
    %v3703 = vpop.f32.mrb[0].mxu0
    %v3704 = vadd.f32 0.0, %v3703
    %v3705 = vpop.f32.mrb[0].mxu0
    %3706 = vmatprep.mubr.f32.mxu0 0.0
    %3707 = vmatmul.mubr.f32.gmra.mrb[0].mxu0 %v3606
    %v3708 = vpop.f32.mrb[0].mxu0
    %v3709 = vadd.f32 0.0, %v3708
    %v3710 = vpop.f32.mrb[0].mxu0
    %3711 = vmatprep.mubr.f32.mxu0 0.0
    %3712 = vmatmul.mubr.f32.gmra.mrb[0].mxu0 %v3609
    %v3713 = vpop.f32.mrb[0].mxu0
    %v3714 = vadd.f32 0.0, %v3713
    %v3715 = vpop.f32.mrb[0].mxu0
    %3716 = vmatprep.mubr.f32.mxu0 0.0
    %3717 = vmatmul.mubr.f32.gmra.mrb[0].mxu0 %v3612
    %v3718 = vpop.f32.mrb[0].mxu0
    %v3719 = vadd.f32 0.0, %v3718
    %v3720 = vpop.f32.mrb[0].mxu0
    %3721 = vmatprep.mubr.f32.mxu0 0.0
    %3722 = vmatmul.mubr.f32.gmra.mrb[0].mxu0 %v3615
    %v3723 = vpop.f32.mrb[0].mxu0
    %v3724 = vadd.f32 0.0, %v3723
    %v3725 = vpop.f32.mrb[0].mxu0
    %3726 = vdwg.mxu0
    %v3727 = vadd.f32 %v3570, %v3684
    %v3728 = vadd.f32 %v3571, %v3689
    %v3729 = vadd.f32 %v3572, %v3694
    %v3730 = vadd.f32 %v3573, %v3699
    %v3731 = vadd.f32 %v3574, %v3704
    %v3732 = vadd.f32 %v3575, %v3709
    %v3733 = vadd.f32 %v3576, %v3714
    %v3734 = vadd.f32 %v3577, %v3719
    %v3735 = vadd.f32 %v3578, %v3724
    %v3736 = vld [vmem:[#allocation4 + $0x7] sm:$0xff]
    %v3737 = vld [vmem:[#allocation4 + $0xf] sm:$0xff]
    %v3738 = vld [vmem:[#allocation4 + $0x17] sm:$0xff]
    %v3739 = vld [vmem:[#allocation4 + $0x1f] sm:$0xff]
    %v3740 = vld [vmem:[#allocation4 + $0x27] sm:$0xff]
    %v3741 = vld [vmem:[#allocation4 + $0x2f] sm:$0xff]
    %v3742 = vld [vmem:[#allocation4 + $0x37] sm:$0xff]
    %v3743 = vld [vmem:[#allocation4 + $0x3f] sm:$0xff]
    %v3744 = vld [vmem:[#allocation4 + $0x47] sm:$0xff]
    %s3745 = scalar_lea.vmem %s3, 32
    %v3746 = vld [vmem:[%s3745] sm:$0xff]
    %v3748 = vsel %vm2997, %v3736, 0
    %v3751 = vsel %vm2997, %v3737, 0
    %v3754 = vsel %vm2997, %v3738, 0
    %v3757 = vsel %vm2997, %v3739, 0
    %v3760 = vsel %vm2997, %v3740, 0
    %v3763 = vsel %vm2997, %v3741, 0
    %v3766 = vsel %vm2997, %v3742, 0
    %v3769 = vsel %vm2997, %v3743, 0
    %v3772 = vsel %vm2997, %v3744, 0
    %3774 = vmatprep.subr.mxu0 0.0
    %3775 = vmatpush1.msra.mxu0 %v3746
    %3776 = vmatprep.subr.mxu0 0.0
    %3777 = vmatpush1.msra.mxu0 0.0
    %3778 = vmatprep.subr.mxu0 0.0
    %3779 = vmatpush1.msra.mxu0 0.0
    %3780 = vmatprep.subr.mxu0 0.0
    %3781 = vmatpush1.msra.mxu0 0.0
    %3782 = vmatprep.subr.mxu0 0.0
    %3783 = vmatpush1.msra.mxu0 0.0
    %3784 = vmatprep.subr.mxu0 0.0
    %3785 = vmatpush1.msra.mxu0 0.0
    %3786 = vmatprep.subr.mxu0 0.0
    %3787 = vmatpush1.msra.mxu0 0.0
    %3788 = vmatprep.subr.mxu0 0.0
    %3789 = vmatpush1.msra.mxu0 0.0
    %3790 = vmatprep.subr.mxu0 0.0
    %3791 = vmatpush1.msra.mxu0 0.0
    %3792 = vmatprep.subr.mxu0 0.0
    %3793 = vmatpush1.msra.mxu0 0.0
    %3794 = vmatprep.subr.mxu0 0.0
    %3795 = vmatpush1.msra.mxu0 0.0
    %3796 = vmatprep.subr.mxu0 0.0
    %3797 = vmatpush1.msra.mxu0 0.0
    %3798 = vmatprep.subr.mxu0 0.0
    %3799 = vmatpush1.msra.mxu0 0.0
    %3800 = vmatprep.subr.mxu0 0.0
    %3801 = vmatpush1.msra.mxu0 0.0
    %3802 = vmatprep.subr.mxu0 0.0
    %3803 = vmatpush1.msra.mxu0 0.0
    %3804 = vmatprep.subr.mxu0 0.0
    %3805 = vmatpush1.msra.mxu0 0.0
    %3806 = vmatprep.subr.mxu0 0.0
    %3807 = vmatpush1.msra.mxu0 0.0
    %3808 = vmatprep.subr.mxu0 0.0
    %3809 = vmatpush1.msra.mxu0 0.0
    %3810 = vmatprep.subr.mxu0 0.0
    %3811 = vmatpush1.msra.mxu0 0.0
    %3812 = vmatprep.subr.mxu0 0.0
    %3813 = vmatpush1.msra.mxu0 0.0
    %3814 = vmatprep.subr.mxu0 0.0
    %3815 = vmatpush1.msra.mxu0 0.0
    %3816 = vmatprep.subr.mxu0 0.0
    %3817 = vmatpush1.msra.mxu0 0.0
    %3818 = vmatprep.subr.mxu0 0.0
    %3819 = vmatpush1.msra.mxu0 0.0
    %3820 = vmatprep.subr.mxu0 0.0
    %3821 = vmatpush1.msra.mxu0 0.0
    %3822 = vmatprep.subr.mxu0 0.0
    %3823 = vmatpush1.msra.mxu0 0.0
    %3824 = vmatprep.subr.mxu0 0.0
    %3825 = vmatpush1.msra.mxu0 0.0
    %3826 = vmatprep.subr.mxu0 0.0
    %3827 = vmatpush1.msra.mxu0 0.0
    %3828 = vmatprep.subr.mxu0 0.0
    %3829 = vmatpush1.msra.mxu0 0.0
    %3830 = vmatprep.subr.mxu0 0.0
    %3831 = vmatpush1.msra.mxu0 0.0
    %3832 = vmatprep.subr.mxu0 0.0
    %3833 = vmatpush1.msra.mxu0 0.0
    %3834 = vmatprep.subr.mxu0 0.0
    %3835 = vmatpush1.msra.mxu0 0.0
    %3836 = vmatprep.subr.mxu0 0.0
    %3837 = vmatpush1.msra.mxu0 0.0
    %3838 = vmatprep.mubr.f32.mxu0 0.0
    %3839 = vmatmul.mubr.f32.gmra.mrb[0].mxu0 %v3748
    %v3840 = vpop.f32.mrb[0].mxu0
    %v3841 = vadd.f32 0.0, %v3840
    %v3842 = vpop.f32.mrb[0].mxu0
    %3843 = vmatprep.mubr.f32.mxu0 0.0
    %3844 = vmatmul.mubr.f32.gmra.mrb[0].mxu0 %v3751
    %v3845 = vpop.f32.mrb[0].mxu0
    %v3846 = vadd.f32 0.0, %v3845
    %v3847 = vpop.f32.mrb[0].mxu0
    %3848 = vmatprep.mubr.f32.mxu0 0.0
    %3849 = vmatmul.mubr.f32.gmra.mrb[0].mxu0 %v3754
    %v3850 = vpop.f32.mrb[0].mxu0
    %v3851 = vadd.f32 0.0, %v3850
    %v3852 = vpop.f32.mrb[0].mxu0
    %3853 = vmatprep.mubr.f32.mxu0 0.0
    %3854 = vmatmul.mubr.f32.gmra.mrb[0].mxu0 %v3757
    %v3855 = vpop.f32.mrb[0].mxu0
    %v3856 = vadd.f32 0.0, %v3855
    %v3857 = vpop.f32.mrb[0].mxu0
    %3858 = vmatprep.mubr.f32.mxu0 0.0
    %3859 = vmatmul.mubr.f32.gmra.mrb[0].mxu0 %v3760
    %v3860 = vpop.f32.mrb[0].mxu0
    %v3861 = vadd.f32 0.0, %v3860
    %v3862 = vpop.f32.mrb[0].mxu0
    %3863 = vmatprep.mubr.f32.mxu0 0.0
    %3864 = vmatmul.mubr.f32.gmra.mrb[0].mxu0 %v3763
    %v3865 = vpop.f32.mrb[0].mxu0
    %v3866 = vadd.f32 0.0, %v3865
    %v3867 = vpop.f32.mrb[0].mxu0
    %3868 = vmatprep.mubr.f32.mxu0 0.0
    %3869 = vmatmul.mubr.f32.gmra.mrb[0].mxu0 %v3766
    %v3870 = vpop.f32.mrb[0].mxu0
    %v3871 = vadd.f32 0.0, %v3870
    %v3872 = vpop.f32.mrb[0].mxu0
    %3873 = vmatprep.mubr.f32.mxu0 0.0
    %3874 = vmatmul.mubr.f32.gmra.mrb[0].mxu0 %v3769
    %v3875 = vpop.f32.mrb[0].mxu0
    %v3876 = vadd.f32 0.0, %v3875
    %v3877 = vpop.f32.mrb[0].mxu0
    %3878 = vmatprep.mubr.f32.mxu0 0.0
    %3879 = vmatmul.mubr.f32.gmra.mrb[0].mxu0 %v3772
    %v3880 = vpop.f32.mrb[0].mxu0
    %v3881 = vadd.f32 0.0, %v3880
    %v3882 = vpop.f32.mrb[0].mxu0
    %3883 = vdwg.mxu0
    %v3884 = vadd.f32 %v3727, %v3841
    %v3885 = vadd.f32 %v3728, %v3846
    %v3886 = vadd.f32 %v3729, %v3851
    %v3887 = vadd.f32 %v3730, %v3856
    %v3888 = vadd.f32 %v3731, %v3861
    %v3889 = vadd.f32 %v3732, %v3866
    %v3890 = vadd.f32 %v3733, %v3871
    %v3891 = vadd.f32 %v3734, %v3876
    %v3892 = vadd.f32 %v3735, %v3881
    %v3893 = vld [vmem:[#allocation4 + $0x8] sm:$0xff]
    %v3894 = vld [vmem:[#allocation4 + $0x10] sm:$0xff]
    %v3895 = vld [vmem:[#allocation4 + $0x18] sm:$0xff]
    %v3896 = vld [vmem:[#allocation4 + $0x20] sm:$0xff]
    %v3897 = vld [vmem:[#allocation4 + $0x28] sm:$0xff]
    %v3898 = vld [vmem:[#allocation4 + $0x30] sm:$0xff]
    %v3899 = vld [vmem:[#allocation4 + $0x38] sm:$0xff]
    %v3900 = vld [vmem:[#allocation4 + $0x40] sm:$0xff]
    %v3901 = vld [vmem:[#allocation4 + $0x48] sm:$0xff]
    %s3902 = scalar_lea.vmem %s3, 40
    %v3903 = vld [vmem:[%s3902] sm:$0xff]
    %v3905 = vsel %vm2997, %v3893, 0
    %v3908 = vsel %vm2997, %v3894, 0
    %v3911 = vsel %vm2997, %v3895, 0
    %v3914 = vsel %vm2997, %v3896, 0
    %v3917 = vsel %vm2997, %v3897, 0
    %v3920 = vsel %vm2997, %v3898, 0
    %v3923 = vsel %vm2997, %v3899, 0
    %v3926 = vsel %vm2997, %v3900, 0
    %v3929 = vsel %vm2997, %v3901, 0
    %3931 = vmatprep.subr.mxu0 0.0
    %3932 = vmatpush1.msra.mxu0 %v3903
    %3933 = vmatprep.subr.mxu0 0.0
    %3934 = vmatpush1.msra.mxu0 0.0
    %3935 = vmatprep.subr.mxu0 0.0
    %3936 = vmatpush1.msra.mxu0 0.0
    %3937 = vmatprep.subr.mxu0 0.0
    %3938 = vmatpush1.msra.mxu0 0.0
    %3939 = vmatprep.subr.mxu0 0.0
    %3940 = vmatpush1.msra.mxu0 0.0
    %3941 = vmatprep.subr.mxu0 0.0
    %3942 = vmatpush1.msra.mxu0 0.0
    %3943 = vmatprep.subr.mxu0 0.0
    %3944 = vmatpush1.msra.mxu0 0.0
    %3945 = vmatprep.subr.mxu0 0.0
    %3946 = vmatpush1.msra.mxu0 0.0
    %3947 = vmatprep.subr.mxu0 0.0
    %3948 = vmatpush1.msra.mxu0 0.0
    %3949 = vmatprep.subr.mxu0 0.0
    %3950 = vmatpush1.msra.mxu0 0.0
    %3951 = vmatprep.subr.mxu0 0.0
    %3952 = vmatpush1.msra.mxu0 0.0
    %3953 = vmatprep.subr.mxu0 0.0
    %3954 = vmatpush1.msra.mxu0 0.0
    %3955 = vmatprep.subr.mxu0 0.0
    %3956 = vmatpush1.msra.mxu0 0.0
    %3957 = vmatprep.subr.mxu0 0.0
    %3958 = vmatpush1.msra.mxu0 0.0
    %3959 = vmatprep.subr.mxu0 0.0
    %3960 = vmatpush1.msra.mxu0 0.0
    %3961 = vmatprep.subr.mxu0 0.0
    %3962 = vmatpush1.msra.mxu0 0.0
    %3963 = vmatprep.subr.mxu0 0.0
    %3964 = vmatpush1.msra.mxu0 0.0
    %3965 = vmatprep.subr.mxu0 0.0
    %3966 = vmatpush1.msra.mxu0 0.0
    %3967 = vmatprep.subr.mxu0 0.0
    %3968 = vmatpush1.msra.mxu0 0.0
    %3969 = vmatprep.subr.mxu0 0.0
    %3970 = vmatpush1.msra.mxu0 0.0
    %3971 = vmatprep.subr.mxu0 0.0
    %3972 = vmatpush1.msra.mxu0 0.0
    %3973 = vmatprep.subr.mxu0 0.0
    %3974 = vmatpush1.msra.mxu0 0.0
    %3975 = vmatprep.subr.mxu0 0.0
    %3976 = vmatpush1.msra.mxu0 0.0
    %3977 = vmatprep.subr.mxu0 0.0
    %3978 = vmatpush1.msra.mxu0 0.0
    %3979 = vmatprep.subr.mxu0 0.0
    %3980 = vmatpush1.msra.mxu0 0.0
    %3981 = vmatprep.subr.mxu0 0.0
    %3982 = vmatpush1.msra.mxu0 0.0
    %3983 = vmatprep.subr.mxu0 0.0
    %3984 = vmatpush1.msra.mxu0 0.0
    %3985 = vmatprep.subr.mxu0 0.0
    %3986 = vmatpush1.msra.mxu0 0.0
    %3987 = vmatprep.subr.mxu0 0.0
    %3988 = vmatpush1.msra.mxu0 0.0
    %3989 = vmatprep.subr.mxu0 0.0
    %3990 = vmatpush1.msra.mxu0 0.0
    %3991 = vmatprep.subr.mxu0 0.0
    %3992 = vmatpush1.msra.mxu0 0.0
    %3993 = vmatprep.subr.mxu0 0.0
    %3994 = vmatpush1.msra.mxu0 0.0
    %3995 = vmatprep.mubr.f32.mxu0 0.0
    %3996 = vmatmul.mubr.f32.gmra.mrb[0].mxu0 %v3905
    %v3997 = vpop.f32.mrb[0].mxu0
    %v3998 = vadd.f32 0.0, %v3997
    %v3999 = vpop.f32.mrb[0].mxu0
    %4000 = vmatprep.mubr.f32.mxu0 0.0
    %4001 = vmatmul.mubr.f32.gmra.mrb[0].mxu0 %v3908
    %v4002 = vpop.f32.mrb[0].mxu0
    %v4003 = vadd.f32 0.0, %v4002
    %v4004 = vpop.f32.mrb[0].mxu0
    %4005 = vmatprep.mubr.f32.mxu0 0.0
    %4006 = vmatmul.mubr.f32.gmra.mrb[0].mxu0 %v3911
    %v4007 = vpop.f32.mrb[0].mxu0
    %v4008 = vadd.f32 0.0, %v4007
    %v4009 = vpop.f32.mrb[0].mxu0
    %4010 = vmatprep.mubr.f32.mxu0 0.0
    %4011 = vmatmul.mubr.f32.gmra.mrb[0].mxu0 %v3914
    %v4012 = vpop.f32.mrb[0].mxu0
    %v4013 = vadd.f32 0.0, %v4012
    %v4014 = vpop.f32.mrb[0].mxu0
    %4015 = vmatprep.mubr.f32.mxu0 0.0
    %4016 = vmatmul.mubr.f32.gmra.mrb[0].mxu0 %v3917
    %v4017 = vpop.f32.mrb[0].mxu0
    %v4018 = vadd.f32 0.0, %v4017
    %v4019 = vpop.f32.mrb[0].mxu0
    %4020 = vmatprep.mubr.f32.mxu0 0.0
    %4021 = vmatmul.mubr.f32.gmra.mrb[0].mxu0 %v3920
    %v4022 = vpop.f32.mrb[0].mxu0
    %v4023 = vadd.f32 0.0, %v4022
    %v4024 = vpop.f32.mrb[0].mxu0
    %4025 = vmatprep.mubr.f32.mxu0 0.0
    %4026 = vmatmul.mubr.f32.gmra.mrb[0].mxu0 %v3923
    %v4027 = vpop.f32.mrb[0].mxu0
    %v4028 = vadd.f32 0.0, %v4027
    %v4029 = vpop.f32.mrb[0].mxu0
    %4030 = vmatprep.mubr.f32.mxu0 0.0
    %4031 = vmatmul.mubr.f32.gmra.mrb[0].mxu0 %v3926
    %v4032 = vpop.f32.mrb[0].mxu0
    %v4033 = vadd.f32 0.0, %v4032
    %v4034 = vpop.f32.mrb[0].mxu0
    %4035 = vmatprep.mubr.f32.mxu0 0.0
    %4036 = vmatmul.mubr.f32.gmra.mrb[0].mxu0 %v3929
    %v4037 = vpop.f32.mrb[0].mxu0
    %v4038 = vadd.f32 0.0, %v4037
    %v4039 = vpop.f32.mrb[0].mxu0
    %4040 = vdwg.mxu0
    %v4041 = vadd.f32 %v3884, %v3998
    %v4042 = vadd.f32 %v3885, %v4003
    %v4043 = vadd.f32 %v3886, %v4008
    %v4044 = vadd.f32 %v3887, %v4013
    %v4045 = vadd.f32 %v3888, %v4018
    %v4046 = vadd.f32 %v3889, %v4023
    %v4047 = vadd.f32 %v3890, %v4028
    %v4048 = vadd.f32 %v3891, %v4033
    %v4049 = vadd.f32 %v3892, %v4038
    %v4050 = vld [vmem:[#allocation4 + $0xc] sm:$0xff]
    %v4051 = vld [vmem:[#allocation4 + $0x14] sm:$0xff]
    %v4052 = vld [vmem:[#allocation4 + $0x1c] sm:$0xff]
    %v4053 = vld [vmem:[#allocation4 + $0x24] sm:$0xff]
    %v4054 = vld [vmem:[#allocation4 + $0x2c] sm:$0xff]
    %v4055 = vld [vmem:[#allocation4 + $0x34] sm:$0xff]
    %v4056 = vld [vmem:[#allocation4 + $0x3c] sm:$0xff]
    %v4057 = vld [vmem:[#allocation4 + $0x44] sm:$0xff]
    %v4058 = vld [vmem:[#allocation4 + $0x4c] sm:$0xff]
    %s4059 = scalar_lea.vmem %s3, 48
    %v4060 = vld [vmem:[%s4059] sm:$0xff]
    %v4062 = vsel %vm2997, %v4050, 0
    %v4065 = vsel %vm2997, %v4051, 0
    %v4068 = vsel %vm2997, %v4052, 0
    %v4071 = vsel %vm2997, %v4053, 0
    %v4074 = vsel %vm2997, %v4054, 0
    %v4077 = vsel %vm2997, %v4055, 0
    %v4080 = vsel %vm2997, %v4056, 0
    %v4083 = vsel %vm2997, %v4057, 0
    %v4086 = vsel %vm2997, %v4058, 0
    %4088 = vmatprep.subr.mxu0 0.0
    %4089 = vmatpush1.msra.mxu0 %v4060
    %4090 = vmatprep.subr.mxu0 0.0
    %4091 = vmatpush1.msra.mxu0 0.0
    %4092 = vmatprep.subr.mxu0 0.0
    %4093 = vmatpush1.msra.mxu0 0.0
    %4094 = vmatprep.subr.mxu0 0.0
    %4095 = vmatpush1.msra.mxu0 0.0
    %4096 = vmatprep.subr.mxu0 0.0
    %4097 = vmatpush1.msra.mxu0 0.0
    %4098 = vmatprep.subr.mxu0 0.0
    %4099 = vmatpush1.msra.mxu0 0.0
    %4100 = vmatprep.subr.mxu0 0.0
    %4101 = vmatpush1.msra.mxu0 0.0
    %4102 = vmatprep.subr.mxu0 0.0
    %4103 = vmatpush1.msra.mxu0 0.0
    %4104 = vmatprep.subr.mxu0 0.0
    %4105 = vmatpush1.msra.mxu0 0.0
    %4106 = vmatprep.subr.mxu0 0.0
    %4107 = vmatpush1.msra.mxu0 0.0
    %4108 = vmatprep.subr.mxu0 0.0
    %4109 = vmatpush1.msra.mxu0 0.0
    %4110 = vmatprep.subr.mxu0 0.0
    %4111 = vmatpush1.msra.mxu0 0.0
    %4112 = vmatprep.subr.mxu0 0.0
    %4113 = vmatpush1.msra.mxu0 0.0
    %4114 = vmatprep.subr.mxu0 0.0
    %4115 = vmatpush1.msra.mxu0 0.0
    %4116 = vmatprep.subr.mxu0 0.0
    %4117 = vmatpush1.msra.mxu0 0.0
    %4118 = vmatprep.subr.mxu0 0.0
    %4119 = vmatpush1.msra.mxu0 0.0
    %4120 = vmatprep.subr.mxu0 0.0
    %4121 = vmatpush1.msra.mxu0 0.0
    %4122 = vmatprep.subr.mxu0 0.0
    %4123 = vmatpush1.msra.mxu0 0.0
    %4124 = vmatprep.subr.mxu0 0.0
    %4125 = vmatpush1.msra.mxu0 0.0
    %4126 = vmatprep.subr.mxu0 0.0
    %4127 = vmatpush1.msra.mxu0 0.0
    %4128 = vmatprep.subr.mxu0 0.0
    %4129 = vmatpush1.msra.mxu0 0.0
    %4130 = vmatprep.subr.mxu0 0.0
    %4131 = vmatpush1.msra.mxu0 0.0
    %4132 = vmatprep.subr.mxu0 0.0
    %4133 = vmatpush1.msra.mxu0 0.0
    %4134 = vmatprep.subr.mxu0 0.0
    %4135 = vmatpush1.msra.mxu0 0.0
    %4136 = vmatprep.subr.mxu0 0.0
    %4137 = vmatpush1.msra.mxu0 0.0
    %4138 = vmatprep.subr.mxu0 0.0
    %4139 = vmatpush1.msra.mxu0 0.0
    %4140 = vmatprep.subr.mxu0 0.0
    %4141 = vmatpush1.msra.mxu0 0.0
    %4142 = vmatprep.subr.mxu0 0.0
    %4143 = vmatpush1.msra.mxu0 0.0
    %4144 = vmatprep.subr.mxu0 0.0
    %4145 = vmatpush1.msra.mxu0 0.0
    %4146 = vmatprep.subr.mxu0 0.0
    %4147 = vmatpush1.msra.mxu0 0.0
    %4148 = vmatprep.subr.mxu0 0.0
    %4149 = vmatpush1.msra.mxu0 0.0
    %4150 = vmatprep.subr.mxu0 0.0
    %4151 = vmatpush1.msra.mxu0 0.0
    %4152 = vmatprep.mubr.f32.mxu0 0.0
    %4153 = vmatmul.mubr.f32.gmra.mrb[0].mxu0 %v4062
    %v4154 = vpop.f32.mrb[0].mxu0
    %v4155 = vadd.f32 0.0, %v4154
    %v4156 = vpop.f32.mrb[0].mxu0
    %4157 = vmatprep.mubr.f32.mxu0 0.0
    %4158 = vmatmul.mubr.f32.gmra.mrb[0].mxu0 %v4065
    %v4159 = vpop.f32.mrb[0].mxu0
    %v4160 = vadd.f32 0.0, %v4159
    %v4161 = vpop.f32.mrb[0].mxu0
    %4162 = vmatprep.mubr.f32.mxu0 0.0
    %4163 = vmatmul.mubr.f32.gmra.mrb[0].mxu0 %v4068
    %v4164 = vpop.f32.mrb[0].mxu0
    %v4165 = vadd.f32 0.0, %v4164
    %v4166 = vpop.f32.mrb[0].mxu0
    %4167 = vmatprep.mubr.f32.mxu0 0.0
    %4168 = vmatmul.mubr.f32.gmra.mrb[0].mxu0 %v4071
    %v4169 = vpop.f32.mrb[0].mxu0
    %v4170 = vadd.f32 0.0, %v4169
    %v4171 = vpop.f32.mrb[0].mxu0
    %4172 = vmatprep.mubr.f32.mxu0 0.0
    %4173 = vmatmul.mubr.f32.gmra.mrb[0].mxu0 %v4074
    %v4174 = vpop.f32.mrb[0].mxu0
    %v4175 = vadd.f32 0.0, %v4174
    %v4176 = vpop.f32.mrb[0].mxu0
    %4177 = vmatprep.mubr.f32.mxu0 0.0
    %4178 = vmatmul.mubr.f32.gmra.mrb[0].mxu0 %v4077
    %v4179 = vpop.f32.mrb[0].mxu0
    %v4180 = vadd.f32 0.0, %v4179
    %v4181 = vpop.f32.mrb[0].mxu0
    %4182 = vmatprep.mubr.f32.mxu0 0.0
    %4183 = vmatmul.mubr.f32.gmra.mrb[0].mxu0 %v4080
    %v4184 = vpop.f32.mrb[0].mxu0
    %v4185 = vadd.f32 0.0, %v4184
    %v4186 = vpop.f32.mrb[0].mxu0
    %4187 = vmatprep.mubr.f32.mxu0 0.0
    %4188 = vmatmul.mubr.f32.gmra.mrb[0].mxu0 %v4083
    %v4189 = vpop.f32.mrb[0].mxu0
    %v4190 = vadd.f32 0.0, %v4189
    %v4191 = vpop.f32.mrb[0].mxu0
    %4192 = vmatprep.mubr.f32.mxu0 0.0
    %4193 = vmatmul.mubr.f32.gmra.mrb[0].mxu0 %v4086
    %v4194 = vpop.f32.mrb[0].mxu0
    %v4195 = vadd.f32 0.0, %v4194
    %v4196 = vpop.f32.mrb[0].mxu0
    %4197 = vdwg.mxu0
    %v4198 = vadd.f32 %v4041, %v4155
    %v4199 = vadd.f32 %v4042, %v4160
    %v4200 = vadd.f32 %v4043, %v4165
    %v4201 = vadd.f32 %v4044, %v4170
    %v4202 = vadd.f32 %v4045, %v4175
    %v4203 = vadd.f32 %v4046, %v4180
    %v4204 = vadd.f32 %v4047, %v4185
    %v4205 = vadd.f32 %v4048, %v4190
    %v4206 = vadd.f32 %v4049, %v4195
    %v4207 = vld [vmem:[#allocation4 + $0xd] sm:$0xff]
    %v4208 = vld [vmem:[#allocation4 + $0x15] sm:$0xff]
    %v4209 = vld [vmem:[#allocation4 + $0x1d] sm:$0xff]
    %v4210 = vld [vmem:[#allocation4 + $0x25] sm:$0xff]
    %v4211 = vld [vmem:[#allocation4 + $0x2d] sm:$0xff]
    %v4212 = vld [vmem:[#allocation4 + $0x35] sm:$0xff]
    %v4213 = vld [vmem:[#allocation4 + $0x3d] sm:$0xff]
    %v4214 = vld [vmem:[#allocation4 + $0x45] sm:$0xff]
    %v4215 = vld [vmem:[#allocation4 + $0x4d] sm:$0xff]
    %s4216 = scalar_lea.vmem %s3, 56
    %v4217 = vld [vmem:[%s4216] sm:$0xff]
    %v4219 = vsel %vm2997, %v4207, 0
    %v4222 = vsel %vm2997, %v4208, 0
    %v4225 = vsel %vm2997, %v4209, 0
    %v4228 = vsel %vm2997, %v4210, 0
    %v4231 = vsel %vm2997, %v4211, 0
    %v4234 = vsel %vm2997, %v4212, 0
    %v4237 = vsel %vm2997, %v4213, 0
    %v4240 = vsel %vm2997, %v4214, 0
    %v4243 = vsel %vm2997, %v4215, 0
    %4245 = vmatprep.subr.mxu0 0.0
    %4246 = vmatpush1.msra.mxu0 %v4217
    %4247 = vmatprep.subr.mxu0 0.0
    %4248 = vmatpush1.msra.mxu0 0.0
    %4249 = vmatprep.subr.mxu0 0.0
    %4250 = vmatpush1.msra.mxu0 0.0
    %4251 = vmatprep.subr.mxu0 0.0
    %4252 = vmatpush1.msra.mxu0 0.0
    %4253 = vmatprep.subr.mxu0 0.0
    %4254 = vmatpush1.msra.mxu0 0.0
    %4255 = vmatprep.subr.mxu0 0.0
    %4256 = vmatpush1.msra.mxu0 0.0
    %4257 = vmatprep.subr.mxu0 0.0
    %4258 = vmatpush1.msra.mxu0 0.0
    %4259 = vmatprep.subr.mxu0 0.0
    %4260 = vmatpush1.msra.mxu0 0.0
    %4261 = vmatprep.subr.mxu0 0.0
    %4262 = vmatpush1.msra.mxu0 0.0
    %4263 = vmatprep.subr.mxu0 0.0
    %4264 = vmatpush1.msra.mxu0 0.0
    %4265 = vmatprep.subr.mxu0 0.0
    %4266 = vmatpush1.msra.mxu0 0.0
    %4267 = vmatprep.subr.mxu0 0.0
    %4268 = vmatpush1.msra.mxu0 0.0
    %4269 = vmatprep.subr.mxu0 0.0
    %4270 = vmatpush1.msra.mxu0 0.0
    %4271 = vmatprep.subr.mxu0 0.0
    %4272 = vmatpush1.msra.mxu0 0.0
    %4273 = vmatprep.subr.mxu0 0.0
    %4274 = vmatpush1.msra.mxu0 0.0
    %4275 = vmatprep.subr.mxu0 0.0
    %4276 = vmatpush1.msra.mxu0 0.0
    %4277 = vmatprep.subr.mxu0 0.0
    %4278 = vmatpush1.msra.mxu0 0.0
    %4279 = vmatprep.subr.mxu0 0.0
    %4280 = vmatpush1.msra.mxu0 0.0
    %4281 = vmatprep.subr.mxu0 0.0
    %4282 = vmatpush1.msra.mxu0 0.0
    %4283 = vmatprep.subr.mxu0 0.0
    %4284 = vmatpush1.msra.mxu0 0.0
    %4285 = vmatprep.subr.mxu0 0.0
    %4286 = vmatpush1.msra.mxu0 0.0
    %4287 = vmatprep.subr.mxu0 0.0
    %4288 = vmatpush1.msra.mxu0 0.0
    %4289 = vmatprep.subr.mxu0 0.0
    %4290 = vmatpush1.msra.mxu0 0.0
    %4291 = vmatprep.subr.mxu0 0.0
    %4292 = vmatpush1.msra.mxu0 0.0
    %4293 = vmatprep.subr.mxu0 0.0
    %4294 = vmatpush1.msra.mxu0 0.0
    %4295 = vmatprep.subr.mxu0 0.0
    %4296 = vmatpush1.msra.mxu0 0.0
    %4297 = vmatprep.subr.mxu0 0.0
    %4298 = vmatpush1.msra.mxu0 0.0
    %4299 = vmatprep.subr.mxu0 0.0
    %4300 = vmatpush1.msra.mxu0 0.0
    %4301 = vmatprep.subr.mxu0 0.0
    %4302 = vmatpush1.msra.mxu0 0.0
    %4303 = vmatprep.subr.mxu0 0.0
    %4304 = vmatpush1.msra.mxu0 0.0
    %4305 = vmatprep.subr.mxu0 0.0
    %4306 = vmatpush1.msra.mxu0 0.0
    %4307 = vmatprep.subr.mxu0 0.0
    %4308 = vmatpush1.msra.mxu0 0.0
    %4309 = vmatprep.mubr.f32.mxu0 0.0
    %4310 = vmatmul.mubr.f32.gmra.mrb[0].mxu0 %v4219
    %v4311 = vpop.f32.mrb[0].mxu0
    %v4312 = vadd.f32 0.0, %v4311
    %v4313 = vpop.f32.mrb[0].mxu0
    %4314 = vmatprep.mubr.f32.mxu0 0.0
    %4315 = vmatmul.mubr.f32.gmra.mrb[0].mxu0 %v4222
    %v4316 = vpop.f32.mrb[0].mxu0
    %v4317 = vadd.f32 0.0, %v4316
    %v4318 = vpop.f32.mrb[0].mxu0
    %4319 = vmatprep.mubr.f32.mxu0 0.0
    %4320 = vmatmul.mubr.f32.gmra.mrb[0].mxu0 %v4225
    %v4321 = vpop.f32.mrb[0].mxu0
    %v4322 = vadd.f32 0.0, %v4321
    %v4323 = vpop.f32.mrb[0].mxu0
    %4324 = vmatprep.mubr.f32.mxu0 0.0
    %4325 = vmatmul.mubr.f32.gmra.mrb[0].mxu0 %v4228
    %v4326 = vpop.f32.mrb[0].mxu0
    %v4327 = vadd.f32 0.0, %v4326
    %v4328 = vpop.f32.mrb[0].mxu0
    %4329 = vmatprep.mubr.f32.mxu0 0.0
    %4330 = vmatmul.mubr.f32.gmra.mrb[0].mxu0 %v4231
    %v4331 = vpop.f32.mrb[0].mxu0
    %v4332 = vadd.f32 0.0, %v4331
    %v4333 = vpop.f32.mrb[0].mxu0
    %4334 = vmatprep.mubr.f32.mxu0 0.0
    %4335 = vmatmul.mubr.f32.gmra.mrb[0].mxu0 %v4234
    %v4336 = vpop.f32.mrb[0].mxu0
    %v4337 = vadd.f32 0.0, %v4336
    %v4338 = vpop.f32.mrb[0].mxu0
    %4339 = vmatprep.mubr.f32.mxu0 0.0
    %4340 = vmatmul.mubr.f32.gmra.mrb[0].mxu0 %v4237
    %v4341 = vpop.f32.mrb[0].mxu0
    %v4342 = vadd.f32 0.0, %v4341
    %v4343 = vpop.f32.mrb[0].mxu0
    %4344 = vmatprep.mubr.f32.mxu0 0.0
    %4345 = vmatmul.mubr.f32.gmra.mrb[0].mxu0 %v4240
    %v4346 = vpop.f32.mrb[0].mxu0
    %v4347 = vadd.f32 0.0, %v4346
    %v4348 = vpop.f32.mrb[0].mxu0
    %4349 = vmatprep.mubr.f32.mxu0 0.0
    %4350 = vmatmul.mubr.f32.gmra.mrb[0].mxu0 %v4243
    %v4351 = vpop.f32.mrb[0].mxu0
    %v4352 = vadd.f32 0.0, %v4351
    %v4353 = vpop.f32.mrb[0].mxu0
    %4354 = vdwg.mxu0
    %v4355 = vadd.f32 %v4198, %v4312
    %v4356 = vadd.f32 %v4199, %v4317
    %v4357 = vadd.f32 %v4200, %v4322
    %v4358 = vadd.f32 %v4201, %v4327
    %v4359 = vadd.f32 %v4202, %v4332
    %v4360 = vadd.f32 %v4203, %v4337
    %v4361 = vadd.f32 %v4204, %v4342
    %v4362 = vadd.f32 %v4205, %v4347
    %v4363 = vadd.f32 %v4206, %v4352
    %v4364 = vld [vmem:[#allocation4 + $0xe] sm:$0xff]
    %v4365 = vld [vmem:[#allocation4 + $0x16] sm:$0xff]
    %v4366 = vld [vmem:[#allocation4 + $0x1e] sm:$0xff]
    %v4367 = vld [vmem:[#allocation4 + $0x26] sm:$0xff]
    %v4368 = vld [vmem:[#allocation4 + $0x2e] sm:$0xff]
    %v4369 = vld [vmem:[#allocation4 + $0x36] sm:$0xff]
    %v4370 = vld [vmem:[#allocation4 + $0x3e] sm:$0xff]
    %v4371 = vld [vmem:[#allocation4 + $0x46] sm:$0xff]
    %v4372 = vld [vmem:[#allocation4 + $0x4e] sm:$0xff]
    %s4373 = scalar_lea.vmem %s3, 64
    %v4374 = vld [vmem:[%s4373] sm:$0xff]
    %v4376 = vsel %vm2997, %v4364, 0
    %v4379 = vsel %vm2997, %v4365, 0
    %v4382 = vsel %vm2997, %v4366, 0
    %v4385 = vsel %vm2997, %v4367, 0
    %v4388 = vsel %vm2997, %v4368, 0
    %v4391 = vsel %vm2997, %v4369, 0
    %v4394 = vsel %vm2997, %v4370, 0
    %v4397 = vsel %vm2997, %v4371, 0
    %v4400 = vsel %vm2997, %v4372, 0
    %4402 = vmatprep.subr.mxu0 0.0
    %4403 = vmatpush1.msra.mxu0 %v4374
    %4404 = vmatprep.subr.mxu0 0.0
    %4405 = vmatpush1.msra.mxu0 0.0
    %4406 = vmatprep.subr.mxu0 0.0
    %4407 = vmatpush1.msra.mxu0 0.0
    %4408 = vmatprep.subr.mxu0 0.0
    %4409 = vmatpush1.msra.mxu0 0.0
    %4410 = vmatprep.subr.mxu0 0.0
    %4411 = vmatpush1.msra.mxu0 0.0
    %4412 = vmatprep.subr.mxu0 0.0
    %4413 = vmatpush1.msra.mxu0 0.0
    %4414 = vmatprep.subr.mxu0 0.0
    %4415 = vmatpush1.msra.mxu0 0.0
    %4416 = vmatprep.subr.mxu0 0.0
    %4417 = vmatpush1.msra.mxu0 0.0
    %4418 = vmatprep.subr.mxu0 0.0
    %4419 = vmatpush1.msra.mxu0 0.0
    %4420 = vmatprep.subr.mxu0 0.0
    %4421 = vmatpush1.msra.mxu0 0.0
    %4422 = vmatprep.subr.mxu0 0.0
    %4423 = vmatpush1.msra.mxu0 0.0
    %4424 = vmatprep.subr.mxu0 0.0
    %4425 = vmatpush1.msra.mxu0 0.0
    %4426 = vmatprep.subr.mxu0 0.0
    %4427 = vmatpush1.msra.mxu0 0.0
    %4428 = vmatprep.subr.mxu0 0.0
    %4429 = vmatpush1.msra.mxu0 0.0
    %4430 = vmatprep.subr.mxu0 0.0
    %4431 = vmatpush1.msra.mxu0 0.0
    %4432 = vmatprep.subr.mxu0 0.0
    %4433 = vmatpush1.msra.mxu0 0.0
    %4434 = vmatprep.subr.mxu0 0.0
    %4435 = vmatpush1.msra.mxu0 0.0
    %4436 = vmatprep.subr.mxu0 0.0
    %4437 = vmatpush1.msra.mxu0 0.0
    %4438 = vmatprep.subr.mxu0 0.0
    %4439 = vmatpush1.msra.mxu0 0.0
    %4440 = vmatprep.subr.mxu0 0.0
    %4441 = vmatpush1.msra.mxu0 0.0
    %4442 = vmatprep.subr.mxu0 0.0
    %4443 = vmatpush1.msra.mxu0 0.0
    %4444 = vmatprep.subr.mxu0 0.0
    %4445 = vmatpush1.msra.mxu0 0.0
    %4446 = vmatprep.subr.mxu0 0.0
    %4447 = vmatpush1.msra.mxu0 0.0
    %4448 = vmatprep.subr.mxu0 0.0
    %4449 = vmatpush1.msra.mxu0 0.0
    %4450 = vmatprep.subr.mxu0 0.0
    %4451 = vmatpush1.msra.mxu0 0.0
    %4452 = vmatprep.subr.mxu0 0.0
    %4453 = vmatpush1.msra.mxu0 0.0
    %4454 = vmatprep.subr.mxu0 0.0
    %4455 = vmatpush1.msra.mxu0 0.0
    %4456 = vmatprep.subr.mxu0 0.0
    %4457 = vmatpush1.msra.mxu0 0.0
    %4458 = vmatprep.subr.mxu0 0.0
    %4459 = vmatpush1.msra.mxu0 0.0
    %4460 = vmatprep.subr.mxu0 0.0
    %4461 = vmatpush1.msra.mxu0 0.0
    %4462 = vmatprep.subr.mxu0 0.0
    %4463 = vmatpush1.msra.mxu0 0.0
    %4464 = vmatprep.subr.mxu0 0.0
    %4465 = vmatpush1.msra.mxu0 0.0
    %4466 = vmatprep.mubr.f32.mxu0 0.0
    %4467 = vmatmul.mubr.f32.gmra.mrb[0].mxu0 %v4376
    %v4468 = vpop.f32.mrb[0].mxu0
    %v4469 = vadd.f32 0.0, %v4468
    %v4470 = vpop.f32.mrb[0].mxu0
    %4471 = vmatprep.mubr.f32.mxu0 0.0
    %4472 = vmatmul.mubr.f32.gmra.mrb[0].mxu0 %v4379
    %v4473 = vpop.f32.mrb[0].mxu0
    %v4474 = vadd.f32 0.0, %v4473
    %v4475 = vpop.f32.mrb[0].mxu0
    %4476 = vmatprep.mubr.f32.mxu0 0.0
    %4477 = vmatmul.mubr.f32.gmra.mrb[0].mxu0 %v4382
    %v4478 = vpop.f32.mrb[0].mxu0
    %v4479 = vadd.f32 0.0, %v4478
    %v4480 = vpop.f32.mrb[0].mxu0
    %4481 = vmatprep.mubr.f32.mxu0 0.0
    %4482 = vmatmul.mubr.f32.gmra.mrb[0].mxu0 %v4385
    %v4483 = vpop.f32.mrb[0].mxu0
    %v4484 = vadd.f32 0.0, %v4483
    %v4485 = vpop.f32.mrb[0].mxu0
    %4486 = vmatprep.mubr.f32.mxu0 0.0
    %4487 = vmatmul.mubr.f32.gmra.mrb[0].mxu0 %v4388
    %v4488 = vpop.f32.mrb[0].mxu0
    %v4489 = vadd.f32 0.0, %v4488
    %v4490 = vpop.f32.mrb[0].mxu0
    %4491 = vmatprep.mubr.f32.mxu0 0.0
    %4492 = vmatmul.mubr.f32.gmra.mrb[0].mxu0 %v4391
    %v4493 = vpop.f32.mrb[0].mxu0
    %v4494 = vadd.f32 0.0, %v4493
    %v4495 = vpop.f32.mrb[0].mxu0
    %4496 = vmatprep.mubr.f32.mxu0 0.0
    %4497 = vmatmul.mubr.f32.gmra.mrb[0].mxu0 %v4394
    %v4498 = vpop.f32.mrb[0].mxu0
    %v4499 = vadd.f32 0.0, %v4498
    %v4500 = vpop.f32.mrb[0].mxu0
    %4501 = vmatprep.mubr.f32.mxu0 0.0
    %4502 = vmatmul.mubr.f32.gmra.mrb[0].mxu0 %v4397
    %v4503 = vpop.f32.mrb[0].mxu0
    %v4504 = vadd.f32 0.0, %v4503
    %v4505 = vpop.f32.mrb[0].mxu0
    %4506 = vmatprep.mubr.f32.mxu0 0.0
    %4507 = vmatmul.mubr.f32.gmra.mrb[0].mxu0 %v4400
    %v4508 = vpop.f32.mrb[0].mxu0
    %v4509 = vadd.f32 0.0, %v4508
    %v4510 = vpop.f32.mrb[0].mxu0
    %4511 = vdwg.mxu0
    %v4512 = vadd.f32 %v4355, %v4469
    %v4513 = vadd.f32 %v4356, %v4474
    %v4514 = vadd.f32 %v4357, %v4479
    %v4515 = vadd.f32 %v4358, %v4484
    %v4516 = vadd.f32 %v4359, %v4489
    %v4517 = vadd.f32 %v4360, %v4494
    %v4518 = vadd.f32 %v4361, %v4499
    %v4519 = vadd.f32 %v4362, %v4504
    %v4520 = vadd.f32 %v4363, %v4509
    %v4521 = vld [vmem:[%s4] sm:$0x1]
    %v4523 = vlaneseq
    %v4524 = vshrl.u32 %v4523, 7
    %v4525 = vsub.s32 0, %v4524
    %v4526 = vrot.slane %v4521, %v4525
    %v4528 = vadd.f32 %v4512, %v4526
    %v4529 = vadd.f32 %v4513, %v4526
    %v4530 = vadd.f32 %v4514, %v4526
    %v4531 = vadd.f32 %v4515, %v4526
    %v4532 = vadd.f32 %v4516, %v4526
    %v4533 = vadd.f32 %v4517, %v4526
    %v4534 = vadd.f32 %v4518, %v4526
    %v4535 = vadd.f32 %v4519, %v4526
    %v4536 = vadd.f32 %v4520, %v4526
    %v4537 = vmax.f32 %v4528, 0.0
    %v4538 = vmax.f32 %v4529, 0.0
    %v4539 = vmax.f32 %v4530, 0.0
    %v4540 = vmax.f32 %v4531, 0.0
    %v4541 = vmax.f32 %v4532, 0.0
    %v4542 = vmax.f32 %v4533, 0.0
    %v4543 = vmax.f32 %v4534, 0.0
    %v4544 = vmax.f32 %v4535, 0.0
    %v4545 = vmax.f32 %v4536, 0.0
    %vm4546 = vcmask 130048
    %4547 = vst.msk [vmem:[#allocation5] sm:$0xff] %vm4546, %v4537
    %4548 = vst.msk [vmem:[#allocation5 + $0x8] sm:$0xff] %vm4546, %v4538
    %4549 = vst.msk [vmem:[#allocation5 + $0x10] sm:$0xff] %vm4546, %v4539
    %4550 = vst.msk [vmem:[#allocation5 + $0x18] sm:$0xff] %vm4546, %v4540
    %4551 = vst.msk [vmem:[#allocation5 + $0x20] sm:$0xff] %vm4546, %v4541
    %4552 = vst.msk [vmem:[#allocation5 + $0x28] sm:$0xff] %vm4546, %v4542
    %4553 = vst.msk [vmem:[#allocation5 + $0x30] sm:$0xff] %vm4546, %v4543
    %4554 = vst.msk [vmem:[#allocation5 + $0x38] sm:$0xff] %vm4546, %v4544
    %4555 = vst.msk [vmem:[#allocation5 + $0x40] sm:$0xff] %vm4546, %v4545
    %4556 = vst.msk [vmem:[#allocation6] sm:$0xff] %vm4546, 0.0
    %4557 = vst.msk [vmem:[#allocation6 + $0x8] sm:$0xff] %vm4546, 0.0
    %4558 = vst.msk [vmem:[#allocation6 + $0x10] sm:$0xff] %vm4546, 0.0
    %4559 = vst.msk [vmem:[#allocation6 + $0x18] sm:$0xff] %vm4546, 0.0
    %4560 = vst.msk [vmem:[#allocation6 + $0x20] sm:$0xff] %vm4546, 0.0
    %vm4561 = vcmask 123904
    %4562 = vst.msk [vmem:[#allocation6 + $0x28] sm:$0x3] %vm4561, 0.0
    %v4563 = vld [vmem:[#allocation5 + $0x7] sm:$0xf]
    %v4564 = vld [vmem:[#allocation5 + $0xd] sm:$0xf]
    %v4565 = vmax.f32 %v4563, %v4564
    %v4567 = vrot.slane %v4565, 1
    %v4569 = vmax.f32 %v4565, %v4567
    %vm4570 = vcmask 122880
    %4571 = vst.msk [vmem:[#allocation6 + $0xa] sm:$0x1] %vm4570, %v4569
    %vm4572 = vcmask 124930
    %4573 = vst.msk [vmem:[#allocation6 + $0x9] sm:$0x4] %vm4572, %v4569
    %v4574 = vld [vmem:[#allocation5 + $0x13] sm:$0xf]
    %v4575 = vld [vmem:[#allocation5 + $0x19] sm:$0xf]
    %v4576 = vmax.f32 %v4574, %v4575
    %v4578 = vrot.slane %v4576, 1
    %v4580 = vmax.f32 %v4576, %v4578
    %4581 = vst.msk [vmem:[#allocation6 + $0xe] sm:$0x1] %vm4570, %v4580
    %4582 = vst.msk [vmem:[#allocation6 + $0xd] sm:$0x4] %vm4572, %v4580
    %v4583 = vld [vmem:[#allocation5 + $0x2b] sm:$0xf]
    %v4584 = vld [vmem:[#allocation5 + $0x31] sm:$0xf]
    %v4585 = vmax.f32 %v4583, %v4584
    %v4587 = vrot.slane %v4585, 1
    %v4589 = vmax.f32 %v4585, %v4587
    %4590 = vst.msk [vmem:[#allocation6 + $0x1a] sm:$0x1] %vm4570, %v4589
    %4591 = vst.msk [vmem:[#allocation6 + $0x19] sm:$0x4] %vm4572, %v4589
    %v4592 = vld [vmem:[#allocation5 + $0x37] sm:$0xf]
    %v4593 = vld [vmem:[#allocation5 + $0x3d] sm:$0xf]
    %v4594 = vmax.f32 %v4592, %v4593
    %v4596 = vrot.slane %v4594, 1
    %v4598 = vmax.f32 %v4594, %v4596
    %4599 = vst.msk [vmem:[#allocation6 + $0x1e] sm:$0x1] %vm4570, %v4598
    %4600 = vst.msk [vmem:[#allocation6 + $0x1d] sm:$0x4] %vm4572, %v4598
    %v4601 = vld [vmem:[#allocation6] sm:$0xff]
    %v4602 = vld [vmem:[#allocation6 + $0x8] sm:$0xff]
    %v4603 = vld [vmem:[#allocation6 + $0x10] sm:$0xff]
    %v4604 = vld [vmem:[#allocation6 + $0x18] sm:$0xff]
    %v4605 = vld [vmem:[%s5] sm:$0xff]
    %v4606 = vld [vmem:[%s5 + $0x8] sm:$0xff]
    %v4607 = vld [vmem:[#allocation6 + $0x1] sm:$0xff]
    %v4608 = vld [vmem:[#allocation6 + $0x9] sm:$0xff]
    %v4609 = vld [vmem:[#allocation6 + $0x11] sm:$0xff]
    %v4610 = vld [vmem:[#allocation6 + $0x19] sm:$0xff]
    %s4611 = scalar_lea.vmem %s5, 16
    %v4612 = vld [vmem:[%s4611] sm:$0xff]
    %v4613 = vld [vmem:[%s4611 + $0x8] sm:$0xff]
    %v4615 = vsel %vm4546, %v4607, 0
    %v4618 = vsel %vm4546, %v4608, 0
    %v4621 = vsel %vm4546, %v4609, 0
    %v4624 = vsel %vm4546, %v4610, 0
    %4626 = vmatprep.subr.mxu0 0.0
    %4627 = vmatpush1.msra.mxu0 %v4612
    %4628 = vmatprep.subr.mxu0 0.0
    %4629 = vmatpush1.msra.mxu0 %v4613
    %4630 = vmatprep.subr.mxu0 0.0
    %4631 = vmatpush1.msra.mxu0 0.0
    %4632 = vmatprep.subr.mxu0 0.0
    %4633 = vmatpush1.msra.mxu0 0.0
    %4634 = vmatprep.subr.mxu0 0.0
    %4635 = vmatpush1.msra.mxu0 0.0
    %4636 = vmatprep.subr.mxu0 0.0
    %4637 = vmatpush1.msra.mxu0 0.0
    %4638 = vmatprep.subr.mxu0 0.0
    %4639 = vmatpush1.msra.mxu0 0.0
    %4640 = vmatprep.subr.mxu0 0.0
    %4641 = vmatpush1.msra.mxu0 0.0
    %4642 = vmatprep.subr.mxu0 0.0
    %4643 = vmatpush1.msra.mxu0 0.0
    %4644 = vmatprep.subr.mxu0 0.0
    %4645 = vmatpush1.msra.mxu0 0.0
    %4646 = vmatprep.subr.mxu0 0.0
    %4647 = vmatpush1.msra.mxu0 0.0
    %4648 = vmatprep.subr.mxu0 0.0
    %4649 = vmatpush1.msra.mxu0 0.0
    %4650 = vmatprep.subr.mxu0 0.0
    %4651 = vmatpush1.msra.mxu0 0.0
    %4652 = vmatprep.subr.mxu0 0.0
    %4653 = vmatpush1.msra.mxu0 0.0
    %4654 = vmatprep.subr.mxu0 0.0
    %4655 = vmatpush1.msra.mxu0 0.0
    %4656 = vmatprep.subr.mxu0 0.0
    %4657 = vmatpush1.msra.mxu0 0.0
    %4658 = vmatprep.subr.mxu0 0.0
    %4659 = vmatpush1.msra.mxu0 0.0
    %4660 = vmatprep.subr.mxu0 0.0
    %4661 = vmatpush1.msra.mxu0 0.0
    %4662 = vmatprep.subr.mxu0 0.0
    %4663 = vmatpush1.msra.mxu0 0.0
    %4664 = vmatprep.subr.mxu0 0.0
    %4665 = vmatpush1.msra.mxu0 0.0
    %4666 = vmatprep.subr.mxu0 0.0
    %4667 = vmatpush1.msra.mxu0 0.0
    %4668 = vmatprep.subr.mxu0 0.0
    %4669 = vmatpush1.msra.mxu0 0.0
    %4670 = vmatprep.subr.mxu0 0.0
    %4671 = vmatpush1.msra.mxu0 0.0
    %4672 = vmatprep.subr.mxu0 0.0
    %4673 = vmatpush1.msra.mxu0 0.0
    %4674 = vmatprep.subr.mxu0 0.0
    %4675 = vmatpush1.msra.mxu0 0.0
    %4676 = vmatprep.subr.mxu0 0.0
    %4677 = vmatpush1.msra.mxu0 0.0
    %4678 = vmatprep.subr.mxu0 0.0
    %4679 = vmatpush1.msra.mxu0 0.0
    %4680 = vmatprep.subr.mxu0 0.0
    %4681 = vmatpush1.msra.mxu0 0.0
    %4682 = vmatprep.subr.mxu0 0.0
    %4683 = vmatpush1.msra.mxu0 0.0
    %4684 = vmatprep.subr.mxu0 0.0
    %4685 = vmatpush1.msra.mxu0 0.0
    %4686 = vmatprep.subr.mxu0 0.0
    %4687 = vmatpush1.msra.mxu0 0.0
    %4688 = vmatprep.subr.mxu0 0.0
    %4689 = vmatpush1.msra.mxu0 0.0
    %4690 = vmatprep.mubr.f32.mxu0 0.0
    %4691 = vmatmul.mubr.f32.gmra.mrb[0].mxu0 %v4615
    %v4692 = vpop.f32.mrb[0].mxu0
    %v4693 = vadd.f32 0.0, %v4692
    %v4694 = vpop.f32.mrb[0].mxu0
    %4695 = vmatprep.mubr.f32.mxu0 0.0
    %4696 = vmatmul.mubr.f32.gmra.mrb[0].mxu0 %v4618
    %v4697 = vpop.f32.mrb[0].mxu0
    %v4698 = vadd.f32 0.0, %v4697
    %v4699 = vpop.f32.mrb[0].mxu0
    %4700 = vmatprep.mubr.f32.mxu0 0.0
    %4701 = vmatmul.mubr.f32.gmra.mrb[0].mxu0 %v4621
    %v4702 = vpop.f32.mrb[0].mxu0
    %v4703 = vadd.f32 0.0, %v4702
    %v4704 = vpop.f32.mrb[0].mxu0
    %4705 = vmatprep.mubr.f32.mxu0 0.0
    %4706 = vmatmul.mubr.f32.gmra.mrb[0].mxu0 %v4624
    %v4707 = vpop.f32.mrb[0].mxu0
    %v4708 = vadd.f32 0.0, %v4707
    %v4709 = vpop.f32.mrb[0].mxu0
    %4710 = vdwg.mxu0
    %v4712 = vsel %vm4546, %v4601, 0
    %v4715 = vsel %vm4546, %v4602, 0
    %v4718 = vsel %vm4546, %v4603, 0
    %v4721 = vsel %vm4546, %v4604, 0
    %4723 = vmatprep.subr.mxu0 0.0
    %4724 = vmatpush1.msra.mxu0 %v4605
    %4725 = vmatprep.subr.mxu0 0.0
    %4726 = vmatpush1.msra.mxu0 %v4606
    %4727 = vmatprep.subr.mxu0 0.0
    %4728 = vmatpush1.msra.mxu0 0.0
    %4729 = vmatprep.subr.mxu0 0.0
    %4730 = vmatpush1.msra.mxu0 0.0
    %4731 = vmatprep.subr.mxu0 0.0
    %4732 = vmatpush1.msra.mxu0 0.0
    %4733 = vmatprep.subr.mxu0 0.0
    %4734 = vmatpush1.msra.mxu0 0.0
    %4735 = vmatprep.subr.mxu0 0.0
    %4736 = vmatpush1.msra.mxu0 0.0
    %4737 = vmatprep.subr.mxu0 0.0
    %4738 = vmatpush1.msra.mxu0 0.0
    %4739 = vmatprep.subr.mxu0 0.0
    %4740 = vmatpush1.msra.mxu0 0.0
    %4741 = vmatprep.subr.mxu0 0.0
    %4742 = vmatpush1.msra.mxu0 0.0
    %4743 = vmatprep.subr.mxu0 0.0
    %4744 = vmatpush1.msra.mxu0 0.0
    %4745 = vmatprep.subr.mxu0 0.0
    %4746 = vmatpush1.msra.mxu0 0.0
    %4747 = vmatprep.subr.mxu0 0.0
    %4748 = vmatpush1.msra.mxu0 0.0
    %4749 = vmatprep.subr.mxu0 0.0
    %4750 = vmatpush1.msra.mxu0 0.0
    %4751 = vmatprep.subr.mxu0 0.0
    %4752 = vmatpush1.msra.mxu0 0.0
    %4753 = vmatprep.subr.mxu0 0.0
    %4754 = vmatpush1.msra.mxu0 0.0
    %4755 = vmatprep.subr.mxu0 0.0
    %4756 = vmatpush1.msra.mxu0 0.0
    %4757 = vmatprep.subr.mxu0 0.0
    %4758 = vmatpush1.msra.mxu0 0.0
    %4759 = vmatprep.subr.mxu0 0.0
    %4760 = vmatpush1.msra.mxu0 0.0
    %4761 = vmatprep.subr.mxu0 0.0
    %4762 = vmatpush1.msra.mxu0 0.0
    %4763 = vmatprep.subr.mxu0 0.0
    %4764 = vmatpush1.msra.mxu0 0.0
    %4765 = vmatprep.subr.mxu0 0.0
    %4766 = vmatpush1.msra.mxu0 0.0
    %4767 = vmatprep.subr.mxu0 0.0
    %4768 = vmatpush1.msra.mxu0 0.0
    %4769 = vmatprep.subr.mxu0 0.0
    %4770 = vmatpush1.msra.mxu0 0.0
    %4771 = vmatprep.subr.mxu0 0.0
    %4772 = vmatpush1.msra.mxu0 0.0
    %4773 = vmatprep.subr.mxu0 0.0
    %4774 = vmatpush1.msra.mxu0 0.0
    %4775 = vmatprep.subr.mxu0 0.0
    %4776 = vmatpush1.msra.mxu0 0.0
    %4777 = vmatprep.subr.mxu0 0.0
    %4778 = vmatpush1.msra.mxu0 0.0
    %4779 = vmatprep.subr.mxu0 0.0
    %4780 = vmatpush1.msra.mxu0 0.0
    %4781 = vmatprep.subr.mxu0 0.0
    %4782 = vmatpush1.msra.mxu0 0.0
    %4783 = vmatprep.subr.mxu0 0.0
    %4784 = vmatpush1.msra.mxu0 0.0
    %4785 = vmatprep.subr.mxu0 0.0
    %4786 = vmatpush1.msra.mxu0 0.0
    %4787 = vmatprep.mubr.f32.mxu0 0.0
    %4788 = vmatmul.mubr.f32.gmra.mrb[0].mxu0 %v4712
    %v4789 = vpop.f32.mrb[0].mxu0
    %v4790 = vadd.f32 %v4693, %v4789
    %v4791 = vpop.f32.mrb[0].mxu0
    %4792 = vmatprep.mubr.f32.mxu0 0.0
    %4793 = vmatmul.mubr.f32.gmra.mrb[0].mxu0 %v4715
    %v4794 = vpop.f32.mrb[0].mxu0
    %v4795 = vadd.f32 %v4698, %v4794
    %v4796 = vpop.f32.mrb[0].mxu0
    %4797 = vmatprep.mubr.f32.mxu0 0.0
    %4798 = vmatmul.mubr.f32.gmra.mrb[0].mxu0 %v4718
    %v4799 = vpop.f32.mrb[0].mxu0
    %v4800 = vadd.f32 %v4703, %v4799
    %v4801 = vpop.f32.mrb[0].mxu0
    %4802 = vmatprep.mubr.f32.mxu0 0.0
    %4803 = vmatmul.mubr.f32.gmra.mrb[0].mxu0 %v4721
    %v4804 = vpop.f32.mrb[0].mxu0
    %v4805 = vadd.f32 %v4708, %v4804
    %v4806 = vpop.f32.mrb[0].mxu0
    %4807 = vdwg.mxu0
    %v4808 = vld [vmem:[#allocation6 + $0x2] sm:$0xff]
    %v4809 = vld [vmem:[#allocation6 + $0xa] sm:$0xff]
    %v4810 = vld [vmem:[#allocation6 + $0x12] sm:$0xff]
    %v4811 = vld [vmem:[#allocation6 + $0x1a] sm:$0xff]
    %s4812 = scalar_lea.vmem %s5, 32
    %v4813 = vld [vmem:[%s4812] sm:$0xff]
    %v4814 = vld [vmem:[%s4812 + $0x8] sm:$0xff]
    %v4816 = vsel %vm4546, %v4808, 0
    %v4819 = vsel %vm4546, %v4809, 0
    %v4822 = vsel %vm4546, %v4810, 0
    %v4825 = vsel %vm4546, %v4811, 0
    %4827 = vmatprep.subr.mxu0 0.0
    %4828 = vmatpush1.msra.mxu0 %v4813
    %4829 = vmatprep.subr.mxu0 0.0
    %4830 = vmatpush1.msra.mxu0 %v4814
    %4831 = vmatprep.subr.mxu0 0.0
    %4832 = vmatpush1.msra.mxu0 0.0
    %4833 = vmatprep.subr.mxu0 0.0
    %4834 = vmatpush1.msra.mxu0 0.0
    %4835 = vmatprep.subr.mxu0 0.0
    %4836 = vmatpush1.msra.mxu0 0.0
    %4837 = vmatprep.subr.mxu0 0.0
    %4838 = vmatpush1.msra.mxu0 0.0
    %4839 = vmatprep.subr.mxu0 0.0
    %4840 = vmatpush1.msra.mxu0 0.0
    %4841 = vmatprep.subr.mxu0 0.0
    %4842 = vmatpush1.msra.mxu0 0.0
    %4843 = vmatprep.subr.mxu0 0.0
    %4844 = vmatpush1.msra.mxu0 0.0
    %4845 = vmatprep.subr.mxu0 0.0
    %4846 = vmatpush1.msra.mxu0 0.0
    %4847 = vmatprep.subr.mxu0 0.0
    %4848 = vmatpush1.msra.mxu0 0.0
    %4849 = vmatprep.subr.mxu0 0.0
    %4850 = vmatpush1.msra.mxu0 0.0
    %4851 = vmatprep.subr.mxu0 0.0
    %4852 = vmatpush1.msra.mxu0 0.0
    %4853 = vmatprep.subr.mxu0 0.0
    %4854 = vmatpush1.msra.mxu0 0.0
    %4855 = vmatprep.subr.mxu0 0.0
    %4856 = vmatpush1.msra.mxu0 0.0
    %4857 = vmatprep.subr.mxu0 0.0
    %4858 = vmatpush1.msra.mxu0 0.0
    %4859 = vmatprep.subr.mxu0 0.0
    %4860 = vmatpush1.msra.mxu0 0.0
    %4861 = vmatprep.subr.mxu0 0.0
    %4862 = vmatpush1.msra.mxu0 0.0
    %4863 = vmatprep.subr.mxu0 0.0
    %4864 = vmatpush1.msra.mxu0 0.0
    %4865 = vmatprep.subr.mxu0 0.0
    %4866 = vmatpush1.msra.mxu0 0.0
    %4867 = vmatprep.subr.mxu0 0.0
    %4868 = vmatpush1.msra.mxu0 0.0
    %4869 = vmatprep.subr.mxu0 0.0
    %4870 = vmatpush1.msra.mxu0 0.0
    %4871 = vmatprep.subr.mxu0 0.0
    %4872 = vmatpush1.msra.mxu0 0.0
    %4873 = vmatprep.subr.mxu0 0.0
    %4874 = vmatpush1.msra.mxu0 0.0
    %4875 = vmatprep.subr.mxu0 0.0
    %4876 = vmatpush1.msra.mxu0 0.0
    %4877 = vmatprep.subr.mxu0 0.0
    %4878 = vmatpush1.msra.mxu0 0.0
    %4879 = vmatprep.subr.mxu0 0.0
    %4880 = vmatpush1.msra.mxu0 0.0
    %4881 = vmatprep.subr.mxu0 0.0
    %4882 = vmatpush1.msra.mxu0 0.0
    %4883 = vmatprep.subr.mxu0 0.0
    %4884 = vmatpush1.msra.mxu0 0.0
    %4885 = vmatprep.subr.mxu0 0.0
    %4886 = vmatpush1.msra.mxu0 0.0
    %4887 = vmatprep.subr.mxu0 0.0
    %4888 = vmatpush1.msra.mxu0 0.0
    %4889 = vmatprep.subr.mxu0 0.0
    %4890 = vmatpush1.msra.mxu0 0.0
    %4891 = vmatprep.mubr.f32.mxu0 0.0
    %4892 = vmatmul.mubr.f32.gmra.mrb[0].mxu0 %v4816
    %v4893 = vpop.f32.mrb[0].mxu0
    %v4894 = vadd.f32 0.0, %v4893
    %v4895 = vpop.f32.mrb[0].mxu0
    %4896 = vmatprep.mubr.f32.mxu0 0.0
    %4897 = vmatmul.mubr.f32.gmra.mrb[0].mxu0 %v4819
    %v4898 = vpop.f32.mrb[0].mxu0
    %v4899 = vadd.f32 0.0, %v4898
    %v4900 = vpop.f32.mrb[0].mxu0
    %4901 = vmatprep.mubr.f32.mxu0 0.0
    %4902 = vmatmul.mubr.f32.gmra.mrb[0].mxu0 %v4822
    %v4903 = vpop.f32.mrb[0].mxu0
    %v4904 = vadd.f32 0.0, %v4903
    %v4905 = vpop.f32.mrb[0].mxu0
    %4906 = vmatprep.mubr.f32.mxu0 0.0
    %4907 = vmatmul.mubr.f32.gmra.mrb[0].mxu0 %v4825
    %v4908 = vpop.f32.mrb[0].mxu0
    %v4909 = vadd.f32 0.0, %v4908
    %v4910 = vpop.f32.mrb[0].mxu0
    %4911 = vdwg.mxu0
    %v4912 = vadd.f32 %v4790, %v4894
    %v4913 = vadd.f32 %v4795, %v4899
    %v4914 = vadd.f32 %v4800, %v4904
    %v4915 = vadd.f32 %v4805, %v4909
    %v4916 = vld [vmem:[#allocation6 + $0x4] sm:$0xff]
    %v4917 = vld [vmem:[#allocation6 + $0xc] sm:$0xff]
    %v4918 = vld [vmem:[#allocation6 + $0x14] sm:$0xff]
    %v4919 = vld [vmem:[#allocation6 + $0x1c] sm:$0xff]
    %s4920 = scalar_lea.vmem %s5, 48
    %v4921 = vld [vmem:[%s4920] sm:$0xff]
    %v4922 = vld [vmem:[%s4920 + $0x8] sm:$0xff]
    %v4924 = vsel %vm4546, %v4916, 0
    %v4927 = vsel %vm4546, %v4917, 0
    %v4930 = vsel %vm4546, %v4918, 0
    %v4933 = vsel %vm4546, %v4919, 0
    %4935 = vmatprep.subr.mxu0 0.0
    %4936 = vmatpush1.msra.mxu0 %v4921
    %4937 = vmatprep.subr.mxu0 0.0
    %4938 = vmatpush1.msra.mxu0 %v4922
    %4939 = vmatprep.subr.mxu0 0.0
    %4940 = vmatpush1.msra.mxu0 0.0
    %4941 = vmatprep.subr.mxu0 0.0
    %4942 = vmatpush1.msra.mxu0 0.0
    %4943 = vmatprep.subr.mxu0 0.0
    %4944 = vmatpush1.msra.mxu0 0.0
    %4945 = vmatprep.subr.mxu0 0.0
    %4946 = vmatpush1.msra.mxu0 0.0
    %4947 = vmatprep.subr.mxu0 0.0
    %4948 = vmatpush1.msra.mxu0 0.0
    %4949 = vmatprep.subr.mxu0 0.0
    %4950 = vmatpush1.msra.mxu0 0.0
    %4951 = vmatprep.subr.mxu0 0.0
    %4952 = vmatpush1.msra.mxu0 0.0
    %4953 = vmatprep.subr.mxu0 0.0
    %4954 = vmatpush1.msra.mxu0 0.0
    %4955 = vmatprep.subr.mxu0 0.0
    %4956 = vmatpush1.msra.mxu0 0.0
    %4957 = vmatprep.subr.mxu0 0.0
    %4958 = vmatpush1.msra.mxu0 0.0
    %4959 = vmatprep.subr.mxu0 0.0
    %4960 = vmatpush1.msra.mxu0 0.0
    %4961 = vmatprep.subr.mxu0 0.0
    %4962 = vmatpush1.msra.mxu0 0.0
    %4963 = vmatprep.subr.mxu0 0.0
    %4964 = vmatpush1.msra.mxu0 0.0
    %4965 = vmatprep.subr.mxu0 0.0
    %4966 = vmatpush1.msra.mxu0 0.0
    %4967 = vmatprep.subr.mxu0 0.0
    %4968 = vmatpush1.msra.mxu0 0.0
    %4969 = vmatprep.subr.mxu0 0.0
    %4970 = vmatpush1.msra.mxu0 0.0
    %4971 = vmatprep.subr.mxu0 0.0
    %4972 = vmatpush1.msra.mxu0 0.0
    %4973 = vmatprep.subr.mxu0 0.0
    %4974 = vmatpush1.msra.mxu0 0.0
    %4975 = vmatprep.subr.mxu0 0.0
    %4976 = vmatpush1.msra.mxu0 0.0
    %4977 = vmatprep.subr.mxu0 0.0
    %4978 = vmatpush1.msra.mxu0 0.0
    %4979 = vmatprep.subr.mxu0 0.0
    %4980 = vmatpush1.msra.mxu0 0.0
    %4981 = vmatprep.subr.mxu0 0.0
    %4982 = vmatpush1.msra.mxu0 0.0
    %4983 = vmatprep.subr.mxu0 0.0
    %4984 = vmatpush1.msra.mxu0 0.0
    %4985 = vmatprep.subr.mxu0 0.0
    %4986 = vmatpush1.msra.mxu0 0.0
    %4987 = vmatprep.subr.mxu0 0.0
    %4988 = vmatpush1.msra.mxu0 0.0
    %4989 = vmatprep.subr.mxu0 0.0
    %4990 = vmatpush1.msra.mxu0 0.0
    %4991 = vmatprep.subr.mxu0 0.0
    %4992 = vmatpush1.msra.mxu0 0.0
    %4993 = vmatprep.subr.mxu0 0.0
    %4994 = vmatpush1.msra.mxu0 0.0
    %4995 = vmatprep.subr.mxu0 0.0
    %4996 = vmatpush1.msra.mxu0 0.0
    %4997 = vmatprep.subr.mxu0 0.0
    %4998 = vmatpush1.msra.mxu0 0.0
    %4999 = vmatprep.mubr.f32.mxu0 0.0
    %5000 = vmatmul.mubr.f32.gmra.mrb[0].mxu0 %v4924
    %v5001 = vpop.f32.mrb[0].mxu0
    %v5002 = vadd.f32 0.0, %v5001
    %v5003 = vpop.f32.mrb[0].mxu0
    %5004 = vmatprep.mubr.f32.mxu0 0.0
    %5005 = vmatmul.mubr.f32.gmra.mrb[0].mxu0 %v4927
    %v5006 = vpop.f32.mrb[0].mxu0
    %v5007 = vadd.f32 0.0, %v5006
    %v5008 = vpop.f32.mrb[0].mxu0
    %5009 = vmatprep.mubr.f32.mxu0 0.0
    %5010 = vmatmul.mubr.f32.gmra.mrb[0].mxu0 %v4930
    %v5011 = vpop.f32.mrb[0].mxu0
    %v5012 = vadd.f32 0.0, %v5011
    %v5013 = vpop.f32.mrb[0].mxu0
    %5014 = vmatprep.mubr.f32.mxu0 0.0
    %5015 = vmatmul.mubr.f32.gmra.mrb[0].mxu0 %v4933
    %v5016 = vpop.f32.mrb[0].mxu0
    %v5017 = vadd.f32 0.0, %v5016
    %v5018 = vpop.f32.mrb[0].mxu0
    %5019 = vdwg.mxu0
    %v5020 = vadd.f32 %v4912, %v5002
    %v5021 = vadd.f32 %v4913, %v5007
    %v5022 = vadd.f32 %v4914, %v5012
    %v5023 = vadd.f32 %v4915, %v5017
    %v5024 = vld [vmem:[#allocation6 + $0x5] sm:$0xff]
    %v5025 = vld [vmem:[#allocation6 + $0xd] sm:$0xff]
    %v5026 = vld [vmem:[#allocation6 + $0x15] sm:$0xff]
    %v5027 = vld [vmem:[#allocation6 + $0x1d] sm:$0xff]
    %s5028 = scalar_lea.vmem %s5, 64
    %v5029 = vld [vmem:[%s5028] sm:$0xff]
    %v5030 = vld [vmem:[%s5028 + $0x8] sm:$0xff]
    %v5032 = vsel %vm4546, %v5024, 0
    %v5035 = vsel %vm4546, %v5025, 0
    %v5038 = vsel %vm4546, %v5026, 0
    %v5041 = vsel %vm4546, %v5027, 0
    %5043 = vmatprep.subr.mxu0 0.0
    %5044 = vmatpush1.msra.mxu0 %v5029
    %5045 = vmatprep.subr.mxu0 0.0
    %5046 = vmatpush1.msra.mxu0 %v5030
    %5047 = vmatprep.subr.mxu0 0.0
    %5048 = vmatpush1.msra.mxu0 0.0
    %5049 = vmatprep.subr.mxu0 0.0
    %5050 = vmatpush1.msra.mxu0 0.0
    %5051 = vmatprep.subr.mxu0 0.0
    %5052 = vmatpush1.msra.mxu0 0.0
    %5053 = vmatprep.subr.mxu0 0.0
    %5054 = vmatpush1.msra.mxu0 0.0
    %5055 = vmatprep.subr.mxu0 0.0
    %5056 = vmatpush1.msra.mxu0 0.0
    %5057 = vmatprep.subr.mxu0 0.0
    %5058 = vmatpush1.msra.mxu0 0.0
    %5059 = vmatprep.subr.mxu0 0.0
    %5060 = vmatpush1.msra.mxu0 0.0
    %5061 = vmatprep.subr.mxu0 0.0
    %5062 = vmatpush1.msra.mxu0 0.0
    %5063 = vmatprep.subr.mxu0 0.0
    %5064 = vmatpush1.msra.mxu0 0.0
    %5065 = vmatprep.subr.mxu0 0.0
    %5066 = vmatpush1.msra.mxu0 0.0
    %5067 = vmatprep.subr.mxu0 0.0
    %5068 = vmatpush1.msra.mxu0 0.0
    %5069 = vmatprep.subr.mxu0 0.0
    %5070 = vmatpush1.msra.mxu0 0.0
    %5071 = vmatprep.subr.mxu0 0.0
    %5072 = vmatpush1.msra.mxu0 0.0
    %5073 = vmatprep.subr.mxu0 0.0
    %5074 = vmatpush1.msra.mxu0 0.0
    %5075 = vmatprep.subr.mxu0 0.0
    %5076 = vmatpush1.msra.mxu0 0.0
    %5077 = vmatprep.subr.mxu0 0.0
    %5078 = vmatpush1.msra.mxu0 0.0
    %5079 = vmatprep.subr.mxu0 0.0
    %5080 = vmatpush1.msra.mxu0 0.0
    %5081 = vmatprep.subr.mxu0 0.0
    %5082 = vmatpush1.msra.mxu0 0.0
    %5083 = vmatprep.subr.mxu0 0.0
    %5084 = vmatpush1.msra.mxu0 0.0
    %5085 = vmatprep.subr.mxu0 0.0
    %5086 = vmatpush1.msra.mxu0 0.0
    %5087 = vmatprep.subr.mxu0 0.0
    %5088 = vmatpush1.msra.mxu0 0.0
    %5089 = vmatprep.subr.mxu0 0.0
    %5090 = vmatpush1.msra.mxu0 0.0
    %5091 = vmatprep.subr.mxu0 0.0
    %5092 = vmatpush1.msra.mxu0 0.0
    %5093 = vmatprep.subr.mxu0 0.0
    %5094 = vmatpush1.msra.mxu0 0.0
    %5095 = vmatprep.subr.mxu0 0.0
    %5096 = vmatpush1.msra.mxu0 0.0
    %5097 = vmatprep.subr.mxu0 0.0
    %5098 = vmatpush1.msra.mxu0 0.0
    %5099 = vmatprep.subr.mxu0 0.0
    %5100 = vmatpush1.msra.mxu0 0.0
    %5101 = vmatprep.subr.mxu0 0.0
    %5102 = vmatpush1.msra.mxu0 0.0
    %5103 = vmatprep.subr.mxu0 0.0
    %5104 = vmatpush1.msra.mxu0 0.0
    %5105 = vmatprep.subr.mxu0 0.0
    %5106 = vmatpush1.msra.mxu0 0.0
    %5107 = vmatprep.mubr.f32.mxu0 0.0
    %5108 = vmatmul.mubr.f32.gmra.mrb[0].mxu0 %v5032
    %v5109 = vpop.f32.mrb[0].mxu0
    %v5110 = vadd.f32 0.0, %v5109
    %v5111 = vpop.f32.mrb[0].mxu0
    %5112 = vmatprep.mubr.f32.mxu0 0.0
    %5113 = vmatmul.mubr.f32.gmra.mrb[0].mxu0 %v5035
    %v5114 = vpop.f32.mrb[0].mxu0
    %v5115 = vadd.f32 0.0, %v5114
    %v5116 = vpop.f32.mrb[0].mxu0
    %5117 = vmatprep.mubr.f32.mxu0 0.0
    %5118 = vmatmul.mubr.f32.gmra.mrb[0].mxu0 %v5038
    %v5119 = vpop.f32.mrb[0].mxu0
    %v5120 = vadd.f32 0.0, %v5119
    %v5121 = vpop.f32.mrb[0].mxu0
    %5122 = vmatprep.mubr.f32.mxu0 0.0
    %5123 = vmatmul.mubr.f32.gmra.mrb[0].mxu0 %v5041
    %v5124 = vpop.f32.mrb[0].mxu0
    %v5125 = vadd.f32 0.0, %v5124
    %v5126 = vpop.f32.mrb[0].mxu0
    %5127 = vdwg.mxu0
    %v5128 = vadd.f32 %v5020, %v5110
    %v5129 = vadd.f32 %v5021, %v5115
    %v5130 = vadd.f32 %v5022, %v5120
    %v5131 = vadd.f32 %v5023, %v5125
    %v5132 = vld [vmem:[#allocation6 + $0x6] sm:$0xff]
    %v5133 = vld [vmem:[#allocation6 + $0xe] sm:$0xff]
    %v5134 = vld [vmem:[#allocation6 + $0x16] sm:$0xff]
    %v5135 = vld [vmem:[#allocation6 + $0x1e] sm:$0xff]
    %s5136 = scalar_lea.vmem %s5, 80
    %v5137 = vld [vmem:[%s5136] sm:$0xff]
    %v5138 = vld [vmem:[%s5136 + $0x8] sm:$0xff]
    %v5140 = vsel %vm4546, %v5132, 0
    %v5143 = vsel %vm4546, %v5133, 0
    %v5146 = vsel %vm4546, %v5134, 0
    %v5149 = vsel %vm4546, %v5135, 0
    %5151 = vmatprep.subr.mxu0 0.0
    %5152 = vmatpush1.msra.mxu0 %v5137
    %5153 = vmatprep.subr.mxu0 0.0
    %5154 = vmatpush1.msra.mxu0 %v5138
    %5155 = vmatprep.subr.mxu0 0.0
    %5156 = vmatpush1.msra.mxu0 0.0
    %5157 = vmatprep.subr.mxu0 0.0
    %5158 = vmatpush1.msra.mxu0 0.0
    %5159 = vmatprep.subr.mxu0 0.0
    %5160 = vmatpush1.msra.mxu0 0.0
    %5161 = vmatprep.subr.mxu0 0.0
    %5162 = vmatpush1.msra.mxu0 0.0
    %5163 = vmatprep.subr.mxu0 0.0
    %5164 = vmatpush1.msra.mxu0 0.0
    %5165 = vmatprep.subr.mxu0 0.0
    %5166 = vmatpush1.msra.mxu0 0.0
    %5167 = vmatprep.subr.mxu0 0.0
    %5168 = vmatpush1.msra.mxu0 0.0
    %5169 = vmatprep.subr.mxu0 0.0
    %5170 = vmatpush1.msra.mxu0 0.0
    %5171 = vmatprep.subr.mxu0 0.0
    %5172 = vmatpush1.msra.mxu0 0.0
    %5173 = vmatprep.subr.mxu0 0.0
    %5174 = vmatpush1.msra.mxu0 0.0
    %5175 = vmatprep.subr.mxu0 0.0
    %5176 = vmatpush1.msra.mxu0 0.0
    %5177 = vmatprep.subr.mxu0 0.0
    %5178 = vmatpush1.msra.mxu0 0.0
    %5179 = vmatprep.subr.mxu0 0.0
    %5180 = vmatpush1.msra.mxu0 0.0
    %5181 = vmatprep.subr.mxu0 0.0
    %5182 = vmatpush1.msra.mxu0 0.0
    %5183 = vmatprep.subr.mxu0 0.0
    %5184 = vmatpush1.msra.mxu0 0.0
    %5185 = vmatprep.subr.mxu0 0.0
    %5186 = vmatpush1.msra.mxu0 0.0
    %5187 = vmatprep.subr.mxu0 0.0
    %5188 = vmatpush1.msra.mxu0 0.0
    %5189 = vmatprep.subr.mxu0 0.0
    %5190 = vmatpush1.msra.mxu0 0.0
    %5191 = vmatprep.subr.mxu0 0.0
    %5192 = vmatpush1.msra.mxu0 0.0
    %5193 = vmatprep.subr.mxu0 0.0
    %5194 = vmatpush1.msra.mxu0 0.0
    %5195 = vmatprep.subr.mxu0 0.0
    %5196 = vmatpush1.msra.mxu0 0.0
    %5197 = vmatprep.subr.mxu0 0.0
    %5198 = vmatpush1.msra.mxu0 0.0
    %5199 = vmatprep.subr.mxu0 0.0
    %5200 = vmatpush1.msra.mxu0 0.0
    %5201 = vmatprep.subr.mxu0 0.0
    %5202 = vmatpush1.msra.mxu0 0.0
    %5203 = vmatprep.subr.mxu0 0.0
    %5204 = vmatpush1.msra.mxu0 0.0
    %5205 = vmatprep.subr.mxu0 0.0
    %5206 = vmatpush1.msra.mxu0 0.0
    %5207 = vmatprep.subr.mxu0 0.0
    %5208 = vmatpush1.msra.mxu0 0.0
    %5209 = vmatprep.subr.mxu0 0.0
    %5210 = vmatpush1.msra.mxu0 0.0
    %5211 = vmatprep.subr.mxu0 0.0
    %5212 = vmatpush1.msra.mxu0 0.0
    %5213 = vmatprep.subr.mxu0 0.0
    %5214 = vmatpush1.msra.mxu0 0.0
    %5215 = vmatprep.mubr.f32.mxu0 0.0
    %5216 = vmatmul.mubr.f32.gmra.mrb[0].mxu0 %v5140
    %v5217 = vpop.f32.mrb[0].mxu0
    %v5218 = vadd.f32 0.0, %v5217
    %v5219 = vpop.f32.mrb[0].mxu0
    %5220 = vmatprep.mubr.f32.mxu0 0.0
    %5221 = vmatmul.mubr.f32.gmra.mrb[0].mxu0 %v5143
    %v5222 = vpop.f32.mrb[0].mxu0
    %v5223 = vadd.f32 0.0, %v5222
    %v5224 = vpop.f32.mrb[0].mxu0
    %5225 = vmatprep.mubr.f32.mxu0 0.0
    %5226 = vmatmul.mubr.f32.gmra.mrb[0].mxu0 %v5146
    %v5227 = vpop.f32.mrb[0].mxu0
    %v5228 = vadd.f32 0.0, %v5227
    %v5229 = vpop.f32.mrb[0].mxu0
    %5230 = vmatprep.mubr.f32.mxu0 0.0
    %5231 = vmatmul.mubr.f32.gmra.mrb[0].mxu0 %v5149
    %v5232 = vpop.f32.mrb[0].mxu0
    %v5233 = vadd.f32 0.0, %v5232
    %v5234 = vpop.f32.mrb[0].mxu0
    %5235 = vdwg.mxu0
    %v5236 = vadd.f32 %v5128, %v5218
    %v5237 = vadd.f32 %v5129, %v5223
    %v5238 = vadd.f32 %v5130, %v5228
    %v5239 = vadd.f32 %v5131, %v5233
    %v5240 = vld [vmem:[#allocation6 + $0x8] sm:$0xff]
    %v5241 = vld [vmem:[#allocation6 + $0x10] sm:$0xff]
    %v5242 = vld [vmem:[#allocation6 + $0x18] sm:$0xff]
    %v5243 = vld [vmem:[#allocation6 + $0x20] sm:$0xff]
    %s5244 = scalar_lea.vmem %s5, 96
    %v5245 = vld [vmem:[%s5244] sm:$0xff]
    %v5246 = vld [vmem:[%s5244 + $0x8] sm:$0xff]
    %v5248 = vsel %vm4546, %v5240, 0
    %v5251 = vsel %vm4546, %v5241, 0
    %v5254 = vsel %vm4546, %v5242, 0
    %v5257 = vsel %vm4546, %v5243, 0
    %5259 = vmatprep.subr.mxu0 0.0
    %5260 = vmatpush1.msra.mxu0 %v5245
    %5261 = vmatprep.subr.mxu0 0.0
    %5262 = vmatpush1.msra.mxu0 %v5246
    %5263 = vmatprep.subr.mxu0 0.0
    %5264 = vmatpush1.msra.mxu0 0.0
    %5265 = vmatprep.subr.mxu0 0.0
    %5266 = vmatpush1.msra.mxu0 0.0
    %5267 = vmatprep.subr.mxu0 0.0
    %5268 = vmatpush1.msra.mxu0 0.0
    %5269 = vmatprep.subr.mxu0 0.0
    %5270 = vmatpush1.msra.mxu0 0.0
    %5271 = vmatprep.subr.mxu0 0.0
    %5272 = vmatpush1.msra.mxu0 0.0
    %5273 = vmatprep.subr.mxu0 0.0
    %5274 = vmatpush1.msra.mxu0 0.0
    %5275 = vmatprep.subr.mxu0 0.0
    %5276 = vmatpush1.msra.mxu0 0.0
    %5277 = vmatprep.subr.mxu0 0.0
    %5278 = vmatpush1.msra.mxu0 0.0
    %5279 = vmatprep.subr.mxu0 0.0
    %5280 = vmatpush1.msra.mxu0 0.0
    %5281 = vmatprep.subr.mxu0 0.0
    %5282 = vmatpush1.msra.mxu0 0.0
    %5283 = vmatprep.subr.mxu0 0.0
    %5284 = vmatpush1.msra.mxu0 0.0
    %5285 = vmatprep.subr.mxu0 0.0
    %5286 = vmatpush1.msra.mxu0 0.0
    %5287 = vmatprep.subr.mxu0 0.0
    %5288 = vmatpush1.msra.mxu0 0.0
    %5289 = vmatprep.subr.mxu0 0.0
    %5290 = vmatpush1.msra.mxu0 0.0
    %5291 = vmatprep.subr.mxu0 0.0
    %5292 = vmatpush1.msra.mxu0 0.0
    %5293 = vmatprep.subr.mxu0 0.0
    %5294 = vmatpush1.msra.mxu0 0.0
    %5295 = vmatprep.subr.mxu0 0.0
    %5296 = vmatpush1.msra.mxu0 0.0
    %5297 = vmatprep.subr.mxu0 0.0
    %5298 = vmatpush1.msra.mxu0 0.0
    %5299 = vmatprep.subr.mxu0 0.0
    %5300 = vmatpush1.msra.mxu0 0.0
    %5301 = vmatprep.subr.mxu0 0.0
    %5302 = vmatpush1.msra.mxu0 0.0
    %5303 = vmatprep.subr.mxu0 0.0
    %5304 = vmatpush1.msra.mxu0 0.0
    %5305 = vmatprep.subr.mxu0 0.0
    %5306 = vmatpush1.msra.mxu0 0.0
    %5307 = vmatprep.subr.mxu0 0.0
    %5308 = vmatpush1.msra.mxu0 0.0
    %5309 = vmatprep.subr.mxu0 0.0
    %5310 = vmatpush1.msra.mxu0 0.0
    %5311 = vmatprep.subr.mxu0 0.0
    %5312 = vmatpush1.msra.mxu0 0.0
    %5313 = vmatprep.subr.mxu0 0.0
    %5314 = vmatpush1.msra.mxu0 0.0
    %5315 = vmatprep.subr.mxu0 0.0
    %5316 = vmatpush1.msra.mxu0 0.0
    %5317 = vmatprep.subr.mxu0 0.0
    %5318 = vmatpush1.msra.mxu0 0.0
    %5319 = vmatprep.subr.mxu0 0.0
    %5320 = vmatpush1.msra.mxu0 0.0
    %5321 = vmatprep.subr.mxu0 0.0
    %5322 = vmatpush1.msra.mxu0 0.0
    %5323 = vmatprep.mubr.f32.mxu0 0.0
    %5324 = vmatmul.mubr.f32.gmra.mrb[0].mxu0 %v5248
    %v5325 = vpop.f32.mrb[0].mxu0
    %v5326 = vadd.f32 0.0, %v5325
    %v5327 = vpop.f32.mrb[0].mxu0
    %5328 = vmatprep.mubr.f32.mxu0 0.0
    %5329 = vmatmul.mubr.f32.gmra.mrb[0].mxu0 %v5251
    %v5330 = vpop.f32.mrb[0].mxu0
    %v5331 = vadd.f32 0.0, %v5330
    %v5332 = vpop.f32.mrb[0].mxu0
    %5333 = vmatprep.mubr.f32.mxu0 0.0
    %5334 = vmatmul.mubr.f32.gmra.mrb[0].mxu0 %v5254
    %v5335 = vpop.f32.mrb[0].mxu0
    %v5336 = vadd.f32 0.0, %v5335
    %v5337 = vpop.f32.mrb[0].mxu0
    %5338 = vmatprep.mubr.f32.mxu0 0.0
    %5339 = vmatmul.mubr.f32.gmra.mrb[0].mxu0 %v5257
    %v5340 = vpop.f32.mrb[0].mxu0
    %v5341 = vadd.f32 0.0, %v5340
    %v5342 = vpop.f32.mrb[0].mxu0
    %5343 = vdwg.mxu0
    %v5344 = vadd.f32 %v5236, %v5326
    %v5345 = vadd.f32 %v5237, %v5331
    %v5346 = vadd.f32 %v5238, %v5336
    %v5347 = vadd.f32 %v5239, %v5341
    %v5348 = vld [vmem:[#allocation6 + $0x9] sm:$0xff]
    %v5349 = vld [vmem:[#allocation6 + $0x11] sm:$0xff]
    %v5350 = vld [vmem:[#allocation6 + $0x19] sm:$0xff]
    %v5351 = vld [vmem:[#allocation6 + $0x21] sm:$0xff]
    %s5352 = scalar_lea.vmem %s5, 112
    %v5353 = vld [vmem:[%s5352] sm:$0xff]
    %v5354 = vld [vmem:[%s5352 + $0x8] sm:$0xff]
    %v5356 = vsel %vm4546, %v5348, 0
    %v5359 = vsel %vm4546, %v5349, 0
    %v5362 = vsel %vm4546, %v5350, 0
    %v5365 = vsel %vm4546, %v5351, 0
    %5367 = vmatprep.subr.mxu0 0.0
    %5368 = vmatpush1.msra.mxu0 %v5353
    %5369 = vmatprep.subr.mxu0 0.0
    %5370 = vmatpush1.msra.mxu0 %v5354
    %5371 = vmatprep.subr.mxu0 0.0
    %5372 = vmatpush1.msra.mxu0 0.0
    %5373 = vmatprep.subr.mxu0 0.0
    %5374 = vmatpush1.msra.mxu0 0.0
    %5375 = vmatprep.subr.mxu0 0.0
    %5376 = vmatpush1.msra.mxu0 0.0
    %5377 = vmatprep.subr.mxu0 0.0
    %5378 = vmatpush1.msra.mxu0 0.0
    %5379 = vmatprep.subr.mxu0 0.0
    %5380 = vmatpush1.msra.mxu0 0.0
    %5381 = vmatprep.subr.mxu0 0.0
    %5382 = vmatpush1.msra.mxu0 0.0
    %5383 = vmatprep.subr.mxu0 0.0
    %5384 = vmatpush1.msra.mxu0 0.0
    %5385 = vmatprep.subr.mxu0 0.0
    %5386 = vmatpush1.msra.mxu0 0.0
    %5387 = vmatprep.subr.mxu0 0.0
    %5388 = vmatpush1.msra.mxu0 0.0
    %5389 = vmatprep.subr.mxu0 0.0
    %5390 = vmatpush1.msra.mxu0 0.0
    %5391 = vmatprep.subr.mxu0 0.0
    %5392 = vmatpush1.msra.mxu0 0.0
    %5393 = vmatprep.subr.mxu0 0.0
    %5394 = vmatpush1.msra.mxu0 0.0
    %5395 = vmatprep.subr.mxu0 0.0
    %5396 = vmatpush1.msra.mxu0 0.0
    %5397 = vmatprep.subr.mxu0 0.0
    %5398 = vmatpush1.msra.mxu0 0.0
    %5399 = vmatprep.subr.mxu0 0.0
    %5400 = vmatpush1.msra.mxu0 0.0
    %5401 = vmatprep.subr.mxu0 0.0
    %5402 = vmatpush1.msra.mxu0 0.0
    %5403 = vmatprep.subr.mxu0 0.0
    %5404 = vmatpush1.msra.mxu0 0.0
    %5405 = vmatprep.subr.mxu0 0.0
    %5406 = vmatpush1.msra.mxu0 0.0
    %5407 = vmatprep.subr.mxu0 0.0
    %5408 = vmatpush1.msra.mxu0 0.0
    %5409 = vmatprep.subr.mxu0 0.0
    %5410 = vmatpush1.msra.mxu0 0.0
    %5411 = vmatprep.subr.mxu0 0.0
    %5412 = vmatpush1.msra.mxu0 0.0
    %5413 = vmatprep.subr.mxu0 0.0
    %5414 = vmatpush1.msra.mxu0 0.0
    %5415 = vmatprep.subr.mxu0 0.0
    %5416 = vmatpush1.msra.mxu0 0.0
    %5417 = vmatprep.subr.mxu0 0.0
    %5418 = vmatpush1.msra.mxu0 0.0
    %5419 = vmatprep.subr.mxu0 0.0
    %5420 = vmatpush1.msra.mxu0 0.0
    %5421 = vmatprep.subr.mxu0 0.0
    %5422 = vmatpush1.msra.mxu0 0.0
    %5423 = vmatprep.subr.mxu0 0.0
    %5424 = vmatpush1.msra.mxu0 0.0
    %5425 = vmatprep.subr.mxu0 0.0
    %5426 = vmatpush1.msra.mxu0 0.0
    %5427 = vmatprep.subr.mxu0 0.0
    %5428 = vmatpush1.msra.mxu0 0.0
    %5429 = vmatprep.subr.mxu0 0.0
    %5430 = vmatpush1.msra.mxu0 0.0
    %5431 = vmatprep.mubr.f32.mxu0 0.0
    %5432 = vmatmul.mubr.f32.gmra.mrb[0].mxu0 %v5356
    %v5433 = vpop.f32.mrb[0].mxu0
    %v5434 = vadd.f32 0.0, %v5433
    %v5435 = vpop.f32.mrb[0].mxu0
    %5436 = vmatprep.mubr.f32.mxu0 0.0
    %5437 = vmatmul.mubr.f32.gmra.mrb[0].mxu0 %v5359
    %v5438 = vpop.f32.mrb[0].mxu0
    %v5439 = vadd.f32 0.0, %v5438
    %v5440 = vpop.f32.mrb[0].mxu0
    %5441 = vmatprep.mubr.f32.mxu0 0.0
    %5442 = vmatmul.mubr.f32.gmra.mrb[0].mxu0 %v5362
    %v5443 = vpop.f32.mrb[0].mxu0
    %v5444 = vadd.f32 0.0, %v5443
    %v5445 = vpop.f32.mrb[0].mxu0
    %5446 = vmatprep.mubr.f32.mxu0 0.0
    %5447 = vmatmul.mubr.f32.gmra.mrb[0].mxu0 %v5365
    %v5448 = vpop.f32.mrb[0].mxu0
    %v5449 = vadd.f32 0.0, %v5448
    %v5450 = vpop.f32.mrb[0].mxu0
    %5451 = vdwg.mxu0
    %v5452 = vadd.f32 %v5344, %v5434
    %v5453 = vadd.f32 %v5345, %v5439
    %v5454 = vadd.f32 %v5346, %v5444
    %v5455 = vadd.f32 %v5347, %v5449
    %v5456 = vld [vmem:[#allocation6 + $0xa] sm:$0xff]
    %v5457 = vld [vmem:[#allocation6 + $0x12] sm:$0xff]
    %v5458 = vld [vmem:[#allocation6 + $0x1a] sm:$0xff]
    %v5459 = vld [vmem:[#allocation6 + $0x22] sm:$0xff]
    %s5460 = scalar_lea.vmem %s5, 128
    %v5461 = vld [vmem:[%s5460] sm:$0xff]
    %v5462 = vld [vmem:[%s5460 + $0x8] sm:$0xff]
    %v5464 = vsel %vm4546, %v5456, 0
    %v5467 = vsel %vm4546, %v5457, 0
    %v5470 = vsel %vm4546, %v5458, 0
    %v5473 = vsel %vm4546, %v5459, 0
    %5475 = vmatprep.subr.mxu0 0.0
    %5476 = vmatpush1.msra.mxu0 %v5461
    %5477 = vmatprep.subr.mxu0 0.0
    %5478 = vmatpush1.msra.mxu0 %v5462
    %5479 = vmatprep.subr.mxu0 0.0
    %5480 = vmatpush1.msra.mxu0 0.0
    %5481 = vmatprep.subr.mxu0 0.0
    %5482 = vmatpush1.msra.mxu0 0.0
    %5483 = vmatprep.subr.mxu0 0.0
    %5484 = vmatpush1.msra.mxu0 0.0
    %5485 = vmatprep.subr.mxu0 0.0
    %5486 = vmatpush1.msra.mxu0 0.0
    %5487 = vmatprep.subr.mxu0 0.0
    %5488 = vmatpush1.msra.mxu0 0.0
    %5489 = vmatprep.subr.mxu0 0.0
    %5490 = vmatpush1.msra.mxu0 0.0
    %5491 = vmatprep.subr.mxu0 0.0
    %5492 = vmatpush1.msra.mxu0 0.0
    %5493 = vmatprep.subr.mxu0 0.0
    %5494 = vmatpush1.msra.mxu0 0.0
    %5495 = vmatprep.subr.mxu0 0.0
    %5496 = vmatpush1.msra.mxu0 0.0
    %5497 = vmatprep.subr.mxu0 0.0
    %5498 = vmatpush1.msra.mxu0 0.0
    %5499 = vmatprep.subr.mxu0 0.0
    %5500 = vmatpush1.msra.mxu0 0.0
    %5501 = vmatprep.subr.mxu0 0.0
    %5502 = vmatpush1.msra.mxu0 0.0
    %5503 = vmatprep.subr.mxu0 0.0
    %5504 = vmatpush1.msra.mxu0 0.0
    %5505 = vmatprep.subr.mxu0 0.0
    %5506 = vmatpush1.msra.mxu0 0.0
    %5507 = vmatprep.subr.mxu0 0.0
    %5508 = vmatpush1.msra.mxu0 0.0
    %5509 = vmatprep.subr.mxu0 0.0
    %5510 = vmatpush1.msra.mxu0 0.0
    %5511 = vmatprep.subr.mxu0 0.0
    %5512 = vmatpush1.msra.mxu0 0.0
    %5513 = vmatprep.subr.mxu0 0.0
    %5514 = vmatpush1.msra.mxu0 0.0
    %5515 = vmatprep.subr.mxu0 0.0
    %5516 = vmatpush1.msra.mxu0 0.0
    %5517 = vmatprep.subr.mxu0 0.0
    %5518 = vmatpush1.msra.mxu0 0.0
    %5519 = vmatprep.subr.mxu0 0.0
    %5520 = vmatpush1.msra.mxu0 0.0
    %5521 = vmatprep.subr.mxu0 0.0
    %5522 = vmatpush1.msra.mxu0 0.0
    %5523 = vmatprep.subr.mxu0 0.0
    %5524 = vmatpush1.msra.mxu0 0.0
    %5525 = vmatprep.subr.mxu0 0.0
    %5526 = vmatpush1.msra.mxu0 0.0
    %5527 = vmatprep.subr.mxu0 0.0
    %5528 = vmatpush1.msra.mxu0 0.0
    %5529 = vmatprep.subr.mxu0 0.0
    %5530 = vmatpush1.msra.mxu0 0.0
    %5531 = vmatprep.subr.mxu0 0.0
    %5532 = vmatpush1.msra.mxu0 0.0
    %5533 = vmatprep.subr.mxu0 0.0
    %5534 = vmatpush1.msra.mxu0 0.0
    %5535 = vmatprep.subr.mxu0 0.0
    %5536 = vmatpush1.msra.mxu0 0.0
    %5537 = vmatprep.subr.mxu0 0.0
    %5538 = vmatpush1.msra.mxu0 0.0
    %5539 = vmatprep.mubr.f32.mxu0 0.0
    %5540 = vmatmul.mubr.f32.gmra.mrb[0].mxu0 %v5464
    %v5541 = vpop.f32.mrb[0].mxu0
    %v5542 = vadd.f32 0.0, %v5541
    %v5543 = vpop.f32.mrb[0].mxu0
    %5544 = vmatprep.mubr.f32.mxu0 0.0
    %5545 = vmatmul.mubr.f32.gmra.mrb[0].mxu0 %v5467
    %v5546 = vpop.f32.mrb[0].mxu0
    %v5547 = vadd.f32 0.0, %v5546
    %v5548 = vpop.f32.mrb[0].mxu0
    %5549 = vmatprep.mubr.f32.mxu0 0.0
    %5550 = vmatmul.mubr.f32.gmra.mrb[0].mxu0 %v5470
    %v5551 = vpop.f32.mrb[0].mxu0
    %v5552 = vadd.f32 0.0, %v5551
    %v5553 = vpop.f32.mrb[0].mxu0
    %5554 = vmatprep.mubr.f32.mxu0 0.0
    %5555 = vmatmul.mubr.f32.gmra.mrb[0].mxu0 %v5473
    %v5556 = vpop.f32.mrb[0].mxu0
    %v5557 = vadd.f32 0.0, %v5556
    %v5558 = vpop.f32.mrb[0].mxu0
    %5559 = vdwg.mxu0
    %v5560 = vadd.f32 %v5452, %v5542
    %v5561 = vadd.f32 %v5453, %v5547
    %v5562 = vadd.f32 %v5454, %v5552
    %v5563 = vadd.f32 %v5455, %v5557
    %v5564 = vld [vmem:[%s6] sm:$0x1]
    %v5566 = vlaneseq
    %v5567 = vshrl.u32 %v5566, 7
    %v5568 = vsub.s32 0, %v5567
    %v5569 = vrot.slane %v5564, %v5568
    %v5571 = vadd.f32 %v5560, %v5569
    %v5572 = vadd.f32 %v5561, %v5569
    %v5573 = vadd.f32 %v5562, %v5569
    %v5574 = vadd.f32 %v5563, %v5569
    %v5575 = vmax.f32 %v5571, 0.0
    %v5576 = vmax.f32 %v5572, 0.0
    %v5577 = vmax.f32 %v5573, 0.0
    %v5578 = vmax.f32 %v5574, 0.0
    %5579 = vst.msk [vmem:[#allocation7] sm:$0xff] %vm4546, %v5575
    %5580 = vst.msk [vmem:[#allocation7 + $0x8] sm:$0xff] %vm4546, %v5576
    %5581 = vst.msk [vmem:[#allocation7 + $0x10] sm:$0xff] %vm4546, %v5577
    %5582 = vst.msk [vmem:[#allocation7 + $0x18] sm:$0xff] %vm4546, %v5578
    %v5583 = vld [vmem:[#allocation7 + $0x5] sm:$0x1]
    %v5584 = vld [vmem:[#allocation7 + $0x6] sm:$0x1]
    %v5585 = vld [vmem:[#allocation7 + $0x9] sm:$0x1]
    %v5586 = vld [vmem:[#allocation7 + $0xa] sm:$0x1]
    %v5587 = vadd.f32 %v5583, %v5584
    %v5588 = vadd.f32 %v5587, %v5585
    %v5589 = vadd.f32 %v5588, %v5586
    %v5590 = vmul.f32 %v5589, 0.25
    %5591 = vst.msk [vmem:[#allocation8] sm:$0x1] %vm4570, %v5590
    %v5592 = vld [vmem:[#allocation7 + $0x15] sm:$0x1]
    %v5593 = vld [vmem:[#allocation7 + $0x16] sm:$0x1]
    %v5594 = vld [vmem:[#allocation7 + $0x19] sm:$0x1]
    %v5595 = vld [vmem:[#allocation7 + $0x1a] sm:$0x1]
    %v5596 = vadd.f32 %v5592, %v5593
    %v5597 = vadd.f32 %v5596, %v5594
    %v5598 = vadd.f32 %v5597, %v5595
    %v5599 = vmul.f32 %v5598, 0.25
    %5600 = vst.msk [vmem:[#allocation8 + $0x1] sm:$0x1] %vm4570, %v5599
    %v5601 = vld [vmem:[#allocation8] sm:$0x3]
    %v5602 = vld [vmem:[%s7] sm:$0xff]
    %v5603 = vld [vmem:[%s7 + $0x8] sm:$0xff]
    %v5604 = vld [vmem:[%s8] sm:$0x1]
    %v5606 = vlaneseq
    %v5607 = vshrl.u32 %v5606, 7
    %v5608 = vsub.s32 0, %v5607
    %v5609 = vrot.slane %v5604, %v5608
    %v5612 = vsel %vm4546, %v5601, 0
    %5614 = vmatprep.subr.mxu0 0.0
    %5615 = vmatpush1.msra.mxu0 %v5602
    %5616 = vmatprep.subr.mxu0 0.0
    %5617 = vmatpush1.msra.mxu0 %v5603
    %5618 = vmatprep.subr.mxu0 0.0
    %5619 = vmatpush1.msra.mxu0 0.0
    %5620 = vmatprep.subr.mxu0 0.0
    %5621 = vmatpush1.msra.mxu0 0.0
    %5622 = vmatprep.subr.mxu0 0.0
    %5623 = vmatpush1.msra.mxu0 0.0
    %5624 = vmatprep.subr.mxu0 0.0
    %5625 = vmatpush1.msra.mxu0 0.0
    %5626 = vmatprep.subr.mxu0 0.0
    %5627 = vmatpush1.msra.mxu0 0.0
    %5628 = vmatprep.subr.mxu0 0.0
    %5629 = vmatpush1.msra.mxu0 0.0
    %5630 = vmatprep.subr.mxu0 0.0
    %5631 = vmatpush1.msra.mxu0 0.0
    %5632 = vmatprep.subr.mxu0 0.0
    %5633 = vmatpush1.msra.mxu0 0.0
    %5634 = vmatprep.subr.mxu0 0.0
    %5635 = vmatpush1.msra.mxu0 0.0
    %5636 = vmatprep.subr.mxu0 0.0
    %5637 = vmatpush1.msra.mxu0 0.0
    %5638 = vmatprep.subr.mxu0 0.0
    %5639 = vmatpush1.msra.mxu0 0.0
    %5640 = vmatprep.subr.mxu0 0.0
    %5641 = vmatpush1.msra.mxu0 0.0
    %5642 = vmatprep.subr.mxu0 0.0
    %5643 = vmatpush1.msra.mxu0 0.0
    %5644 = vmatprep.subr.mxu0 0.0
    %5645 = vmatpush1.msra.mxu0 0.0
    %5646 = vmatprep.subr.mxu0 0.0
    %5647 = vmatpush1.msra.mxu0 0.0
    %5648 = vmatprep.subr.mxu0 0.0
    %5649 = vmatpush1.msra.mxu0 0.0
    %5650 = vmatprep.subr.mxu0 0.0
    %5651 = vmatpush1.msra.mxu0 0.0
    %5652 = vmatprep.subr.mxu0 0.0
    %5653 = vmatpush1.msra.mxu0 0.0
    %5654 = vmatprep.subr.mxu0 0.0
    %5655 = vmatpush1.msra.mxu0 0.0
    %5656 = vmatprep.subr.mxu0 0.0
    %5657 = vmatpush1.msra.mxu0 0.0
    %5658 = vmatprep.subr.mxu0 0.0
    %5659 = vmatpush1.msra.mxu0 0.0
    %5660 = vmatprep.subr.mxu0 0.0
    %5661 = vmatpush1.msra.mxu0 0.0
    %5662 = vmatprep.subr.mxu0 0.0
    %5663 = vmatpush1.msra.mxu0 0.0
    %5664 = vmatprep.subr.mxu0 0.0
    %5665 = vmatpush1.msra.mxu0 0.0
    %5666 = vmatprep.subr.mxu0 0.0
    %5667 = vmatpush1.msra.mxu0 0.0
    %5668 = vmatprep.subr.mxu0 0.0
    %5669 = vmatpush1.msra.mxu0 0.0
    %5670 = vmatprep.subr.mxu0 0.0
    %5671 = vmatpush1.msra.mxu0 0.0
    %5672 = vmatprep.subr.mxu0 0.0
    %5673 = vmatpush1.msra.mxu0 0.0
    %5674 = vmatprep.subr.mxu0 0.0
    %5675 = vmatpush1.msra.mxu0 0.0
    %5676 = vmatprep.subr.mxu0 0.0
    %5677 = vmatpush1.msra.mxu0 0.0
    %5678 = vmatprep.mubr.f32.mxu0 0.0
    %5679 = vmatmul.mubr.f32.gmra.mrb[0].mxu0 %v5612
    %v5680 = vpop.f32.mrb[0].mxu0
    %v5681 = vadd.f32 %v5609, %v5680
    %v5682 = vpop.f32.mrb[0].mxu0
    %5683 = vdwg.mxu0
    %5684 = vst [vmem:[#allocation9] sm:$0x3] %v5681
    // Predicated region
    $region38: #{vgg_forward.1} parent=1 // pred_check
      _
    $region39: #{vgg_forward.1} parent=1 // pred_check_branch
      %5686 = sbr.rel (0) target = $region41
    $region40: #{vgg_forward.1} parent=1 // pred_region
      %s5688 = ssub.s32 32, 32
      %5689 = vsyncadd [#allocation10], %s5688
      %s5691 = sshll.u32 [#allocation9], 4
      %s5692 = int_to_ptr.vmem [resolvable:$true] %s5691
      %5694 = dma.vmem_to_hbm [thread:$0]  %s5692, 32, %s9, [#allocation10]
    $region41: #{vgg_forward.1} parent=1 // pred_fallthru
      _
    // Predicated region
    $region42: #{vgg_forward.1} parent=1 // pred_check
      _
    $region43: #{vgg_forward.1} parent=1 // pred_check_branch
      %5696 = sbr.rel (0) target = $region45
    $region44: #{vgg_forward.1} parent=1 // pred_region
      %5697 = dma.done [#allocation10], 32
    $region45: #{vgg_forward.1} parent=1 // pred_fallthru
      _
    %5698 = vsyncpa [#allocation10], 1

</llo_original>
